<compile_context>
chip_gen: v5e
topology: v5e:2x2
jax: 0.10.0
libtpu: 0.0.40
codegen_flags: <defaults>
</compile_context>

<pallas_src>
import jax
import jax.numpy as jnp
from jax.experimental import pallas as pl
from jax.experimental.pallas import tpu as pltpu

na = 3          # number of conditioning attributes (matches dcgan.py)
nd = 6          # number of output channels           (matches dcgan.py)
EPS = 1e-5      # BatchNorm1d default eps
L0 = 16         # length after layer 1 (= its kernel size, since L_in = 1)
N_S2 = 4        # number of stride-2 ConvTranspose1d layers
NDPAD = 128     # final layer channels padded to a full lane tile (lane-dense output)


# ----------------------------------------------------------------------------
# In-kernel helpers (traced inside the Pallas kernel)
# ----------------------------------------------------------------------------
def _bn_relu_flat(blocks, gamma, beta):
    """BatchNorm1d (training-mode batch stats, biased, two-pass centered var) + ReLU.

    blocks: list of (..., C) f32 pre-activation phase blocks (leading dims = rows).
    gamma/beta: (1, C) f32.
    Returns all blocks normalized, ReLU'd, cast to bf16 and concatenated block-major
    into a single (rows, C) bf16 matmul LHS for the next layer.
    """
    C = blocks[0].shape[-1]
    flats = [blk.reshape(-1, C) for blk in blocks]            # leading-dim merge: free
    rows = sum(f.shape[0] for f in flats)
    inv_n = 1.0 / rows

    s = None
    for f in flats:                                           # pass 1: mean
        ps = jnp.sum(f, axis=0, keepdims=True)
        s = ps if s is None else s + ps
    mean = s * inv_n                                          # (1, C)

    sq = None
    for f in flats:                                           # pass 2: centered var
        d = f - mean
        ps = jnp.sum(d * d, axis=0, keepdims=True)
        sq = ps if sq is None else sq + ps
    var = sq * inv_n

    scale = gamma * jax.lax.rsqrt(var + EPS)                  # (1, C)
    shift = beta - mean * scale
    return jnp.concatenate(
        [jnp.maximum(f * scale + shift, 0.0).astype(jnp.bfloat16) for f in flats],
        axis=0)


def _convT_stride2(flat, residues, wcat, cout, B, n):
    """One ConvTranspose1d(K=4, stride=2, padding=1), polyphase, ONE merged matmul.

    flat:  (P*B*n, Cin) bf16, block-major.  Block j (rows [j*B*n, (j+1)*B*n)) holds
           natural positions m = P*i + residues[j], i = 0..n-1, row order (b, i).
    wcat:  (Cin, 4*Cout) bf16, columns [k*Cout:(k+1)*Cout] = tap k of the PyTorch
           (Cin, Cout, K=4) weight.
    Returns (list of 2P output blocks of shape (B, n, Cout) f32, new residues) with
        out[2m]   = X[m]   @ W1 + X[m-1] @ W3
        out[2m+1] = X[m]   @ W2 + X[m+1] @ W0
    so the structurally-zero half of the zero-inserted im2col is never touched.
    """
    P = len(residues)
    rows = B * n
    prods = jnp.dot(flat, wcat, preferred_element_type=jnp.float32)  # (P*B*n, 4*Cout)

    def tap(k, j):            # static row/lane slices of the single matmul result
        return prods[j * rows:(j + 1) * rows,
                     k * cout:(k + 1) * cout].reshape(B, n, cout)

    blk = {r: j for j, r in enumerate(residues)}              # residue -> block index

    def down(x):   # y[i] = x[i-1] within each batch, zero row at i = 0
        return jnp.concatenate([jnp.zeros_like(x[:, :1]), x[:, :-1]], axis=1)

    def up(x):     # y[i] = x[i+1] within each batch, zero row at i = n-1
        return jnp.concatenate([x[:, 1:], jnp.zeros_like(x[:, :1])], axis=1)

    out_blocks, out_res = [], []
    for j, r in enumerate(residues):                          # even outputs
        nb3 = down(tap(3, blk[P - 1])) if r == 0 else tap(3, blk[r - 1])
        out_blocks.append(tap(1, j) + nb3)
        out_res.append(2 * r)
    for j, r in enumerate(residues):                          # odd outputs
        nb0 = up(tap(0, blk[0])) if r == P - 1 else tap(0, blk[r + 1])
        out_blocks.append(tap(2, j) + nb0)
        out_res.append(2 * r + 1)
    return out_blocks, out_res


# ----------------------------------------------------------------------------
# The fused generator kernel
# ----------------------------------------------------------------------------
def _generator_kernel(z_ref, w1_ref, g1_ref, b1_ref,
                      w2_hbm, g2_ref, b2_ref,
                      w3_hbm, g3_ref, b3_ref,
                      w4_hbm, g4_ref, b4_ref,
                      w5_hbm,
                      o_ref,
                      w2_vmem, w3_vmem, w4_vmem, w5_vmem, dma_sem):
    B = z_ref.shape[0]
    c0 = z_ref.shape[1]

    # Kick off the later-layer weight DMAs immediately so they overlap layer-1/2
    # compute instead of sitting in a serialized prologue (v5e/v6e win).
    cps = []
    for i, (src, dst) in enumerate(((w2_hbm, w2_vmem), (w3_hbm, w3_vmem),
                                    (w4_hbm, w4_vmem), (w5_hbm, w5_vmem))):
        cp = pltpu.make_async_copy(src, dst, dma_sem.at[i])
        cp.start()
        cps.append(cp)

    # ---- layer 1: ConvTranspose1d(K=16, s=1, p=0) on L=1 input == weighted sum of
    #      per-channel (16, 512) weight planes.  Latent/condition coefficients are
    #      SMEM scalars -> broadcast FMAs on the VPU, positions on sublanes, channels
    #      on lanes (the layout used by the rest of the network).
    w1_planes = [w1_ref[c] for c in range(c0)]                # each (16, 512) f32
    hs = []
    for b in range(B):
        acc = z_ref[b, 0] * w1_planes[0]
        for c in range(1, c0):
            acc = acc + z_ref[b, c] * w1_planes[c]
        hs.append(acc)                                        # (16, 512) f32
    flat = _bn_relu_flat(hs, g1_ref[...], b1_ref[...])        # (B*16, 512) bf16
    residues = [0]

    # ---- stride-2 ConvTranspose1d layers 2..4 (polyphase) + BN + ReLU
    for cp, w_vmem, cout, g_ref, b_ref in (
            (cps[0], w2_vmem, 256, g2_ref, b2_ref),
            (cps[1], w3_vmem, 128, g3_ref, b3_ref),
            (cps[2], w4_vmem, 64, g4_ref, b4_ref)):
        cp.wait()                                             # weight is now in VMEM
        blocks, residues = _convT_stride2(flat, residues, w_vmem[...], cout, B, L0)
        flat = _bn_relu_flat(blocks, g_ref[...], b_ref[...])

    # ---- final stride-2 ConvTranspose1d (Cout padded to 128 lanes) + tanh.
    #      Phase blocks are stored at their NATURAL residue (in-kernel un-permute).
    cps[3].wait()
    blocks, residues = _convT_stride2(flat, residues, w5_vmem[...], NDPAD, B, L0)
    for j, r in enumerate(residues):
        o_ref[r] = jnp.tanh(blocks[j])                        # static index store


# ----------------------------------------------------------------------------
# Parameter init (deterministic, synthetic) -- kernel layout + PyTorch layout
# ----------------------------------------------------------------------------
def init_params(key, nz):
    cin0 = nz + na
    cfgs = [
        (cin0, 512, 16, True),     # layer 1: K=16, stride=1, pad=0
        (512, 256, 4, True),
        (256, 128, 4, True),
        (128, 64, 4, True),
        (64, nd, 4, False),        # layer 5: tanh, no BN
    ]
    kern, torch_p = {}, {}
    for i, (cin, cout, K, use_bn) in enumerate(cfgs, start=1):
        key, kw, kg, kb = jax.random.split(key, 4)
        w = (0.02 * jax.random.normal(kw, (cin, cout, K))).astype(jnp.float32)
        torch_p[f"w{i}"] = w                                  # PyTorch (Cin, Cout, K)
        if i == 1:
            # kept f32 (tiny; used on the VPU, not the MXU)
            kern["w1t"] = jnp.transpose(w, (0, 2, 1))         # (Cin0, 16, 512)
        else:
            wp = w if use_bn else jnp.pad(w, ((0, 0), (0, NDPAD - cout), (0, 0)))
            # (Cin, K, Cout') -> (Cin, K*Cout'): the 4 taps concatenated along lanes,
            # bf16 so each layer is ONE wide bf16 MXU matmul.
            kern[f"w{i}c"] = (jnp.transpose(wp, (0, 2, 1))
                              .reshape(cin, -1).astype(jnp.bfloat16))
        if use_bn:
            g = (1.0 + 0.1 * jax.random.normal(kg, (1, cout))).astype(jnp.float32)
            b = (0.1 * jax.random.normal(kb, (1, cout))).astype(jnp.float32)
            kern[f"g{i}"], kern[f"b{i}"] = g, b
            torch_p[f"g{i}"], torch_p[f"b{i}"] = g, b
    return kern, torch_p


# ----------------------------------------------------------------------------
# Forward pass: one fused pallas_call + minimal static reshuffle in the wrapper
# ----------------------------------------------------------------------------
@jax.jit
def generator_forward(params, x, y):
    """x: (B, nz, 1) latent, y: (B, na) condition.  Returns (B, nd, 256) (NCL)."""
    B, _, L = x.shape
    assert L == 1, "fused kernel is specialized to DCGAN latent length L == 1"
    c0 = x.shape[1] + y.shape[1]
    z = jnp.concatenate([x[:, :, 0], y], axis=1)              # (B, nz+na) -> SMEM

    # Advisory cost estimate (helps XLA schedule around the custom call).
    m = B * L0
    flops = 2 * B * c0 * L0 * 512
    for cin, cout in ((512, 256), (256, 128), (128, 64), (64, NDPAD)):
        flops += 2 * m * cin * 4 * cout
        m *= 2
    transcendentals = (512 + 256 + 128 + 64) + (2 ** N_S2) * B * L0 * NDPAD
    bytes_accessed = sum(int(v.size) * v.dtype.itemsize for v in params.values())
    bytes_accessed += int(z.size) * 4 + (2 ** N_S2) * B * L0 * NDPAD * 4

    vmem = pltpu.MemorySpace.VMEM
    smem = pltpu.MemorySpace.SMEM
    out_blocked = pl.pallas_call(
        _generator_kernel,
        out_shape=jax.ShapeDtypeStruct((2 ** N_S2, B, L0, NDPAD), jnp.float32),
        in_specs=[
            pl.BlockSpec(memory_space=smem),                  # z scalars
            pl.BlockSpec(memory_space=vmem),                  # w1t (needed first)
            pl.BlockSpec(memory_space=vmem), pl.BlockSpec(memory_space=vmem),  # g1,b1
            pl.BlockSpec(memory_space=pl.ANY),                # w2c: manual overlapped DMA
            pl.BlockSpec(memory_space=vmem), pl.BlockSpec(memory_space=vmem),  # g2,b2
            pl.BlockSpec(memory_space=pl.ANY),                # w3c
            pl.BlockSpec(memory_space=vmem), pl.BlockSpec(memory_space=vmem),  # g3,b3
            pl.BlockSpec(memory_space=pl.ANY),                # w4c
            pl.BlockSpec(memory_space=vmem), pl.BlockSpec(memory_space=vmem),  # g4,b4
            pl.BlockSpec(memory_space=pl.ANY),                # w5c
        ],
        out_specs=pl.BlockSpec(memory_space=vmem),
        scratch_shapes=[
            pltpu.VMEM((512, 4 * 256), jnp.bfloat16),         # w2 landing buffer
            pltpu.VMEM((256, 4 * 128), jnp.bfloat16),         # w3
            pltpu.VMEM((128, 4 * 64), jnp.bfloat16),          # w4
            pltpu.VMEM((64, 4 * NDPAD), jnp.bfloat16),        # w5 (Cout padded)
            pltpu.SemaphoreType.DMA((4,)),
        ],
        cost_estimate=pl.CostEstimate(flops=int(flops),
                                      transcendentals=int(transcendentals),
                                      bytes_accessed=int(bytes_accessed)),
    )(z,
      params["w1t"], params["g1"], params["b1"],
      params["w2c"], params["g2"], params["b2"],
      params["w3c"], params["g3"], params["b3"],
      params["w4c"], params["g4"], params["b4"],
      params["w5c"])

    # o_ref[r, b, q, c] = output at natural position 16*q + r, channel c.
    out = jnp.transpose(out_blocked[..., :nd], (1, 3, 2, 0))  # (B, nd, q, r)
    return out.reshape(B, nd, L0 * (2 ** N_S2))               # (B, nd, 256) NCL


# ----------------------------------------------------------------------------
# Pure-JAX reference (zero-insert + pad + flipped-kernel correlation) for checking
# ----------------------------------------------------------------------------
def _ref_convT1d(x, w, stride, padding):
    B, cin, L = x.shape
    K = w.shape[2]
    L_up = stride * (L - 1) + 1
    xu = jnp.zeros((B, cin, L_up), x.dtype).at[:, :, ::stride].set(x)
    pad = K - 1 - padding
    xp = jnp.pad(xu, ((0, 0), (0, 0), (pad, pad)))
    L_out = stride * (L - 1) + K - 2 * padding
    idx = jnp.arange(L_out)[:, None] + jnp.arange(K)[None, :]
    patches = xp[:, :, idx]                                   # (B, Cin, L_out, K)
    return jnp.einsum("bcok,cdk->bdo", patches, w[:, :, ::-1],
                      precision=jax.lax.Precision.HIGHEST)


def _ref_bn_relu(x, gamma, beta):
    mean = jnp.mean(x, axis=(0, 2), keepdims=True)
    var = jnp.mean((x - mean) ** 2, axis=(0, 2), keepdims=True)
    xn = (x - mean) * jax.lax.rsqrt(var + EPS)
    return jnp.maximum(xn * gamma.reshape(1, -1, 1) + beta.reshape(1, -1, 1), 0.0)


@jax.jit
def reference_forward(tparams, x, y):
    B, _, L = x.shape
    yb = jnp.broadcast_to(y[:, :, None], (B, y.shape[1], L))
    h = jnp.concatenate([x, yb], axis=1)
    cfgs = [(16, 1, 0), (4, 2, 1), (4, 2, 1), (4, 2, 1), (4, 2, 1)]
    for i, (K, s, p) in enumerate(cfgs, start=1):
        h = _ref_convT1d(h, tparams[f"w{i}"], s, p)
        if i < 5:
            h = _ref_bn_relu(h, tparams[f"g{i}"], tparams[f"b{i}"])
    return jnp.tanh(h)


if __name__ == "__main__":
    nz = 8   # latent channels (small, chosen in-script)
    B = 2
    L = 1    # DCGAN latent spatial length

    key = jax.random.PRNGKey(0)
    kp, kx, ky = jax.random.split(key, 3)
    kparams, tparams = init_params(kp, nz)
    x = jax.random.normal(kx, (B, nz, L), jnp.float32)
    y = jax.random.normal(ky, (B, na), jnp.float32)

    out = generator_forward(kparams, x, y)
    out = jax.block_until_ready(out)

    assert out.shape == (B, nd, 256), out.shape
    assert bool(jnp.all(jnp.isfinite(out)))
    assert bool(jnp.all(jnp.abs(out) <= 1.0 + 1e-6))          # tanh output range

    ref = reference_forward(tparams, x, y)
    err = float(jnp.max(jnp.abs(out - ref)))
    # bf16 MXU operands vs the f32 reference: BatchNorm renormalizes every layer, so
    # ~0.4% per-layer rounding stays ~1% relative at the |pre-tanh| ~ 0.1-0.3 final
    # layer -> expected max abs error well below 2e-2; assert with margin.
    assert err < 3e-2, f"mismatch vs reference: max abs err = {err}"

    print("KERNEL_OK")
</pallas_src>

<mosaic_0001>
module attributes {stable_mosaic.version = 11 : i64} {
  func.func @_generator_kernel(%arg0: memref<2x11xf32, #tpu.memory_space<smem>>, %arg1: memref<11x16x512xf32, #tpu.memory_space<vmem>>, %arg2: memref<1x512xf32, #tpu.memory_space<vmem>>, %arg3: memref<1x512xf32, #tpu.memory_space<vmem>>, %arg4: memref<512x1024xbf16, #tpu.memory_space<any>>, %arg5: memref<1x256xf32, #tpu.memory_space<vmem>>, %arg6: memref<1x256xf32, #tpu.memory_space<vmem>>, %arg7: memref<256x512xbf16, #tpu.memory_space<any>>, %arg8: memref<1x128xf32, #tpu.memory_space<vmem>>, %arg9: memref<1x128xf32, #tpu.memory_space<vmem>>, %arg10: memref<128x256xbf16, #tpu.memory_space<any>>, %arg11: memref<1x64xf32, #tpu.memory_space<vmem>>, %arg12: memref<1x64xf32, #tpu.memory_space<vmem>>, %arg13: memref<64x512xbf16, #tpu.memory_space<any>>, %arg14: memref<16x2x16x128xf32, #tpu.memory_space<vmem>>, %arg15: memref<512x1024xbf16, #tpu.memory_space<vmem>>, %arg16: memref<256x512xbf16, #tpu.memory_space<vmem>>, %arg17: memref<128x256xbf16, #tpu.memory_space<vmem>>, %arg18: memref<64x512xbf16, #tpu.memory_space<vmem>>, %arg19: memref<4x!tpu.dma_semaphore, #tpu.memory_space<semaphore_mem>>) attributes {dimension_semantics = [], scalar_prefetch = 0 : i64, scratch_operands = 5 : i64, tpu.core_type = #tpu.core_type<tc>} {
    %c0_i32 = arith.constant 0 : i32
    %0 = tpu.memref_slice %arg19[%c0_i32] : memref<4x!tpu.dma_semaphore, #tpu.memory_space<semaphore_mem>> -> memref<1x!tpu.dma_semaphore, #tpu.memory_space<semaphore_mem>>
    %1 = tpu.memref_squeeze %0 : memref<1x!tpu.dma_semaphore, #tpu.memory_space<semaphore_mem>> -> memref<!tpu.dma_semaphore, #tpu.memory_space<semaphore_mem>>
    tpu.enqueue_dma source(%arg4 : memref<512x1024xbf16, #tpu.memory_space<any>>) target(%arg15 : memref<512x1024xbf16, #tpu.memory_space<vmem>>) target_semaphore(%1 : memref<!tpu.dma_semaphore, #tpu.memory_space<semaphore_mem>>)
    %c1_i32 = arith.constant 1 : i32
    %2 = tpu.memref_slice %arg19[%c1_i32] : memref<4x!tpu.dma_semaphore, #tpu.memory_space<semaphore_mem>> -> memref<1x!tpu.dma_semaphore, #tpu.memory_space<semaphore_mem>>
    %3 = tpu.memref_squeeze %2 : memref<1x!tpu.dma_semaphore, #tpu.memory_space<semaphore_mem>> -> memref<!tpu.dma_semaphore, #tpu.memory_space<semaphore_mem>>
    tpu.enqueue_dma source(%arg7 : memref<256x512xbf16, #tpu.memory_space<any>>) target(%arg16 : memref<256x512xbf16, #tpu.memory_space<vmem>>) target_semaphore(%3 : memref<!tpu.dma_semaphore, #tpu.memory_space<semaphore_mem>>)
    %c2_i32 = arith.constant 2 : i32
    %4 = tpu.memref_slice %arg19[%c2_i32] : memref<4x!tpu.dma_semaphore, #tpu.memory_space<semaphore_mem>> -> memref<1x!tpu.dma_semaphore, #tpu.memory_space<semaphore_mem>>
    %5 = tpu.memref_squeeze %4 : memref<1x!tpu.dma_semaphore, #tpu.memory_space<semaphore_mem>> -> memref<!tpu.dma_semaphore, #tpu.memory_space<semaphore_mem>>
    tpu.enqueue_dma source(%arg10 : memref<128x256xbf16, #tpu.memory_space<any>>) target(%arg17 : memref<128x256xbf16, #tpu.memory_space<vmem>>) target_semaphore(%5 : memref<!tpu.dma_semaphore, #tpu.memory_space<semaphore_mem>>)
    %c3_i32 = arith.constant 3 : i32
    %6 = tpu.memref_slice %arg19[%c3_i32] : memref<4x!tpu.dma_semaphore, #tpu.memory_space<semaphore_mem>> -> memref<1x!tpu.dma_semaphore, #tpu.memory_space<semaphore_mem>>
    %7 = tpu.memref_squeeze %6 : memref<1x!tpu.dma_semaphore, #tpu.memory_space<semaphore_mem>> -> memref<!tpu.dma_semaphore, #tpu.memory_space<semaphore_mem>>
    tpu.enqueue_dma source(%arg13 : memref<64x512xbf16, #tpu.memory_space<any>>) target(%arg18 : memref<64x512xbf16, #tpu.memory_space<vmem>>) target_semaphore(%7 : memref<!tpu.dma_semaphore, #tpu.memory_space<semaphore_mem>>)
    %c0 = arith.constant 0 : index
    %c0_0 = arith.constant 0 : index
    %c0_1 = arith.constant 0 : index
    %8 = vector.load %arg1[%c0, %c0_0, %c0_1] : memref<11x16x512xf32, #tpu.memory_space<vmem>>, vector<1x16x512xf32>
    %9 = vector.shape_cast %8 : vector<1x16x512xf32> to vector<16x512xf32>
    %c1 = arith.constant 1 : index
    %c0_2 = arith.constant 0 : index
    %c0_3 = arith.constant 0 : index
    %10 = vector.load %arg1[%c1, %c0_2, %c0_3] : memref<11x16x512xf32, #tpu.memory_space<vmem>>, vector<1x16x512xf32>
    %11 = vector.shape_cast %10 : vector<1x16x512xf32> to vector<16x512xf32>
    %c2 = arith.constant 2 : index
    %c0_4 = arith.constant 0 : index
    %c0_5 = arith.constant 0 : index
    %12 = vector.load %arg1[%c2, %c0_4, %c0_5] : memref<11x16x512xf32, #tpu.memory_space<vmem>>, vector<1x16x512xf32>
    %13 = vector.shape_cast %12 : vector<1x16x512xf32> to vector<16x512xf32>
    %c3 = arith.constant 3 : index
    %c0_6 = arith.constant 0 : index
    %c0_7 = arith.constant 0 : index
    %14 = vector.load %arg1[%c3, %c0_6, %c0_7] : memref<11x16x512xf32, #tpu.memory_space<vmem>>, vector<1x16x512xf32>
    %15 = vector.shape_cast %14 : vector<1x16x512xf32> to vector<16x512xf32>
    %c4 = arith.constant 4 : index
    %c0_8 = arith.constant 0 : index
    %c0_9 = arith.constant 0 : index
    %16 = vector.load %arg1[%c4, %c0_8, %c0_9] : memref<11x16x512xf32, #tpu.memory_space<vmem>>, vector<1x16x512xf32>
    %17 = vector.shape_cast %16 : vector<1x16x512xf32> to vector<16x512xf32>
    %c5 = arith.constant 5 : index
    %c0_10 = arith.constant 0 : index
    %c0_11 = arith.constant 0 : index
    %18 = vector.load %arg1[%c5, %c0_10, %c0_11] : memref<11x16x512xf32, #tpu.memory_space<vmem>>, vector<1x16x512xf32>
    %19 = vector.shape_cast %18 : vector<1x16x512xf32> to vector<16x512xf32>
    %c6 = arith.constant 6 : index
    %c0_12 = arith.constant 0 : index
    %c0_13 = arith.constant 0 : index
    %20 = vector.load %arg1[%c6, %c0_12, %c0_13] : memref<11x16x512xf32, #tpu.memory_space<vmem>>, vector<1x16x512xf32>
    %21 = vector.shape_cast %20 : vector<1x16x512xf32> to vector<16x512xf32>
    %c7 = arith.constant 7 : index
    %c0_14 = arith.constant 0 : index
    %c0_15 = arith.constant 0 : index
    %22 = vector.load %arg1[%c7, %c0_14, %c0_15] : memref<11x16x512xf32, #tpu.memory_space<vmem>>, vector<1x16x512xf32>
    %23 = vector.shape_cast %22 : vector<1x16x512xf32> to vector<16x512xf32>
    %c8 = arith.constant 8 : index
    %c0_16 = arith.constant 0 : index
    %c0_17 = arith.constant 0 : index
    %24 = vector.load %arg1[%c8, %c0_16, %c0_17] : memref<11x16x512xf32, #tpu.memory_space<vmem>>, vector<1x16x512xf32>
    %25 = vector.shape_cast %24 : vector<1x16x512xf32> to vector<16x512xf32>
    %c9 = arith.constant 9 : index
    %c0_18 = arith.constant 0 : index
    %c0_19 = arith.constant 0 : index
    %26 = vector.load %arg1[%c9, %c0_18, %c0_19] : memref<11x16x512xf32, #tpu.memory_space<vmem>>, vector<1x16x512xf32>
    %27 = vector.shape_cast %26 : vector<1x16x512xf32> to vector<16x512xf32>
    %c10 = arith.constant 10 : index
    %c0_20 = arith.constant 0 : index
    %c0_21 = arith.constant 0 : index
    %28 = vector.load %arg1[%c10, %c0_20, %c0_21] : memref<11x16x512xf32, #tpu.memory_space<vmem>>, vector<1x16x512xf32>
    %29 = vector.shape_cast %28 : vector<1x16x512xf32> to vector<16x512xf32>
    %c0_22 = arith.constant 0 : index
    %c0_23 = arith.constant 0 : index
    %30 = memref.load %arg0[%c0_22, %c0_23] : memref<2x11xf32, #tpu.memory_space<smem>>
    %31 = vector.broadcast %30 : f32 to vector<16x512xf32>
    %32 = arith.mulf %31, %9 : vector<16x512xf32>
    %c0_24 = arith.constant 0 : index
    %c1_25 = arith.constant 1 : index
    %33 = memref.load %arg0[%c0_24, %c1_25] : memref<2x11xf32, #tpu.memory_space<smem>>
    %34 = vector.broadcast %33 : f32 to vector<16x512xf32>
    %35 = arith.mulf %34, %11 : vector<16x512xf32>
    %36 = arith.addf %32, %35 : vector<16x512xf32>
    %c0_26 = arith.constant 0 : index
    %c2_27 = arith.constant 2 : index
    %37 = memref.load %arg0[%c0_26, %c2_27] : memref<2x11xf32, #tpu.memory_space<smem>>
    %38 = vector.broadcast %37 : f32 to vector<16x512xf32>
    %39 = arith.mulf %38, %13 : vector<16x512xf32>
    %40 = arith.addf %36, %39 : vector<16x512xf32>
    %c0_28 = arith.constant 0 : index
    %c3_29 = arith.constant 3 : index
    %41 = memref.load %arg0[%c0_28, %c3_29] : memref<2x11xf32, #tpu.memory_space<smem>>
    %42 = vector.broadcast %41 : f32 to vector<16x512xf32>
    %43 = arith.mulf %42, %15 : vector<16x512xf32>
    %44 = arith.addf %40, %43 : vector<16x512xf32>
    %c0_30 = arith.constant 0 : index
    %c4_31 = arith.constant 4 : index
    %45 = memref.load %arg0[%c0_30, %c4_31] : memref<2x11xf32, #tpu.memory_space<smem>>
    %46 = vector.broadcast %45 : f32 to vector<16x512xf32>
    %47 = arith.mulf %46, %17 : vector<16x512xf32>
    %48 = arith.addf %44, %47 : vector<16x512xf32>
    %c0_32 = arith.constant 0 : index
    %c5_33 = arith.constant 5 : index
    %49 = memref.load %arg0[%c0_32, %c5_33] : memref<2x11xf32, #tpu.memory_space<smem>>
    %50 = vector.broadcast %49 : f32 to vector<16x512xf32>
    %51 = arith.mulf %50, %19 : vector<16x512xf32>
    %52 = arith.addf %48, %51 : vector<16x512xf32>
    %c0_34 = arith.constant 0 : index
    %c6_35 = arith.constant 6 : index
    %53 = memref.load %arg0[%c0_34, %c6_35] : memref<2x11xf32, #tpu.memory_space<smem>>
    %54 = vector.broadcast %53 : f32 to vector<16x512xf32>
    %55 = arith.mulf %54, %21 : vector<16x512xf32>
    %56 = arith.addf %52, %55 : vector<16x512xf32>
    %c0_36 = arith.constant 0 : index
    %c7_37 = arith.constant 7 : index
    %57 = memref.load %arg0[%c0_36, %c7_37] : memref<2x11xf32, #tpu.memory_space<smem>>
    %58 = vector.broadcast %57 : f32 to vector<16x512xf32>
    %59 = arith.mulf %58, %23 : vector<16x512xf32>
    %60 = arith.addf %56, %59 : vector<16x512xf32>
    %c0_38 = arith.constant 0 : index
    %c8_39 = arith.constant 8 : index
    %61 = memref.load %arg0[%c0_38, %c8_39] : memref<2x11xf32, #tpu.memory_space<smem>>
    %62 = vector.broadcast %61 : f32 to vector<16x512xf32>
    %63 = arith.mulf %62, %25 : vector<16x512xf32>
    %64 = arith.addf %60, %63 : vector<16x512xf32>
    %c0_40 = arith.constant 0 : index
    %c9_41 = arith.constant 9 : index
    %65 = memref.load %arg0[%c0_40, %c9_41] : memref<2x11xf32, #tpu.memory_space<smem>>
    %66 = vector.broadcast %65 : f32 to vector<16x512xf32>
    %67 = arith.mulf %66, %27 : vector<16x512xf32>
    %68 = arith.addf %64, %67 : vector<16x512xf32>
    %c0_42 = arith.constant 0 : index
    %c10_43 = arith.constant 10 : index
    %69 = memref.load %arg0[%c0_42, %c10_43] : memref<2x11xf32, #tpu.memory_space<smem>>
    %70 = vector.broadcast %69 : f32 to vector<16x512xf32>
    %71 = arith.mulf %70, %29 : vector<16x512xf32>
    %72 = arith.addf %68, %71 : vector<16x512xf32>
    %c1_44 = arith.constant 1 : index
    %c0_45 = arith.constant 0 : index
    %73 = memref.load %arg0[%c1_44, %c0_45] : memref<2x11xf32, #tpu.memory_space<smem>>
    %74 = vector.broadcast %73 : f32 to vector<16x512xf32>
    %75 = arith.mulf %74, %9 : vector<16x512xf32>
    %c1_46 = arith.constant 1 : index
    %c1_47 = arith.constant 1 : index
    %76 = memref.load %arg0[%c1_46, %c1_47] : memref<2x11xf32, #tpu.memory_space<smem>>
    %77 = vector.broadcast %76 : f32 to vector<16x512xf32>
    %78 = arith.mulf %77, %11 : vector<16x512xf32>
    %79 = arith.addf %75, %78 : vector<16x512xf32>
    %c1_48 = arith.constant 1 : index
    %c2_49 = arith.constant 2 : index
    %80 = memref.load %arg0[%c1_48, %c2_49] : memref<2x11xf32, #tpu.memory_space<smem>>
    %81 = vector.broadcast %80 : f32 to vector<16x512xf32>
    %82 = arith.mulf %81, %13 : vector<16x512xf32>
    %83 = arith.addf %79, %82 : vector<16x512xf32>
    %c1_50 = arith.constant 1 : index
    %c3_51 = arith.constant 3 : index
    %84 = memref.load %arg0[%c1_50, %c3_51] : memref<2x11xf32, #tpu.memory_space<smem>>
    %85 = vector.broadcast %84 : f32 to vector<16x512xf32>
    %86 = arith.mulf %85, %15 : vector<16x512xf32>
    %87 = arith.addf %83, %86 : vector<16x512xf32>
    %c1_52 = arith.constant 1 : index
    %c4_53 = arith.constant 4 : index
    %88 = memref.load %arg0[%c1_52, %c4_53] : memref<2x11xf32, #tpu.memory_space<smem>>
    %89 = vector.broadcast %88 : f32 to vector<16x512xf32>
    %90 = arith.mulf %89, %17 : vector<16x512xf32>
    %91 = arith.addf %87, %90 : vector<16x512xf32>
    %c1_54 = arith.constant 1 : index
    %c5_55 = arith.constant 5 : index
    %92 = memref.load %arg0[%c1_54, %c5_55] : memref<2x11xf32, #tpu.memory_space<smem>>
    %93 = vector.broadcast %92 : f32 to vector<16x512xf32>
    %94 = arith.mulf %93, %19 : vector<16x512xf32>
    %95 = arith.addf %91, %94 : vector<16x512xf32>
    %c1_56 = arith.constant 1 : index
    %c6_57 = arith.constant 6 : index
    %96 = memref.load %arg0[%c1_56, %c6_57] : memref<2x11xf32, #tpu.memory_space<smem>>
    %97 = vector.broadcast %96 : f32 to vector<16x512xf32>
    %98 = arith.mulf %97, %21 : vector<16x512xf32>
    %99 = arith.addf %95, %98 : vector<16x512xf32>
    %c1_58 = arith.constant 1 : index
    %c7_59 = arith.constant 7 : index
    %100 = memref.load %arg0[%c1_58, %c7_59] : memref<2x11xf32, #tpu.memory_space<smem>>
    %101 = vector.broadcast %100 : f32 to vector<16x512xf32>
    %102 = arith.mulf %101, %23 : vector<16x512xf32>
    %103 = arith.addf %99, %102 : vector<16x512xf32>
    %c1_60 = arith.constant 1 : index
    %c8_61 = arith.constant 8 : index
    %104 = memref.load %arg0[%c1_60, %c8_61] : memref<2x11xf32, #tpu.memory_space<smem>>
    %105 = vector.broadcast %104 : f32 to vector<16x512xf32>
    %106 = arith.mulf %105, %25 : vector<16x512xf32>
    %107 = arith.addf %103, %106 : vector<16x512xf32>
    %c1_62 = arith.constant 1 : index
    %c9_63 = arith.constant 9 : index
    %108 = memref.load %arg0[%c1_62, %c9_63] : memref<2x11xf32, #tpu.memory_space<smem>>
    %109 = vector.broadcast %108 : f32 to vector<16x512xf32>
    %110 = arith.mulf %109, %27 : vector<16x512xf32>
    %111 = arith.addf %107, %110 : vector<16x512xf32>
    %c1_64 = arith.constant 1 : index
    %c10_65 = arith.constant 10 : index
    %112 = memref.load %arg0[%c1_64, %c10_65] : memref<2x11xf32, #tpu.memory_space<smem>>
    %113 = vector.broadcast %112 : f32 to vector<16x512xf32>
    %114 = arith.mulf %113, %29 : vector<16x512xf32>
    %115 = arith.addf %111, %114 : vector<16x512xf32>
    %c0_66 = arith.constant 0 : index
    %c0_67 = arith.constant 0 : index
    %116 = vector.load %arg2[%c0_66, %c0_67] : memref<1x512xf32, #tpu.memory_space<vmem>>, vector<1x512xf32>
    %c0_68 = arith.constant 0 : index
    %c0_69 = arith.constant 0 : index
    %117 = vector.load %arg3[%c0_68, %c0_69] : memref<1x512xf32, #tpu.memory_space<vmem>>, vector<1x512xf32>
    %cst = arith.constant dense<0.000000e+00> : vector<512xf32>
    %118 = vector.multi_reduction <add>, %72, %cst [0] : vector<16x512xf32> to vector<512xf32>
    %119 = vector.shape_cast %118 : vector<512xf32> to vector<1x512xf32>
    %cst_70 = arith.constant dense<0.000000e+00> : vector<512xf32>
    %120 = vector.multi_reduction <add>, %115, %cst_70 [0] : vector<16x512xf32> to vector<512xf32>
    %121 = vector.shape_cast %120 : vector<512xf32> to vector<1x512xf32>
    %122 = arith.addf %119, %121 : vector<1x512xf32>
    %cst_71 = arith.constant 3.125000e-02 : f32
    %123 = vector.broadcast %cst_71 : f32 to vector<1x512xf32>
    %124 = arith.mulf %122, %123 : vector<1x512xf32>
    %125 = vector.broadcast %124 : vector<1x512xf32> to vector<16x512xf32>
    %126 = arith.subf %72, %125 : vector<16x512xf32>
    %127 = arith.mulf %126, %126 : vector<16x512xf32>
    %cst_72 = arith.constant dense<0.000000e+00> : vector<512xf32>
    %128 = vector.multi_reduction <add>, %127, %cst_72 [0] : vector<16x512xf32> to vector<512xf32>
    %129 = vector.shape_cast %128 : vector<512xf32> to vector<1x512xf32>
    %130 = vector.broadcast %124 : vector<1x512xf32> to vector<16x512xf32>
    %131 = arith.subf %115, %130 : vector<16x512xf32>
    %132 = arith.mulf %131, %131 : vector<16x512xf32>
    %cst_73 = arith.constant dense<0.000000e+00> : vector<512xf32>
    %133 = vector.multi_reduction <add>, %132, %cst_73 [0] : vector<16x512xf32> to vector<512xf32>
    %134 = vector.shape_cast %133 : vector<512xf32> to vector<1x512xf32>
    %135 = arith.addf %129, %134 : vector<1x512xf32>
    %cst_74 = arith.constant 3.125000e-02 : f32
    %136 = vector.broadcast %cst_74 : f32 to vector<1x512xf32>
    %137 = arith.mulf %135, %136 : vector<1x512xf32>
    %cst_75 = arith.constant 9.99999974E-6 : f32
    %138 = vector.broadcast %cst_75 : f32 to vector<1x512xf32>
    %139 = arith.addf %137, %138 : vector<1x512xf32>
    %140 = math.rsqrt %139 : vector<1x512xf32>
    %141 = arith.mulf %116, %140 : vector<1x512xf32>
    %142 = arith.mulf %124, %141 : vector<1x512xf32>
    %143 = arith.subf %117, %142 : vector<1x512xf32>
    %144 = vector.broadcast %141 : vector<1x512xf32> to vector<16x512xf32>
    %145 = arith.mulf %72, %144 : vector<16x512xf32>
    %146 = vector.broadcast %143 : vector<1x512xf32> to vector<16x512xf32>
    %147 = arith.addf %145, %146 : vector<16x512xf32>
    %cst_76 = arith.constant 0.000000e+00 : f32
    %148 = vector.broadcast %cst_76 : f32 to vector<16x512xf32>
    %149 = arith.maximumf %147, %148 : vector<16x512xf32>
    %150 = arith.truncf %149 : vector<16x512xf32> to vector<16x512xbf16>
    %151 = vector.broadcast %141 : vector<1x512xf32> to vector<16x512xf32>
    %152 = arith.mulf %115, %151 : vector<16x512xf32>
    %153 = vector.broadcast %143 : vector<1x512xf32> to vector<16x512xf32>
    %154 = arith.addf %152, %153 : vector<16x512xf32>
    %cst_77 = arith.constant 0.000000e+00 : f32
    %155 = vector.broadcast %cst_77 : f32 to vector<16x512xf32>
    %156 = arith.maximumf %154, %155 : vector<16x512xf32>
    %157 = arith.truncf %156 : vector<16x512xf32> to vector<16x512xbf16>
    %158 = tpu.concatenate %150, %157 in 0 : vector<16x512xbf16>, vector<16x512xbf16> -> vector<32x512xbf16>
    %c0_i32_78 = arith.constant 0 : i32
    %159 = tpu.memref_slice %arg19[%c0_i32_78] : memref<4x!tpu.dma_semaphore, #tpu.memory_space<semaphore_mem>> -> memref<1x!tpu.dma_semaphore, #tpu.memory_space<semaphore_mem>>
    %160 = tpu.memref_squeeze %159 : memref<1x!tpu.dma_semaphore, #tpu.memory_space<semaphore_mem>> -> memref<!tpu.dma_semaphore, #tpu.memory_space<semaphore_mem>>
    tpu.wait_dma2 semaphore(%160 : memref<!tpu.dma_semaphore, #tpu.memory_space<semaphore_mem>>) src(%arg4 : memref<512x1024xbf16, #tpu.memory_space<any>>) dst(%arg15 : memref<512x1024xbf16, #tpu.memory_space<vmem>>)
    %c0_79 = arith.constant 0 : index
    %c0_80 = arith.constant 0 : index
    %161 = vector.load %arg15[%c0_79, %c0_80] : memref<512x1024xbf16, #tpu.memory_space<vmem>>, vector<512x1024xbf16>
    %cst_81 = arith.constant dense<0.000000e+00> : vector<32x1024xf32>
    %162 = tpu.matmul %158, %161, %cst_81 {dimension_numbers = #tpu.dot_dimension_numbers<[1], [0], [0], [1], [0, 0, 1, 1], [], []>} : vector<32x512xbf16>, vector<512x1024xbf16>, vector<32x1024xf32> -> vector<32x1024xf32>
    %163 = vector.extract_strided_slice %162 {offsets = [0, 768], sizes = [32, 256], strides = [1, 1]} : vector<32x1024xf32> to vector<32x256xf32>
    %164 = vector.shape_cast %163 : vector<32x256xf32> to vector<2x16x256xf32>
    %cst_82 = arith.constant 0.000000e+00 : f32
    %165 = vector.broadcast %cst_82 : f32 to vector<2x1x256xf32>
    %166 = vector.extract_strided_slice %164 {offsets = [0, 0, 0], sizes = [2, 15, 256], strides = [1, 1, 1]} : vector<2x16x256xf32> to vector<2x15x256xf32>
    %167 = tpu.concatenate %165, %166 in 1 : vector<2x1x256xf32>, vector<2x15x256xf32> -> vector<2x16x256xf32>
    %168 = vector.extract_strided_slice %162 {offsets = [0, 256], sizes = [32, 256], strides = [1, 1]} : vector<32x1024xf32> to vector<32x256xf32>
    %169 = vector.shape_cast %168 : vector<32x256xf32> to vector<2x16x256xf32>
    %170 = arith.addf %169, %167 : vector<2x16x256xf32>
    %171 = vector.extract_strided_slice %162 {offsets = [0, 0], sizes = [32, 256], strides = [1, 1]} : vector<32x1024xf32> to vector<32x256xf32>
    %172 = vector.shape_cast %171 : vector<32x256xf32> to vector<2x16x256xf32>
    %173 = vector.extract_strided_slice %172 {offsets = [0, 1, 0], sizes = [2, 15, 256], strides = [1, 1, 1]} : vector<2x16x256xf32> to vector<2x15x256xf32>
    %cst_83 = arith.constant 0.000000e+00 : f32
    %174 = vector.broadcast %cst_83 : f32 to vector<2x1x256xf32>
    %175 = tpu.concatenate %173, %174 in 1 : vector<2x15x256xf32>, vector<2x1x256xf32> -> vector<2x16x256xf32>
    %176 = vector.extract_strided_slice %162 {offsets = [0, 512], sizes = [32, 256], strides = [1, 1]} : vector<32x1024xf32> to vector<32x256xf32>
    %177 = vector.shape_cast %176 : vector<32x256xf32> to vector<2x16x256xf32>
    %178 = arith.addf %177, %175 : vector<2x16x256xf32>
    %c0_84 = arith.constant 0 : index
    %c0_85 = arith.constant 0 : index
    %179 = vector.load %arg5[%c0_84, %c0_85] : memref<1x256xf32, #tpu.memory_space<vmem>>, vector<1x256xf32>
    %c0_86 = arith.constant 0 : index
    %c0_87 = arith.constant 0 : index
    %180 = vector.load %arg6[%c0_86, %c0_87] : memref<1x256xf32, #tpu.memory_space<vmem>>, vector<1x256xf32>
    %181 = vector.shape_cast %170 : vector<2x16x256xf32> to vector<32x256xf32>
    %182 = vector.shape_cast %178 : vector<2x16x256xf32> to vector<32x256xf32>
    %cst_88 = arith.constant dense<0.000000e+00> : vector<256xf32>
    %183 = vector.multi_reduction <add>, %181, %cst_88 [0] : vector<32x256xf32> to vector<256xf32>
    %184 = vector.shape_cast %183 : vector<256xf32> to vector<1x256xf32>
    %cst_89 = arith.constant dense<0.000000e+00> : vector<256xf32>
    %185 = vector.multi_reduction <add>, %182, %cst_89 [0] : vector<32x256xf32> to vector<256xf32>
    %186 = vector.shape_cast %185 : vector<256xf32> to vector<1x256xf32>
    %187 = arith.addf %184, %186 : vector<1x256xf32>
    %cst_90 = arith.constant 1.562500e-02 : f32
    %188 = vector.broadcast %cst_90 : f32 to vector<1x256xf32>
    %189 = arith.mulf %187, %188 : vector<1x256xf32>
    %190 = vector.broadcast %189 : vector<1x256xf32> to vector<32x256xf32>
    %191 = arith.subf %181, %190 : vector<32x256xf32>
    %192 = arith.mulf %191, %191 : vector<32x256xf32>
    %cst_91 = arith.constant dense<0.000000e+00> : vector<256xf32>
    %193 = vector.multi_reduction <add>, %192, %cst_91 [0] : vector<32x256xf32> to vector<256xf32>
    %194 = vector.shape_cast %193 : vector<256xf32> to vector<1x256xf32>
    %195 = vector.broadcast %189 : vector<1x256xf32> to vector<32x256xf32>
    %196 = arith.subf %182, %195 : vector<32x256xf32>
    %197 = arith.mulf %196, %196 : vector<32x256xf32>
    %cst_92 = arith.constant dense<0.000000e+00> : vector<256xf32>
    %198 = vector.multi_reduction <add>, %197, %cst_92 [0] : vector<32x256xf32> to vector<256xf32>
    %199 = vector.shape_cast %198 : vector<256xf32> to vector<1x256xf32>
    %200 = arith.addf %194, %199 : vector<1x256xf32>
    %cst_93 = arith.constant 1.562500e-02 : f32
    %201 = vector.broadcast %cst_93 : f32 to vector<1x256xf32>
    %202 = arith.mulf %200, %201 : vector<1x256xf32>
    %cst_94 = arith.constant 9.99999974E-6 : f32
    %203 = vector.broadcast %cst_94 : f32 to vector<1x256xf32>
    %204 = arith.addf %202, %203 : vector<1x256xf32>
    %205 = math.rsqrt %204 : vector<1x256xf32>
    %206 = arith.mulf %179, %205 : vector<1x256xf32>
    %207 = arith.mulf %189, %206 : vector<1x256xf32>
    %208 = arith.subf %180, %207 : vector<1x256xf32>
    %209 = vector.broadcast %206 : vector<1x256xf32> to vector<32x256xf32>
    %210 = arith.mulf %181, %209 : vector<32x256xf32>
    %211 = vector.broadcast %208 : vector<1x256xf32> to vector<32x256xf32>
    %212 = arith.addf %210, %211 : vector<32x256xf32>
    %cst_95 = arith.constant 0.000000e+00 : f32
    %213 = vector.broadcast %cst_95 : f32 to vector<32x256xf32>
    %214 = arith.maximumf %212, %213 : vector<32x256xf32>
    %215 = arith.truncf %214 : vector<32x256xf32> to vector<32x256xbf16>
    %216 = vector.broadcast %206 : vector<1x256xf32> to vector<32x256xf32>
    %217 = arith.mulf %182, %216 : vector<32x256xf32>
    %218 = vector.broadcast %208 : vector<1x256xf32> to vector<32x256xf32>
    %219 = arith.addf %217, %218 : vector<32x256xf32>
    %cst_96 = arith.constant 0.000000e+00 : f32
    %220 = vector.broadcast %cst_96 : f32 to vector<32x256xf32>
    %221 = arith.maximumf %219, %220 : vector<32x256xf32>
    %222 = arith.truncf %221 : vector<32x256xf32> to vector<32x256xbf16>
    %223 = tpu.concatenate %215, %222 in 0 : vector<32x256xbf16>, vector<32x256xbf16> -> vector<64x256xbf16>
    %c1_i32_97 = arith.constant 1 : i32
    %224 = tpu.memref_slice %arg19[%c1_i32_97] : memref<4x!tpu.dma_semaphore, #tpu.memory_space<semaphore_mem>> -> memref<1x!tpu.dma_semaphore, #tpu.memory_space<semaphore_mem>>
    %225 = tpu.memref_squeeze %224 : memref<1x!tpu.dma_semaphore, #tpu.memory_space<semaphore_mem>> -> memref<!tpu.dma_semaphore, #tpu.memory_space<semaphore_mem>>
    tpu.wait_dma2 semaphore(%225 : memref<!tpu.dma_semaphore, #tpu.memory_space<semaphore_mem>>) src(%arg7 : memref<256x512xbf16, #tpu.memory_space<any>>) dst(%arg16 : memref<256x512xbf16, #tpu.memory_space<vmem>>)
    %c0_98 = arith.constant 0 : index
    %c0_99 = arith.constant 0 : index
    %226 = vector.load %arg16[%c0_98, %c0_99] : memref<256x512xbf16, #tpu.memory_space<vmem>>, vector<256x512xbf16>
    %cst_100 = arith.constant dense<0.000000e+00> : vector<64x512xf32>
    %227 = tpu.matmul %223, %226, %cst_100 {dimension_numbers = #tpu.dot_dimension_numbers<[1], [0], [0], [1], [0, 0, 1, 1], [], []>} : vector<64x256xbf16>, vector<256x512xbf16>, vector<64x512xf32> -> vector<64x512xf32>
    %228 = vector.extract_strided_slice %227 {offsets = [32, 384], sizes = [32, 128], strides = [1, 1]} : vector<64x512xf32> to vector<32x128xf32>
    %229 = vector.shape_cast %228 : vector<32x128xf32> to vector<2x16x128xf32>
    %cst_101 = arith.constant 0.000000e+00 : f32
    %230 = vector.broadcast %cst_101 : f32 to vector<2x1x128xf32>
    %231 = vector.extract_strided_slice %229 {offsets = [0, 0, 0], sizes = [2, 15, 128], strides = [1, 1, 1]} : vector<2x16x128xf32> to vector<2x15x128xf32>
    %232 = tpu.concatenate %230, %231 in 1 : vector<2x1x128xf32>, vector<2x15x128xf32> -> vector<2x16x128xf32>
    %233 = vector.extract_strided_slice %227 {offsets = [0, 128], sizes = [32, 128], strides = [1, 1]} : vector<64x512xf32> to vector<32x128xf32>
    %234 = vector.shape_cast %233 : vector<32x128xf32> to vector<2x16x128xf32>
    %235 = arith.addf %234, %232 : vector<2x16x128xf32>
    %236 = vector.extract_strided_slice %227 {offsets = [0, 384], sizes = [32, 128], strides = [1, 1]} : vector<64x512xf32> to vector<32x128xf32>
    %237 = vector.shape_cast %236 : vector<32x128xf32> to vector<2x16x128xf32>
    %238 = vector.extract_strided_slice %227 {offsets = [32, 128], sizes = [32, 128], strides = [1, 1]} : vector<64x512xf32> to vector<32x128xf32>
    %239 = vector.shape_cast %238 : vector<32x128xf32> to vector<2x16x128xf32>
    %240 = arith.addf %239, %237 : vector<2x16x128xf32>
    %241 = vector.extract_strided_slice %227 {offsets = [32, 0], sizes = [32, 128], strides = [1, 1]} : vector<64x512xf32> to vector<32x128xf32>
    %242 = vector.shape_cast %241 : vector<32x128xf32> to vector<2x16x128xf32>
    %243 = vector.extract_strided_slice %227 {offsets = [0, 256], sizes = [32, 128], strides = [1, 1]} : vector<64x512xf32> to vector<32x128xf32>
    %244 = vector.shape_cast %243 : vector<32x128xf32> to vector<2x16x128xf32>
    %245 = arith.addf %244, %242 : vector<2x16x128xf32>
    %246 = vector.extract_strided_slice %227 {offsets = [0, 0], sizes = [32, 128], strides = [1, 1]} : vector<64x512xf32> to vector<32x128xf32>
    %247 = vector.shape_cast %246 : vector<32x128xf32> to vector<2x16x128xf32>
    %248 = vector.extract_strided_slice %247 {offsets = [0, 1, 0], sizes = [2, 15, 128], strides = [1, 1, 1]} : vector<2x16x128xf32> to vector<2x15x128xf32>
    %cst_102 = arith.constant 0.000000e+00 : f32
    %249 = vector.broadcast %cst_102 : f32 to vector<2x1x128xf32>
    %250 = tpu.concatenate %248, %249 in 1 : vector<2x15x128xf32>, vector<2x1x128xf32> -> vector<2x16x128xf32>
    %251 = vector.extract_strided_slice %227 {offsets = [32, 256], sizes = [32, 128], strides = [1, 1]} : vector<64x512xf32> to vector<32x128xf32>
    %252 = vector.shape_cast %251 : vector<32x128xf32> to vector<2x16x128xf32>
    %253 = arith.addf %252, %250 : vector<2x16x128xf32>
    %c0_103 = arith.constant 0 : index
    %c0_104 = arith.constant 0 : index
    %254 = vector.load %arg8[%c0_103, %c0_104] : memref<1x128xf32, #tpu.memory_space<vmem>>, vector<1x128xf32>
    %c0_105 = arith.constant 0 : index
    %c0_106 = arith.constant 0 : index
    %255 = vector.load %arg9[%c0_105, %c0_106] : memref<1x128xf32, #tpu.memory_space<vmem>>, vector<1x128xf32>
    %256 = vector.shape_cast %235 : vector<2x16x128xf32> to vector<32x128xf32>
    %257 = vector.shape_cast %240 : vector<2x16x128xf32> to vector<32x128xf32>
    %258 = vector.shape_cast %245 : vector<2x16x128xf32> to vector<32x128xf32>
    %259 = vector.shape_cast %253 : vector<2x16x128xf32> to vector<32x128xf32>
    %cst_107 = arith.constant dense<0.000000e+00> : vector<128xf32>
    %260 = vector.multi_reduction <add>, %256, %cst_107 [0] : vector<32x128xf32> to vector<128xf32>
    %261 = vector.shape_cast %260 : vector<128xf32> to vector<1x128xf32>
    %cst_108 = arith.constant dense<0.000000e+00> : vector<128xf32>
    %262 = vector.multi_reduction <add>, %257, %cst_108 [0] : vector<32x128xf32> to vector<128xf32>
    %263 = vector.shape_cast %262 : vector<128xf32> to vector<1x128xf32>
    %264 = arith.addf %261, %263 : vector<1x128xf32>
    %cst_109 = arith.constant dense<0.000000e+00> : vector<128xf32>
    %265 = vector.multi_reduction <add>, %258, %cst_109 [0] : vector<32x128xf32> to vector<128xf32>
    %266 = vector.shape_cast %265 : vector<128xf32> to vector<1x128xf32>
    %267 = arith.addf %264, %266 : vector<1x128xf32>
    %cst_110 = arith.constant dense<0.000000e+00> : vector<128xf32>
    %268 = vector.multi_reduction <add>, %259, %cst_110 [0] : vector<32x128xf32> to vector<128xf32>
    %269 = vector.shape_cast %268 : vector<128xf32> to vector<1x128xf32>
    %270 = arith.addf %267, %269 : vector<1x128xf32>
    %cst_111 = arith.constant 7.812500e-03 : f32
    %271 = vector.broadcast %cst_111 : f32 to vector<1x128xf32>
    %272 = arith.mulf %270, %271 : vector<1x128xf32>
    %273 = vector.broadcast %272 : vector<1x128xf32> to vector<32x128xf32>
    %274 = arith.subf %256, %273 : vector<32x128xf32>
    %275 = arith.mulf %274, %274 : vector<32x128xf32>
    %cst_112 = arith.constant dense<0.000000e+00> : vector<128xf32>
    %276 = vector.multi_reduction <add>, %275, %cst_112 [0] : vector<32x128xf32> to vector<128xf32>
    %277 = vector.shape_cast %276 : vector<128xf32> to vector<1x128xf32>
    %278 = vector.broadcast %272 : vector<1x128xf32> to vector<32x128xf32>
    %279 = arith.subf %257, %278 : vector<32x128xf32>
    %280 = arith.mulf %279, %279 : vector<32x128xf32>
    %cst_113 = arith.constant dense<0.000000e+00> : vector<128xf32>
    %281 = vector.multi_reduction <add>, %280, %cst_113 [0] : vector<32x128xf32> to vector<128xf32>
    %282 = vector.shape_cast %281 : vector<128xf32> to vector<1x128xf32>
    %283 = arith.addf %277, %282 : vector<1x128xf32>
    %284 = vector.broadcast %272 : vector<1x128xf32> to vector<32x128xf32>
    %285 = arith.subf %258, %284 : vector<32x128xf32>
    %286 = arith.mulf %285, %285 : vector<32x128xf32>
    %cst_114 = arith.constant dense<0.000000e+00> : vector<128xf32>
    %287 = vector.multi_reduction <add>, %286, %cst_114 [0] : vector<32x128xf32> to vector<128xf32>
    %288 = vector.shape_cast %287 : vector<128xf32> to vector<1x128xf32>
    %289 = arith.addf %283, %288 : vector<1x128xf32>
    %290 = vector.broadcast %272 : vector<1x128xf32> to vector<32x128xf32>
    %291 = arith.subf %259, %290 : vector<32x128xf32>
    %292 = arith.mulf %291, %291 : vector<32x128xf32>
    %cst_115 = arith.constant dense<0.000000e+00> : vector<128xf32>
    %293 = vector.multi_reduction <add>, %292, %cst_115 [0] : vector<32x128xf32> to vector<128xf32>
    %294 = vector.shape_cast %293 : vector<128xf32> to vector<1x128xf32>
    %295 = arith.addf %289, %294 : vector<1x128xf32>
    %cst_116 = arith.constant 7.812500e-03 : f32
    %296 = vector.broadcast %cst_116 : f32 to vector<1x128xf32>
    %297 = arith.mulf %295, %296 : vector<1x128xf32>
    %cst_117 = arith.constant 9.99999974E-6 : f32
    %298 = vector.broadcast %cst_117 : f32 to vector<1x128xf32>
    %299 = arith.addf %297, %298 : vector<1x128xf32>
    %300 = math.rsqrt %299 : vector<1x128xf32>
    %301 = arith.mulf %254, %300 : vector<1x128xf32>
    %302 = arith.mulf %272, %301 : vector<1x128xf32>
    %303 = arith.subf %255, %302 : vector<1x128xf32>
    %304 = vector.broadcast %301 : vector<1x128xf32> to vector<32x128xf32>
    %305 = arith.mulf %256, %304 : vector<32x128xf32>
    %306 = vector.broadcast %303 : vector<1x128xf32> to vector<32x128xf32>
    %307 = arith.addf %305, %306 : vector<32x128xf32>
    %cst_118 = arith.constant 0.000000e+00 : f32
    %308 = vector.broadcast %cst_118 : f32 to vector<32x128xf32>
    %309 = arith.maximumf %307, %308 : vector<32x128xf32>
    %310 = arith.truncf %309 : vector<32x128xf32> to vector<32x128xbf16>
    %311 = vector.broadcast %301 : vector<1x128xf32> to vector<32x128xf32>
    %312 = arith.mulf %257, %311 : vector<32x128xf32>
    %313 = vector.broadcast %303 : vector<1x128xf32> to vector<32x128xf32>
    %314 = arith.addf %312, %313 : vector<32x128xf32>
    %cst_119 = arith.constant 0.000000e+00 : f32
    %315 = vector.broadcast %cst_119 : f32 to vector<32x128xf32>
    %316 = arith.maximumf %314, %315 : vector<32x128xf32>
    %317 = arith.truncf %316 : vector<32x128xf32> to vector<32x128xbf16>
    %318 = vector.broadcast %301 : vector<1x128xf32> to vector<32x128xf32>
    %319 = arith.mulf %258, %318 : vector<32x128xf32>
    %320 = vector.broadcast %303 : vector<1x128xf32> to vector<32x128xf32>
    %321 = arith.addf %319, %320 : vector<32x128xf32>
    %cst_120 = arith.constant 0.000000e+00 : f32
    %322 = vector.broadcast %cst_120 : f32 to vector<32x128xf32>
    %323 = arith.maximumf %321, %322 : vector<32x128xf32>
    %324 = arith.truncf %323 : vector<32x128xf32> to vector<32x128xbf16>
    %325 = vector.broadcast %301 : vector<1x128xf32> to vector<32x128xf32>
    %326 = arith.mulf %259, %325 : vector<32x128xf32>
    %327 = vector.broadcast %303 : vector<1x128xf32> to vector<32x128xf32>
    %328 = arith.addf %326, %327 : vector<32x128xf32>
    %cst_121 = arith.constant 0.000000e+00 : f32
    %329 = vector.broadcast %cst_121 : f32 to vector<32x128xf32>
    %330 = arith.maximumf %328, %329 : vector<32x128xf32>
    %331 = arith.truncf %330 : vector<32x128xf32> to vector<32x128xbf16>
    %332 = tpu.concatenate %310, %317, %324, %331 in 0 : vector<32x128xbf16>, vector<32x128xbf16>, vector<32x128xbf16>, vector<32x128xbf16> -> vector<128x128xbf16>
    %c2_i32_122 = arith.constant 2 : i32
    %333 = tpu.memref_slice %arg19[%c2_i32_122] : memref<4x!tpu.dma_semaphore, #tpu.memory_space<semaphore_mem>> -> memref<1x!tpu.dma_semaphore, #tpu.memory_space<semaphore_mem>>
    %334 = tpu.memref_squeeze %333 : memref<1x!tpu.dma_semaphore, #tpu.memory_space<semaphore_mem>> -> memref<!tpu.dma_semaphore, #tpu.memory_space<semaphore_mem>>
    tpu.wait_dma2 semaphore(%334 : memref<!tpu.dma_semaphore, #tpu.memory_space<semaphore_mem>>) src(%arg10 : memref<128x256xbf16, #tpu.memory_space<any>>) dst(%arg17 : memref<128x256xbf16, #tpu.memory_space<vmem>>)
    %c0_123 = arith.constant 0 : index
    %c0_124 = arith.constant 0 : index
    %335 = vector.load %arg17[%c0_123, %c0_124] : memref<128x256xbf16, #tpu.memory_space<vmem>>, vector<128x256xbf16>
    %cst_125 = arith.constant dense<0.000000e+00> : vector<128x256xf32>
    %336 = tpu.matmul %332, %335, %cst_125 {dimension_numbers = #tpu.dot_dimension_numbers<[1], [0], [0], [1], [0, 0, 1, 1], [], []>} : vector<128x128xbf16>, vector<128x256xbf16>, vector<128x256xf32> -> vector<128x256xf32>
    %337 = vector.extract_strided_slice %336 {offsets = [96, 192], sizes = [32, 64], strides = [1, 1]} : vector<128x256xf32> to vector<32x64xf32>
    %338 = vector.shape_cast %337 : vector<32x64xf32> to vector<2x16x64xf32>
    %cst_126 = arith.constant 0.000000e+00 : f32
    %339 = vector.broadcast %cst_126 : f32 to vector<2x1x64xf32>
    %340 = vector.extract_strided_slice %338 {offsets = [0, 0, 0], sizes = [2, 15, 64], strides = [1, 1, 1]} : vector<2x16x64xf32> to vector<2x15x64xf32>
    %341 = tpu.concatenate %339, %340 in 1 : vector<2x1x64xf32>, vector<2x15x64xf32> -> vector<2x16x64xf32>
    %342 = vector.extract_strided_slice %336 {offsets = [0, 64], sizes = [32, 64], strides = [1, 1]} : vector<128x256xf32> to vector<32x64xf32>
    %343 = vector.shape_cast %342 : vector<32x64xf32> to vector<2x16x64xf32>
    %344 = arith.addf %343, %341 : vector<2x16x64xf32>
    %345 = vector.extract_strided_slice %336 {offsets = [64, 192], sizes = [32, 64], strides = [1, 1]} : vector<128x256xf32> to vector<32x64xf32>
    %346 = vector.shape_cast %345 : vector<32x64xf32> to vector<2x16x64xf32>
    %347 = vector.extract_strided_slice %336 {offsets = [32, 64], sizes = [32, 64], strides = [1, 1]} : vector<128x256xf32> to vector<32x64xf32>
    %348 = vector.shape_cast %347 : vector<32x64xf32> to vector<2x16x64xf32>
    %349 = arith.addf %348, %346 : vector<2x16x64xf32>
    %350 = vector.extract_strided_slice %336 {offsets = [0, 192], sizes = [32, 64], strides = [1, 1]} : vector<128x256xf32> to vector<32x64xf32>
    %351 = vector.shape_cast %350 : vector<32x64xf32> to vector<2x16x64xf32>
    %352 = vector.extract_strided_slice %336 {offsets = [64, 64], sizes = [32, 64], strides = [1, 1]} : vector<128x256xf32> to vector<32x64xf32>
    %353 = vector.shape_cast %352 : vector<32x64xf32> to vector<2x16x64xf32>
    %354 = arith.addf %353, %351 : vector<2x16x64xf32>
    %355 = vector.extract_strided_slice %336 {offsets = [32, 192], sizes = [32, 64], strides = [1, 1]} : vector<128x256xf32> to vector<32x64xf32>
    %356 = vector.shape_cast %355 : vector<32x64xf32> to vector<2x16x64xf32>
    %357 = vector.extract_strided_slice %336 {offsets = [96, 64], sizes = [32, 64], strides = [1, 1]} : vector<128x256xf32> to vector<32x64xf32>
    %358 = vector.shape_cast %357 : vector<32x64xf32> to vector<2x16x64xf32>
    %359 = arith.addf %358, %356 : vector<2x16x64xf32>
    %360 = vector.extract_strided_slice %336 {offsets = [64, 0], sizes = [32, 64], strides = [1, 1]} : vector<128x256xf32> to vector<32x64xf32>
    %361 = vector.shape_cast %360 : vector<32x64xf32> to vector<2x16x64xf32>
    %362 = vector.extract_strided_slice %336 {offsets = [0, 128], sizes = [32, 64], strides = [1, 1]} : vector<128x256xf32> to vector<32x64xf32>
    %363 = vector.shape_cast %362 : vector<32x64xf32> to vector<2x16x64xf32>
    %364 = arith.addf %363, %361 : vector<2x16x64xf32>
    %365 = vector.extract_strided_slice %336 {offsets = [96, 0], sizes = [32, 64], strides = [1, 1]} : vector<128x256xf32> to vector<32x64xf32>
    %366 = vector.shape_cast %365 : vector<32x64xf32> to vector<2x16x64xf32>
    %367 = vector.extract_strided_slice %336 {offsets = [32, 128], sizes = [32, 64], strides = [1, 1]} : vector<128x256xf32> to vector<32x64xf32>
    %368 = vector.shape_cast %367 : vector<32x64xf32> to vector<2x16x64xf32>
    %369 = arith.addf %368, %366 : vector<2x16x64xf32>
    %370 = vector.extract_strided_slice %336 {offsets = [32, 0], sizes = [32, 64], strides = [1, 1]} : vector<128x256xf32> to vector<32x64xf32>
    %371 = vector.shape_cast %370 : vector<32x64xf32> to vector<2x16x64xf32>
    %372 = vector.extract_strided_slice %336 {offsets = [64, 128], sizes = [32, 64], strides = [1, 1]} : vector<128x256xf32> to vector<32x64xf32>
    %373 = vector.shape_cast %372 : vector<32x64xf32> to vector<2x16x64xf32>
    %374 = arith.addf %373, %371 : vector<2x16x64xf32>
    %375 = vector.extract_strided_slice %336 {offsets = [0, 0], sizes = [32, 64], strides = [1, 1]} : vector<128x256xf32> to vector<32x64xf32>
    %376 = vector.shape_cast %375 : vector<32x64xf32> to vector<2x16x64xf32>
    %377 = vector.extract_strided_slice %376 {offsets = [0, 1, 0], sizes = [2, 15, 64], strides = [1, 1, 1]} : vector<2x16x64xf32> to vector<2x15x64xf32>
    %cst_127 = arith.constant 0.000000e+00 : f32
    %378 = vector.broadcast %cst_127 : f32 to vector<2x1x64xf32>
    %379 = tpu.concatenate %377, %378 in 1 : vector<2x15x64xf32>, vector<2x1x64xf32> -> vector<2x16x64xf32>
    %380 = vector.extract_strided_slice %336 {offsets = [96, 128], sizes = [32, 64], strides = [1, 1]} : vector<128x256xf32> to vector<32x64xf32>
    %381 = vector.shape_cast %380 : vector<32x64xf32> to vector<2x16x64xf32>
    %382 = arith.addf %381, %379 : vector<2x16x64xf32>
    %c0_128 = arith.constant 0 : index
    %c0_129 = arith.constant 0 : index
    %383 = vector.load %arg11[%c0_128, %c0_129] : memref<1x64xf32, #tpu.memory_space<vmem>>, vector<1x64xf32>
    %c0_130 = arith.constant 0 : index
    %c0_131 = arith.constant 0 : index
    %384 = vector.load %arg12[%c0_130, %c0_131] : memref<1x64xf32, #tpu.memory_space<vmem>>, vector<1x64xf32>
    %385 = vector.shape_cast %344 : vector<2x16x64xf32> to vector<32x64xf32>
    %386 = vector.shape_cast %349 : vector<2x16x64xf32> to vector<32x64xf32>
    %387 = vector.shape_cast %354 : vector<2x16x64xf32> to vector<32x64xf32>
    %388 = vector.shape_cast %359 : vector<2x16x64xf32> to vector<32x64xf32>
    %389 = vector.shape_cast %364 : vector<2x16x64xf32> to vector<32x64xf32>
    %390 = vector.shape_cast %369 : vector<2x16x64xf32> to vector<32x64xf32>
    %391 = vector.shape_cast %374 : vector<2x16x64xf32> to vector<32x64xf32>
    %392 = vector.shape_cast %382 : vector<2x16x64xf32> to vector<32x64xf32>
    %cst_132 = arith.constant dense<0.000000e+00> : vector<64xf32>
    %393 = vector.multi_reduction <add>, %385, %cst_132 [0] : vector<32x64xf32> to vector<64xf32>
    %394 = vector.shape_cast %393 : vector<64xf32> to vector<1x64xf32>
    %cst_133 = arith.constant dense<0.000000e+00> : vector<64xf32>
    %395 = vector.multi_reduction <add>, %386, %cst_133 [0] : vector<32x64xf32> to vector<64xf32>
    %396 = vector.shape_cast %395 : vector<64xf32> to vector<1x64xf32>
    %397 = arith.addf %394, %396 : vector<1x64xf32>
    %cst_134 = arith.constant dense<0.000000e+00> : vector<64xf32>
    %398 = vector.multi_reduction <add>, %387, %cst_134 [0] : vector<32x64xf32> to vector<64xf32>
    %399 = vector.shape_cast %398 : vector<64xf32> to vector<1x64xf32>
    %400 = arith.addf %397, %399 : vector<1x64xf32>
    %cst_135 = arith.constant dense<0.000000e+00> : vector<64xf32>
    %401 = vector.multi_reduction <add>, %388, %cst_135 [0] : vector<32x64xf32> to vector<64xf32>
    %402 = vector.shape_cast %401 : vector<64xf32> to vector<1x64xf32>
    %403 = arith.addf %400, %402 : vector<1x64xf32>
    %cst_136 = arith.constant dense<0.000000e+00> : vector<64xf32>
    %404 = vector.multi_reduction <add>, %389, %cst_136 [0] : vector<32x64xf32> to vector<64xf32>
    %405 = vector.shape_cast %404 : vector<64xf32> to vector<1x64xf32>
    %406 = arith.addf %403, %405 : vector<1x64xf32>
    %cst_137 = arith.constant dense<0.000000e+00> : vector<64xf32>
    %407 = vector.multi_reduction <add>, %390, %cst_137 [0] : vector<32x64xf32> to vector<64xf32>
    %408 = vector.shape_cast %407 : vector<64xf32> to vector<1x64xf32>
    %409 = arith.addf %406, %408 : vector<1x64xf32>
    %cst_138 = arith.constant dense<0.000000e+00> : vector<64xf32>
    %410 = vector.multi_reduction <add>, %391, %cst_138 [0] : vector<32x64xf32> to vector<64xf32>
    %411 = vector.shape_cast %410 : vector<64xf32> to vector<1x64xf32>
    %412 = arith.addf %409, %411 : vector<1x64xf32>
    %cst_139 = arith.constant dense<0.000000e+00> : vector<64xf32>
    %413 = vector.multi_reduction <add>, %392, %cst_139 [0] : vector<32x64xf32> to vector<64xf32>
    %414 = vector.shape_cast %413 : vector<64xf32> to vector<1x64xf32>
    %415 = arith.addf %412, %414 : vector<1x64xf32>
    %cst_140 = arith.constant 3.906250e-03 : f32
    %416 = vector.broadcast %cst_140 : f32 to vector<1x64xf32>
    %417 = arith.mulf %415, %416 : vector<1x64xf32>
    %418 = vector.broadcast %417 : vector<1x64xf32> to vector<32x64xf32>
    %419 = arith.subf %385, %418 : vector<32x64xf32>
    %420 = arith.mulf %419, %419 : vector<32x64xf32>
    %cst_141 = arith.constant dense<0.000000e+00> : vector<64xf32>
    %421 = vector.multi_reduction <add>, %420, %cst_141 [0] : vector<32x64xf32> to vector<64xf32>
    %422 = vector.shape_cast %421 : vector<64xf32> to vector<1x64xf32>
    %423 = vector.broadcast %417 : vector<1x64xf32> to vector<32x64xf32>
    %424 = arith.subf %386, %423 : vector<32x64xf32>
    %425 = arith.mulf %424, %424 : vector<32x64xf32>
    %cst_142 = arith.constant dense<0.000000e+00> : vector<64xf32>
    %426 = vector.multi_reduction <add>, %425, %cst_142 [0] : vector<32x64xf32> to vector<64xf32>
    %427 = vector.shape_cast %426 : vector<64xf32> to vector<1x64xf32>
    %428 = arith.addf %422, %427 : vector<1x64xf32>
    %429 = vector.broadcast %417 : vector<1x64xf32> to vector<32x64xf32>
    %430 = arith.subf %387, %429 : vector<32x64xf32>
    %431 = arith.mulf %430, %430 : vector<32x64xf32>
    %cst_143 = arith.constant dense<0.000000e+00> : vector<64xf32>
    %432 = vector.multi_reduction <add>, %431, %cst_143 [0] : vector<32x64xf32> to vector<64xf32>
    %433 = vector.shape_cast %432 : vector<64xf32> to vector<1x64xf32>
    %434 = arith.addf %428, %433 : vector<1x64xf32>
    %435 = vector.broadcast %417 : vector<1x64xf32> to vector<32x64xf32>
    %436 = arith.subf %388, %435 : vector<32x64xf32>
    %437 = arith.mulf %436, %436 : vector<32x64xf32>
    %cst_144 = arith.constant dense<0.000000e+00> : vector<64xf32>
    %438 = vector.multi_reduction <add>, %437, %cst_144 [0] : vector<32x64xf32> to vector<64xf32>
    %439 = vector.shape_cast %438 : vector<64xf32> to vector<1x64xf32>
    %440 = arith.addf %434, %439 : vector<1x64xf32>
    %441 = vector.broadcast %417 : vector<1x64xf32> to vector<32x64xf32>
    %442 = arith.subf %389, %441 : vector<32x64xf32>
    %443 = arith.mulf %442, %442 : vector<32x64xf32>
    %cst_145 = arith.constant dense<0.000000e+00> : vector<64xf32>
    %444 = vector.multi_reduction <add>, %443, %cst_145 [0] : vector<32x64xf32> to vector<64xf32>
    %445 = vector.shape_cast %444 : vector<64xf32> to vector<1x64xf32>
    %446 = arith.addf %440, %445 : vector<1x64xf32>
    %447 = vector.broadcast %417 : vector<1x64xf32> to vector<32x64xf32>
    %448 = arith.subf %390, %447 : vector<32x64xf32>
    %449 = arith.mulf %448, %448 : vector<32x64xf32>
    %cst_146 = arith.constant dense<0.000000e+00> : vector<64xf32>
    %450 = vector.multi_reduction <add>, %449, %cst_146 [0] : vector<32x64xf32> to vector<64xf32>
    %451 = vector.shape_cast %450 : vector<64xf32> to vector<1x64xf32>
    %452 = arith.addf %446, %451 : vector<1x64xf32>
    %453 = vector.broadcast %417 : vector<1x64xf32> to vector<32x64xf32>
    %454 = arith.subf %391, %453 : vector<32x64xf32>
    %455 = arith.mulf %454, %454 : vector<32x64xf32>
    %cst_147 = arith.constant dense<0.000000e+00> : vector<64xf32>
    %456 = vector.multi_reduction <add>, %455, %cst_147 [0] : vector<32x64xf32> to vector<64xf32>
    %457 = vector.shape_cast %456 : vector<64xf32> to vector<1x64xf32>
    %458 = arith.addf %452, %457 : vector<1x64xf32>
    %459 = vector.broadcast %417 : vector<1x64xf32> to vector<32x64xf32>
    %460 = arith.subf %392, %459 : vector<32x64xf32>
    %461 = arith.mulf %460, %460 : vector<32x64xf32>
    %cst_148 = arith.constant dense<0.000000e+00> : vector<64xf32>
    %462 = vector.multi_reduction <add>, %461, %cst_148 [0] : vector<32x64xf32> to vector<64xf32>
    %463 = vector.shape_cast %462 : vector<64xf32> to vector<1x64xf32>
    %464 = arith.addf %458, %463 : vector<1x64xf32>
    %cst_149 = arith.constant 3.906250e-03 : f32
    %465 = vector.broadcast %cst_149 : f32 to vector<1x64xf32>
    %466 = arith.mulf %464, %465 : vector<1x64xf32>
    %cst_150 = arith.constant 9.99999974E-6 : f32
    %467 = vector.broadcast %cst_150 : f32 to vector<1x64xf32>
    %468 = arith.addf %466, %467 : vector<1x64xf32>
    %469 = math.rsqrt %468 : vector<1x64xf32>
    %470 = arith.mulf %383, %469 : vector<1x64xf32>
    %471 = arith.mulf %417, %470 : vector<1x64xf32>
    %472 = arith.subf %384, %471 : vector<1x64xf32>
    %473 = vector.broadcast %470 : vector<1x64xf32> to vector<32x64xf32>
    %474 = arith.mulf %385, %473 : vector<32x64xf32>
    %475 = vector.broadcast %472 : vector<1x64xf32> to vector<32x64xf32>
    %476 = arith.addf %474, %475 : vector<32x64xf32>
    %cst_151 = arith.constant 0.000000e+00 : f32
    %477 = vector.broadcast %cst_151 : f32 to vector<32x64xf32>
    %478 = arith.maximumf %476, %477 : vector<32x64xf32>
    %479 = arith.truncf %478 : vector<32x64xf32> to vector<32x64xbf16>
    %480 = vector.broadcast %470 : vector<1x64xf32> to vector<32x64xf32>
    %481 = arith.mulf %386, %480 : vector<32x64xf32>
    %482 = vector.broadcast %472 : vector<1x64xf32> to vector<32x64xf32>
    %483 = arith.addf %481, %482 : vector<32x64xf32>
    %cst_152 = arith.constant 0.000000e+00 : f32
    %484 = vector.broadcast %cst_152 : f32 to vector<32x64xf32>
    %485 = arith.maximumf %483, %484 : vector<32x64xf32>
    %486 = arith.truncf %485 : vector<32x64xf32> to vector<32x64xbf16>
    %487 = vector.broadcast %470 : vector<1x64xf32> to vector<32x64xf32>
    %488 = arith.mulf %387, %487 : vector<32x64xf32>
    %489 = vector.broadcast %472 : vector<1x64xf32> to vector<32x64xf32>
    %490 = arith.addf %488, %489 : vector<32x64xf32>
    %cst_153 = arith.constant 0.000000e+00 : f32
    %491 = vector.broadcast %cst_153 : f32 to vector<32x64xf32>
    %492 = arith.maximumf %490, %491 : vector<32x64xf32>
    %493 = arith.truncf %492 : vector<32x64xf32> to vector<32x64xbf16>
    %494 = vector.broadcast %470 : vector<1x64xf32> to vector<32x64xf32>
    %495 = arith.mulf %388, %494 : vector<32x64xf32>
    %496 = vector.broadcast %472 : vector<1x64xf32> to vector<32x64xf32>
    %497 = arith.addf %495, %496 : vector<32x64xf32>
    %cst_154 = arith.constant 0.000000e+00 : f32
    %498 = vector.broadcast %cst_154 : f32 to vector<32x64xf32>
    %499 = arith.maximumf %497, %498 : vector<32x64xf32>
    %500 = arith.truncf %499 : vector<32x64xf32> to vector<32x64xbf16>
    %501 = vector.broadcast %470 : vector<1x64xf32> to vector<32x64xf32>
    %502 = arith.mulf %389, %501 : vector<32x64xf32>
    %503 = vector.broadcast %472 : vector<1x64xf32> to vector<32x64xf32>
    %504 = arith.addf %502, %503 : vector<32x64xf32>
    %cst_155 = arith.constant 0.000000e+00 : f32
    %505 = vector.broadcast %cst_155 : f32 to vector<32x64xf32>
    %506 = arith.maximumf %504, %505 : vector<32x64xf32>
    %507 = arith.truncf %506 : vector<32x64xf32> to vector<32x64xbf16>
    %508 = vector.broadcast %470 : vector<1x64xf32> to vector<32x64xf32>
    %509 = arith.mulf %390, %508 : vector<32x64xf32>
    %510 = vector.broadcast %472 : vector<1x64xf32> to vector<32x64xf32>
    %511 = arith.addf %509, %510 : vector<32x64xf32>
    %cst_156 = arith.constant 0.000000e+00 : f32
    %512 = vector.broadcast %cst_156 : f32 to vector<32x64xf32>
    %513 = arith.maximumf %511, %512 : vector<32x64xf32>
    %514 = arith.truncf %513 : vector<32x64xf32> to vector<32x64xbf16>
    %515 = vector.broadcast %470 : vector<1x64xf32> to vector<32x64xf32>
    %516 = arith.mulf %391, %515 : vector<32x64xf32>
    %517 = vector.broadcast %472 : vector<1x64xf32> to vector<32x64xf32>
    %518 = arith.addf %516, %517 : vector<32x64xf32>
    %cst_157 = arith.constant 0.000000e+00 : f32
    %519 = vector.broadcast %cst_157 : f32 to vector<32x64xf32>
    %520 = arith.maximumf %518, %519 : vector<32x64xf32>
    %521 = arith.truncf %520 : vector<32x64xf32> to vector<32x64xbf16>
    %522 = vector.broadcast %470 : vector<1x64xf32> to vector<32x64xf32>
    %523 = arith.mulf %392, %522 : vector<32x64xf32>
    %524 = vector.broadcast %472 : vector<1x64xf32> to vector<32x64xf32>
    %525 = arith.addf %523, %524 : vector<32x64xf32>
    %cst_158 = arith.constant 0.000000e+00 : f32
    %526 = vector.broadcast %cst_158 : f32 to vector<32x64xf32>
    %527 = arith.maximumf %525, %526 : vector<32x64xf32>
    %528 = arith.truncf %527 : vector<32x64xf32> to vector<32x64xbf16>
    %529 = tpu.concatenate %479, %486, %493, %500, %507, %514, %521, %528 in 0 : vector<32x64xbf16>, vector<32x64xbf16>, vector<32x64xbf16>, vector<32x64xbf16>, vector<32x64xbf16>, vector<32x64xbf16>, vector<32x64xbf16>, vector<32x64xbf16> -> vector<256x64xbf16>
    %c3_i32_159 = arith.constant 3 : i32
    %530 = tpu.memref_slice %arg19[%c3_i32_159] : memref<4x!tpu.dma_semaphore, #tpu.memory_space<semaphore_mem>> -> memref<1x!tpu.dma_semaphore, #tpu.memory_space<semaphore_mem>>
    %531 = tpu.memref_squeeze %530 : memref<1x!tpu.dma_semaphore, #tpu.memory_space<semaphore_mem>> -> memref<!tpu.dma_semaphore, #tpu.memory_space<semaphore_mem>>
    tpu.wait_dma2 semaphore(%531 : memref<!tpu.dma_semaphore, #tpu.memory_space<semaphore_mem>>) src(%arg13 : memref<64x512xbf16, #tpu.memory_space<any>>) dst(%arg18 : memref<64x512xbf16, #tpu.memory_space<vmem>>)
    %c0_160 = arith.constant 0 : index
    %c0_161 = arith.constant 0 : index
    %532 = vector.load %arg18[%c0_160, %c0_161] : memref<64x512xbf16, #tpu.memory_space<vmem>>, vector<64x512xbf16>
    %cst_162 = arith.constant dense<0.000000e+00> : vector<256x512xf32>
    %533 = tpu.matmul %529, %532, %cst_162 {dimension_numbers = #tpu.dot_dimension_numbers<[1], [0], [0], [1], [0, 0, 1, 1], [], []>} : vector<256x64xbf16>, vector<64x512xbf16>, vector<256x512xf32> -> vector<256x512xf32>
    %534 = vector.extract_strided_slice %533 {offsets = [224, 384], sizes = [32, 128], strides = [1, 1]} : vector<256x512xf32> to vector<32x128xf32>
    %535 = vector.shape_cast %534 : vector<32x128xf32> to vector<2x16x128xf32>
    %cst_163 = arith.constant 0.000000e+00 : f32
    %536 = vector.broadcast %cst_163 : f32 to vector<2x1x128xf32>
    %537 = vector.extract_strided_slice %535 {offsets = [0, 0, 0], sizes = [2, 15, 128], strides = [1, 1, 1]} : vector<2x16x128xf32> to vector<2x15x128xf32>
    %538 = tpu.concatenate %536, %537 in 1 : vector<2x1x128xf32>, vector<2x15x128xf32> -> vector<2x16x128xf32>
    %539 = vector.extract_strided_slice %533 {offsets = [0, 128], sizes = [32, 128], strides = [1, 1]} : vector<256x512xf32> to vector<32x128xf32>
    %540 = vector.shape_cast %539 : vector<32x128xf32> to vector<2x16x128xf32>
    %541 = arith.addf %540, %538 : vector<2x16x128xf32>
    %542 = vector.extract_strided_slice %533 {offsets = [192, 384], sizes = [32, 128], strides = [1, 1]} : vector<256x512xf32> to vector<32x128xf32>
    %543 = vector.shape_cast %542 : vector<32x128xf32> to vector<2x16x128xf32>
    %544 = vector.extract_strided_slice %533 {offsets = [32, 128], sizes = [32, 128], strides = [1, 1]} : vector<256x512xf32> to vector<32x128xf32>
    %545 = vector.shape_cast %544 : vector<32x128xf32> to vector<2x16x128xf32>
    %546 = arith.addf %545, %543 : vector<2x16x128xf32>
    %547 = vector.extract_strided_slice %533 {offsets = [128, 384], sizes = [32, 128], strides = [1, 1]} : vector<256x512xf32> to vector<32x128xf32>
    %548 = vector.shape_cast %547 : vector<32x128xf32> to vector<2x16x128xf32>
    %549 = vector.extract_strided_slice %533 {offsets = [64, 128], sizes = [32, 128], strides = [1, 1]} : vector<256x512xf32> to vector<32x128xf32>
    %550 = vector.shape_cast %549 : vector<32x128xf32> to vector<2x16x128xf32>
    %551 = arith.addf %550, %548 : vector<2x16x128xf32>
    %552 = vector.extract_strided_slice %533 {offsets = [160, 384], sizes = [32, 128], strides = [1, 1]} : vector<256x512xf32> to vector<32x128xf32>
    %553 = vector.shape_cast %552 : vector<32x128xf32> to vector<2x16x128xf32>
    %554 = vector.extract_strided_slice %533 {offsets = [96, 128], sizes = [32, 128], strides = [1, 1]} : vector<256x512xf32> to vector<32x128xf32>
    %555 = vector.shape_cast %554 : vector<32x128xf32> to vector<2x16x128xf32>
    %556 = arith.addf %555, %553 : vector<2x16x128xf32>
    %557 = vector.extract_strided_slice %533 {offsets = [0, 384], sizes = [32, 128], strides = [1, 1]} : vector<256x512xf32> to vector<32x128xf32>
    %558 = vector.shape_cast %557 : vector<32x128xf32> to vector<2x16x128xf32>
    %559 = vector.extract_strided_slice %533 {offsets = [128, 128], sizes = [32, 128], strides = [1, 1]} : vector<256x512xf32> to vector<32x128xf32>
    %560 = vector.shape_cast %559 : vector<32x128xf32> to vector<2x16x128xf32>
    %561 = arith.addf %560, %558 : vector<2x16x128xf32>
    %562 = vector.extract_strided_slice %533 {offsets = [32, 384], sizes = [32, 128], strides = [1, 1]} : vector<256x512xf32> to vector<32x128xf32>
    %563 = vector.shape_cast %562 : vector<32x128xf32> to vector<2x16x128xf32>
    %564 = vector.extract_strided_slice %533 {offsets = [160, 128], sizes = [32, 128], strides = [1, 1]} : vector<256x512xf32> to vector<32x128xf32>
    %565 = vector.shape_cast %564 : vector<32x128xf32> to vector<2x16x128xf32>
    %566 = arith.addf %565, %563 : vector<2x16x128xf32>
    %567 = vector.extract_strided_slice %533 {offsets = [64, 384], sizes = [32, 128], strides = [1, 1]} : vector<256x512xf32> to vector<32x128xf32>
    %568 = vector.shape_cast %567 : vector<32x128xf32> to vector<2x16x128xf32>
    %569 = vector.extract_strided_slice %533 {offsets = [192, 128], sizes = [32, 128], strides = [1, 1]} : vector<256x512xf32> to vector<32x128xf32>
    %570 = vector.shape_cast %569 : vector<32x128xf32> to vector<2x16x128xf32>
    %571 = arith.addf %570, %568 : vector<2x16x128xf32>
    %572 = vector.extract_strided_slice %533 {offsets = [96, 384], sizes = [32, 128], strides = [1, 1]} : vector<256x512xf32> to vector<32x128xf32>
    %573 = vector.shape_cast %572 : vector<32x128xf32> to vector<2x16x128xf32>
    %574 = vector.extract_strided_slice %533 {offsets = [224, 128], sizes = [32, 128], strides = [1, 1]} : vector<256x512xf32> to vector<32x128xf32>
    %575 = vector.shape_cast %574 : vector<32x128xf32> to vector<2x16x128xf32>
    %576 = arith.addf %575, %573 : vector<2x16x128xf32>
    %577 = vector.extract_strided_slice %533 {offsets = [128, 0], sizes = [32, 128], strides = [1, 1]} : vector<256x512xf32> to vector<32x128xf32>
    %578 = vector.shape_cast %577 : vector<32x128xf32> to vector<2x16x128xf32>
    %579 = vector.extract_strided_slice %533 {offsets = [0, 256], sizes = [32, 128], strides = [1, 1]} : vector<256x512xf32> to vector<32x128xf32>
    %580 = vector.shape_cast %579 : vector<32x128xf32> to vector<2x16x128xf32>
    %581 = arith.addf %580, %578 : vector<2x16x128xf32>
    %582 = vector.extract_strided_slice %533 {offsets = [160, 0], sizes = [32, 128], strides = [1, 1]} : vector<256x512xf32> to vector<32x128xf32>
    %583 = vector.shape_cast %582 : vector<32x128xf32> to vector<2x16x128xf32>
    %584 = vector.extract_strided_slice %533 {offsets = [32, 256], sizes = [32, 128], strides = [1, 1]} : vector<256x512xf32> to vector<32x128xf32>
    %585 = vector.shape_cast %584 : vector<32x128xf32> to vector<2x16x128xf32>
    %586 = arith.addf %585, %583 : vector<2x16x128xf32>
    %587 = vector.extract_strided_slice %533 {offsets = [192, 0], sizes = [32, 128], strides = [1, 1]} : vector<256x512xf32> to vector<32x128xf32>
    %588 = vector.shape_cast %587 : vector<32x128xf32> to vector<2x16x128xf32>
    %589 = vector.extract_strided_slice %533 {offsets = [64, 256], sizes = [32, 128], strides = [1, 1]} : vector<256x512xf32> to vector<32x128xf32>
    %590 = vector.shape_cast %589 : vector<32x128xf32> to vector<2x16x128xf32>
    %591 = arith.addf %590, %588 : vector<2x16x128xf32>
    %592 = vector.extract_strided_slice %533 {offsets = [224, 0], sizes = [32, 128], strides = [1, 1]} : vector<256x512xf32> to vector<32x128xf32>
    %593 = vector.shape_cast %592 : vector<32x128xf32> to vector<2x16x128xf32>
    %594 = vector.extract_strided_slice %533 {offsets = [96, 256], sizes = [32, 128], strides = [1, 1]} : vector<256x512xf32> to vector<32x128xf32>
    %595 = vector.shape_cast %594 : vector<32x128xf32> to vector<2x16x128xf32>
    %596 = arith.addf %595, %593 : vector<2x16x128xf32>
    %597 = vector.extract_strided_slice %533 {offsets = [64, 0], sizes = [32, 128], strides = [1, 1]} : vector<256x512xf32> to vector<32x128xf32>
    %598 = vector.shape_cast %597 : vector<32x128xf32> to vector<2x16x128xf32>
    %599 = vector.extract_strided_slice %533 {offsets = [128, 256], sizes = [32, 128], strides = [1, 1]} : vector<256x512xf32> to vector<32x128xf32>
    %600 = vector.shape_cast %599 : vector<32x128xf32> to vector<2x16x128xf32>
    %601 = arith.addf %600, %598 : vector<2x16x128xf32>
    %602 = vector.extract_strided_slice %533 {offsets = [96, 0], sizes = [32, 128], strides = [1, 1]} : vector<256x512xf32> to vector<32x128xf32>
    %603 = vector.shape_cast %602 : vector<32x128xf32> to vector<2x16x128xf32>
    %604 = vector.extract_strided_slice %533 {offsets = [160, 256], sizes = [32, 128], strides = [1, 1]} : vector<256x512xf32> to vector<32x128xf32>
    %605 = vector.shape_cast %604 : vector<32x128xf32> to vector<2x16x128xf32>
    %606 = arith.addf %605, %603 : vector<2x16x128xf32>
    %607 = vector.extract_strided_slice %533 {offsets = [32, 0], sizes = [32, 128], strides = [1, 1]} : vector<256x512xf32> to vector<32x128xf32>
    %608 = vector.shape_cast %607 : vector<32x128xf32> to vector<2x16x128xf32>
    %609 = vector.extract_strided_slice %533 {offsets = [192, 256], sizes = [32, 128], strides = [1, 1]} : vector<256x512xf32> to vector<32x128xf32>
    %610 = vector.shape_cast %609 : vector<32x128xf32> to vector<2x16x128xf32>
    %611 = arith.addf %610, %608 : vector<2x16x128xf32>
    %612 = vector.extract_strided_slice %533 {offsets = [0, 0], sizes = [32, 128], strides = [1, 1]} : vector<256x512xf32> to vector<32x128xf32>
    %613 = vector.shape_cast %612 : vector<32x128xf32> to vector<2x16x128xf32>
    %614 = vector.extract_strided_slice %613 {offsets = [0, 1, 0], sizes = [2, 15, 128], strides = [1, 1, 1]} : vector<2x16x128xf32> to vector<2x15x128xf32>
    %cst_164 = arith.constant 0.000000e+00 : f32
    %615 = vector.broadcast %cst_164 : f32 to vector<2x1x128xf32>
    %616 = tpu.concatenate %614, %615 in 1 : vector<2x15x128xf32>, vector<2x1x128xf32> -> vector<2x16x128xf32>
    %617 = vector.extract_strided_slice %533 {offsets = [224, 256], sizes = [32, 128], strides = [1, 1]} : vector<256x512xf32> to vector<32x128xf32>
    %618 = vector.shape_cast %617 : vector<32x128xf32> to vector<2x16x128xf32>
    %619 = arith.addf %618, %616 : vector<2x16x128xf32>
    %620 = math.tanh %541 : vector<2x16x128xf32>
    %c0_165 = arith.constant 0 : index
    %c0_166 = arith.constant 0 : index
    %c0_167 = arith.constant 0 : index
    %c0_168 = arith.constant 0 : index
    %621 = vector.load %arg14[%c0_165, %c0_166, %c0_167, %c0_168] : memref<16x2x16x128xf32, #tpu.memory_space<vmem>>, vector<1x2x16x128xf32>
    %622 = vector.shape_cast %621 : vector<1x2x16x128xf32> to vector<2x16x128xf32>
    %623 = vector.shape_cast %620 : vector<2x16x128xf32> to vector<1x2x16x128xf32>
    tpu.vector_store %arg14[%c0_165, %c0_166, %c0_167, %c0_168], %623 {strides = array<i32>} : memref<16x2x16x128xf32, #tpu.memory_space<vmem>>, vector<1x2x16x128xf32>,
    %624 = math.tanh %546 : vector<2x16x128xf32>
    %c8_169 = arith.constant 8 : index
    %c0_170 = arith.constant 0 : index
    %c0_171 = arith.constant 0 : index
    %c0_172 = arith.constant 0 : index
    %625 = vector.load %arg14[%c8_169, %c0_170, %c0_171, %c0_172] : memref<16x2x16x128xf32, #tpu.memory_space<vmem>>, vector<1x2x16x128xf32>
    %626 = vector.shape_cast %625 : vector<1x2x16x128xf32> to vector<2x16x128xf32>
    %627 = vector.shape_cast %624 : vector<2x16x128xf32> to vector<1x2x16x128xf32>
    tpu.vector_store %arg14[%c8_169, %c0_170, %c0_171, %c0_172], %627 {strides = array<i32>} : memref<16x2x16x128xf32, #tpu.memory_space<vmem>>, vector<1x2x16x128xf32>,
    %628 = math.tanh %551 : vector<2x16x128xf32>
    %c4_173 = arith.constant 4 : index
    %c0_174 = arith.constant 0 : index
    %c0_175 = arith.constant 0 : index
    %c0_176 = arith.constant 0 : index
    %629 = vector.load %arg14[%c4_173, %c0_174, %c0_175, %c0_176] : memref<16x2x16x128xf32, #tpu.memory_space<vmem>>, vector<1x2x16x128xf32>
    %630 = vector.shape_cast %629 : vector<1x2x16x128xf32> to vector<2x16x128xf32>
    %631 = vector.shape_cast %628 : vector<2x16x128xf32> to vector<1x2x16x128xf32>
    tpu.vector_store %arg14[%c4_173, %c0_174, %c0_175, %c0_176], %631 {strides = array<i32>} : memref<16x2x16x128xf32, #tpu.memory_space<vmem>>, vector<1x2x16x128xf32>,
    %632 = math.tanh %556 : vector<2x16x128xf32>
    %c12 = arith.constant 12 : index
    %c0_177 = arith.constant 0 : index
    %c0_178 = arith.constant 0 : index
    %c0_179 = arith.constant 0 : index
    %633 = vector.load %arg14[%c12, %c0_177, %c0_178, %c0_179] : memref<16x2x16x128xf32, #tpu.memory_space<vmem>>, vector<1x2x16x128xf32>
    %634 = vector.shape_cast %633 : vector<1x2x16x128xf32> to vector<2x16x128xf32>
    %635 = vector.shape_cast %632 : vector<2x16x128xf32> to vector<1x2x16x128xf32>
    tpu.vector_store %arg14[%c12, %c0_177, %c0_178, %c0_179], %635 {strides = array<i32>} : memref<16x2x16x128xf32, #tpu.memory_space<vmem>>, vector<1x2x16x128xf32>,
    %636 = math.tanh %561 : vector<2x16x128xf32>
    %c2_180 = arith.constant 2 : index
    %c0_181 = arith.constant 0 : index
    %c0_182 = arith.constant 0 : index
    %c0_183 = arith.constant 0 : index
    %637 = vector.load %arg14[%c2_180, %c0_181, %c0_182, %c0_183] : memref<16x2x16x128xf32, #tpu.memory_space<vmem>>, vector<1x2x16x128xf32>
    %638 = vector.shape_cast %637 : vector<1x2x16x128xf32> to vector<2x16x128xf32>
    %639 = vector.shape_cast %636 : vector<2x16x128xf32> to vector<1x2x16x128xf32>
    tpu.vector_store %arg14[%c2_180, %c0_181, %c0_182, %c0_183], %639 {strides = array<i32>} : memref<16x2x16x128xf32, #tpu.memory_space<vmem>>, vector<1x2x16x128xf32>,
    %640 = math.tanh %566 : vector<2x16x128xf32>
    %c10_184 = arith.constant 10 : index
    %c0_185 = arith.constant 0 : index
    %c0_186 = arith.constant 0 : index
    %c0_187 = arith.constant 0 : index
    %641 = vector.load %arg14[%c10_184, %c0_185, %c0_186, %c0_187] : memref<16x2x16x128xf32, #tpu.memory_space<vmem>>, vector<1x2x16x128xf32>
    %642 = vector.shape_cast %641 : vector<1x2x16x128xf32> to vector<2x16x128xf32>
    %643 = vector.shape_cast %640 : vector<2x16x128xf32> to vector<1x2x16x128xf32>
    tpu.vector_store %arg14[%c10_184, %c0_185, %c0_186, %c0_187], %643 {strides = array<i32>} : memref<16x2x16x128xf32, #tpu.memory_space<vmem>>, vector<1x2x16x128xf32>,
    %644 = math.tanh %571 : vector<2x16x128xf32>
    %c6_188 = arith.constant 6 : index
    %c0_189 = arith.constant 0 : index
    %c0_190 = arith.constant 0 : index
    %c0_191 = arith.constant 0 : index
    %645 = vector.load %arg14[%c6_188, %c0_189, %c0_190, %c0_191] : memref<16x2x16x128xf32, #tpu.memory_space<vmem>>, vector<1x2x16x128xf32>
    %646 = vector.shape_cast %645 : vector<1x2x16x128xf32> to vector<2x16x128xf32>
    %647 = vector.shape_cast %644 : vector<2x16x128xf32> to vector<1x2x16x128xf32>
    tpu.vector_store %arg14[%c6_188, %c0_189, %c0_190, %c0_191], %647 {strides = array<i32>} : memref<16x2x16x128xf32, #tpu.memory_space<vmem>>, vector<1x2x16x128xf32>,
    %648 = math.tanh %576 : vector<2x16x128xf32>
    %c14 = arith.constant 14 : index
    %c0_192 = arith.constant 0 : index
    %c0_193 = arith.constant 0 : index
    %c0_194 = arith.constant 0 : index
    %649 = vector.load %arg14[%c14, %c0_192, %c0_193, %c0_194] : memref<16x2x16x128xf32, #tpu.memory_space<vmem>>, vector<1x2x16x128xf32>
    %650 = vector.shape_cast %649 : vector<1x2x16x128xf32> to vector<2x16x128xf32>
    %651 = vector.shape_cast %648 : vector<2x16x128xf32> to vector<1x2x16x128xf32>
    tpu.vector_store %arg14[%c14, %c0_192, %c0_193, %c0_194], %651 {strides = array<i32>} : memref<16x2x16x128xf32, #tpu.memory_space<vmem>>, vector<1x2x16x128xf32>,
    %652 = math.tanh %581 : vector<2x16x128xf32>
    %c1_195 = arith.constant 1 : index
    %c0_196 = arith.constant 0 : index
    %c0_197 = arith.constant 0 : index
    %c0_198 = arith.constant 0 : index
    %653 = vector.load %arg14[%c1_195, %c0_196, %c0_197, %c0_198] : memref<16x2x16x128xf32, #tpu.memory_space<vmem>>, vector<1x2x16x128xf32>
    %654 = vector.shape_cast %653 : vector<1x2x16x128xf32> to vector<2x16x128xf32>
    %655 = vector.shape_cast %652 : vector<2x16x128xf32> to vector<1x2x16x128xf32>
    tpu.vector_store %arg14[%c1_195, %c0_196, %c0_197, %c0_198], %655 {strides = array<i32>} : memref<16x2x16x128xf32, #tpu.memory_space<vmem>>, vector<1x2x16x128xf32>,
    %656 = math.tanh %586 : vector<2x16x128xf32>
    %c9_199 = arith.constant 9 : index
    %c0_200 = arith.constant 0 : index
    %c0_201 = arith.constant 0 : index
    %c0_202 = arith.constant 0 : index
    %657 = vector.load %arg14[%c9_199, %c0_200, %c0_201, %c0_202] : memref<16x2x16x128xf32, #tpu.memory_space<vmem>>, vector<1x2x16x128xf32>
    %658 = vector.shape_cast %657 : vector<1x2x16x128xf32> to vector<2x16x128xf32>
    %659 = vector.shape_cast %656 : vector<2x16x128xf32> to vector<1x2x16x128xf32>
    tpu.vector_store %arg14[%c9_199, %c0_200, %c0_201, %c0_202], %659 {strides = array<i32>} : memref<16x2x16x128xf32, #tpu.memory_space<vmem>>, vector<1x2x16x128xf32>,
    %660 = math.tanh %591 : vector<2x16x128xf32>
    %c5_203 = arith.constant 5 : index
    %c0_204 = arith.constant 0 : index
    %c0_205 = arith.constant 0 : index
    %c0_206 = arith.constant 0 : index
    %661 = vector.load %arg14[%c5_203, %c0_204, %c0_205, %c0_206] : memref<16x2x16x128xf32, #tpu.memory_space<vmem>>, vector<1x2x16x128xf32>
    %662 = vector.shape_cast %661 : vector<1x2x16x128xf32> to vector<2x16x128xf32>
    %663 = vector.shape_cast %660 : vector<2x16x128xf32> to vector<1x2x16x128xf32>
    tpu.vector_store %arg14[%c5_203, %c0_204, %c0_205, %c0_206], %663 {strides = array<i32>} : memref<16x2x16x128xf32, #tpu.memory_space<vmem>>, vector<1x2x16x128xf32>,
    %664 = math.tanh %596 : vector<2x16x128xf32>
    %c13 = arith.constant 13 : index
    %c0_207 = arith.constant 0 : index
    %c0_208 = arith.constant 0 : index
    %c0_209 = arith.constant 0 : index
    %665 = vector.load %arg14[%c13, %c0_207, %c0_208, %c0_209] : memref<16x2x16x128xf32, #tpu.memory_space<vmem>>, vector<1x2x16x128xf32>
    %666 = vector.shape_cast %665 : vector<1x2x16x128xf32> to vector<2x16x128xf32>
    %667 = vector.shape_cast %664 : vector<2x16x128xf32> to vector<1x2x16x128xf32>
    tpu.vector_store %arg14[%c13, %c0_207, %c0_208, %c0_209], %667 {strides = array<i32>} : memref<16x2x16x128xf32, #tpu.memory_space<vmem>>, vector<1x2x16x128xf32>,
    %668 = math.tanh %601 : vector<2x16x128xf32>
    %c3_210 = arith.constant 3 : index
    %c0_211 = arith.constant 0 : index
    %c0_212 = arith.constant 0 : index
    %c0_213 = arith.constant 0 : index
    %669 = vector.load %arg14[%c3_210, %c0_211, %c0_212, %c0_213] : memref<16x2x16x128xf32, #tpu.memory_space<vmem>>, vector<1x2x16x128xf32>
    %670 = vector.shape_cast %669 : vector<1x2x16x128xf32> to vector<2x16x128xf32>
    %671 = vector.shape_cast %668 : vector<2x16x128xf32> to vector<1x2x16x128xf32>
    tpu.vector_store %arg14[%c3_210, %c0_211, %c0_212, %c0_213], %671 {strides = array<i32>} : memref<16x2x16x128xf32, #tpu.memory_space<vmem>>, vector<1x2x16x128xf32>,
    %672 = math.tanh %606 : vector<2x16x128xf32>
    %c11 = arith.constant 11 : index
    %c0_214 = arith.constant 0 : index
    %c0_215 = arith.constant 0 : index
    %c0_216 = arith.constant 0 : index
    %673 = vector.load %arg14[%c11, %c0_214, %c0_215, %c0_216] : memref<16x2x16x128xf32, #tpu.memory_space<vmem>>, vector<1x2x16x128xf32>
    %674 = vector.shape_cast %673 : vector<1x2x16x128xf32> to vector<2x16x128xf32>
    %675 = vector.shape_cast %672 : vector<2x16x128xf32> to vector<1x2x16x128xf32>
    tpu.vector_store %arg14[%c11, %c0_214, %c0_215, %c0_216], %675 {strides = array<i32>} : memref<16x2x16x128xf32, #tpu.memory_space<vmem>>, vector<1x2x16x128xf32>,
    %676 = math.tanh %611 : vector<2x16x128xf32>
    %c7_217 = arith.constant 7 : index
    %c0_218 = arith.constant 0 : index
    %c0_219 = arith.constant 0 : index
    %c0_220 = arith.constant 0 : index
    %677 = vector.load %arg14[%c7_217, %c0_218, %c0_219, %c0_220] : memref<16x2x16x128xf32, #tpu.memory_space<vmem>>, vector<1x2x16x128xf32>
    %678 = vector.shape_cast %677 : vector<1x2x16x128xf32> to vector<2x16x128xf32>
    %679 = vector.shape_cast %676 : vector<2x16x128xf32> to vector<1x2x16x128xf32>
    tpu.vector_store %arg14[%c7_217, %c0_218, %c0_219, %c0_220], %679 {strides = array<i32>} : memref<16x2x16x128xf32, #tpu.memory_space<vmem>>, vector<1x2x16x128xf32>,
    %680 = math.tanh %619 : vector<2x16x128xf32>
    %c15 = arith.constant 15 : index
    %c0_221 = arith.constant 0 : index
    %c0_222 = arith.constant 0 : index
    %c0_223 = arith.constant 0 : index
    %681 = vector.load %arg14[%c15, %c0_221, %c0_222, %c0_223] : memref<16x2x16x128xf32, #tpu.memory_space<vmem>>, vector<1x2x16x128xf32>
    %682 = vector.shape_cast %681 : vector<1x2x16x128xf32> to vector<2x16x128xf32>
    %683 = vector.shape_cast %680 : vector<2x16x128xf32> to vector<1x2x16x128xf32>
    tpu.vector_store %arg14[%c15, %c0_221, %c0_222, %c0_223], %683 {strides = array<i32>} : memref<16x2x16x128xf32, #tpu.memory_space<vmem>>, vector<1x2x16x128xf32>,
    return
  }
}

</mosaic_0001>

<llo_original>
// kernel: generator_forward.1
$region0: #{generator_forward.1}
  #allocation0 [shape = 'u32[]', space=smem, size = 0x4, offset = 0x4, fixed_abs, tag = 'smem constant byte address 0x4 - core index']
  #allocation1 [shape = 'u32[72,128]{1,0:T(1,128)}', space=vmem, size = 0x9000, scoped, tag = 'internal scratch']
  #allocation2 [shape = 'bf16[512,1024]{1,0:T(8,128)(2,1)}', space=vmem, size = 0x100000, scoped, tag = 'scratch operand']
  #allocation3 [shape = 'bf16[256,512]{1,0:T(8,128)(2,1)}', space=vmem, size = 0x40000, scoped, tag = 'scratch operand']
  #allocation4 [shape = 'bf16[128,256]{1,0:T(8,128)(2,1)}', space=vmem, size = 0x10000, scoped, tag = 'scratch operand']
  #allocation5 [shape = 'bf16[64,512]{1,0:T(8,128)(2,1)}', space=vmem, size = 0x10000, scoped, tag = 'scratch operand']
  #allocation6 [shape = 's32[4]{0}', space=sflag, size = 0x10, scoped, tag = 'scratch operand']
  #allocation17 [shape = 's32[]', space=sflag, size = 0x4, offset = 0, fixed_abs, tag = 'sflag constant byte address 0x0 - dummy sync flag']
  #allocation18 [shape = 's32[]', space=sflag, size = 0x4, offset = 0, fixed_abs, tag = 'sflag constant byte address 0x0 - dummy sync flag']
  #allocation19 [shape = 'u32[]', space=smem, size = 0x4, offset = 0x44, fixed_abs, tag = 'smem constant byte address 0x44 - assertion arg 0']
  #allocation20 [shape = 'u32[]', space=smem, size = 0x4, offset = 0x48, fixed_abs, tag = 'smem constant byte address 0x48 - assertion arg 1']
  #allocation21 [shape = 's32[]', space=sflag, size = 0x4, offset = 0, fixed_abs, tag = 'sflag constant byte address 0x0 - dummy sync flag']
  #allocation22 [shape = 's32[]', space=sflag, size = 0x4, offset = 0, fixed_abs, tag = 'sflag constant byte address 0x0 - dummy sync flag']
  #allocation23 [shape = 's32[]', space=sflag, size = 0x4, offset = 0, fixed_abs, tag = 'sflag constant byte address 0x0 - dummy sync flag']
  #allocation24 [shape = 's32[]', space=sflag, size = 0x4, offset = 0, fixed_abs, tag = 'sflag constant byte address 0x0 - dummy sync flag']
  #allocation25 [shape = 's32[]', space=sflag, size = 0x4, offset = 0, fixed_abs, tag = 'sflag constant byte address 0x0 - dummy sync flag']
  #allocation26 [shape = 's32[]', space=sflag, size = 0x4, offset = 0, fixed_abs, tag = 'sflag constant byte address 0x0 - dummy sync flag']
  %s0 = inlined_call_operand.vmem [shape: f32[2,11], index: 0, kind: input, shape index: {}]
  %s1 = inlined_call_operand.hbm [shape: f32[11,16,512], index: 1, kind: input, shape index: {}]
  %s2 = inlined_call_operand.vmem [shape: f32[1,512], index: 2, kind: input, shape index: {}]
  %s3 = inlined_call_operand.hbm [shape: f32[1,512], index: 3, kind: input, shape index: {}]
  %s4 = inlined_call_operand.hbm [shape: bf16[512,1024], index: 4, kind: input, shape index: {}]
  %s5 = inlined_call_operand.vmem [shape: f32[1,256], index: 5, kind: input, shape index: {}]
  %s6 = inlined_call_operand.hbm [shape: f32[1,256], index: 6, kind: input, shape index: {}]
  %s7 = inlined_call_operand.hbm [shape: bf16[256,512], index: 7, kind: input, shape index: {}]
  %s8 = inlined_call_operand.vmem [shape: f32[1,128], index: 8, kind: input, shape index: {}]
  %s9 = inlined_call_operand.hbm [shape: f32[1,128], index: 9, kind: input, shape index: {}]
  %s10 = inlined_call_operand.hbm [shape: bf16[128,256], index: 10, kind: input, shape index: {}]
  %s11 = inlined_call_operand.vmem [shape: f32[1,64], index: 11, kind: input, shape index: {}]
  %s12 = inlined_call_operand.hbm [shape: f32[1,64], index: 12, kind: input, shape index: {}]
  %s13 = inlined_call_operand.hbm [shape: bf16[64,512], index: 13, kind: input, shape index: {}]
  %s14 = inlined_call_operand.vmem [shape: f32[16,2,16,128], index: 14, kind: output, shape index: {}]
  %s15 = sld [smem:[#allocation0]]
  $region90: #{generator_forward.1} parent=0
    _
  %s17 = ssub.s32 1, %s15
  %s18 = scalar_select 0, %s17, %s15
  $region1: #{generator_forward.1} parent=0
    #allocation7 [shape = 'u8[1024]{0}', space=smem, size = 0x400, scoped, tag = 'input window, operand 0, single buffered']
    #allocation8 [shape = 's32[1]{0}', space=sflag, size = 0x4, scoped, tag = 'scoped memory for generator_forward.1']
    #allocation9 [shape = 's32[1]{0}', space=sflag, size = 0x4, scoped, tag = 'scoped memory for generator_forward.1']
    #allocation10 [shape = 'u8[360448]{0}', space=vmem, size = 0x58000, scoped, tag = 'input window, operand 1, single buffered']
    #allocation11 [shape = 'u8[2048]{0}', space=vmem, size = 0x800, scoped, tag = 'input window, operand 3, single buffered']
    #allocation12 [shape = 's32[1]{0}', space=sflag, size = 0x4, scoped, tag = 'scoped memory for generator_forward.1']
    #allocation13 [shape = 'u8[1024]{0}', space=vmem, size = 0x400, scoped, tag = 'input window, operand 6, single buffered']
    #allocation14 [shape = 'u8[512]{0}', space=vmem, size = 0x400, scoped, tag = 'input window, operand 9, single buffered']
    #allocation15 [shape = 's32[1]{0}', space=sflag, size = 0x4, scoped, tag = 'scoped memory for generator_forward.1']
    #allocation16 [shape = 'u8[512]{0}', space=vmem, size = 0x400, scoped, tag = 'input window, operand 12, single buffered']
    %19 = vsyncpa [#allocation9], 0
    %20 = vsyncpa [#allocation8], 0
    %21 = vsyncpa [#allocation12], 0
    %22 = vsyncpa [#allocation15], 0
    // Predicated region
    $region2: #{generator_forward.1} parent=1 // pred_check
      _
    $region3: #{generator_forward.1} parent=1 // pred_check_branch
      %24 = sbr.rel (0) target = $region5
    $region4: #{generator_forward.1} parent=1 // pred_region
      %26 = vsyncadd [#allocation9], 0
      %s28 = sshll.u32 %s0, 4
      %s29 = int_to_ptr.vmem [resolvable:$true] %s28
      %31 = dma.vmem_to_smem %s29, 32, [#allocation7], [#allocation9]
    $region5: #{generator_forward.1} parent=1 // pred_fallthru
      _
    // Predicated region
    $region6: #{generator_forward.1} parent=1 // pred_check
      _
    $region7: #{generator_forward.1} parent=1 // pred_check_branch
      %33 = sbr.rel (0) target = $region9
    $region8: #{generator_forward.1} parent=1 // pred_region
      %35 = vsyncadd [#allocation8], 0
      %s36 = sshll.u32 %s1, 4
      %s37 = int_to_ptr.hbm [resolvable:$true] %s36
      %s38 = sshll.u32 [#allocation10], 4
      %s39 = int_to_ptr.vmem [resolvable:$true] %s38
      %44 = dma.hbm_to_vmem [thread:$0]  %s37, 11264, %s39, [#allocation8], 512, 512, 32
    $region9: #{generator_forward.1} parent=1 // pred_fallthru
      _
    // Predicated region
    $region10: #{generator_forward.1} parent=1 // pred_check
      _
    $region11: #{generator_forward.1} parent=1 // pred_check_branch
      %46 = sbr.rel (0) target = $region13
    $region12: #{generator_forward.1} parent=1 // pred_region
      _
    $region13: #{generator_forward.1} parent=1 // pred_fallthru
      _
    // Predicated region
    $region14: #{generator_forward.1} parent=1 // pred_check
      _
    $region15: #{generator_forward.1} parent=1 // pred_check_branch
      %48 = sbr.rel (0) target = $region17
    $region16: #{generator_forward.1} parent=1 // pred_region
      %50 = vsyncadd [#allocation12], 0
      %s52 = sshll.u32 %s3, 4
      %s53 = int_to_ptr.hbm [resolvable:$true] %s52
      %s54 = sshll.u32 [#allocation11], 4
      %s55 = int_to_ptr.vmem [resolvable:$true] %s54
      %57 = dma.hbm_to_vmem [thread:$0]  %s53, 64, %s55, [#allocation12]
    $region17: #{generator_forward.1} parent=1 // pred_fallthru
      _
    // Predicated region
    $region18: #{generator_forward.1} parent=1 // pred_check
      _
    $region19: #{generator_forward.1} parent=1 // pred_check_branch
      %59 = sbr.rel (0) target = $region21
    $region20: #{generator_forward.1} parent=1 // pred_region
      _
    $region21: #{generator_forward.1} parent=1 // pred_fallthru
      _
    // Predicated region
    $region22: #{generator_forward.1} parent=1 // pred_check
      _
    $region23: #{generator_forward.1} parent=1 // pred_check_branch
      %61 = sbr.rel (0) target = $region25
    $region24: #{generator_forward.1} parent=1 // pred_region
      %63 = vsyncadd [#allocation12], 0
      %s65 = sshll.u32 %s6, 4
      %s66 = int_to_ptr.hbm [resolvable:$true] %s65
      %s67 = sshll.u32 [#allocation13], 4
      %s68 = int_to_ptr.vmem [resolvable:$true] %s67
      %70 = dma.hbm_to_vmem [thread:$0]  %s66, 32, %s68, [#allocation12]
    $region25: #{generator_forward.1} parent=1 // pred_fallthru
      _
    // Predicated region
    $region26: #{generator_forward.1} parent=1 // pred_check
      _
    $region27: #{generator_forward.1} parent=1 // pred_check_branch
      %72 = sbr.rel (0) target = $region29
    $region28: #{generator_forward.1} parent=1 // pred_region
      _
    $region29: #{generator_forward.1} parent=1 // pred_fallthru
      _
    // Predicated region
    $region30: #{generator_forward.1} parent=1 // pred_check
      _
    $region31: #{generator_forward.1} parent=1 // pred_check_branch
      %74 = sbr.rel (0) target = $region33
    $region32: #{generator_forward.1} parent=1 // pred_region
      %76 = vsyncadd [#allocation15], 0
      %s78 = sshll.u32 %s9, 4
      %s79 = int_to_ptr.hbm [resolvable:$true] %s78
      %s80 = sshll.u32 [#allocation14], 4
      %s81 = int_to_ptr.vmem [resolvable:$true] %s80
      %83 = dma.hbm_to_vmem [thread:$0]  %s79, 16, %s81, [#allocation15]
    $region33: #{generator_forward.1} parent=1 // pred_fallthru
      _
    // Predicated region
    $region34: #{generator_forward.1} parent=1 // pred_check
      _
    $region35: #{generator_forward.1} parent=1 // pred_check_branch
      %85 = sbr.rel (0) target = $region37
    $region36: #{generator_forward.1} parent=1 // pred_region
      _
    $region37: #{generator_forward.1} parent=1 // pred_fallthru
      _
    // Predicated region
    $region38: #{generator_forward.1} parent=1 // pred_check
      _
    $region39: #{generator_forward.1} parent=1 // pred_check_branch
      %87 = sbr.rel (0) target = $region41
    $region40: #{generator_forward.1} parent=1 // pred_region
      %89 = vsyncadd [#allocation15], 0
      %s91 = sshll.u32 %s12, 4
      %s92 = int_to_ptr.hbm [resolvable:$true] %s91
      %s93 = sshll.u32 [#allocation16], 4
      %s94 = int_to_ptr.vmem [resolvable:$true] %s93
      %96 = dma.hbm_to_vmem [thread:$0]  %s92, 16, %s94, [#allocation15]
    $region41: #{generator_forward.1} parent=1 // pred_fallthru
      _
    // Predicated region
    $region42: #{generator_forward.1} parent=1 // pred_check
      _
    $region43: #{generator_forward.1} parent=1 // pred_check_branch
      %98 = sbr.rel (0) target = $region45
    $region44: #{generator_forward.1} parent=1 // pred_region
      %100 = dma.done [#allocation9], 32
    $region45: #{generator_forward.1} parent=1 // pred_fallthru
      _
    // Predicated region
    $region46: #{generator_forward.1} parent=1 // pred_check
      _
    $region47: #{generator_forward.1} parent=1 // pred_check_branch
      %102 = sbr.rel (0) target = $region49
    $region48: #{generator_forward.1} parent=1 // pred_region
      %104 = dma.done [#allocation8], 11264
    $region49: #{generator_forward.1} parent=1 // pred_fallthru
      _
    // Predicated region
    $region50: #{generator_forward.1} parent=1 // pred_check
      _
    $region51: #{generator_forward.1} parent=1 // pred_check_branch
      %106 = sbr.rel (0) target = $region53
    $region52: #{generator_forward.1} parent=1 // pred_region
      %108 = dma.done [#allocation12], 64
    $region53: #{generator_forward.1} parent=1 // pred_fallthru
      _
    // Predicated region
    $region54: #{generator_forward.1} parent=1 // pred_check
      _
    $region55: #{generator_forward.1} parent=1 // pred_check_branch
      %110 = sbr.rel (0) target = $region57
    $region56: #{generator_forward.1} parent=1 // pred_region
      %112 = dma.done [#allocation12], 32
    $region57: #{generator_forward.1} parent=1 // pred_fallthru
      _
    // Predicated region
    $region58: #{generator_forward.1} parent=1 // pred_check
      _
    $region59: #{generator_forward.1} parent=1 // pred_check_branch
      %114 = sbr.rel (0) target = $region61
    $region60: #{generator_forward.1} parent=1 // pred_region
      %116 = dma.done [#allocation15], 16
    $region61: #{generator_forward.1} parent=1 // pred_fallthru
      _
    // Predicated region
    $region62: #{generator_forward.1} parent=1 // pred_check
      _
    $region63: #{generator_forward.1} parent=1 // pred_check_branch
      %118 = sbr.rel (0) target = $region65
    $region64: #{generator_forward.1} parent=1 // pred_region
      %120 = dma.done [#allocation15], 16
    $region65: #{generator_forward.1} parent=1 // pred_fallthru
      _
    %121 = sfence
    // Predicated region
    $region66: #{generator_forward.1} parent=1 // pred_check
      _
    $region67: #{generator_forward.1} parent=1 // pred_check_branch
      %124 = sbr.rel target = $region69
    $region68: #{generator_forward.1} parent=1 // pred_region
      %125 = sst [smem:[#allocation19]] [#allocation18]
      %126 = sst [smem:[#allocation20]] [#allocation17]
    $region69: #{generator_forward.1} parent=1 // pred_fallthru
      _
    %128 = shalt.err (0)
    %s130 = sshll.u32 %s4, 4
    %s131 = int_to_ptr.hbm [resolvable:$true] %s130
    %s132 = sshll.u32 [#allocation2], 4
    %s133 = int_to_ptr.vmem [resolvable:$true] %s132
    %135 = dma.hbm_to_vmem [thread:$0]  %s131, 32768, %s133, [#allocation6]
    %s136 = scalar_lea.sflag [#allocation6], 1
    // Predicated region
    $region70: #{generator_forward.1} parent=1 // pred_check
      _
    $region71: #{generator_forward.1} parent=1 // pred_check_branch
      %138 = sbr.rel target = $region73
    $region72: #{generator_forward.1} parent=1 // pred_region
      %139 = sst [smem:[#allocation19]] [#allocation22]
      %140 = sst [smem:[#allocation20]] [#allocation21]
    $region73: #{generator_forward.1} parent=1 // pred_fallthru
      _
    %142 = shalt.err (0)
    %s144 = sshll.u32 %s7, 4
    %s145 = int_to_ptr.hbm [resolvable:$true] %s144
    %s146 = sshll.u32 [#allocation3], 4
    %s147 = int_to_ptr.vmem [resolvable:$true] %s146
    %149 = dma.hbm_to_vmem [thread:$0]  %s145, 8192, %s147, %s136
    %s150 = scalar_lea.sflag [#allocation6], 2
    // Predicated region
    $region74: #{generator_forward.1} parent=1 // pred_check
      _
    $region75: #{generator_forward.1} parent=1 // pred_check_branch
      %152 = sbr.rel target = $region77
    $region76: #{generator_forward.1} parent=1 // pred_region
      %153 = sst [smem:[#allocation19]] [#allocation24]
      %154 = sst [smem:[#allocation20]] [#allocation23]
    $region77: #{generator_forward.1} parent=1 // pred_fallthru
      _
    %156 = shalt.err (0)
    %s158 = sshll.u32 %s10, 4
    %s159 = int_to_ptr.hbm [resolvable:$true] %s158
    %s160 = sshll.u32 [#allocation4], 4
    %s161 = int_to_ptr.vmem [resolvable:$true] %s160
    %163 = dma.hbm_to_vmem [thread:$0]  %s159, 2048, %s161, %s150
    %s164 = scalar_lea.sflag [#allocation6], 3
    // Predicated region
    $region78: #{generator_forward.1} parent=1 // pred_check
      _
    $region79: #{generator_forward.1} parent=1 // pred_check_branch
      %166 = sbr.rel target = $region81
    $region80: #{generator_forward.1} parent=1 // pred_region
      %167 = sst [smem:[#allocation19]] [#allocation26]
      %168 = sst [smem:[#allocation20]] [#allocation25]
    $region81: #{generator_forward.1} parent=1 // pred_fallthru
      _
    %170 = shalt.err (0)
    %s172 = sshll.u32 %s13, 4
    %s173 = int_to_ptr.hbm [resolvable:$true] %s172
    %s174 = sshll.u32 [#allocation5], 4
    %s175 = int_to_ptr.vmem [resolvable:$true] %s174
    %177 = dma.hbm_to_vmem [thread:$0]  %s173, 2048, %s175, %s164
    %v178 = vld [vmem:[#allocation10] sm:$0xff]
    %v179 = vld [vmem:[#allocation10 + $0x8] sm:$0xff]
    %v180 = vld [vmem:[#allocation10 + $0x10] sm:$0xff]
    %v181 = vld [vmem:[#allocation10 + $0x18] sm:$0xff]
    %v182 = vld [vmem:[#allocation10 + $0x20] sm:$0xff]
    %v183 = vld [vmem:[#allocation10 + $0x28] sm:$0xff]
    %v184 = vld [vmem:[#allocation10 + $0x30] sm:$0xff]
    %v185 = vld [vmem:[#allocation10 + $0x38] sm:$0xff]
    %s186 = scalar_lea.vmem [#allocation10], 64
    %v187 = vld [vmem:[%s186] sm:$0xff]
    %v188 = vld [vmem:[%s186 + $0x8] sm:$0xff]
    %v189 = vld [vmem:[%s186 + $0x10] sm:$0xff]
    %v190 = vld [vmem:[%s186 + $0x18] sm:$0xff]
    %v191 = vld [vmem:[%s186 + $0x20] sm:$0xff]
    %v192 = vld [vmem:[%s186 + $0x28] sm:$0xff]
    %v193 = vld [vmem:[%s186 + $0x30] sm:$0xff]
    %v194 = vld [vmem:[%s186 + $0x38] sm:$0xff]
    %s195 = scalar_lea.vmem [#allocation10], 128
    %v196 = vld [vmem:[%s195] sm:$0xff]
    %v197 = vld [vmem:[%s195 + $0x8] sm:$0xff]
    %v198 = vld [vmem:[%s195 + $0x10] sm:$0xff]
    %v199 = vld [vmem:[%s195 + $0x18] sm:$0xff]
    %v200 = vld [vmem:[%s195 + $0x20] sm:$0xff]
    %v201 = vld [vmem:[%s195 + $0x28] sm:$0xff]
    %v202 = vld [vmem:[%s195 + $0x30] sm:$0xff]
    %v203 = vld [vmem:[%s195 + $0x38] sm:$0xff]
    %s204 = scalar_lea.vmem [#allocation10], 192
    %v205 = vld [vmem:[%s204] sm:$0xff]
    %v206 = vld [vmem:[%s204 + $0x8] sm:$0xff]
    %v207 = vld [vmem:[%s204 + $0x10] sm:$0xff]
    %v208 = vld [vmem:[%s204 + $0x18] sm:$0xff]
    %v209 = vld [vmem:[%s204 + $0x20] sm:$0xff]
    %v210 = vld [vmem:[%s204 + $0x28] sm:$0xff]
    %v211 = vld [vmem:[%s204 + $0x30] sm:$0xff]
    %v212 = vld [vmem:[%s204 + $0x38] sm:$0xff]
    %s213 = scalar_lea.vmem [#allocation10], 256
    %v214 = vld [vmem:[%s213] sm:$0xff]
    %v215 = vld [vmem:[%s213 + $0x8] sm:$0xff]
    %v216 = vld [vmem:[%s213 + $0x10] sm:$0xff]
    %v217 = vld [vmem:[%s213 + $0x18] sm:$0xff]
    %v218 = vld [vmem:[%s213 + $0x20] sm:$0xff]
    %v219 = vld [vmem:[%s213 + $0x28] sm:$0xff]
    %v220 = vld [vmem:[%s213 + $0x30] sm:$0xff]
    %v221 = vld [vmem:[%s213 + $0x38] sm:$0xff]
    %s222 = scalar_lea.vmem [#allocation10], 320
    %v223 = vld [vmem:[%s222] sm:$0xff]
    %v224 = vld [vmem:[%s222 + $0x8] sm:$0xff]
    %v225 = vld [vmem:[%s222 + $0x10] sm:$0xff]
    %v226 = vld [vmem:[%s222 + $0x18] sm:$0xff]
    %v227 = vld [vmem:[%s222 + $0x20] sm:$0xff]
    %v228 = vld [vmem:[%s222 + $0x28] sm:$0xff]
    %v229 = vld [vmem:[%s222 + $0x30] sm:$0xff]
    %v230 = vld [vmem:[%s222 + $0x38] sm:$0xff]
    %s231 = scalar_lea.vmem [#allocation10], 384
    %v232 = vld [vmem:[%s231] sm:$0xff]
    %v233 = vld [vmem:[%s231 + $0x8] sm:$0xff]
    %v234 = vld [vmem:[%s231 + $0x10] sm:$0xff]
    %v235 = vld [vmem:[%s231 + $0x18] sm:$0xff]
    %v236 = vld [vmem:[%s231 + $0x20] sm:$0xff]
    %v237 = vld [vmem:[%s231 + $0x28] sm:$0xff]
    %v238 = vld [vmem:[%s231 + $0x30] sm:$0xff]
    %v239 = vld [vmem:[%s231 + $0x38] sm:$0xff]
    %s240 = scalar_lea.vmem [#allocation10], 448
    %v241 = vld [vmem:[%s240] sm:$0xff]
    %v242 = vld [vmem:[%s240 + $0x8] sm:$0xff]
    %v243 = vld [vmem:[%s240 + $0x10] sm:$0xff]
    %v244 = vld [vmem:[%s240 + $0x18] sm:$0xff]
    %v245 = vld [vmem:[%s240 + $0x20] sm:$0xff]
    %v246 = vld [vmem:[%s240 + $0x28] sm:$0xff]
    %v247 = vld [vmem:[%s240 + $0x30] sm:$0xff]
    %v248 = vld [vmem:[%s240 + $0x38] sm:$0xff]
    %s249 = scalar_lea.vmem [#allocation10], 512
    %v250 = vld [vmem:[%s249] sm:$0xff]
    %v251 = vld [vmem:[%s249 + $0x8] sm:$0xff]
    %v252 = vld [vmem:[%s249 + $0x10] sm:$0xff]
    %v253 = vld [vmem:[%s249 + $0x18] sm:$0xff]
    %v254 = vld [vmem:[%s249 + $0x20] sm:$0xff]
    %v255 = vld [vmem:[%s249 + $0x28] sm:$0xff]
    %v256 = vld [vmem:[%s249 + $0x30] sm:$0xff]
    %v257 = vld [vmem:[%s249 + $0x38] sm:$0xff]
    %s258 = scalar_lea.vmem [#allocation10], 576
    %v259 = vld [vmem:[%s258] sm:$0xff]
    %v260 = vld [vmem:[%s258 + $0x8] sm:$0xff]
    %v261 = vld [vmem:[%s258 + $0x10] sm:$0xff]
    %v262 = vld [vmem:[%s258 + $0x18] sm:$0xff]
    %v263 = vld [vmem:[%s258 + $0x20] sm:$0xff]
    %v264 = vld [vmem:[%s258 + $0x28] sm:$0xff]
    %v265 = vld [vmem:[%s258 + $0x30] sm:$0xff]
    %v266 = vld [vmem:[%s258 + $0x38] sm:$0xff]
    %s267 = scalar_lea.vmem [#allocation10], 640
    %v268 = vld [vmem:[%s267] sm:$0xff]
    %v269 = vld [vmem:[%s267 + $0x8] sm:$0xff]
    %v270 = vld [vmem:[%s267 + $0x10] sm:$0xff]
    %v271 = vld [vmem:[%s267 + $0x18] sm:$0xff]
    %v272 = vld [vmem:[%s267 + $0x20] sm:$0xff]
    %v273 = vld [vmem:[%s267 + $0x28] sm:$0xff]
    %v274 = vld [vmem:[%s267 + $0x30] sm:$0xff]
    %v275 = vld [vmem:[%s267 + $0x38] sm:$0xff]
    %s276 = sld [smem:[#allocation7]]
    %v277 = vstv %s276
    %v278 = vmul.f32 %v277, %v178
    %v279 = vmul.f32 %v277, %v179
    %v280 = vmul.f32 %v277, %v180
    %v281 = vmul.f32 %v277, %v181
    %v282 = vmul.f32 %v277, %v182
    %v283 = vmul.f32 %v277, %v183
    %v284 = vmul.f32 %v277, %v184
    %v285 = vmul.f32 %v277, %v185
    %s286 = sld [smem:[#allocation7 + $0x1]]
    %v287 = vstv %s286
    %v288 = vmul.f32 %v287, %v187
    %v289 = vmul.f32 %v287, %v188
    %v290 = vmul.f32 %v287, %v189
    %v291 = vmul.f32 %v287, %v190
    %v292 = vmul.f32 %v287, %v191
    %v293 = vmul.f32 %v287, %v192
    %v294 = vmul.f32 %v287, %v193
    %v295 = vmul.f32 %v287, %v194
    %v296 = vadd.f32 %v278, %v288
    %v297 = vadd.f32 %v279, %v289
    %v298 = vadd.f32 %v280, %v290
    %v299 = vadd.f32 %v281, %v291
    %v300 = vadd.f32 %v282, %v292
    %v301 = vadd.f32 %v283, %v293
    %v302 = vadd.f32 %v284, %v294
    %v303 = vadd.f32 %v285, %v295
    %s304 = sld [smem:[#allocation7 + $0x2]]
    %v305 = vstv %s304
    %v306 = vmul.f32 %v305, %v196
    %v307 = vmul.f32 %v305, %v197
    %v308 = vmul.f32 %v305, %v198
    %v309 = vmul.f32 %v305, %v199
    %v310 = vmul.f32 %v305, %v200
    %v311 = vmul.f32 %v305, %v201
    %v312 = vmul.f32 %v305, %v202
    %v313 = vmul.f32 %v305, %v203
    %v314 = vadd.f32 %v296, %v306
    %v315 = vadd.f32 %v297, %v307
    %v316 = vadd.f32 %v298, %v308
    %v317 = vadd.f32 %v299, %v309
    %v318 = vadd.f32 %v300, %v310
    %v319 = vadd.f32 %v301, %v311
    %v320 = vadd.f32 %v302, %v312
    %v321 = vadd.f32 %v303, %v313
    %s322 = sld [smem:[#allocation7 + $0x3]]
    %v323 = vstv %s322
    %v324 = vmul.f32 %v323, %v205
    %v325 = vmul.f32 %v323, %v206
    %v326 = vmul.f32 %v323, %v207
    %v327 = vmul.f32 %v323, %v208
    %v328 = vmul.f32 %v323, %v209
    %v329 = vmul.f32 %v323, %v210
    %v330 = vmul.f32 %v323, %v211
    %v331 = vmul.f32 %v323, %v212
    %v332 = vadd.f32 %v314, %v324
    %v333 = vadd.f32 %v315, %v325
    %v334 = vadd.f32 %v316, %v326
    %v335 = vadd.f32 %v317, %v327
    %v336 = vadd.f32 %v318, %v328
    %v337 = vadd.f32 %v319, %v329
    %v338 = vadd.f32 %v320, %v330
    %v339 = vadd.f32 %v321, %v331
    %s340 = sld [smem:[#allocation7 + $0x4]]
    %v341 = vstv %s340
    %v342 = vmul.f32 %v341, %v214
    %v343 = vmul.f32 %v341, %v215
    %v344 = vmul.f32 %v341, %v216
    %v345 = vmul.f32 %v341, %v217
    %v346 = vmul.f32 %v341, %v218
    %v347 = vmul.f32 %v341, %v219
    %v348 = vmul.f32 %v341, %v220
    %v349 = vmul.f32 %v341, %v221
    %v350 = vadd.f32 %v332, %v342
    %v351 = vadd.f32 %v333, %v343
    %v352 = vadd.f32 %v334, %v344
    %v353 = vadd.f32 %v335, %v345
    %v354 = vadd.f32 %v336, %v346
    %v355 = vadd.f32 %v337, %v347
    %v356 = vadd.f32 %v338, %v348
    %v357 = vadd.f32 %v339, %v349
    %s358 = sld [smem:[#allocation7 + $0x5]]
    %v359 = vstv %s358
    %v360 = vmul.f32 %v359, %v223
    %v361 = vmul.f32 %v359, %v224
    %v362 = vmul.f32 %v359, %v225
    %v363 = vmul.f32 %v359, %v226
    %v364 = vmul.f32 %v359, %v227
    %v365 = vmul.f32 %v359, %v228
    %v366 = vmul.f32 %v359, %v229
    %v367 = vmul.f32 %v359, %v230
    %v368 = vadd.f32 %v350, %v360
    %v369 = vadd.f32 %v351, %v361
    %v370 = vadd.f32 %v352, %v362
    %v371 = vadd.f32 %v353, %v363
    %v372 = vadd.f32 %v354, %v364
    %v373 = vadd.f32 %v355, %v365
    %v374 = vadd.f32 %v356, %v366
    %v375 = vadd.f32 %v357, %v367
    %s376 = sld [smem:[#allocation7 + $0x6]]
    %v377 = vstv %s376
    %v378 = vmul.f32 %v377, %v232
    %v379 = vmul.f32 %v377, %v233
    %v380 = vmul.f32 %v377, %v234
    %v381 = vmul.f32 %v377, %v235
    %v382 = vmul.f32 %v377, %v236
    %v383 = vmul.f32 %v377, %v237
    %v384 = vmul.f32 %v377, %v238
    %v385 = vmul.f32 %v377, %v239
    %v386 = vadd.f32 %v368, %v378
    %v387 = vadd.f32 %v369, %v379
    %v388 = vadd.f32 %v370, %v380
    %v389 = vadd.f32 %v371, %v381
    %v390 = vadd.f32 %v372, %v382
    %v391 = vadd.f32 %v373, %v383
    %v392 = vadd.f32 %v374, %v384
    %v393 = vadd.f32 %v375, %v385
    %s394 = sld [smem:[#allocation7 + $0x7]]
    %v395 = vstv %s394
    %v396 = vmul.f32 %v395, %v241
    %v397 = vmul.f32 %v395, %v242
    %v398 = vmul.f32 %v395, %v243
    %v399 = vmul.f32 %v395, %v244
    %v400 = vmul.f32 %v395, %v245
    %v401 = vmul.f32 %v395, %v246
    %v402 = vmul.f32 %v395, %v247
    %v403 = vmul.f32 %v395, %v248
    %v404 = vadd.f32 %v386, %v396
    %v405 = vadd.f32 %v387, %v397
    %v406 = vadd.f32 %v388, %v398
    %v407 = vadd.f32 %v389, %v399
    %v408 = vadd.f32 %v390, %v400
    %v409 = vadd.f32 %v391, %v401
    %v410 = vadd.f32 %v392, %v402
    %v411 = vadd.f32 %v393, %v403
    %s412 = sld [smem:[#allocation7 + $0x8]]
    %v413 = vstv %s412
    %v414 = vmul.f32 %v413, %v250
    %v415 = vmul.f32 %v413, %v251
    %v416 = vmul.f32 %v413, %v252
    %v417 = vmul.f32 %v413, %v253
    %v418 = vmul.f32 %v413, %v254
    %v419 = vmul.f32 %v413, %v255
    %v420 = vmul.f32 %v413, %v256
    %v421 = vmul.f32 %v413, %v257
    %v422 = vadd.f32 %v404, %v414
    %v423 = vadd.f32 %v405, %v415
    %v424 = vadd.f32 %v406, %v416
    %v425 = vadd.f32 %v407, %v417
    %v426 = vadd.f32 %v408, %v418
    %v427 = vadd.f32 %v409, %v419
    %v428 = vadd.f32 %v410, %v420
    %v429 = vadd.f32 %v411, %v421
    %s430 = sld [smem:[#allocation7 + $0x9]]
    %v431 = vstv %s430
    %v432 = vmul.f32 %v431, %v259
    %v433 = vmul.f32 %v431, %v260
    %v434 = vmul.f32 %v431, %v261
    %v435 = vmul.f32 %v431, %v262
    %v436 = vmul.f32 %v431, %v263
    %v437 = vmul.f32 %v431, %v264
    %v438 = vmul.f32 %v431, %v265
    %v439 = vmul.f32 %v431, %v266
    %v440 = vadd.f32 %v422, %v432
    %v441 = vadd.f32 %v423, %v433
    %v442 = vadd.f32 %v424, %v434
    %v443 = vadd.f32 %v425, %v435
    %v444 = vadd.f32 %v426, %v436
    %v445 = vadd.f32 %v427, %v437
    %v446 = vadd.f32 %v428, %v438
    %v447 = vadd.f32 %v429, %v439
    %s448 = sld [smem:[#allocation7 + $0xa]]
    %v449 = vstv %s448
    %v450 = vmul.f32 %v449, %v268
    %v451 = vmul.f32 %v449, %v269
    %v452 = vmul.f32 %v449, %v270
    %v453 = vmul.f32 %v449, %v271
    %v454 = vmul.f32 %v449, %v272
    %v455 = vmul.f32 %v449, %v273
    %v456 = vmul.f32 %v449, %v274
    %v457 = vmul.f32 %v449, %v275
    %v458 = vadd.f32 %v440, %v450
    %v459 = vadd.f32 %v441, %v451
    %v460 = vadd.f32 %v442, %v452
    %v461 = vadd.f32 %v443, %v453
    %v462 = vadd.f32 %v444, %v454
    %v463 = vadd.f32 %v445, %v455
    %v464 = vadd.f32 %v446, %v456
    %v465 = vadd.f32 %v447, %v457
    %s466 = sld [smem:[#allocation7 + $0x80]]
    %v467 = vstv %s466
    %v468 = vmul.f32 %v467, %v178
    %v469 = vmul.f32 %v467, %v179
    %v470 = vmul.f32 %v467, %v180
    %v471 = vmul.f32 %v467, %v181
    %v472 = vmul.f32 %v467, %v182
    %v473 = vmul.f32 %v467, %v183
    %v474 = vmul.f32 %v467, %v184
    %v475 = vmul.f32 %v467, %v185
    %s476 = sld [smem:[#allocation7 + $0x81]]
    %v477 = vstv %s476
    %v478 = vmul.f32 %v477, %v187
    %v479 = vmul.f32 %v477, %v188
    %v480 = vmul.f32 %v477, %v189
    %v481 = vmul.f32 %v477, %v190
    %v482 = vmul.f32 %v477, %v191
    %v483 = vmul.f32 %v477, %v192
    %v484 = vmul.f32 %v477, %v193
    %v485 = vmul.f32 %v477, %v194
    %v486 = vadd.f32 %v468, %v478
    %v487 = vadd.f32 %v469, %v479
    %v488 = vadd.f32 %v470, %v480
    %v489 = vadd.f32 %v471, %v481
    %v490 = vadd.f32 %v472, %v482
    %v491 = vadd.f32 %v473, %v483
    %v492 = vadd.f32 %v474, %v484
    %v493 = vadd.f32 %v475, %v485
    %s494 = sld [smem:[#allocation7 + $0x82]]
    %v495 = vstv %s494
    %v496 = vmul.f32 %v495, %v196
    %v497 = vmul.f32 %v495, %v197
    %v498 = vmul.f32 %v495, %v198
    %v499 = vmul.f32 %v495, %v199
    %v500 = vmul.f32 %v495, %v200
    %v501 = vmul.f32 %v495, %v201
    %v502 = vmul.f32 %v495, %v202
    %v503 = vmul.f32 %v495, %v203
    %v504 = vadd.f32 %v486, %v496
    %v505 = vadd.f32 %v487, %v497
    %v506 = vadd.f32 %v488, %v498
    %v507 = vadd.f32 %v489, %v499
    %v508 = vadd.f32 %v490, %v500
    %v509 = vadd.f32 %v491, %v501
    %v510 = vadd.f32 %v492, %v502
    %v511 = vadd.f32 %v493, %v503
    %s512 = sld [smem:[#allocation7 + $0x83]]
    %v513 = vstv %s512
    %v514 = vmul.f32 %v513, %v205
    %v515 = vmul.f32 %v513, %v206
    %v516 = vmul.f32 %v513, %v207
    %v517 = vmul.f32 %v513, %v208
    %v518 = vmul.f32 %v513, %v209
    %v519 = vmul.f32 %v513, %v210
    %v520 = vmul.f32 %v513, %v211
    %v521 = vmul.f32 %v513, %v212
    %v522 = vadd.f32 %v504, %v514
    %v523 = vadd.f32 %v505, %v515
    %v524 = vadd.f32 %v506, %v516
    %v525 = vadd.f32 %v507, %v517
    %v526 = vadd.f32 %v508, %v518
    %v527 = vadd.f32 %v509, %v519
    %v528 = vadd.f32 %v510, %v520
    %v529 = vadd.f32 %v511, %v521
    %s530 = sld [smem:[#allocation7 + $0x84]]
    %v531 = vstv %s530
    %v532 = vmul.f32 %v531, %v214
    %v533 = vmul.f32 %v531, %v215
    %v534 = vmul.f32 %v531, %v216
    %v535 = vmul.f32 %v531, %v217
    %v536 = vmul.f32 %v531, %v218
    %v537 = vmul.f32 %v531, %v219
    %v538 = vmul.f32 %v531, %v220
    %v539 = vmul.f32 %v531, %v221
    %v540 = vadd.f32 %v522, %v532
    %v541 = vadd.f32 %v523, %v533
    %v542 = vadd.f32 %v524, %v534
    %v543 = vadd.f32 %v525, %v535
    %v544 = vadd.f32 %v526, %v536
    %v545 = vadd.f32 %v527, %v537
    %v546 = vadd.f32 %v528, %v538
    %v547 = vadd.f32 %v529, %v539
    %s548 = sld [smem:[#allocation7 + $0x85]]
    %v549 = vstv %s548
    %v550 = vmul.f32 %v549, %v223
    %v551 = vmul.f32 %v549, %v224
    %v552 = vmul.f32 %v549, %v225
    %v553 = vmul.f32 %v549, %v226
    %v554 = vmul.f32 %v549, %v227
    %v555 = vmul.f32 %v549, %v228
    %v556 = vmul.f32 %v549, %v229
    %v557 = vmul.f32 %v549, %v230
    %v558 = vadd.f32 %v540, %v550
    %v559 = vadd.f32 %v541, %v551
    %v560 = vadd.f32 %v542, %v552
    %v561 = vadd.f32 %v543, %v553
    %v562 = vadd.f32 %v544, %v554
    %v563 = vadd.f32 %v545, %v555
    %v564 = vadd.f32 %v546, %v556
    %v565 = vadd.f32 %v547, %v557
    %s566 = sld [smem:[#allocation7 + $0x86]]
    %v567 = vstv %s566
    %v568 = vmul.f32 %v567, %v232
    %v569 = vmul.f32 %v567, %v233
    %v570 = vmul.f32 %v567, %v234
    %v571 = vmul.f32 %v567, %v235
    %v572 = vmul.f32 %v567, %v236
    %v573 = vmul.f32 %v567, %v237
    %v574 = vmul.f32 %v567, %v238
    %v575 = vmul.f32 %v567, %v239
    %v576 = vadd.f32 %v558, %v568
    %v577 = vadd.f32 %v559, %v569
    %v578 = vadd.f32 %v560, %v570
    %v579 = vadd.f32 %v561, %v571
    %v580 = vadd.f32 %v562, %v572
    %v581 = vadd.f32 %v563, %v573
    %v582 = vadd.f32 %v564, %v574
    %v583 = vadd.f32 %v565, %v575
    %s584 = sld [smem:[#allocation7 + $0x87]]
    %v585 = vstv %s584
    %v586 = vmul.f32 %v585, %v241
    %v587 = vmul.f32 %v585, %v242
    %v588 = vmul.f32 %v585, %v243
    %v589 = vmul.f32 %v585, %v244
    %v590 = vmul.f32 %v585, %v245
    %v591 = vmul.f32 %v585, %v246
    %v592 = vmul.f32 %v585, %v247
    %v593 = vmul.f32 %v585, %v248
    %v594 = vadd.f32 %v576, %v586
    %v595 = vadd.f32 %v577, %v587
    %v596 = vadd.f32 %v578, %v588
    %v597 = vadd.f32 %v579, %v589
    %v598 = vadd.f32 %v580, %v590
    %v599 = vadd.f32 %v581, %v591
    %v600 = vadd.f32 %v582, %v592
    %v601 = vadd.f32 %v583, %v593
    %s602 = sld [smem:[#allocation7 + $0x88]]
    %v603 = vstv %s602
    %v604 = vmul.f32 %v603, %v250
    %v605 = vmul.f32 %v603, %v251
    %v606 = vmul.f32 %v603, %v252
    %v607 = vmul.f32 %v603, %v253
    %v608 = vmul.f32 %v603, %v254
    %v609 = vmul.f32 %v603, %v255
    %v610 = vmul.f32 %v603, %v256
    %v611 = vmul.f32 %v603, %v257
    %v612 = vadd.f32 %v594, %v604
    %v613 = vadd.f32 %v595, %v605
    %v614 = vadd.f32 %v596, %v606
    %v615 = vadd.f32 %v597, %v607
    %v616 = vadd.f32 %v598, %v608
    %v617 = vadd.f32 %v599, %v609
    %v618 = vadd.f32 %v600, %v610
    %v619 = vadd.f32 %v601, %v611
    %s620 = sld [smem:[#allocation7 + $0x89]]
    %v621 = vstv %s620
    %v622 = vmul.f32 %v621, %v259
    %v623 = vmul.f32 %v621, %v260
    %v624 = vmul.f32 %v621, %v261
    %v625 = vmul.f32 %v621, %v262
    %v626 = vmul.f32 %v621, %v263
    %v627 = vmul.f32 %v621, %v264
    %v628 = vmul.f32 %v621, %v265
    %v629 = vmul.f32 %v621, %v266
    %v630 = vadd.f32 %v612, %v622
    %v631 = vadd.f32 %v613, %v623
    %v632 = vadd.f32 %v614, %v624
    %v633 = vadd.f32 %v615, %v625
    %v634 = vadd.f32 %v616, %v626
    %v635 = vadd.f32 %v617, %v627
    %v636 = vadd.f32 %v618, %v628
    %v637 = vadd.f32 %v619, %v629
    %s638 = sld [smem:[#allocation7 + $0x8a]]
    %v639 = vstv %s638
    %v640 = vmul.f32 %v639, %v268
    %v641 = vmul.f32 %v639, %v269
    %v642 = vmul.f32 %v639, %v270
    %v643 = vmul.f32 %v639, %v271
    %v644 = vmul.f32 %v639, %v272
    %v645 = vmul.f32 %v639, %v273
    %v646 = vmul.f32 %v639, %v274
    %v647 = vmul.f32 %v639, %v275
    %v648 = vadd.f32 %v630, %v640
    %v649 = vadd.f32 %v631, %v641
    %v650 = vadd.f32 %v632, %v642
    %v651 = vadd.f32 %v633, %v643
    %v652 = vadd.f32 %v634, %v644
    %v653 = vadd.f32 %v635, %v645
    %v654 = vadd.f32 %v636, %v646
    %v655 = vadd.f32 %v637, %v647
    %v656 = vld [vmem:[%s2] sm:$0xf]
    %v657 = vld [vmem:[#allocation11] sm:$0xf]
    %v658 = vadd.f32 %v458, %v462
    %v659 = vrot.slane %v658, 4
    %v660 = vadd.f32 %v658, %v659
    %v661 = vrot.slane %v660, 2
    %v662 = vadd.f32 %v660, %v661
    %v663 = vrot.slane %v662, 1
    %v664 = vadd.f32 %v662, %v663
    %v665 = vadd.f32 %v459, %v463
    %v666 = vrot.slane %v665, 4
    %v667 = vadd.f32 %v665, %v666
    %v668 = vrot.slane %v667, 2
    %v669 = vadd.f32 %v667, %v668
    %v670 = vrot.slane %v669, 1
    %v671 = vadd.f32 %v669, %v670
    %v672 = vadd.f32 %v460, %v464
    %v673 = vrot.slane %v672, 4
    %v674 = vadd.f32 %v672, %v673
    %v675 = vrot.slane %v674, 2
    %v676 = vadd.f32 %v674, %v675
    %v677 = vrot.slane %v676, 1
    %v678 = vadd.f32 %v676, %v677
    %v679 = vadd.f32 %v461, %v465
    %v680 = vrot.slane %v679, 4
    %v681 = vadd.f32 %v679, %v680
    %v682 = vrot.slane %v681, 2
    %v683 = vadd.f32 %v681, %v682
    %v684 = vrot.slane %v683, 1
    %v685 = vadd.f32 %v683, %v684
    %v686 = vadd.f32 %v648, %v652
    %v687 = vrot.slane %v686, 4
    %v688 = vadd.f32 %v686, %v687
    %v689 = vrot.slane %v688, 2
    %v690 = vadd.f32 %v688, %v689
    %v691 = vrot.slane %v690, 1
    %v692 = vadd.f32 %v690, %v691
    %v693 = vadd.f32 %v649, %v653
    %v694 = vrot.slane %v693, 4
    %v695 = vadd.f32 %v693, %v694
    %v696 = vrot.slane %v695, 2
    %v697 = vadd.f32 %v695, %v696
    %v698 = vrot.slane %v697, 1
    %v699 = vadd.f32 %v697, %v698
    %v700 = vadd.f32 %v650, %v654
    %v701 = vrot.slane %v700, 4
    %v702 = vadd.f32 %v700, %v701
    %v703 = vrot.slane %v702, 2
    %v704 = vadd.f32 %v702, %v703
    %v705 = vrot.slane %v704, 1
    %v706 = vadd.f32 %v704, %v705
    %v707 = vadd.f32 %v651, %v655
    %v708 = vrot.slane %v707, 4
    %v709 = vadd.f32 %v707, %v708
    %v710 = vrot.slane %v709, 2
    %v711 = vadd.f32 %v709, %v710
    %v712 = vrot.slane %v711, 1
    %v713 = vadd.f32 %v711, %v712
    %v714 = vadd.f32 %v664, %v692
    %v715 = vadd.f32 %v671, %v699
    %v716 = vadd.f32 %v678, %v706
    %v717 = vadd.f32 %v685, %v713
    %v718 = vmul.f32 %v714, 0.03125
    %v719 = vmul.f32 %v715, 0.03125
    %v720 = vmul.f32 %v716, 0.03125
    %v721 = vmul.f32 %v717, 0.03125
    %v722 = vsub.f32 %v458, %v718
    %v723 = vsub.f32 %v459, %v719
    %v724 = vsub.f32 %v460, %v720
    %v725 = vsub.f32 %v461, %v721
    %v726 = vsub.f32 %v462, %v718
    %v727 = vsub.f32 %v463, %v719
    %v728 = vsub.f32 %v464, %v720
    %v729 = vsub.f32 %v465, %v721
    %v730 = vmul.f32 %v722, %v722
    %v731 = vmul.f32 %v723, %v723
    %v732 = vmul.f32 %v724, %v724
    %v733 = vmul.f32 %v725, %v725
    %v734 = vmul.f32 %v726, %v726
    %v735 = vmul.f32 %v727, %v727
    %v736 = vmul.f32 %v728, %v728
    %v737 = vmul.f32 %v729, %v729
    %v738 = vadd.f32 %v730, %v734
    %v739 = vrot.slane %v738, 4
    %v740 = vadd.f32 %v738, %v739
    %v741 = vrot.slane %v740, 2
    %v742 = vadd.f32 %v740, %v741
    %v743 = vrot.slane %v742, 1
    %v744 = vadd.f32 %v742, %v743
    %v745 = vadd.f32 %v731, %v735
    %v746 = vrot.slane %v745, 4
    %v747 = vadd.f32 %v745, %v746
    %v748 = vrot.slane %v747, 2
    %v749 = vadd.f32 %v747, %v748
    %v750 = vrot.slane %v749, 1
    %v751 = vadd.f32 %v749, %v750
    %v752 = vadd.f32 %v732, %v736
    %v753 = vrot.slane %v752, 4
    %v754 = vadd.f32 %v752, %v753
    %v755 = vrot.slane %v754, 2
    %v756 = vadd.f32 %v754, %v755
    %v757 = vrot.slane %v756, 1
    %v758 = vadd.f32 %v756, %v757
    %v759 = vadd.f32 %v733, %v737
    %v760 = vrot.slane %v759, 4
    %v761 = vadd.f32 %v759, %v760
    %v762 = vrot.slane %v761, 2
    %v763 = vadd.f32 %v761, %v762
    %v764 = vrot.slane %v763, 1
    %v765 = vadd.f32 %v763, %v764
    %v766 = vsub.f32 %v648, %v718
    %v767 = vsub.f32 %v649, %v719
    %v768 = vsub.f32 %v650, %v720
    %v769 = vsub.f32 %v651, %v721
    %v770 = vsub.f32 %v652, %v718
    %v771 = vsub.f32 %v653, %v719
    %v772 = vsub.f32 %v654, %v720
    %v773 = vsub.f32 %v655, %v721
    %v774 = vmul.f32 %v766, %v766
    %v775 = vmul.f32 %v767, %v767
    %v776 = vmul.f32 %v768, %v768
    %v777 = vmul.f32 %v769, %v769
    %v778 = vmul.f32 %v770, %v770
    %v779 = vmul.f32 %v771, %v771
    %v780 = vmul.f32 %v772, %v772
    %v781 = vmul.f32 %v773, %v773
    %v782 = vadd.f32 %v774, %v778
    %v783 = vrot.slane %v782, 4
    %v784 = vadd.f32 %v782, %v783
    %v785 = vrot.slane %v784, 2
    %v786 = vadd.f32 %v784, %v785
    %v787 = vrot.slane %v786, 1
    %v788 = vadd.f32 %v786, %v787
    %v789 = vadd.f32 %v775, %v779
    %v790 = vrot.slane %v789, 4
    %v791 = vadd.f32 %v789, %v790
    %v792 = vrot.slane %v791, 2
    %v793 = vadd.f32 %v791, %v792
    %v794 = vrot.slane %v793, 1
    %v795 = vadd.f32 %v793, %v794
    %v796 = vadd.f32 %v776, %v780
    %v797 = vrot.slane %v796, 4
    %v798 = vadd.f32 %v796, %v797
    %v799 = vrot.slane %v798, 2
    %v800 = vadd.f32 %v798, %v799
    %v801 = vrot.slane %v800, 1
    %v802 = vadd.f32 %v800, %v801
    %v803 = vadd.f32 %v777, %v781
    %v804 = vrot.slane %v803, 4
    %v805 = vadd.f32 %v803, %v804
    %v806 = vrot.slane %v805, 2
    %v807 = vadd.f32 %v805, %v806
    %v808 = vrot.slane %v807, 1
    %v809 = vadd.f32 %v807, %v808
    %v810 = vadd.f32 %v744, %v788
    %v811 = vadd.f32 %v751, %v795
    %v812 = vadd.f32 %v758, %v802
    %v813 = vadd.f32 %v765, %v809
    %v814 = vmul.f32 %v810, 0.03125
    %v815 = vmul.f32 %v811, 0.03125
    %v816 = vmul.f32 %v812, 0.03125
    %v817 = vmul.f32 %v813, 0.03125
    %v818 = vadd.f32 %v814, 1e-05
    %v819 = vadd.f32 %v815, 1e-05
    %v820 = vadd.f32 %v816, 1e-05
    %v821 = vadd.f32 %v817, 1e-05
    %v822 = vrsqrt.pop %v818
    %v823 = vmul.f32 %v822, %v818
    %v824 = vmul.f32 %v823, %v822
    %v825 = vmul.f32 0.5, %v824
    %v826 = vsub.f32 1.5, %v825
    %v827 = vmul.f32 %v822, %v826
    %vm828 = vweird.f32 %v818
    %vm829 = vweird.f32 %v822
    %vm830 = vmor %vm828, %vm829
    %v831 = vsel %vm830, %v822, %v827
    %v832 = vrsqrt.pop %v819
    %v833 = vmul.f32 %v832, %v819
    %v834 = vmul.f32 %v833, %v832
    %v835 = vmul.f32 0.5, %v834
    %v836 = vsub.f32 1.5, %v835
    %v837 = vmul.f32 %v832, %v836
    %vm838 = vweird.f32 %v819
    %vm839 = vweird.f32 %v832
    %vm840 = vmor %vm838, %vm839
    %v841 = vsel %vm840, %v832, %v837
    %v842 = vrsqrt.pop %v820
    %v843 = vmul.f32 %v842, %v820
    %v844 = vmul.f32 %v843, %v842
    %v845 = vmul.f32 0.5, %v844
    %v846 = vsub.f32 1.5, %v845
    %v847 = vmul.f32 %v842, %v846
    %vm848 = vweird.f32 %v820
    %vm849 = vweird.f32 %v842
    %vm850 = vmor %vm848, %vm849
    %v851 = vsel %vm850, %v842, %v847
    %v852 = vrsqrt.pop %v821
    %v853 = vmul.f32 %v852, %v821
    %v854 = vmul.f32 %v853, %v852
    %v855 = vmul.f32 0.5, %v854
    %v856 = vsub.f32 1.5, %v855
    %v857 = vmul.f32 %v852, %v856
    %vm858 = vweird.f32 %v821
    %vm859 = vweird.f32 %v852
    %vm860 = vmor %vm858, %vm859
    %v861 = vsel %vm860, %v852, %v857
    %v866 = vrot.slane %v841, 7
    %v867 = vrot.slane %v851, 6
    %v868 = vrot.slane %v861, 5
    %vm869 = vcmask 1040384
    %v870 = vsel %vm869, %v831, %v866
    %vm871 = vcmask 1042434
    %v872 = vsel %vm871, %v867, %v868
    %vm873 = vcmask 1041408
    %v874 = vsel %vm873, %v870, %v872
    %v876 = vmul.f32 %v656, %v874
    %v878 = vperm.slane %v876, 0
    %v879 = vperm.slane %v876, 1
    %v880 = vperm.slane %v876, 2
    %v881 = vperm.slane %v876, 3
    %v886 = vmul.f32 %v718, %v878
    %v887 = vmul.f32 %v719, %v879
    %v888 = vmul.f32 %v720, %v880
    %v889 = vmul.f32 %v721, %v881
    %v894 = vrot.slane %v887, 7
    %v895 = vrot.slane %v888, 6
    %v896 = vrot.slane %v889, 5
    %v897 = vsel %vm869, %v886, %v894
    %v898 = vsel %vm871, %v895, %v896
    %v899 = vsel %vm873, %v897, %v898
    %v901 = vsub.f32 %v657, %v899
    %v902 = vmul.f32 %v458, %v878
    %v903 = vmul.f32 %v459, %v879
    %v904 = vmul.f32 %v460, %v880
    %v905 = vmul.f32 %v461, %v881
    %v906 = vmul.f32 %v462, %v878
    %v907 = vmul.f32 %v463, %v879
    %v908 = vmul.f32 %v464, %v880
    %v909 = vmul.f32 %v465, %v881
    %v911 = vperm.slane %v901, 0
    %v912 = vperm.slane %v901, 1
    %v913 = vperm.slane %v901, 2
    %v914 = vperm.slane %v901, 3
    %v919 = vadd.f32 %v902, %v911
    %v920 = vadd.f32 %v903, %v912
    %v921 = vadd.f32 %v904, %v913
    %v922 = vadd.f32 %v905, %v914
    %v923 = vadd.f32 %v906, %v911
    %v924 = vadd.f32 %v907, %v912
    %v925 = vadd.f32 %v908, %v913
    %v926 = vadd.f32 %v909, %v914
    %v927 = vmax.f32 %v919, 0.0
    %v928 = vmax.f32 %v920, 0.0
    %v929 = vmax.f32 %v921, 0.0
    %v930 = vmax.f32 %v922, 0.0
    %v931 = vmax.f32 %v923, 0.0
    %v932 = vmax.f32 %v924, 0.0
    %v933 = vmax.f32 %v925, 0.0
    %v934 = vmax.f32 %v926, 0.0
    %v935 = vpack.c.bf16 %v928, %v927
    %v936 = vpack.c.bf16 %v930, %v929
    %v937 = vpack.c.bf16 %v932, %v931
    %v938 = vpack.c.bf16 %v934, %v933
    %v939 = vmul.f32 %v648, %v878
    %v940 = vmul.f32 %v649, %v879
    %v941 = vmul.f32 %v650, %v880
    %v942 = vmul.f32 %v651, %v881
    %v943 = vmul.f32 %v652, %v878
    %v944 = vmul.f32 %v653, %v879
    %v945 = vmul.f32 %v654, %v880
    %v946 = vmul.f32 %v655, %v881
    %v947 = vadd.f32 %v939, %v911
    %v948 = vadd.f32 %v940, %v912
    %v949 = vadd.f32 %v941, %v913
    %v950 = vadd.f32 %v942, %v914
    %v951 = vadd.f32 %v943, %v911
    %v952 = vadd.f32 %v944, %v912
    %v953 = vadd.f32 %v945, %v913
    %v954 = vadd.f32 %v946, %v914
    %v955 = vmax.f32 %v947, 0.0
    %v956 = vmax.f32 %v948, 0.0
    %v957 = vmax.f32 %v949, 0.0
    %v958 = vmax.f32 %v950, 0.0
    %v959 = vmax.f32 %v951, 0.0
    %v960 = vmax.f32 %v952, 0.0
    %v961 = vmax.f32 %v953, 0.0
    %v962 = vmax.f32 %v954, 0.0
    %v963 = vpack.c.bf16 %v956, %v955
    %v964 = vpack.c.bf16 %v958, %v957
    %v965 = vpack.c.bf16 %v960, %v959
    %v966 = vpack.c.bf16 %v962, %v961
    %v971 = vunpack.c.l.b16 %v935
    %v972 = vunpack.c.h.b16 %v935
    %v973 = vunpack.c.l.b16 %v936
    %v974 = vunpack.c.h.b16 %v936
    %v975 = vunpack.c.l.b16 %v937
    %v976 = vunpack.c.h.b16 %v937
    %v977 = vunpack.c.l.b16 %v938
    %v978 = vunpack.c.h.b16 %v938
    %v979 = vpack.c.b16 %v975, %v971
    %v980 = vpack.c.b16 %v976, %v972
    %v981 = vpack.c.b16 %v977, %v973
    %v982 = vpack.c.b16 %v978, %v974
    %v991 = vunpack.c.l.b16 %v963
    %v992 = vunpack.c.h.b16 %v963
    %v993 = vunpack.c.l.b16 %v964
    %v994 = vunpack.c.h.b16 %v964
    %v995 = vunpack.c.l.b16 %v965
    %v996 = vunpack.c.h.b16 %v965
    %v997 = vunpack.c.l.b16 %v966
    %v998 = vunpack.c.h.b16 %v966
    %v999 = vpack.c.b16 %v995, %v991
    %v1000 = vpack.c.b16 %v996, %v992
    %v1001 = vpack.c.b16 %v997, %v993
    %v1002 = vpack.c.b16 %v998, %v994
    %s1007 = smul.u32 4, 64
    %s1008 = smul.u32 %s1007, 8
    %s1009 = sshll.u32 %s1008, 4
    %1010 = dma.done [#allocation6], %s1009
    %v1011 = vld [vmem:[#allocation2] sm:$0xff]
    %v1012 = vld [vmem:[#allocation2 + $0x8] sm:$0xff]
    %v1013 = vld [vmem:[#allocation2 + $0x10] sm:$0xff]
    %v1014 = vld [vmem:[#allocation2 + $0x18] sm:$0xff]
    %v1015 = vld [vmem:[#allocation2 + $0x20] sm:$0xff]
    %v1016 = vld [vmem:[#allocation2 + $0x28] sm:$0xff]
    %v1017 = vld [vmem:[#allocation2 + $0x30] sm:$0xff]
    %v1018 = vld [vmem:[#allocation2 + $0x38] sm:$0xff]
    %v1019 = vld [vmem:[#allocation2 + $0x40] sm:$0xff]
    %v1020 = vld [vmem:[#allocation2 + $0x48] sm:$0xff]
    %v1021 = vld [vmem:[#allocation2 + $0x50] sm:$0xff]
    %v1022 = vld [vmem:[#allocation2 + $0x58] sm:$0xff]
    %v1023 = vld [vmem:[#allocation2 + $0x60] sm:$0xff]
    %v1024 = vld [vmem:[#allocation2 + $0x68] sm:$0xff]
    %v1025 = vld [vmem:[#allocation2 + $0x70] sm:$0xff]
    %v1026 = vld [vmem:[#allocation2 + $0x78] sm:$0xff]
    %v1027 = vld [vmem:[#allocation2 + $0x80] sm:$0xff]
    %v1028 = vld [vmem:[#allocation2 + $0x88] sm:$0xff]
    %v1029 = vld [vmem:[#allocation2 + $0x90] sm:$0xff]
    %v1030 = vld [vmem:[#allocation2 + $0x98] sm:$0xff]
    %v1031 = vld [vmem:[#allocation2 + $0xa0] sm:$0xff]
    %v1032 = vld [vmem:[#allocation2 + $0xa8] sm:$0xff]
    %v1033 = vld [vmem:[#allocation2 + $0xb0] sm:$0xff]
    %v1034 = vld [vmem:[#allocation2 + $0xb8] sm:$0xff]
    %v1035 = vld [vmem:[#allocation2 + $0xc0] sm:$0xff]
    %v1036 = vld [vmem:[#allocation2 + $0xc8] sm:$0xff]
    %v1037 = vld [vmem:[#allocation2 + $0xd0] sm:$0xff]
    %v1038 = vld [vmem:[#allocation2 + $0xd8] sm:$0xff]
    %v1039 = vld [vmem:[#allocation2 + $0xe0] sm:$0xff]
    %v1040 = vld [vmem:[#allocation2 + $0xe8] sm:$0xff]
    %v1041 = vld [vmem:[#allocation2 + $0xf0] sm:$0xff]
    %v1042 = vld [vmem:[#allocation2 + $0xf8] sm:$0xff]
    %v1043 = vld [vmem:[#allocation2 + $0x100] sm:$0xff]
    %v1044 = vld [vmem:[#allocation2 + $0x108] sm:$0xff]
    %v1045 = vld [vmem:[#allocation2 + $0x110] sm:$0xff]
    %v1046 = vld [vmem:[#allocation2 + $0x118] sm:$0xff]
    %v1047 = vld [vmem:[#allocation2 + $0x120] sm:$0xff]
    %v1048 = vld [vmem:[#allocation2 + $0x128] sm:$0xff]
    %v1049 = vld [vmem:[#allocation2 + $0x130] sm:$0xff]
    %v1050 = vld [vmem:[#allocation2 + $0x138] sm:$0xff]
    %v1051 = vld [vmem:[#allocation2 + $0x140] sm:$0xff]
    %v1052 = vld [vmem:[#allocation2 + $0x148] sm:$0xff]
    %v1053 = vld [vmem:[#allocation2 + $0x150] sm:$0xff]
    %v1054 = vld [vmem:[#allocation2 + $0x158] sm:$0xff]
    %v1055 = vld [vmem:[#allocation2 + $0x160] sm:$0xff]
    %v1056 = vld [vmem:[#allocation2 + $0x168] sm:$0xff]
    %v1057 = vld [vmem:[#allocation2 + $0x170] sm:$0xff]
    %v1058 = vld [vmem:[#allocation2 + $0x178] sm:$0xff]
    %v1059 = vld [vmem:[#allocation2 + $0x180] sm:$0xff]
    %v1060 = vld [vmem:[#allocation2 + $0x188] sm:$0xff]
    %v1061 = vld [vmem:[#allocation2 + $0x190] sm:$0xff]
    %v1062 = vld [vmem:[#allocation2 + $0x198] sm:$0xff]
    %v1063 = vld [vmem:[#allocation2 + $0x1a0] sm:$0xff]
    %v1064 = vld [vmem:[#allocation2 + $0x1a8] sm:$0xff]
    %v1065 = vld [vmem:[#allocation2 + $0x1b0] sm:$0xff]
    %v1066 = vld [vmem:[#allocation2 + $0x1b8] sm:$0xff]
    %v1067 = vld [vmem:[#allocation2 + $0x1c0] sm:$0xff]
    %v1068 = vld [vmem:[#allocation2 + $0x1c8] sm:$0xff]
    %v1069 = vld [vmem:[#allocation2 + $0x1d0] sm:$0xff]
    %v1070 = vld [vmem:[#allocation2 + $0x1d8] sm:$0xff]
    %v1071 = vld [vmem:[#allocation2 + $0x1e0] sm:$0xff]
    %v1072 = vld [vmem:[#allocation2 + $0x1e8] sm:$0xff]
    %v1073 = vld [vmem:[#allocation2 + $0x1f0] sm:$0xff]
    %v1074 = vld [vmem:[#allocation2 + $0x1f8] sm:$0xff]
    %v1075 = vld [vmem:[#allocation2 + $0x200] sm:$0xff]
    %v1076 = vld [vmem:[#allocation2 + $0x208] sm:$0xff]
    %v1077 = vld [vmem:[#allocation2 + $0x210] sm:$0xff]
    %v1078 = vld [vmem:[#allocation2 + $0x218] sm:$0xff]
    %v1079 = vld [vmem:[#allocation2 + $0x220] sm:$0xff]
    %v1080 = vld [vmem:[#allocation2 + $0x228] sm:$0xff]
    %v1081 = vld [vmem:[#allocation2 + $0x230] sm:$0xff]
    %v1082 = vld [vmem:[#allocation2 + $0x238] sm:$0xff]
    %v1083 = vld [vmem:[#allocation2 + $0x240] sm:$0xff]
    %v1084 = vld [vmem:[#allocation2 + $0x248] sm:$0xff]
    %v1085 = vld [vmem:[#allocation2 + $0x250] sm:$0xff]
    %v1086 = vld [vmem:[#allocation2 + $0x258] sm:$0xff]
    %v1087 = vld [vmem:[#allocation2 + $0x260] sm:$0xff]
    %v1088 = vld [vmem:[#allocation2 + $0x268] sm:$0xff]
    %v1089 = vld [vmem:[#allocation2 + $0x270] sm:$0xff]
    %v1090 = vld [vmem:[#allocation2 + $0x278] sm:$0xff]
    %v1091 = vld [vmem:[#allocation2 + $0x280] sm:$0xff]
    %v1092 = vld [vmem:[#allocation2 + $0x288] sm:$0xff]
    %v1093 = vld [vmem:[#allocation2 + $0x290] sm:$0xff]
    %v1094 = vld [vmem:[#allocation2 + $0x298] sm:$0xff]
    %v1095 = vld [vmem:[#allocation2 + $0x2a0] sm:$0xff]
    %v1096 = vld [vmem:[#allocation2 + $0x2a8] sm:$0xff]
    %v1097 = vld [vmem:[#allocation2 + $0x2b0] sm:$0xff]
    %v1098 = vld [vmem:[#allocation2 + $0x2b8] sm:$0xff]
    %v1099 = vld [vmem:[#allocation2 + $0x2c0] sm:$0xff]
    %v1100 = vld [vmem:[#allocation2 + $0x2c8] sm:$0xff]
    %v1101 = vld [vmem:[#allocation2 + $0x2d0] sm:$0xff]
    %v1102 = vld [vmem:[#allocation2 + $0x2d8] sm:$0xff]
    %v1103 = vld [vmem:[#allocation2 + $0x2e0] sm:$0xff]
    %v1104 = vld [vmem:[#allocation2 + $0x2e8] sm:$0xff]
    %v1105 = vld [vmem:[#allocation2 + $0x2f0] sm:$0xff]
    %v1106 = vld [vmem:[#allocation2 + $0x2f8] sm:$0xff]
    %v1107 = vld [vmem:[#allocation2 + $0x300] sm:$0xff]
    %v1108 = vld [vmem:[#allocation2 + $0x308] sm:$0xff]
    %v1109 = vld [vmem:[#allocation2 + $0x310] sm:$0xff]
    %v1110 = vld [vmem:[#allocation2 + $0x318] sm:$0xff]
    %v1111 = vld [vmem:[#allocation2 + $0x320] sm:$0xff]
    %v1112 = vld [vmem:[#allocation2 + $0x328] sm:$0xff]
    %v1113 = vld [vmem:[#allocation2 + $0x330] sm:$0xff]
    %v1114 = vld [vmem:[#allocation2 + $0x338] sm:$0xff]
    %v1115 = vld [vmem:[#allocation2 + $0x340] sm:$0xff]
    %v1116 = vld [vmem:[#allocation2 + $0x348] sm:$0xff]
    %v1117 = vld [vmem:[#allocation2 + $0x350] sm:$0xff]
    %v1118 = vld [vmem:[#allocation2 + $0x358] sm:$0xff]
    %v1119 = vld [vmem:[#allocation2 + $0x360] sm:$0xff]
    %v1120 = vld [vmem:[#allocation2 + $0x368] sm:$0xff]
    %v1121 = vld [vmem:[#allocation2 + $0x370] sm:$0xff]
    %v1122 = vld [vmem:[#allocation2 + $0x378] sm:$0xff]
    %v1123 = vld [vmem:[#allocation2 + $0x380] sm:$0xff]
    %v1124 = vld [vmem:[#allocation2 + $0x388] sm:$0xff]
    %v1125 = vld [vmem:[#allocation2 + $0x390] sm:$0xff]
    %v1126 = vld [vmem:[#allocation2 + $0x398] sm:$0xff]
    %v1127 = vld [vmem:[#allocation2 + $0x3a0] sm:$0xff]
    %v1128 = vld [vmem:[#allocation2 + $0x3a8] sm:$0xff]
    %v1129 = vld [vmem:[#allocation2 + $0x3b0] sm:$0xff]
    %v1130 = vld [vmem:[#allocation2 + $0x3b8] sm:$0xff]
    %v1131 = vld [vmem:[#allocation2 + $0x3c0] sm:$0xff]
    %v1132 = vld [vmem:[#allocation2 + $0x3c8] sm:$0xff]
    %v1133 = vld [vmem:[#allocation2 + $0x3d0] sm:$0xff]
    %v1134 = vld [vmem:[#allocation2 + $0x3d8] sm:$0xff]
    %v1135 = vld [vmem:[#allocation2 + $0x3e0] sm:$0xff]
    %v1136 = vld [vmem:[#allocation2 + $0x3e8] sm:$0xff]
    %v1137 = vld [vmem:[#allocation2 + $0x3f0] sm:$0xff]
    %v1138 = vld [vmem:[#allocation2 + $0x3f8] sm:$0xff]
    %v1139 = vld [vmem:[#allocation2 + $0x400] sm:$0xff]
    %v1140 = vld [vmem:[#allocation2 + $0x408] sm:$0xff]
    %v1141 = vld [vmem:[#allocation2 + $0x410] sm:$0xff]
    %v1142 = vld [vmem:[#allocation2 + $0x418] sm:$0xff]
    %v1143 = vld [vmem:[#allocation2 + $0x420] sm:$0xff]
    %v1144 = vld [vmem:[#allocation2 + $0x428] sm:$0xff]
    %v1145 = vld [vmem:[#allocation2 + $0x430] sm:$0xff]
    %v1146 = vld [vmem:[#allocation2 + $0x438] sm:$0xff]
    %v1147 = vld [vmem:[#allocation2 + $0x440] sm:$0xff]
    %v1148 = vld [vmem:[#allocation2 + $0x448] sm:$0xff]
    %v1149 = vld [vmem:[#allocation2 + $0x450] sm:$0xff]
    %v1150 = vld [vmem:[#allocation2 + $0x458] sm:$0xff]
    %v1151 = vld [vmem:[#allocation2 + $0x460] sm:$0xff]
    %v1152 = vld [vmem:[#allocation2 + $0x468] sm:$0xff]
    %v1153 = vld [vmem:[#allocation2 + $0x470] sm:$0xff]
    %v1154 = vld [vmem:[#allocation2 + $0x478] sm:$0xff]
    %v1155 = vld [vmem:[#allocation2 + $0x480] sm:$0xff]
    %v1156 = vld [vmem:[#allocation2 + $0x488] sm:$0xff]
    %v1157 = vld [vmem:[#allocation2 + $0x490] sm:$0xff]
    %v1158 = vld [vmem:[#allocation2 + $0x498] sm:$0xff]
    %v1159 = vld [vmem:[#allocation2 + $0x4a0] sm:$0xff]
    %v1160 = vld [vmem:[#allocation2 + $0x4a8] sm:$0xff]
    %v1161 = vld [vmem:[#allocation2 + $0x4b0] sm:$0xff]
    %v1162 = vld [vmem:[#allocation2 + $0x4b8] sm:$0xff]
    %v1163 = vld [vmem:[#allocation2 + $0x4c0] sm:$0xff]
    %v1164 = vld [vmem:[#allocation2 + $0x4c8] sm:$0xff]
    %v1165 = vld [vmem:[#allocation2 + $0x4d0] sm:$0xff]
    %v1166 = vld [vmem:[#allocation2 + $0x4d8] sm:$0xff]
    %v1167 = vld [vmem:[#allocation2 + $0x4e0] sm:$0xff]
    %v1168 = vld [vmem:[#allocation2 + $0x4e8] sm:$0xff]
    %v1169 = vld [vmem:[#allocation2 + $0x4f0] sm:$0xff]
    %v1170 = vld [vmem:[#allocation2 + $0x4f8] sm:$0xff]
    %v1171 = vld [vmem:[#allocation2 + $0x500] sm:$0xff]
    %v1172 = vld [vmem:[#allocation2 + $0x508] sm:$0xff]
    %v1173 = vld [vmem:[#allocation2 + $0x510] sm:$0xff]
    %v1174 = vld [vmem:[#allocation2 + $0x518] sm:$0xff]
    %v1175 = vld [vmem:[#allocation2 + $0x520] sm:$0xff]
    %v1176 = vld [vmem:[#allocation2 + $0x528] sm:$0xff]
    %v1177 = vld [vmem:[#allocation2 + $0x530] sm:$0xff]
    %v1178 = vld [vmem:[#allocation2 + $0x538] sm:$0xff]
    %v1179 = vld [vmem:[#allocation2 + $0x540] sm:$0xff]
    %v1180 = vld [vmem:[#allocation2 + $0x548] sm:$0xff]
    %v1181 = vld [vmem:[#allocation2 + $0x550] sm:$0xff]
    %v1182 = vld [vmem:[#allocation2 + $0x558] sm:$0xff]
    %v1183 = vld [vmem:[#allocation2 + $0x560] sm:$0xff]
    %v1184 = vld [vmem:[#allocation2 + $0x568] sm:$0xff]
    %v1185 = vld [vmem:[#allocation2 + $0x570] sm:$0xff]
    %v1186 = vld [vmem:[#allocation2 + $0x578] sm:$0xff]
    %v1187 = vld [vmem:[#allocation2 + $0x580] sm:$0xff]
    %v1188 = vld [vmem:[#allocation2 + $0x588] sm:$0xff]
    %v1189 = vld [vmem:[#allocation2 + $0x590] sm:$0xff]
    %v1190 = vld [vmem:[#allocation2 + $0x598] sm:$0xff]
    %v1191 = vld [vmem:[#allocation2 + $0x5a0] sm:$0xff]
    %v1192 = vld [vmem:[#allocation2 + $0x5a8] sm:$0xff]
    %v1193 = vld [vmem:[#allocation2 + $0x5b0] sm:$0xff]
    %v1194 = vld [vmem:[#allocation2 + $0x5b8] sm:$0xff]
    %v1195 = vld [vmem:[#allocation2 + $0x5c0] sm:$0xff]
    %v1196 = vld [vmem:[#allocation2 + $0x5c8] sm:$0xff]
    %v1197 = vld [vmem:[#allocation2 + $0x5d0] sm:$0xff]
    %v1198 = vld [vmem:[#allocation2 + $0x5d8] sm:$0xff]
    %v1199 = vld [vmem:[#allocation2 + $0x5e0] sm:$0xff]
    %v1200 = vld [vmem:[#allocation2 + $0x5e8] sm:$0xff]
    %v1201 = vld [vmem:[#allocation2 + $0x5f0] sm:$0xff]
    %v1202 = vld [vmem:[#allocation2 + $0x5f8] sm:$0xff]
    %v1203 = vld [vmem:[#allocation2 + $0x600] sm:$0xff]
    %v1204 = vld [vmem:[#allocation2 + $0x608] sm:$0xff]
    %v1205 = vld [vmem:[#allocation2 + $0x610] sm:$0xff]
    %v1206 = vld [vmem:[#allocation2 + $0x618] sm:$0xff]
    %v1207 = vld [vmem:[#allocation2 + $0x620] sm:$0xff]
    %v1208 = vld [vmem:[#allocation2 + $0x628] sm:$0xff]
    %v1209 = vld [vmem:[#allocation2 + $0x630] sm:$0xff]
    %v1210 = vld [vmem:[#allocation2 + $0x638] sm:$0xff]
    %v1211 = vld [vmem:[#allocation2 + $0x640] sm:$0xff]
    %v1212 = vld [vmem:[#allocation2 + $0x648] sm:$0xff]
    %v1213 = vld [vmem:[#allocation2 + $0x650] sm:$0xff]
    %v1214 = vld [vmem:[#allocation2 + $0x658] sm:$0xff]
    %v1215 = vld [vmem:[#allocation2 + $0x660] sm:$0xff]
    %v1216 = vld [vmem:[#allocation2 + $0x668] sm:$0xff]
    %v1217 = vld [vmem:[#allocation2 + $0x670] sm:$0xff]
    %v1218 = vld [vmem:[#allocation2 + $0x678] sm:$0xff]
    %v1219 = vld [vmem:[#allocation2 + $0x680] sm:$0xff]
    %v1220 = vld [vmem:[#allocation2 + $0x688] sm:$0xff]
    %v1221 = vld [vmem:[#allocation2 + $0x690] sm:$0xff]
    %v1222 = vld [vmem:[#allocation2 + $0x698] sm:$0xff]
    %v1223 = vld [vmem:[#allocation2 + $0x6a0] sm:$0xff]
    %v1224 = vld [vmem:[#allocation2 + $0x6a8] sm:$0xff]
    %v1225 = vld [vmem:[#allocation2 + $0x6b0] sm:$0xff]
    %v1226 = vld [vmem:[#allocation2 + $0x6b8] sm:$0xff]
    %v1227 = vld [vmem:[#allocation2 + $0x6c0] sm:$0xff]
    %v1228 = vld [vmem:[#allocation2 + $0x6c8] sm:$0xff]
    %v1229 = vld [vmem:[#allocation2 + $0x6d0] sm:$0xff]
    %v1230 = vld [vmem:[#allocation2 + $0x6d8] sm:$0xff]
    %v1231 = vld [vmem:[#allocation2 + $0x6e0] sm:$0xff]
    %v1232 = vld [vmem:[#allocation2 + $0x6e8] sm:$0xff]
    %v1233 = vld [vmem:[#allocation2 + $0x6f0] sm:$0xff]
    %v1234 = vld [vmem:[#allocation2 + $0x6f8] sm:$0xff]
    %v1235 = vld [vmem:[#allocation2 + $0x700] sm:$0xff]
    %v1236 = vld [vmem:[#allocation2 + $0x708] sm:$0xff]
    %v1237 = vld [vmem:[#allocation2 + $0x710] sm:$0xff]
    %v1238 = vld [vmem:[#allocation2 + $0x718] sm:$0xff]
    %v1239 = vld [vmem:[#allocation2 + $0x720] sm:$0xff]
    %v1240 = vld [vmem:[#allocation2 + $0x728] sm:$0xff]
    %v1241 = vld [vmem:[#allocation2 + $0x730] sm:$0xff]
    %v1242 = vld [vmem:[#allocation2 + $0x738] sm:$0xff]
    %v1243 = vld [vmem:[#allocation2 + $0x740] sm:$0xff]
    %v1244 = vld [vmem:[#allocation2 + $0x748] sm:$0xff]
    %v1245 = vld [vmem:[#allocation2 + $0x750] sm:$0xff]
    %v1246 = vld [vmem:[#allocation2 + $0x758] sm:$0xff]
    %v1247 = vld [vmem:[#allocation2 + $0x760] sm:$0xff]
    %v1248 = vld [vmem:[#allocation2 + $0x768] sm:$0xff]
    %v1249 = vld [vmem:[#allocation2 + $0x770] sm:$0xff]
    %v1250 = vld [vmem:[#allocation2 + $0x778] sm:$0xff]
    %v1251 = vld [vmem:[#allocation2 + $0x780] sm:$0xff]
    %v1252 = vld [vmem:[#allocation2 + $0x788] sm:$0xff]
    %v1253 = vld [vmem:[#allocation2 + $0x790] sm:$0xff]
    %v1254 = vld [vmem:[#allocation2 + $0x798] sm:$0xff]
    %v1255 = vld [vmem:[#allocation2 + $0x7a0] sm:$0xff]
    %v1256 = vld [vmem:[#allocation2 + $0x7a8] sm:$0xff]
    %v1257 = vld [vmem:[#allocation2 + $0x7b0] sm:$0xff]
    %v1258 = vld [vmem:[#allocation2 + $0x7b8] sm:$0xff]
    %v1259 = vld [vmem:[#allocation2 + $0x7c0] sm:$0xff]
    %v1260 = vld [vmem:[#allocation2 + $0x7c8] sm:$0xff]
    %v1261 = vld [vmem:[#allocation2 + $0x7d0] sm:$0xff]
    %v1262 = vld [vmem:[#allocation2 + $0x7d8] sm:$0xff]
    %v1263 = vld [vmem:[#allocation2 + $0x7e0] sm:$0xff]
    %v1264 = vld [vmem:[#allocation2 + $0x7e8] sm:$0xff]
    %v1265 = vld [vmem:[#allocation2 + $0x7f0] sm:$0xff]
    %v1266 = vld [vmem:[#allocation2 + $0x7f8] sm:$0xff]
    %v1523 = vunpack.c.l.b16 %v1011
    %v1524 = vunpack.c.h.b16 %v1011
    %v1525 = vunpack.c.l.b16 %v1012
    %v1526 = vunpack.c.h.b16 %v1012
    %v1527 = vunpack.c.l.b16 %v1013
    %v1528 = vunpack.c.h.b16 %v1013
    %v1529 = vunpack.c.l.b16 %v1014
    %v1530 = vunpack.c.h.b16 %v1014
    %v1531 = vunpack.c.l.b16 %v1015
    %v1532 = vunpack.c.h.b16 %v1015
    %v1533 = vunpack.c.l.b16 %v1016
    %v1534 = vunpack.c.h.b16 %v1016
    %v1535 = vunpack.c.l.b16 %v1017
    %v1536 = vunpack.c.h.b16 %v1017
    %v1537 = vunpack.c.l.b16 %v1018
    %v1538 = vunpack.c.h.b16 %v1018
    %v1539 = vunpack.c.l.b16 %v1019
    %v1540 = vunpack.c.h.b16 %v1019
    %v1541 = vunpack.c.l.b16 %v1020
    %v1542 = vunpack.c.h.b16 %v1020
    %v1543 = vunpack.c.l.b16 %v1021
    %v1544 = vunpack.c.h.b16 %v1021
    %v1545 = vunpack.c.l.b16 %v1022
    %v1546 = vunpack.c.h.b16 %v1022
    %v1547 = vunpack.c.l.b16 %v1023
    %v1548 = vunpack.c.h.b16 %v1023
    %v1549 = vunpack.c.l.b16 %v1024
    %v1550 = vunpack.c.h.b16 %v1024
    %v1551 = vunpack.c.l.b16 %v1025
    %v1552 = vunpack.c.h.b16 %v1025
    %v1553 = vunpack.c.l.b16 %v1026
    %v1554 = vunpack.c.h.b16 %v1026
    %v1555 = vunpack.c.l.b16 %v1027
    %v1556 = vunpack.c.h.b16 %v1027
    %v1557 = vunpack.c.l.b16 %v1028
    %v1558 = vunpack.c.h.b16 %v1028
    %v1559 = vunpack.c.l.b16 %v1029
    %v1560 = vunpack.c.h.b16 %v1029
    %v1561 = vunpack.c.l.b16 %v1030
    %v1562 = vunpack.c.h.b16 %v1030
    %v1563 = vunpack.c.l.b16 %v1031
    %v1564 = vunpack.c.h.b16 %v1031
    %v1565 = vunpack.c.l.b16 %v1032
    %v1566 = vunpack.c.h.b16 %v1032
    %v1567 = vunpack.c.l.b16 %v1033
    %v1568 = vunpack.c.h.b16 %v1033
    %v1569 = vunpack.c.l.b16 %v1034
    %v1570 = vunpack.c.h.b16 %v1034
    %v1571 = vunpack.c.l.b16 %v1035
    %v1572 = vunpack.c.h.b16 %v1035
    %v1573 = vunpack.c.l.b16 %v1036
    %v1574 = vunpack.c.h.b16 %v1036
    %v1575 = vunpack.c.l.b16 %v1037
    %v1576 = vunpack.c.h.b16 %v1037
    %v1577 = vunpack.c.l.b16 %v1038
    %v1578 = vunpack.c.h.b16 %v1038
    %v1579 = vunpack.c.l.b16 %v1039
    %v1580 = vunpack.c.h.b16 %v1039
    %v1581 = vunpack.c.l.b16 %v1040
    %v1582 = vunpack.c.h.b16 %v1040
    %v1583 = vunpack.c.l.b16 %v1041
    %v1584 = vunpack.c.h.b16 %v1041
    %v1585 = vunpack.c.l.b16 %v1042
    %v1586 = vunpack.c.h.b16 %v1042
    %v1587 = vunpack.c.l.b16 %v1043
    %v1588 = vunpack.c.h.b16 %v1043
    %v1589 = vunpack.c.l.b16 %v1044
    %v1590 = vunpack.c.h.b16 %v1044
    %v1591 = vunpack.c.l.b16 %v1045
    %v1592 = vunpack.c.h.b16 %v1045
    %v1593 = vunpack.c.l.b16 %v1046
    %v1594 = vunpack.c.h.b16 %v1046
    %v1595 = vunpack.c.l.b16 %v1047
    %v1596 = vunpack.c.h.b16 %v1047
    %v1597 = vunpack.c.l.b16 %v1048
    %v1598 = vunpack.c.h.b16 %v1048
    %v1599 = vunpack.c.l.b16 %v1049
    %v1600 = vunpack.c.h.b16 %v1049
    %v1601 = vunpack.c.l.b16 %v1050
    %v1602 = vunpack.c.h.b16 %v1050
    %v1603 = vunpack.c.l.b16 %v1051
    %v1604 = vunpack.c.h.b16 %v1051
    %v1605 = vunpack.c.l.b16 %v1052
    %v1606 = vunpack.c.h.b16 %v1052
    %v1607 = vunpack.c.l.b16 %v1053
    %v1608 = vunpack.c.h.b16 %v1053
    %v1609 = vunpack.c.l.b16 %v1054
    %v1610 = vunpack.c.h.b16 %v1054
    %v1611 = vunpack.c.l.b16 %v1055
    %v1612 = vunpack.c.h.b16 %v1055
    %v1613 = vunpack.c.l.b16 %v1056
    %v1614 = vunpack.c.h.b16 %v1056
    %v1615 = vunpack.c.l.b16 %v1057
    %v1616 = vunpack.c.h.b16 %v1057
    %v1617 = vunpack.c.l.b16 %v1058
    %v1618 = vunpack.c.h.b16 %v1058
    %v1619 = vunpack.c.l.b16 %v1059
    %v1620 = vunpack.c.h.b16 %v1059
    %v1621 = vunpack.c.l.b16 %v1060
    %v1622 = vunpack.c.h.b16 %v1060
    %v1623 = vunpack.c.l.b16 %v1061
    %v1624 = vunpack.c.h.b16 %v1061
    %v1625 = vunpack.c.l.b16 %v1062
    %v1626 = vunpack.c.h.b16 %v1062
    %v1627 = vunpack.c.l.b16 %v1063
    %v1628 = vunpack.c.h.b16 %v1063
    %v1629 = vunpack.c.l.b16 %v1064
    %v1630 = vunpack.c.h.b16 %v1064
    %v1631 = vunpack.c.l.b16 %v1065
    %v1632 = vunpack.c.h.b16 %v1065
    %v1633 = vunpack.c.l.b16 %v1066
    %v1634 = vunpack.c.h.b16 %v1066
    %v1635 = vunpack.c.l.b16 %v1067
    %v1636 = vunpack.c.h.b16 %v1067
    %v1637 = vunpack.c.l.b16 %v1068
    %v1638 = vunpack.c.h.b16 %v1068
    %v1639 = vunpack.c.l.b16 %v1069
    %v1640 = vunpack.c.h.b16 %v1069
    %v1641 = vunpack.c.l.b16 %v1070
    %v1642 = vunpack.c.h.b16 %v1070
    %v1643 = vunpack.c.l.b16 %v1071
    %v1644 = vunpack.c.h.b16 %v1071
    %v1645 = vunpack.c.l.b16 %v1072
    %v1646 = vunpack.c.h.b16 %v1072
    %v1647 = vunpack.c.l.b16 %v1073
    %v1648 = vunpack.c.h.b16 %v1073
    %v1649 = vunpack.c.l.b16 %v1074
    %v1650 = vunpack.c.h.b16 %v1074
    %v1651 = vunpack.c.l.b16 %v1075
    %v1652 = vunpack.c.h.b16 %v1075
    %v1653 = vunpack.c.l.b16 %v1076
    %v1654 = vunpack.c.h.b16 %v1076
    %v1655 = vunpack.c.l.b16 %v1077
    %v1656 = vunpack.c.h.b16 %v1077
    %v1657 = vunpack.c.l.b16 %v1078
    %v1658 = vunpack.c.h.b16 %v1078
    %v1659 = vunpack.c.l.b16 %v1079
    %v1660 = vunpack.c.h.b16 %v1079
    %v1661 = vunpack.c.l.b16 %v1080
    %v1662 = vunpack.c.h.b16 %v1080
    %v1663 = vunpack.c.l.b16 %v1081
    %v1664 = vunpack.c.h.b16 %v1081
    %v1665 = vunpack.c.l.b16 %v1082
    %v1666 = vunpack.c.h.b16 %v1082
    %v1667 = vunpack.c.l.b16 %v1083
    %v1668 = vunpack.c.h.b16 %v1083
    %v1669 = vunpack.c.l.b16 %v1084
    %v1670 = vunpack.c.h.b16 %v1084
    %v1671 = vunpack.c.l.b16 %v1085
    %v1672 = vunpack.c.h.b16 %v1085
    %v1673 = vunpack.c.l.b16 %v1086
    %v1674 = vunpack.c.h.b16 %v1086
    %v1675 = vunpack.c.l.b16 %v1087
    %v1676 = vunpack.c.h.b16 %v1087
    %v1677 = vunpack.c.l.b16 %v1088
    %v1678 = vunpack.c.h.b16 %v1088
    %v1679 = vunpack.c.l.b16 %v1089
    %v1680 = vunpack.c.h.b16 %v1089
    %v1681 = vunpack.c.l.b16 %v1090
    %v1682 = vunpack.c.h.b16 %v1090
    %v1683 = vunpack.c.l.b16 %v1091
    %v1684 = vunpack.c.h.b16 %v1091
    %v1685 = vunpack.c.l.b16 %v1092
    %v1686 = vunpack.c.h.b16 %v1092
    %v1687 = vunpack.c.l.b16 %v1093
    %v1688 = vunpack.c.h.b16 %v1093
    %v1689 = vunpack.c.l.b16 %v1094
    %v1690 = vunpack.c.h.b16 %v1094
    %v1691 = vunpack.c.l.b16 %v1095
    %v1692 = vunpack.c.h.b16 %v1095
    %v1693 = vunpack.c.l.b16 %v1096
    %v1694 = vunpack.c.h.b16 %v1096
    %v1695 = vunpack.c.l.b16 %v1097
    %v1696 = vunpack.c.h.b16 %v1097
    %v1697 = vunpack.c.l.b16 %v1098
    %v1698 = vunpack.c.h.b16 %v1098
    %v1699 = vunpack.c.l.b16 %v1099
    %v1700 = vunpack.c.h.b16 %v1099
    %v1701 = vunpack.c.l.b16 %v1100
    %v1702 = vunpack.c.h.b16 %v1100
    %v1703 = vunpack.c.l.b16 %v1101
    %v1704 = vunpack.c.h.b16 %v1101
    %v1705 = vunpack.c.l.b16 %v1102
    %v1706 = vunpack.c.h.b16 %v1102
    %v1707 = vunpack.c.l.b16 %v1103
    %v1708 = vunpack.c.h.b16 %v1103
    %v1709 = vunpack.c.l.b16 %v1104
    %v1710 = vunpack.c.h.b16 %v1104
    %v1711 = vunpack.c.l.b16 %v1105
    %v1712 = vunpack.c.h.b16 %v1105
    %v1713 = vunpack.c.l.b16 %v1106
    %v1714 = vunpack.c.h.b16 %v1106
    %v1715 = vunpack.c.l.b16 %v1107
    %v1716 = vunpack.c.h.b16 %v1107
    %v1717 = vunpack.c.l.b16 %v1108
    %v1718 = vunpack.c.h.b16 %v1108
    %v1719 = vunpack.c.l.b16 %v1109
    %v1720 = vunpack.c.h.b16 %v1109
    %v1721 = vunpack.c.l.b16 %v1110
    %v1722 = vunpack.c.h.b16 %v1110
    %v1723 = vunpack.c.l.b16 %v1111
    %v1724 = vunpack.c.h.b16 %v1111
    %v1725 = vunpack.c.l.b16 %v1112
    %v1726 = vunpack.c.h.b16 %v1112
    %v1727 = vunpack.c.l.b16 %v1113
    %v1728 = vunpack.c.h.b16 %v1113
    %v1729 = vunpack.c.l.b16 %v1114
    %v1730 = vunpack.c.h.b16 %v1114
    %v1731 = vunpack.c.l.b16 %v1115
    %v1732 = vunpack.c.h.b16 %v1115
    %v1733 = vunpack.c.l.b16 %v1116
    %v1734 = vunpack.c.h.b16 %v1116
    %v1735 = vunpack.c.l.b16 %v1117
    %v1736 = vunpack.c.h.b16 %v1117
    %v1737 = vunpack.c.l.b16 %v1118
    %v1738 = vunpack.c.h.b16 %v1118
    %v1739 = vunpack.c.l.b16 %v1119
    %v1740 = vunpack.c.h.b16 %v1119
    %v1741 = vunpack.c.l.b16 %v1120
    %v1742 = vunpack.c.h.b16 %v1120
    %v1743 = vunpack.c.l.b16 %v1121
    %v1744 = vunpack.c.h.b16 %v1121
    %v1745 = vunpack.c.l.b16 %v1122
    %v1746 = vunpack.c.h.b16 %v1122
    %v1747 = vunpack.c.l.b16 %v1123
    %v1748 = vunpack.c.h.b16 %v1123
    %v1749 = vunpack.c.l.b16 %v1124
    %v1750 = vunpack.c.h.b16 %v1124
    %v1751 = vunpack.c.l.b16 %v1125
    %v1752 = vunpack.c.h.b16 %v1125
    %v1753 = vunpack.c.l.b16 %v1126
    %v1754 = vunpack.c.h.b16 %v1126
    %v1755 = vunpack.c.l.b16 %v1127
    %v1756 = vunpack.c.h.b16 %v1127
    %v1757 = vunpack.c.l.b16 %v1128
    %v1758 = vunpack.c.h.b16 %v1128
    %v1759 = vunpack.c.l.b16 %v1129
    %v1760 = vunpack.c.h.b16 %v1129
    %v1761 = vunpack.c.l.b16 %v1130
    %v1762 = vunpack.c.h.b16 %v1130
    %v1763 = vunpack.c.l.b16 %v1131
    %v1764 = vunpack.c.h.b16 %v1131
    %v1765 = vunpack.c.l.b16 %v1132
    %v1766 = vunpack.c.h.b16 %v1132
    %v1767 = vunpack.c.l.b16 %v1133
    %v1768 = vunpack.c.h.b16 %v1133
    %v1769 = vunpack.c.l.b16 %v1134
    %v1770 = vunpack.c.h.b16 %v1134
    %v1771 = vunpack.c.l.b16 %v1135
    %v1772 = vunpack.c.h.b16 %v1135
    %v1773 = vunpack.c.l.b16 %v1136
    %v1774 = vunpack.c.h.b16 %v1136
    %v1775 = vunpack.c.l.b16 %v1137
    %v1776 = vunpack.c.h.b16 %v1137
    %v1777 = vunpack.c.l.b16 %v1138
    %v1778 = vunpack.c.h.b16 %v1138
    %v1779 = vunpack.c.l.b16 %v1139
    %v1780 = vunpack.c.h.b16 %v1139
    %v1781 = vunpack.c.l.b16 %v1140
    %v1782 = vunpack.c.h.b16 %v1140
    %v1783 = vunpack.c.l.b16 %v1141
    %v1784 = vunpack.c.h.b16 %v1141
    %v1785 = vunpack.c.l.b16 %v1142
    %v1786 = vunpack.c.h.b16 %v1142
    %v1787 = vunpack.c.l.b16 %v1143
    %v1788 = vunpack.c.h.b16 %v1143
    %v1789 = vunpack.c.l.b16 %v1144
    %v1790 = vunpack.c.h.b16 %v1144
    %v1791 = vunpack.c.l.b16 %v1145
    %v1792 = vunpack.c.h.b16 %v1145
    %v1793 = vunpack.c.l.b16 %v1146
    %v1794 = vunpack.c.h.b16 %v1146
    %v1795 = vunpack.c.l.b16 %v1147
    %v1796 = vunpack.c.h.b16 %v1147
    %v1797 = vunpack.c.l.b16 %v1148
    %v1798 = vunpack.c.h.b16 %v1148
    %v1799 = vunpack.c.l.b16 %v1149
    %v1800 = vunpack.c.h.b16 %v1149
    %v1801 = vunpack.c.l.b16 %v1150
    %v1802 = vunpack.c.h.b16 %v1150
    %v1803 = vunpack.c.l.b16 %v1151
    %v1804 = vunpack.c.h.b16 %v1151
    %v1805 = vunpack.c.l.b16 %v1152
    %v1806 = vunpack.c.h.b16 %v1152
    %v1807 = vunpack.c.l.b16 %v1153
    %v1808 = vunpack.c.h.b16 %v1153
    %v1809 = vunpack.c.l.b16 %v1154
    %v1810 = vunpack.c.h.b16 %v1154
    %v1811 = vunpack.c.l.b16 %v1155
    %v1812 = vunpack.c.h.b16 %v1155
    %v1813 = vunpack.c.l.b16 %v1156
    %v1814 = vunpack.c.h.b16 %v1156
    %v1815 = vunpack.c.l.b16 %v1157
    %v1816 = vunpack.c.h.b16 %v1157
    %v1817 = vunpack.c.l.b16 %v1158
    %v1818 = vunpack.c.h.b16 %v1158
    %v1819 = vunpack.c.l.b16 %v1159
    %v1820 = vunpack.c.h.b16 %v1159
    %v1821 = vunpack.c.l.b16 %v1160
    %v1822 = vunpack.c.h.b16 %v1160
    %v1823 = vunpack.c.l.b16 %v1161
    %v1824 = vunpack.c.h.b16 %v1161
    %v1825 = vunpack.c.l.b16 %v1162
    %v1826 = vunpack.c.h.b16 %v1162
    %v1827 = vunpack.c.l.b16 %v1163
    %v1828 = vunpack.c.h.b16 %v1163
    %v1829 = vunpack.c.l.b16 %v1164
    %v1830 = vunpack.c.h.b16 %v1164
    %v1831 = vunpack.c.l.b16 %v1165
    %v1832 = vunpack.c.h.b16 %v1165
    %v1833 = vunpack.c.l.b16 %v1166
    %v1834 = vunpack.c.h.b16 %v1166
    %v1835 = vunpack.c.l.b16 %v1167
    %v1836 = vunpack.c.h.b16 %v1167
    %v1837 = vunpack.c.l.b16 %v1168
    %v1838 = vunpack.c.h.b16 %v1168
    %v1839 = vunpack.c.l.b16 %v1169
    %v1840 = vunpack.c.h.b16 %v1169
    %v1841 = vunpack.c.l.b16 %v1170
    %v1842 = vunpack.c.h.b16 %v1170
    %v1843 = vunpack.c.l.b16 %v1171
    %v1844 = vunpack.c.h.b16 %v1171
    %v1845 = vunpack.c.l.b16 %v1172
    %v1846 = vunpack.c.h.b16 %v1172
    %v1847 = vunpack.c.l.b16 %v1173
    %v1848 = vunpack.c.h.b16 %v1173
    %v1849 = vunpack.c.l.b16 %v1174
    %v1850 = vunpack.c.h.b16 %v1174
    %v1851 = vunpack.c.l.b16 %v1175
    %v1852 = vunpack.c.h.b16 %v1175
    %v1853 = vunpack.c.l.b16 %v1176
    %v1854 = vunpack.c.h.b16 %v1176
    %v1855 = vunpack.c.l.b16 %v1177
    %v1856 = vunpack.c.h.b16 %v1177
    %v1857 = vunpack.c.l.b16 %v1178
    %v1858 = vunpack.c.h.b16 %v1178
    %v1859 = vunpack.c.l.b16 %v1179
    %v1860 = vunpack.c.h.b16 %v1179
    %v1861 = vunpack.c.l.b16 %v1180
    %v1862 = vunpack.c.h.b16 %v1180
    %v1863 = vunpack.c.l.b16 %v1181
    %v1864 = vunpack.c.h.b16 %v1181
    %v1865 = vunpack.c.l.b16 %v1182
    %v1866 = vunpack.c.h.b16 %v1182
    %v1867 = vunpack.c.l.b16 %v1183
    %v1868 = vunpack.c.h.b16 %v1183
    %v1869 = vunpack.c.l.b16 %v1184
    %v1870 = vunpack.c.h.b16 %v1184
    %v1871 = vunpack.c.l.b16 %v1185
    %v1872 = vunpack.c.h.b16 %v1185
    %v1873 = vunpack.c.l.b16 %v1186
    %v1874 = vunpack.c.h.b16 %v1186
    %v1875 = vunpack.c.l.b16 %v1187
    %v1876 = vunpack.c.h.b16 %v1187
    %v1877 = vunpack.c.l.b16 %v1188
    %v1878 = vunpack.c.h.b16 %v1188
    %v1879 = vunpack.c.l.b16 %v1189
    %v1880 = vunpack.c.h.b16 %v1189
    %v1881 = vunpack.c.l.b16 %v1190
    %v1882 = vunpack.c.h.b16 %v1190
    %v1883 = vunpack.c.l.b16 %v1191
    %v1884 = vunpack.c.h.b16 %v1191
    %v1885 = vunpack.c.l.b16 %v1192
    %v1886 = vunpack.c.h.b16 %v1192
    %v1887 = vunpack.c.l.b16 %v1193
    %v1888 = vunpack.c.h.b16 %v1193
    %v1889 = vunpack.c.l.b16 %v1194
    %v1890 = vunpack.c.h.b16 %v1194
    %v1891 = vunpack.c.l.b16 %v1195
    %v1892 = vunpack.c.h.b16 %v1195
    %v1893 = vunpack.c.l.b16 %v1196
    %v1894 = vunpack.c.h.b16 %v1196
    %v1895 = vunpack.c.l.b16 %v1197
    %v1896 = vunpack.c.h.b16 %v1197
    %v1897 = vunpack.c.l.b16 %v1198
    %v1898 = vunpack.c.h.b16 %v1198
    %v1899 = vunpack.c.l.b16 %v1199
    %v1900 = vunpack.c.h.b16 %v1199
    %v1901 = vunpack.c.l.b16 %v1200
    %v1902 = vunpack.c.h.b16 %v1200
    %v1903 = vunpack.c.l.b16 %v1201
    %v1904 = vunpack.c.h.b16 %v1201
    %v1905 = vunpack.c.l.b16 %v1202
    %v1906 = vunpack.c.h.b16 %v1202
    %v1907 = vunpack.c.l.b16 %v1203
    %v1908 = vunpack.c.h.b16 %v1203
    %v1909 = vunpack.c.l.b16 %v1204
    %v1910 = vunpack.c.h.b16 %v1204
    %v1911 = vunpack.c.l.b16 %v1205
    %v1912 = vunpack.c.h.b16 %v1205
    %v1913 = vunpack.c.l.b16 %v1206
    %v1914 = vunpack.c.h.b16 %v1206
    %v1915 = vunpack.c.l.b16 %v1207
    %v1916 = vunpack.c.h.b16 %v1207
    %v1917 = vunpack.c.l.b16 %v1208
    %v1918 = vunpack.c.h.b16 %v1208
    %v1919 = vunpack.c.l.b16 %v1209
    %v1920 = vunpack.c.h.b16 %v1209
    %v1921 = vunpack.c.l.b16 %v1210
    %v1922 = vunpack.c.h.b16 %v1210
    %v1923 = vunpack.c.l.b16 %v1211
    %v1924 = vunpack.c.h.b16 %v1211
    %v1925 = vunpack.c.l.b16 %v1212
    %v1926 = vunpack.c.h.b16 %v1212
    %v1927 = vunpack.c.l.b16 %v1213
    %v1928 = vunpack.c.h.b16 %v1213
    %v1929 = vunpack.c.l.b16 %v1214
    %v1930 = vunpack.c.h.b16 %v1214
    %v1931 = vunpack.c.l.b16 %v1215
    %v1932 = vunpack.c.h.b16 %v1215
    %v1933 = vunpack.c.l.b16 %v1216
    %v1934 = vunpack.c.h.b16 %v1216
    %v1935 = vunpack.c.l.b16 %v1217
    %v1936 = vunpack.c.h.b16 %v1217
    %v1937 = vunpack.c.l.b16 %v1218
    %v1938 = vunpack.c.h.b16 %v1218
    %v1939 = vunpack.c.l.b16 %v1219
    %v1940 = vunpack.c.h.b16 %v1219
    %v1941 = vunpack.c.l.b16 %v1220
    %v1942 = vunpack.c.h.b16 %v1220
    %v1943 = vunpack.c.l.b16 %v1221
    %v1944 = vunpack.c.h.b16 %v1221
    %v1945 = vunpack.c.l.b16 %v1222
    %v1946 = vunpack.c.h.b16 %v1222
    %v1947 = vunpack.c.l.b16 %v1223
    %v1948 = vunpack.c.h.b16 %v1223
    %v1949 = vunpack.c.l.b16 %v1224
    %v1950 = vunpack.c.h.b16 %v1224
    %v1951 = vunpack.c.l.b16 %v1225
    %v1952 = vunpack.c.h.b16 %v1225
    %v1953 = vunpack.c.l.b16 %v1226
    %v1954 = vunpack.c.h.b16 %v1226
    %v1955 = vunpack.c.l.b16 %v1227
    %v1956 = vunpack.c.h.b16 %v1227
    %v1957 = vunpack.c.l.b16 %v1228
    %v1958 = vunpack.c.h.b16 %v1228
    %v1959 = vunpack.c.l.b16 %v1229
    %v1960 = vunpack.c.h.b16 %v1229
    %v1961 = vunpack.c.l.b16 %v1230
    %v1962 = vunpack.c.h.b16 %v1230
    %v1963 = vunpack.c.l.b16 %v1231
    %v1964 = vunpack.c.h.b16 %v1231
    %v1965 = vunpack.c.l.b16 %v1232
    %v1966 = vunpack.c.h.b16 %v1232
    %v1967 = vunpack.c.l.b16 %v1233
    %v1968 = vunpack.c.h.b16 %v1233
    %v1969 = vunpack.c.l.b16 %v1234
    %v1970 = vunpack.c.h.b16 %v1234
    %v1971 = vunpack.c.l.b16 %v1235
    %v1972 = vunpack.c.h.b16 %v1235
    %v1973 = vunpack.c.l.b16 %v1236
    %v1974 = vunpack.c.h.b16 %v1236
    %v1975 = vunpack.c.l.b16 %v1237
    %v1976 = vunpack.c.h.b16 %v1237
    %v1977 = vunpack.c.l.b16 %v1238
    %v1978 = vunpack.c.h.b16 %v1238
    %v1979 = vunpack.c.l.b16 %v1239
    %v1980 = vunpack.c.h.b16 %v1239
    %v1981 = vunpack.c.l.b16 %v1240
    %v1982 = vunpack.c.h.b16 %v1240
    %v1983 = vunpack.c.l.b16 %v1241
    %v1984 = vunpack.c.h.b16 %v1241
    %v1985 = vunpack.c.l.b16 %v1242
    %v1986 = vunpack.c.h.b16 %v1242
    %v1987 = vunpack.c.l.b16 %v1243
    %v1988 = vunpack.c.h.b16 %v1243
    %v1989 = vunpack.c.l.b16 %v1244
    %v1990 = vunpack.c.h.b16 %v1244
    %v1991 = vunpack.c.l.b16 %v1245
    %v1992 = vunpack.c.h.b16 %v1245
    %v1993 = vunpack.c.l.b16 %v1246
    %v1994 = vunpack.c.h.b16 %v1246
    %v1995 = vunpack.c.l.b16 %v1247
    %v1996 = vunpack.c.h.b16 %v1247
    %v1997 = vunpack.c.l.b16 %v1248
    %v1998 = vunpack.c.h.b16 %v1248
    %v1999 = vunpack.c.l.b16 %v1249
    %v2000 = vunpack.c.h.b16 %v1249
    %v2001 = vunpack.c.l.b16 %v1250
    %v2002 = vunpack.c.h.b16 %v1250
    %v2003 = vunpack.c.l.b16 %v1251
    %v2004 = vunpack.c.h.b16 %v1251
    %v2005 = vunpack.c.l.b16 %v1252
    %v2006 = vunpack.c.h.b16 %v1252
    %v2007 = vunpack.c.l.b16 %v1253
    %v2008 = vunpack.c.h.b16 %v1253
    %v2009 = vunpack.c.l.b16 %v1254
    %v2010 = vunpack.c.h.b16 %v1254
    %v2011 = vunpack.c.l.b16 %v1255
    %v2012 = vunpack.c.h.b16 %v1255
    %v2013 = vunpack.c.l.b16 %v1256
    %v2014 = vunpack.c.h.b16 %v1256
    %v2015 = vunpack.c.l.b16 %v1257
    %v2016 = vunpack.c.h.b16 %v1257
    %v2017 = vunpack.c.l.b16 %v1258
    %v2018 = vunpack.c.h.b16 %v1258
    %v2019 = vunpack.c.l.b16 %v1259
    %v2020 = vunpack.c.h.b16 %v1259
    %v2021 = vunpack.c.l.b16 %v1260
    %v2022 = vunpack.c.h.b16 %v1260
    %v2023 = vunpack.c.l.b16 %v1261
    %v2024 = vunpack.c.h.b16 %v1261
    %v2025 = vunpack.c.l.b16 %v1262
    %v2026 = vunpack.c.h.b16 %v1262
    %v2027 = vunpack.c.l.b16 %v1263
    %v2028 = vunpack.c.h.b16 %v1263
    %v2029 = vunpack.c.l.b16 %v1264
    %v2030 = vunpack.c.h.b16 %v1264
    %v2031 = vunpack.c.l.b16 %v1265
    %v2032 = vunpack.c.h.b16 %v1265
    %v2033 = vunpack.c.l.b16 %v1266
    %v2034 = vunpack.c.h.b16 %v1266
    %v2035 = vpack.c.b16 %v1531, %v1523
    %v2036 = vpack.c.b16 %v1532, %v1524
    %v2037 = vpack.c.b16 %v1533, %v1525
    %v2038 = vpack.c.b16 %v1534, %v1526
    %v2039 = vpack.c.b16 %v1535, %v1527
    %v2040 = vpack.c.b16 %v1536, %v1528
    %v2041 = vpack.c.b16 %v1537, %v1529
    %v2042 = vpack.c.b16 %v1538, %v1530
    %v2043 = vpack.c.b16 %v1547, %v1539
    %v2044 = vpack.c.b16 %v1548, %v1540
    %v2045 = vpack.c.b16 %v1549, %v1541
    %v2046 = vpack.c.b16 %v1550, %v1542
    %v2047 = vpack.c.b16 %v1551, %v1543
    %v2048 = vpack.c.b16 %v1552, %v1544
    %v2049 = vpack.c.b16 %v1553, %v1545
    %v2050 = vpack.c.b16 %v1554, %v1546
    %v2051 = vpack.c.b16 %v1563, %v1555
    %v2052 = vpack.c.b16 %v1564, %v1556
    %v2053 = vpack.c.b16 %v1565, %v1557
    %v2054 = vpack.c.b16 %v1566, %v1558
    %v2055 = vpack.c.b16 %v1567, %v1559
    %v2056 = vpack.c.b16 %v1568, %v1560
    %v2057 = vpack.c.b16 %v1569, %v1561
    %v2058 = vpack.c.b16 %v1570, %v1562
    %v2059 = vpack.c.b16 %v1579, %v1571
    %v2060 = vpack.c.b16 %v1580, %v1572
    %v2061 = vpack.c.b16 %v1581, %v1573
    %v2062 = vpack.c.b16 %v1582, %v1574
    %v2063 = vpack.c.b16 %v1583, %v1575
    %v2064 = vpack.c.b16 %v1584, %v1576
    %v2065 = vpack.c.b16 %v1585, %v1577
    %v2066 = vpack.c.b16 %v1586, %v1578
    %v2067 = vpack.c.b16 %v1595, %v1587
    %v2068 = vpack.c.b16 %v1596, %v1588
    %v2069 = vpack.c.b16 %v1597, %v1589
    %v2070 = vpack.c.b16 %v1598, %v1590
    %v2071 = vpack.c.b16 %v1599, %v1591
    %v2072 = vpack.c.b16 %v1600, %v1592
    %v2073 = vpack.c.b16 %v1601, %v1593
    %v2074 = vpack.c.b16 %v1602, %v1594
    %v2075 = vpack.c.b16 %v1611, %v1603
    %v2076 = vpack.c.b16 %v1612, %v1604
    %v2077 = vpack.c.b16 %v1613, %v1605
    %v2078 = vpack.c.b16 %v1614, %v1606
    %v2079 = vpack.c.b16 %v1615, %v1607
    %v2080 = vpack.c.b16 %v1616, %v1608
    %v2081 = vpack.c.b16 %v1617, %v1609
    %v2082 = vpack.c.b16 %v1618, %v1610
    %v2083 = vpack.c.b16 %v1627, %v1619
    %v2084 = vpack.c.b16 %v1628, %v1620
    %v2085 = vpack.c.b16 %v1629, %v1621
    %v2086 = vpack.c.b16 %v1630, %v1622
    %v2087 = vpack.c.b16 %v1631, %v1623
    %v2088 = vpack.c.b16 %v1632, %v1624
    %v2089 = vpack.c.b16 %v1633, %v1625
    %v2090 = vpack.c.b16 %v1634, %v1626
    %v2091 = vpack.c.b16 %v1643, %v1635
    %v2092 = vpack.c.b16 %v1644, %v1636
    %v2093 = vpack.c.b16 %v1645, %v1637
    %v2094 = vpack.c.b16 %v1646, %v1638
    %v2095 = vpack.c.b16 %v1647, %v1639
    %v2096 = vpack.c.b16 %v1648, %v1640
    %v2097 = vpack.c.b16 %v1649, %v1641
    %v2098 = vpack.c.b16 %v1650, %v1642
    %v2099 = vpack.c.b16 %v1659, %v1651
    %v2100 = vpack.c.b16 %v1660, %v1652
    %v2101 = vpack.c.b16 %v1661, %v1653
    %v2102 = vpack.c.b16 %v1662, %v1654
    %v2103 = vpack.c.b16 %v1663, %v1655
    %v2104 = vpack.c.b16 %v1664, %v1656
    %v2105 = vpack.c.b16 %v1665, %v1657
    %v2106 = vpack.c.b16 %v1666, %v1658
    %v2107 = vpack.c.b16 %v1675, %v1667
    %v2108 = vpack.c.b16 %v1676, %v1668
    %v2109 = vpack.c.b16 %v1677, %v1669
    %v2110 = vpack.c.b16 %v1678, %v1670
    %v2111 = vpack.c.b16 %v1679, %v1671
    %v2112 = vpack.c.b16 %v1680, %v1672
    %v2113 = vpack.c.b16 %v1681, %v1673
    %v2114 = vpack.c.b16 %v1682, %v1674
    %v2115 = vpack.c.b16 %v1691, %v1683
    %v2116 = vpack.c.b16 %v1692, %v1684
    %v2117 = vpack.c.b16 %v1693, %v1685
    %v2118 = vpack.c.b16 %v1694, %v1686
    %v2119 = vpack.c.b16 %v1695, %v1687
    %v2120 = vpack.c.b16 %v1696, %v1688
    %v2121 = vpack.c.b16 %v1697, %v1689
    %v2122 = vpack.c.b16 %v1698, %v1690
    %v2123 = vpack.c.b16 %v1707, %v1699
    %v2124 = vpack.c.b16 %v1708, %v1700
    %v2125 = vpack.c.b16 %v1709, %v1701
    %v2126 = vpack.c.b16 %v1710, %v1702
    %v2127 = vpack.c.b16 %v1711, %v1703
    %v2128 = vpack.c.b16 %v1712, %v1704
    %v2129 = vpack.c.b16 %v1713, %v1705
    %v2130 = vpack.c.b16 %v1714, %v1706
    %v2131 = vpack.c.b16 %v1723, %v1715
    %v2132 = vpack.c.b16 %v1724, %v1716
    %v2133 = vpack.c.b16 %v1725, %v1717
    %v2134 = vpack.c.b16 %v1726, %v1718
    %v2135 = vpack.c.b16 %v1727, %v1719
    %v2136 = vpack.c.b16 %v1728, %v1720
    %v2137 = vpack.c.b16 %v1729, %v1721
    %v2138 = vpack.c.b16 %v1730, %v1722
    %v2139 = vpack.c.b16 %v1739, %v1731
    %v2140 = vpack.c.b16 %v1740, %v1732
    %v2141 = vpack.c.b16 %v1741, %v1733
    %v2142 = vpack.c.b16 %v1742, %v1734
    %v2143 = vpack.c.b16 %v1743, %v1735
    %v2144 = vpack.c.b16 %v1744, %v1736
    %v2145 = vpack.c.b16 %v1745, %v1737
    %v2146 = vpack.c.b16 %v1746, %v1738
    %v2147 = vpack.c.b16 %v1755, %v1747
    %v2148 = vpack.c.b16 %v1756, %v1748
    %v2149 = vpack.c.b16 %v1757, %v1749
    %v2150 = vpack.c.b16 %v1758, %v1750
    %v2151 = vpack.c.b16 %v1759, %v1751
    %v2152 = vpack.c.b16 %v1760, %v1752
    %v2153 = vpack.c.b16 %v1761, %v1753
    %v2154 = vpack.c.b16 %v1762, %v1754
    %v2155 = vpack.c.b16 %v1771, %v1763
    %v2156 = vpack.c.b16 %v1772, %v1764
    %v2157 = vpack.c.b16 %v1773, %v1765
    %v2158 = vpack.c.b16 %v1774, %v1766
    %v2159 = vpack.c.b16 %v1775, %v1767
    %v2160 = vpack.c.b16 %v1776, %v1768
    %v2161 = vpack.c.b16 %v1777, %v1769
    %v2162 = vpack.c.b16 %v1778, %v1770
    %v2163 = vpack.c.b16 %v1787, %v1779
    %v2164 = vpack.c.b16 %v1788, %v1780
    %v2165 = vpack.c.b16 %v1789, %v1781
    %v2166 = vpack.c.b16 %v1790, %v1782
    %v2167 = vpack.c.b16 %v1791, %v1783
    %v2168 = vpack.c.b16 %v1792, %v1784
    %v2169 = vpack.c.b16 %v1793, %v1785
    %v2170 = vpack.c.b16 %v1794, %v1786
    %v2171 = vpack.c.b16 %v1803, %v1795
    %v2172 = vpack.c.b16 %v1804, %v1796
    %v2173 = vpack.c.b16 %v1805, %v1797
    %v2174 = vpack.c.b16 %v1806, %v1798
    %v2175 = vpack.c.b16 %v1807, %v1799
    %v2176 = vpack.c.b16 %v1808, %v1800
    %v2177 = vpack.c.b16 %v1809, %v1801
    %v2178 = vpack.c.b16 %v1810, %v1802
    %v2179 = vpack.c.b16 %v1819, %v1811
    %v2180 = vpack.c.b16 %v1820, %v1812
    %v2181 = vpack.c.b16 %v1821, %v1813
    %v2182 = vpack.c.b16 %v1822, %v1814
    %v2183 = vpack.c.b16 %v1823, %v1815
    %v2184 = vpack.c.b16 %v1824, %v1816
    %v2185 = vpack.c.b16 %v1825, %v1817
    %v2186 = vpack.c.b16 %v1826, %v1818
    %v2187 = vpack.c.b16 %v1835, %v1827
    %v2188 = vpack.c.b16 %v1836, %v1828
    %v2189 = vpack.c.b16 %v1837, %v1829
    %v2190 = vpack.c.b16 %v1838, %v1830
    %v2191 = vpack.c.b16 %v1839, %v1831
    %v2192 = vpack.c.b16 %v1840, %v1832
    %v2193 = vpack.c.b16 %v1841, %v1833
    %v2194 = vpack.c.b16 %v1842, %v1834
    %v2195 = vpack.c.b16 %v1851, %v1843
    %v2196 = vpack.c.b16 %v1852, %v1844
    %v2197 = vpack.c.b16 %v1853, %v1845
    %v2198 = vpack.c.b16 %v1854, %v1846
    %v2199 = vpack.c.b16 %v1855, %v1847
    %v2200 = vpack.c.b16 %v1856, %v1848
    %v2201 = vpack.c.b16 %v1857, %v1849
    %v2202 = vpack.c.b16 %v1858, %v1850
    %v2203 = vpack.c.b16 %v1867, %v1859
    %v2204 = vpack.c.b16 %v1868, %v1860
    %v2205 = vpack.c.b16 %v1869, %v1861
    %v2206 = vpack.c.b16 %v1870, %v1862
    %v2207 = vpack.c.b16 %v1871, %v1863
    %v2208 = vpack.c.b16 %v1872, %v1864
    %v2209 = vpack.c.b16 %v1873, %v1865
    %v2210 = vpack.c.b16 %v1874, %v1866
    %v2211 = vpack.c.b16 %v1883, %v1875
    %v2212 = vpack.c.b16 %v1884, %v1876
    %v2213 = vpack.c.b16 %v1885, %v1877
    %v2214 = vpack.c.b16 %v1886, %v1878
    %v2215 = vpack.c.b16 %v1887, %v1879
    %v2216 = vpack.c.b16 %v1888, %v1880
    %v2217 = vpack.c.b16 %v1889, %v1881
    %v2218 = vpack.c.b16 %v1890, %v1882
    %v2219 = vpack.c.b16 %v1899, %v1891
    %v2220 = vpack.c.b16 %v1900, %v1892
    %v2221 = vpack.c.b16 %v1901, %v1893
    %v2222 = vpack.c.b16 %v1902, %v1894
    %v2223 = vpack.c.b16 %v1903, %v1895
    %v2224 = vpack.c.b16 %v1904, %v1896
    %v2225 = vpack.c.b16 %v1905, %v1897
    %v2226 = vpack.c.b16 %v1906, %v1898
    %v2227 = vpack.c.b16 %v1915, %v1907
    %v2228 = vpack.c.b16 %v1916, %v1908
    %v2229 = vpack.c.b16 %v1917, %v1909
    %v2230 = vpack.c.b16 %v1918, %v1910
    %v2231 = vpack.c.b16 %v1919, %v1911
    %v2232 = vpack.c.b16 %v1920, %v1912
    %v2233 = vpack.c.b16 %v1921, %v1913
    %v2234 = vpack.c.b16 %v1922, %v1914
    %v2235 = vpack.c.b16 %v1931, %v1923
    %v2236 = vpack.c.b16 %v1932, %v1924
    %v2237 = vpack.c.b16 %v1933, %v1925
    %v2238 = vpack.c.b16 %v1934, %v1926
    %v2239 = vpack.c.b16 %v1935, %v1927
    %v2240 = vpack.c.b16 %v1936, %v1928
    %v2241 = vpack.c.b16 %v1937, %v1929
    %v2242 = vpack.c.b16 %v1938, %v1930
    %v2243 = vpack.c.b16 %v1947, %v1939
    %v2244 = vpack.c.b16 %v1948, %v1940
    %v2245 = vpack.c.b16 %v1949, %v1941
    %v2246 = vpack.c.b16 %v1950, %v1942
    %v2247 = vpack.c.b16 %v1951, %v1943
    %v2248 = vpack.c.b16 %v1952, %v1944
    %v2249 = vpack.c.b16 %v1953, %v1945
    %v2250 = vpack.c.b16 %v1954, %v1946
    %v2251 = vpack.c.b16 %v1963, %v1955
    %v2252 = vpack.c.b16 %v1964, %v1956
    %v2253 = vpack.c.b16 %v1965, %v1957
    %v2254 = vpack.c.b16 %v1966, %v1958
    %v2255 = vpack.c.b16 %v1967, %v1959
    %v2256 = vpack.c.b16 %v1968, %v1960
    %v2257 = vpack.c.b16 %v1969, %v1961
    %v2258 = vpack.c.b16 %v1970, %v1962
    %v2259 = vpack.c.b16 %v1979, %v1971
    %v2260 = vpack.c.b16 %v1980, %v1972
    %v2261 = vpack.c.b16 %v1981, %v1973
    %v2262 = vpack.c.b16 %v1982, %v1974
    %v2263 = vpack.c.b16 %v1983, %v1975
    %v2264 = vpack.c.b16 %v1984, %v1976
    %v2265 = vpack.c.b16 %v1985, %v1977
    %v2266 = vpack.c.b16 %v1986, %v1978
    %v2267 = vpack.c.b16 %v1995, %v1987
    %v2268 = vpack.c.b16 %v1996, %v1988
    %v2269 = vpack.c.b16 %v1997, %v1989
    %v2270 = vpack.c.b16 %v1998, %v1990
    %v2271 = vpack.c.b16 %v1999, %v1991
    %v2272 = vpack.c.b16 %v2000, %v1992
    %v2273 = vpack.c.b16 %v2001, %v1993
    %v2274 = vpack.c.b16 %v2002, %v1994
    %v2275 = vpack.c.b16 %v2011, %v2003
    %v2276 = vpack.c.b16 %v2012, %v2004
    %v2277 = vpack.c.b16 %v2013, %v2005
    %v2278 = vpack.c.b16 %v2014, %v2006
    %v2279 = vpack.c.b16 %v2015, %v2007
    %v2280 = vpack.c.b16 %v2016, %v2008
    %v2281 = vpack.c.b16 %v2017, %v2009
    %v2282 = vpack.c.b16 %v2018, %v2010
    %v2283 = vpack.c.b16 %v2027, %v2019
    %v2284 = vpack.c.b16 %v2028, %v2020
    %v2285 = vpack.c.b16 %v2029, %v2021
    %v2286 = vpack.c.b16 %v2030, %v2022
    %v2287 = vpack.c.b16 %v2031, %v2023
    %v2288 = vpack.c.b16 %v2032, %v2024
    %v2289 = vpack.c.b16 %v2033, %v2025
    %v2290 = vpack.c.b16 %v2034, %v2026
    %2547 = vmatpush.bf16.msra.mxu0 %v2091
    %2548 = vmatpush.bf16.msra.mxu0 %v2083
    %2549 = vmatpush.bf16.msra.mxu0 %v2075
    %2550 = vmatpush.bf16.msra.mxu0 %v2067
    %2551 = vmatpush.bf16.msra.mxu0 %v2059
    %2552 = vmatpush.bf16.msra.mxu0 %v2051
    %2553 = vmatpush.bf16.msra.mxu0 %v2043
    %2554 = vmatpush.bf16.msra.mxu0 %v2035
    %2555 = vmatmul.bf16.gmra.mxu0 %v979
    %v2556 = vpop.f32.mrf.mxu0
    %v2557 = vadd.f32 0.0, %v2556
    %v2558 = vpop.f32.mrf.mxu0
    %v2559 = vadd.f32 0.0, %v2558
    %2560 = vmatmul.bf16.gmra.mxu0 %v999
    %v2561 = vpop.f32.mrf.mxu0
    %v2562 = vadd.f32 0.0, %v2561
    %v2563 = vpop.f32.mrf.mxu0
    %v2564 = vadd.f32 0.0, %v2563
    %2565 = vdwg.mxu0
    %2566 = vmatpush.bf16.msra.mxu0 %v2155
    %2567 = vmatpush.bf16.msra.mxu0 %v2147
    %2568 = vmatpush.bf16.msra.mxu0 %v2139
    %2569 = vmatpush.bf16.msra.mxu0 %v2131
    %2570 = vmatpush.bf16.msra.mxu0 %v2123
    %2571 = vmatpush.bf16.msra.mxu0 %v2115
    %2572 = vmatpush.bf16.msra.mxu0 %v2107
    %2573 = vmatpush.bf16.msra.mxu0 %v2099
    %2574 = vmatmul.bf16.gmra.mxu0 %v980
    %v2575 = vpop.f32.mrf.mxu0
    %v2576 = vadd.f32 %v2557, %v2575
    %v2577 = vpop.f32.mrf.mxu0
    %v2578 = vadd.f32 %v2559, %v2577
    %2579 = vmatmul.bf16.gmra.mxu0 %v1000
    %v2580 = vpop.f32.mrf.mxu0
    %v2581 = vadd.f32 %v2562, %v2580
    %v2582 = vpop.f32.mrf.mxu0
    %v2583 = vadd.f32 %v2564, %v2582
    %2584 = vdwg.mxu0
    %2585 = vmatpush.bf16.msra.mxu0 %v2219
    %2586 = vmatpush.bf16.msra.mxu0 %v2211
    %2587 = vmatpush.bf16.msra.mxu0 %v2203
    %2588 = vmatpush.bf16.msra.mxu0 %v2195
    %2589 = vmatpush.bf16.msra.mxu0 %v2187
    %2590 = vmatpush.bf16.msra.mxu0 %v2179
    %2591 = vmatpush.bf16.msra.mxu0 %v2171
    %2592 = vmatpush.bf16.msra.mxu0 %v2163
    %2593 = vmatmul.bf16.gmra.mxu0 %v981
    %v2594 = vpop.f32.mrf.mxu0
    %v2595 = vadd.f32 %v2576, %v2594
    %v2596 = vpop.f32.mrf.mxu0
    %v2597 = vadd.f32 %v2578, %v2596
    %2598 = vmatmul.bf16.gmra.mxu0 %v1001
    %v2599 = vpop.f32.mrf.mxu0
    %v2600 = vadd.f32 %v2581, %v2599
    %v2601 = vpop.f32.mrf.mxu0
    %v2602 = vadd.f32 %v2583, %v2601
    %2603 = vdwg.mxu0
    %2604 = vmatpush.bf16.msra.mxu0 %v2283
    %2605 = vmatpush.bf16.msra.mxu0 %v2275
    %2606 = vmatpush.bf16.msra.mxu0 %v2267
    %2607 = vmatpush.bf16.msra.mxu0 %v2259
    %2608 = vmatpush.bf16.msra.mxu0 %v2251
    %2609 = vmatpush.bf16.msra.mxu0 %v2243
    %2610 = vmatpush.bf16.msra.mxu0 %v2235
    %2611 = vmatpush.bf16.msra.mxu0 %v2227
    %2612 = vmatmul.bf16.gmra.mxu0 %v982
    %v2613 = vpop.f32.mrf.mxu0
    %v2614 = vadd.f32 %v2595, %v2613
    %v2615 = vpop.f32.mrf.mxu0
    %v2616 = vadd.f32 %v2597, %v2615
    %2617 = vmatmul.bf16.gmra.mxu0 %v1002
    %v2618 = vpop.f32.mrf.mxu0
    %v2619 = vadd.f32 %v2600, %v2618
    %v2620 = vpop.f32.mrf.mxu0
    %v2621 = vadd.f32 %v2602, %v2620
    %2622 = vdwg.mxu0
    %2623 = vmatpush.bf16.msra.mxu0 %v2092
    %2624 = vmatpush.bf16.msra.mxu0 %v2084
    %2625 = vmatpush.bf16.msra.mxu0 %v2076
    %2626 = vmatpush.bf16.msra.mxu0 %v2068
    %2627 = vmatpush.bf16.msra.mxu0 %v2060
    %2628 = vmatpush.bf16.msra.mxu0 %v2052
    %2629 = vmatpush.bf16.msra.mxu0 %v2044
    %2630 = vmatpush.bf16.msra.mxu0 %v2036
    %2631 = vmatmul.bf16.gmra.mxu0 %v979
    %v2632 = vpop.f32.mrf.mxu0
    %v2633 = vadd.f32 0.0, %v2632
    %v2634 = vpop.f32.mrf.mxu0
    %v2635 = vadd.f32 0.0, %v2634
    %2636 = vmatmul.bf16.gmra.mxu0 %v999
    %v2637 = vpop.f32.mrf.mxu0
    %v2638 = vadd.f32 0.0, %v2637
    %v2639 = vpop.f32.mrf.mxu0
    %v2640 = vadd.f32 0.0, %v2639
    %2641 = vdwg.mxu0
    %2642 = vmatpush.bf16.msra.mxu0 %v2156
    %2643 = vmatpush.bf16.msra.mxu0 %v2148
    %2644 = vmatpush.bf16.msra.mxu0 %v2140
    %2645 = vmatpush.bf16.msra.mxu0 %v2132
    %2646 = vmatpush.bf16.msra.mxu0 %v2124
    %2647 = vmatpush.bf16.msra.mxu0 %v2116
    %2648 = vmatpush.bf16.msra.mxu0 %v2108
    %2649 = vmatpush.bf16.msra.mxu0 %v2100
    %2650 = vmatmul.bf16.gmra.mxu0 %v980
    %v2651 = vpop.f32.mrf.mxu0
    %v2652 = vadd.f32 %v2633, %v2651
    %v2653 = vpop.f32.mrf.mxu0
    %v2654 = vadd.f32 %v2635, %v2653
    %2655 = vmatmul.bf16.gmra.mxu0 %v1000
    %v2656 = vpop.f32.mrf.mxu0
    %v2657 = vadd.f32 %v2638, %v2656
    %v2658 = vpop.f32.mrf.mxu0
    %v2659 = vadd.f32 %v2640, %v2658
    %2660 = vdwg.mxu0
    %2661 = vmatpush.bf16.msra.mxu0 %v2220
    %2662 = vmatpush.bf16.msra.mxu0 %v2212
    %2663 = vmatpush.bf16.msra.mxu0 %v2204
    %2664 = vmatpush.bf16.msra.mxu0 %v2196
    %2665 = vmatpush.bf16.msra.mxu0 %v2188
    %2666 = vmatpush.bf16.msra.mxu0 %v2180
    %2667 = vmatpush.bf16.msra.mxu0 %v2172
    %2668 = vmatpush.bf16.msra.mxu0 %v2164
    %2669 = vmatmul.bf16.gmra.mxu0 %v981
    %v2670 = vpop.f32.mrf.mxu0
    %v2671 = vadd.f32 %v2652, %v2670
    %v2672 = vpop.f32.mrf.mxu0
    %v2673 = vadd.f32 %v2654, %v2672
    %2674 = vmatmul.bf16.gmra.mxu0 %v1001
    %v2675 = vpop.f32.mrf.mxu0
    %v2676 = vadd.f32 %v2657, %v2675
    %v2677 = vpop.f32.mrf.mxu0
    %v2678 = vadd.f32 %v2659, %v2677
    %2679 = vdwg.mxu0
    %2680 = vmatpush.bf16.msra.mxu0 %v2284
    %2681 = vmatpush.bf16.msra.mxu0 %v2276
    %2682 = vmatpush.bf16.msra.mxu0 %v2268
    %2683 = vmatpush.bf16.msra.mxu0 %v2260
    %2684 = vmatpush.bf16.msra.mxu0 %v2252
    %2685 = vmatpush.bf16.msra.mxu0 %v2244
    %2686 = vmatpush.bf16.msra.mxu0 %v2236
    %2687 = vmatpush.bf16.msra.mxu0 %v2228
    %2688 = vmatmul.bf16.gmra.mxu0 %v982
    %v2689 = vpop.f32.mrf.mxu0
    %v2690 = vadd.f32 %v2671, %v2689
    %v2691 = vpop.f32.mrf.mxu0
    %v2692 = vadd.f32 %v2673, %v2691
    %2693 = vmatmul.bf16.gmra.mxu0 %v1002
    %v2694 = vpop.f32.mrf.mxu0
    %v2695 = vadd.f32 %v2676, %v2694
    %v2696 = vpop.f32.mrf.mxu0
    %v2697 = vadd.f32 %v2678, %v2696
    %2698 = vdwg.mxu0
    %2699 = vmatpush.bf16.msra.mxu0 %v2093
    %2700 = vmatpush.bf16.msra.mxu0 %v2085
    %2701 = vmatpush.bf16.msra.mxu0 %v2077
    %2702 = vmatpush.bf16.msra.mxu0 %v2069
    %2703 = vmatpush.bf16.msra.mxu0 %v2061
    %2704 = vmatpush.bf16.msra.mxu0 %v2053
    %2705 = vmatpush.bf16.msra.mxu0 %v2045
    %2706 = vmatpush.bf16.msra.mxu0 %v2037
    %2707 = vmatmul.bf16.gmra.mxu0 %v979
    %v2708 = vpop.f32.mrf.mxu0
    %v2709 = vadd.f32 0.0, %v2708
    %v2710 = vpop.f32.mrf.mxu0
    %v2711 = vadd.f32 0.0, %v2710
    %2712 = vmatmul.bf16.gmra.mxu0 %v999
    %v2713 = vpop.f32.mrf.mxu0
    %v2714 = vadd.f32 0.0, %v2713
    %v2715 = vpop.f32.mrf.mxu0
    %v2716 = vadd.f32 0.0, %v2715
    %2717 = vdwg.mxu0
    %2718 = vmatpush.bf16.msra.mxu0 %v2157
    %2719 = vmatpush.bf16.msra.mxu0 %v2149
    %2720 = vmatpush.bf16.msra.mxu0 %v2141
    %2721 = vmatpush.bf16.msra.mxu0 %v2133
    %2722 = vmatpush.bf16.msra.mxu0 %v2125
    %2723 = vmatpush.bf16.msra.mxu0 %v2117
    %2724 = vmatpush.bf16.msra.mxu0 %v2109
    %2725 = vmatpush.bf16.msra.mxu0 %v2101
    %2726 = vmatmul.bf16.gmra.mxu0 %v980
    %v2727 = vpop.f32.mrf.mxu0
    %v2728 = vadd.f32 %v2709, %v2727
    %v2729 = vpop.f32.mrf.mxu0
    %v2730 = vadd.f32 %v2711, %v2729
    %2731 = vmatmul.bf16.gmra.mxu0 %v1000
    %v2732 = vpop.f32.mrf.mxu0
    %v2733 = vadd.f32 %v2714, %v2732
    %v2734 = vpop.f32.mrf.mxu0
    %v2735 = vadd.f32 %v2716, %v2734
    %2736 = vdwg.mxu0
    %2737 = vmatpush.bf16.msra.mxu0 %v2221
    %2738 = vmatpush.bf16.msra.mxu0 %v2213
    %2739 = vmatpush.bf16.msra.mxu0 %v2205
    %2740 = vmatpush.bf16.msra.mxu0 %v2197
    %2741 = vmatpush.bf16.msra.mxu0 %v2189
    %2742 = vmatpush.bf16.msra.mxu0 %v2181
    %2743 = vmatpush.bf16.msra.mxu0 %v2173
    %2744 = vmatpush.bf16.msra.mxu0 %v2165
    %2745 = vmatmul.bf16.gmra.mxu0 %v981
    %v2746 = vpop.f32.mrf.mxu0
    %v2747 = vadd.f32 %v2728, %v2746
    %v2748 = vpop.f32.mrf.mxu0
    %v2749 = vadd.f32 %v2730, %v2748
    %2750 = vmatmul.bf16.gmra.mxu0 %v1001
    %v2751 = vpop.f32.mrf.mxu0
    %v2752 = vadd.f32 %v2733, %v2751
    %v2753 = vpop.f32.mrf.mxu0
    %v2754 = vadd.f32 %v2735, %v2753
    %2755 = vdwg.mxu0
    %2756 = vmatpush.bf16.msra.mxu0 %v2285
    %2757 = vmatpush.bf16.msra.mxu0 %v2277
    %2758 = vmatpush.bf16.msra.mxu0 %v2269
    %2759 = vmatpush.bf16.msra.mxu0 %v2261
    %2760 = vmatpush.bf16.msra.mxu0 %v2253
    %2761 = vmatpush.bf16.msra.mxu0 %v2245
    %2762 = vmatpush.bf16.msra.mxu0 %v2237
    %2763 = vmatpush.bf16.msra.mxu0 %v2229
    %2764 = vmatmul.bf16.gmra.mxu0 %v982
    %v2765 = vpop.f32.mrf.mxu0
    %v2766 = vadd.f32 %v2747, %v2765
    %v2767 = vpop.f32.mrf.mxu0
    %v2768 = vadd.f32 %v2749, %v2767
    %2769 = vmatmul.bf16.gmra.mxu0 %v1002
    %v2770 = vpop.f32.mrf.mxu0
    %v2771 = vadd.f32 %v2752, %v2770
    %v2772 = vpop.f32.mrf.mxu0
    %v2773 = vadd.f32 %v2754, %v2772
    %2774 = vdwg.mxu0
    %2775 = vmatpush.bf16.msra.mxu0 %v2094
    %2776 = vmatpush.bf16.msra.mxu0 %v2086
    %2777 = vmatpush.bf16.msra.mxu0 %v2078
    %2778 = vmatpush.bf16.msra.mxu0 %v2070
    %2779 = vmatpush.bf16.msra.mxu0 %v2062
    %2780 = vmatpush.bf16.msra.mxu0 %v2054
    %2781 = vmatpush.bf16.msra.mxu0 %v2046
    %2782 = vmatpush.bf16.msra.mxu0 %v2038
    %2783 = vmatmul.bf16.gmra.mxu0 %v979
    %v2784 = vpop.f32.mrf.mxu0
    %v2785 = vadd.f32 0.0, %v2784
    %v2786 = vpop.f32.mrf.mxu0
    %v2787 = vadd.f32 0.0, %v2786
    %2788 = vmatmul.bf16.gmra.mxu0 %v999
    %v2789 = vpop.f32.mrf.mxu0
    %v2790 = vadd.f32 0.0, %v2789
    %v2791 = vpop.f32.mrf.mxu0
    %v2792 = vadd.f32 0.0, %v2791
    %2793 = vdwg.mxu0
    %2794 = vmatpush.bf16.msra.mxu0 %v2158
    %2795 = vmatpush.bf16.msra.mxu0 %v2150
    %2796 = vmatpush.bf16.msra.mxu0 %v2142
    %2797 = vmatpush.bf16.msra.mxu0 %v2134
    %2798 = vmatpush.bf16.msra.mxu0 %v2126
    %2799 = vmatpush.bf16.msra.mxu0 %v2118
    %2800 = vmatpush.bf16.msra.mxu0 %v2110
    %2801 = vmatpush.bf16.msra.mxu0 %v2102
    %2802 = vmatmul.bf16.gmra.mxu0 %v980
    %v2803 = vpop.f32.mrf.mxu0
    %v2804 = vadd.f32 %v2785, %v2803
    %v2805 = vpop.f32.mrf.mxu0
    %v2806 = vadd.f32 %v2787, %v2805
    %2807 = vmatmul.bf16.gmra.mxu0 %v1000
    %v2808 = vpop.f32.mrf.mxu0
    %v2809 = vadd.f32 %v2790, %v2808
    %v2810 = vpop.f32.mrf.mxu0
    %v2811 = vadd.f32 %v2792, %v2810
    %2812 = vdwg.mxu0
    %2813 = vmatpush.bf16.msra.mxu0 %v2222
    %2814 = vmatpush.bf16.msra.mxu0 %v2214
    %2815 = vmatpush.bf16.msra.mxu0 %v2206
    %2816 = vmatpush.bf16.msra.mxu0 %v2198
    %2817 = vmatpush.bf16.msra.mxu0 %v2190
    %2818 = vmatpush.bf16.msra.mxu0 %v2182
    %2819 = vmatpush.bf16.msra.mxu0 %v2174
    %2820 = vmatpush.bf16.msra.mxu0 %v2166
    %2821 = vmatmul.bf16.gmra.mxu0 %v981
    %v2822 = vpop.f32.mrf.mxu0
    %v2823 = vadd.f32 %v2804, %v2822
    %v2824 = vpop.f32.mrf.mxu0
    %v2825 = vadd.f32 %v2806, %v2824
    %2826 = vmatmul.bf16.gmra.mxu0 %v1001
    %v2827 = vpop.f32.mrf.mxu0
    %v2828 = vadd.f32 %v2809, %v2827
    %v2829 = vpop.f32.mrf.mxu0
    %v2830 = vadd.f32 %v2811, %v2829
    %2831 = vdwg.mxu0
    %2832 = vmatpush.bf16.msra.mxu0 %v2286
    %2833 = vmatpush.bf16.msra.mxu0 %v2278
    %2834 = vmatpush.bf16.msra.mxu0 %v2270
    %2835 = vmatpush.bf16.msra.mxu0 %v2262
    %2836 = vmatpush.bf16.msra.mxu0 %v2254
    %2837 = vmatpush.bf16.msra.mxu0 %v2246
    %2838 = vmatpush.bf16.msra.mxu0 %v2238
    %2839 = vmatpush.bf16.msra.mxu0 %v2230
    %2840 = vmatmul.bf16.gmra.mxu0 %v982
    %v2841 = vpop.f32.mrf.mxu0
    %v2842 = vadd.f32 %v2823, %v2841
    %v2843 = vpop.f32.mrf.mxu0
    %v2844 = vadd.f32 %v2825, %v2843
    %2845 = vmatmul.bf16.gmra.mxu0 %v1002
    %v2846 = vpop.f32.mrf.mxu0
    %v2847 = vadd.f32 %v2828, %v2846
    %v2848 = vpop.f32.mrf.mxu0
    %v2849 = vadd.f32 %v2830, %v2848
    %2850 = vdwg.mxu0
    %2851 = vmatpush.bf16.msra.mxu0 %v2095
    %2852 = vmatpush.bf16.msra.mxu0 %v2087
    %2853 = vmatpush.bf16.msra.mxu0 %v2079
    %2854 = vmatpush.bf16.msra.mxu0 %v2071
    %2855 = vmatpush.bf16.msra.mxu0 %v2063
    %2856 = vmatpush.bf16.msra.mxu0 %v2055
    %2857 = vmatpush.bf16.msra.mxu0 %v2047
    %2858 = vmatpush.bf16.msra.mxu0 %v2039
    %2859 = vmatmul.bf16.gmra.mxu0 %v979
    %v2860 = vpop.f32.mrf.mxu0
    %v2861 = vadd.f32 0.0, %v2860
    %v2862 = vpop.f32.mrf.mxu0
    %v2863 = vadd.f32 0.0, %v2862
    %2864 = vmatmul.bf16.gmra.mxu0 %v999
    %v2865 = vpop.f32.mrf.mxu0
    %v2866 = vadd.f32 0.0, %v2865
    %v2867 = vpop.f32.mrf.mxu0
    %v2868 = vadd.f32 0.0, %v2867
    %2869 = vdwg.mxu0
    %2870 = vmatpush.bf16.msra.mxu0 %v2159
    %2871 = vmatpush.bf16.msra.mxu0 %v2151
    %2872 = vmatpush.bf16.msra.mxu0 %v2143
    %2873 = vmatpush.bf16.msra.mxu0 %v2135
    %2874 = vmatpush.bf16.msra.mxu0 %v2127
    %2875 = vmatpush.bf16.msra.mxu0 %v2119
    %2876 = vmatpush.bf16.msra.mxu0 %v2111
    %2877 = vmatpush.bf16.msra.mxu0 %v2103
    %2878 = vmatmul.bf16.gmra.mxu0 %v980
    %v2879 = vpop.f32.mrf.mxu0
    %v2880 = vadd.f32 %v2861, %v2879
    %v2881 = vpop.f32.mrf.mxu0
    %v2882 = vadd.f32 %v2863, %v2881
    %2883 = vmatmul.bf16.gmra.mxu0 %v1000
    %v2884 = vpop.f32.mrf.mxu0
    %v2885 = vadd.f32 %v2866, %v2884
    %v2886 = vpop.f32.mrf.mxu0
    %v2887 = vadd.f32 %v2868, %v2886
    %2888 = vdwg.mxu0
    %2889 = vmatpush.bf16.msra.mxu0 %v2223
    %2890 = vmatpush.bf16.msra.mxu0 %v2215
    %2891 = vmatpush.bf16.msra.mxu0 %v2207
    %2892 = vmatpush.bf16.msra.mxu0 %v2199
    %2893 = vmatpush.bf16.msra.mxu0 %v2191
    %2894 = vmatpush.bf16.msra.mxu0 %v2183
    %2895 = vmatpush.bf16.msra.mxu0 %v2175
    %2896 = vmatpush.bf16.msra.mxu0 %v2167
    %2897 = vmatmul.bf16.gmra.mxu0 %v981
    %v2898 = vpop.f32.mrf.mxu0
    %v2899 = vadd.f32 %v2880, %v2898
    %v2900 = vpop.f32.mrf.mxu0
    %v2901 = vadd.f32 %v2882, %v2900
    %2902 = vmatmul.bf16.gmra.mxu0 %v1001
    %v2903 = vpop.f32.mrf.mxu0
    %v2904 = vadd.f32 %v2885, %v2903
    %v2905 = vpop.f32.mrf.mxu0
    %v2906 = vadd.f32 %v2887, %v2905
    %2907 = vdwg.mxu0
    %2908 = vmatpush.bf16.msra.mxu0 %v2287
    %2909 = vmatpush.bf16.msra.mxu0 %v2279
    %2910 = vmatpush.bf16.msra.mxu0 %v2271
    %2911 = vmatpush.bf16.msra.mxu0 %v2263
    %2912 = vmatpush.bf16.msra.mxu0 %v2255
    %2913 = vmatpush.bf16.msra.mxu0 %v2247
    %2914 = vmatpush.bf16.msra.mxu0 %v2239
    %2915 = vmatpush.bf16.msra.mxu0 %v2231
    %2916 = vmatmul.bf16.gmra.mxu0 %v982
    %v2917 = vpop.f32.mrf.mxu0
    %v2918 = vadd.f32 %v2899, %v2917
    %v2919 = vpop.f32.mrf.mxu0
    %v2920 = vadd.f32 %v2901, %v2919
    %2921 = vmatmul.bf16.gmra.mxu0 %v1002
    %v2922 = vpop.f32.mrf.mxu0
    %v2923 = vadd.f32 %v2904, %v2922
    %v2924 = vpop.f32.mrf.mxu0
    %v2925 = vadd.f32 %v2906, %v2924
    %2926 = vdwg.mxu0
    %2927 = vmatpush.bf16.msra.mxu0 %v2096
    %2928 = vmatpush.bf16.msra.mxu0 %v2088
    %2929 = vmatpush.bf16.msra.mxu0 %v2080
    %2930 = vmatpush.bf16.msra.mxu0 %v2072
    %2931 = vmatpush.bf16.msra.mxu0 %v2064
    %2932 = vmatpush.bf16.msra.mxu0 %v2056
    %2933 = vmatpush.bf16.msra.mxu0 %v2048
    %2934 = vmatpush.bf16.msra.mxu0 %v2040
    %2935 = vmatmul.bf16.gmra.mxu0 %v979
    %v2936 = vpop.f32.mrf.mxu0
    %v2937 = vadd.f32 0.0, %v2936
    %v2938 = vpop.f32.mrf.mxu0
    %v2939 = vadd.f32 0.0, %v2938
    %2940 = vmatmul.bf16.gmra.mxu0 %v999
    %v2941 = vpop.f32.mrf.mxu0
    %v2942 = vadd.f32 0.0, %v2941
    %v2943 = vpop.f32.mrf.mxu0
    %v2944 = vadd.f32 0.0, %v2943
    %2945 = vdwg.mxu0
    %2946 = vmatpush.bf16.msra.mxu0 %v2160
    %2947 = vmatpush.bf16.msra.mxu0 %v2152
    %2948 = vmatpush.bf16.msra.mxu0 %v2144
    %2949 = vmatpush.bf16.msra.mxu0 %v2136
    %2950 = vmatpush.bf16.msra.mxu0 %v2128
    %2951 = vmatpush.bf16.msra.mxu0 %v2120
    %2952 = vmatpush.bf16.msra.mxu0 %v2112
    %2953 = vmatpush.bf16.msra.mxu0 %v2104
    %2954 = vmatmul.bf16.gmra.mxu0 %v980
    %v2955 = vpop.f32.mrf.mxu0
    %v2956 = vadd.f32 %v2937, %v2955
    %v2957 = vpop.f32.mrf.mxu0
    %v2958 = vadd.f32 %v2939, %v2957
    %2959 = vmatmul.bf16.gmra.mxu0 %v1000
    %v2960 = vpop.f32.mrf.mxu0
    %v2961 = vadd.f32 %v2942, %v2960
    %v2962 = vpop.f32.mrf.mxu0
    %v2963 = vadd.f32 %v2944, %v2962
    %2964 = vdwg.mxu0
    %2965 = vmatpush.bf16.msra.mxu0 %v2224
    %2966 = vmatpush.bf16.msra.mxu0 %v2216
    %2967 = vmatpush.bf16.msra.mxu0 %v2208
    %2968 = vmatpush.bf16.msra.mxu0 %v2200
    %2969 = vmatpush.bf16.msra.mxu0 %v2192
    %2970 = vmatpush.bf16.msra.mxu0 %v2184
    %2971 = vmatpush.bf16.msra.mxu0 %v2176
    %2972 = vmatpush.bf16.msra.mxu0 %v2168
    %2973 = vmatmul.bf16.gmra.mxu0 %v981
    %v2974 = vpop.f32.mrf.mxu0
    %v2975 = vadd.f32 %v2956, %v2974
    %v2976 = vpop.f32.mrf.mxu0
    %v2977 = vadd.f32 %v2958, %v2976
    %2978 = vmatmul.bf16.gmra.mxu0 %v1001
    %v2979 = vpop.f32.mrf.mxu0
    %v2980 = vadd.f32 %v2961, %v2979
    %v2981 = vpop.f32.mrf.mxu0
    %v2982 = vadd.f32 %v2963, %v2981
    %2983 = vdwg.mxu0
    %2984 = vmatpush.bf16.msra.mxu0 %v2288
    %2985 = vmatpush.bf16.msra.mxu0 %v2280
    %2986 = vmatpush.bf16.msra.mxu0 %v2272
    %2987 = vmatpush.bf16.msra.mxu0 %v2264
    %2988 = vmatpush.bf16.msra.mxu0 %v2256
    %2989 = vmatpush.bf16.msra.mxu0 %v2248
    %2990 = vmatpush.bf16.msra.mxu0 %v2240
    %2991 = vmatpush.bf16.msra.mxu0 %v2232
    %2992 = vmatmul.bf16.gmra.mxu0 %v982
    %v2993 = vpop.f32.mrf.mxu0
    %v2994 = vadd.f32 %v2975, %v2993
    %v2995 = vpop.f32.mrf.mxu0
    %v2996 = vadd.f32 %v2977, %v2995
    %2997 = vmatmul.bf16.gmra.mxu0 %v1002
    %v2998 = vpop.f32.mrf.mxu0
    %v2999 = vadd.f32 %v2980, %v2998
    %v3000 = vpop.f32.mrf.mxu0
    %v3001 = vadd.f32 %v2982, %v3000
    %3002 = vdwg.mxu0
    %3003 = vmatpush.bf16.msra.mxu0 %v2097
    %3004 = vmatpush.bf16.msra.mxu0 %v2089
    %3005 = vmatpush.bf16.msra.mxu0 %v2081
    %3006 = vmatpush.bf16.msra.mxu0 %v2073
    %3007 = vmatpush.bf16.msra.mxu0 %v2065
    %3008 = vmatpush.bf16.msra.mxu0 %v2057
    %3009 = vmatpush.bf16.msra.mxu0 %v2049
    %3010 = vmatpush.bf16.msra.mxu0 %v2041
    %3011 = vmatmul.bf16.gmra.mxu0 %v979
    %v3012 = vpop.f32.mrf.mxu0
    %v3013 = vadd.f32 0.0, %v3012
    %v3014 = vpop.f32.mrf.mxu0
    %v3015 = vadd.f32 0.0, %v3014
    %3016 = vmatmul.bf16.gmra.mxu0 %v999
    %v3017 = vpop.f32.mrf.mxu0
    %v3018 = vadd.f32 0.0, %v3017
    %v3019 = vpop.f32.mrf.mxu0
    %v3020 = vadd.f32 0.0, %v3019
    %3021 = vdwg.mxu0
    %3022 = vmatpush.bf16.msra.mxu0 %v2161
    %3023 = vmatpush.bf16.msra.mxu0 %v2153
    %3024 = vmatpush.bf16.msra.mxu0 %v2145
    %3025 = vmatpush.bf16.msra.mxu0 %v2137
    %3026 = vmatpush.bf16.msra.mxu0 %v2129
    %3027 = vmatpush.bf16.msra.mxu0 %v2121
    %3028 = vmatpush.bf16.msra.mxu0 %v2113
    %3029 = vmatpush.bf16.msra.mxu0 %v2105
    %3030 = vmatmul.bf16.gmra.mxu0 %v980
    %v3031 = vpop.f32.mrf.mxu0
    %v3032 = vadd.f32 %v3013, %v3031
    %v3033 = vpop.f32.mrf.mxu0
    %v3034 = vadd.f32 %v3015, %v3033
    %3035 = vmatmul.bf16.gmra.mxu0 %v1000
    %v3036 = vpop.f32.mrf.mxu0
    %v3037 = vadd.f32 %v3018, %v3036
    %v3038 = vpop.f32.mrf.mxu0
    %v3039 = vadd.f32 %v3020, %v3038
    %3040 = vdwg.mxu0
    %3041 = vmatpush.bf16.msra.mxu0 %v2225
    %3042 = vmatpush.bf16.msra.mxu0 %v2217
    %3043 = vmatpush.bf16.msra.mxu0 %v2209
    %3044 = vmatpush.bf16.msra.mxu0 %v2201
    %3045 = vmatpush.bf16.msra.mxu0 %v2193
    %3046 = vmatpush.bf16.msra.mxu0 %v2185
    %3047 = vmatpush.bf16.msra.mxu0 %v2177
    %3048 = vmatpush.bf16.msra.mxu0 %v2169
    %3049 = vmatmul.bf16.gmra.mxu0 %v981
    %v3050 = vpop.f32.mrf.mxu0
    %v3051 = vadd.f32 %v3032, %v3050
    %v3052 = vpop.f32.mrf.mxu0
    %v3053 = vadd.f32 %v3034, %v3052
    %3054 = vmatmul.bf16.gmra.mxu0 %v1001
    %v3055 = vpop.f32.mrf.mxu0
    %v3056 = vadd.f32 %v3037, %v3055
    %v3057 = vpop.f32.mrf.mxu0
    %v3058 = vadd.f32 %v3039, %v3057
    %3059 = vdwg.mxu0
    %3060 = vmatpush.bf16.msra.mxu0 %v2289
    %3061 = vmatpush.bf16.msra.mxu0 %v2281
    %3062 = vmatpush.bf16.msra.mxu0 %v2273
    %3063 = vmatpush.bf16.msra.mxu0 %v2265
    %3064 = vmatpush.bf16.msra.mxu0 %v2257
    %3065 = vmatpush.bf16.msra.mxu0 %v2249
    %3066 = vmatpush.bf16.msra.mxu0 %v2241
    %3067 = vmatpush.bf16.msra.mxu0 %v2233
    %3068 = vmatmul.bf16.gmra.mxu0 %v982
    %v3069 = vpop.f32.mrf.mxu0
    %v3070 = vadd.f32 %v3051, %v3069
    %v3071 = vpop.f32.mrf.mxu0
    %v3072 = vadd.f32 %v3053, %v3071
    %3073 = vmatmul.bf16.gmra.mxu0 %v1002
    %v3074 = vpop.f32.mrf.mxu0
    %v3075 = vadd.f32 %v3056, %v3074
    %v3076 = vpop.f32.mrf.mxu0
    %v3077 = vadd.f32 %v3058, %v3076
    %3078 = vdwg.mxu0
    %3079 = vmatpush.bf16.msra.mxu0 %v2098
    %3080 = vmatpush.bf16.msra.mxu0 %v2090
    %3081 = vmatpush.bf16.msra.mxu0 %v2082
    %3082 = vmatpush.bf16.msra.mxu0 %v2074
    %3083 = vmatpush.bf16.msra.mxu0 %v2066
    %3084 = vmatpush.bf16.msra.mxu0 %v2058
    %3085 = vmatpush.bf16.msra.mxu0 %v2050
    %3086 = vmatpush.bf16.msra.mxu0 %v2042
    %3087 = vmatmul.bf16.gmra.mxu0 %v979
    %v3088 = vpop.f32.mrf.mxu0
    %v3089 = vadd.f32 0.0, %v3088
    %v3090 = vpop.f32.mrf.mxu0
    %v3091 = vadd.f32 0.0, %v3090
    %3092 = vmatmul.bf16.gmra.mxu0 %v999
    %v3093 = vpop.f32.mrf.mxu0
    %v3094 = vadd.f32 0.0, %v3093
    %v3095 = vpop.f32.mrf.mxu0
    %v3096 = vadd.f32 0.0, %v3095
    %3097 = vdwg.mxu0
    %3098 = vmatpush.bf16.msra.mxu0 %v2162
    %3099 = vmatpush.bf16.msra.mxu0 %v2154
    %3100 = vmatpush.bf16.msra.mxu0 %v2146
    %3101 = vmatpush.bf16.msra.mxu0 %v2138
    %3102 = vmatpush.bf16.msra.mxu0 %v2130
    %3103 = vmatpush.bf16.msra.mxu0 %v2122
    %3104 = vmatpush.bf16.msra.mxu0 %v2114
    %3105 = vmatpush.bf16.msra.mxu0 %v2106
    %3106 = vmatmul.bf16.gmra.mxu0 %v980
    %v3107 = vpop.f32.mrf.mxu0
    %v3108 = vadd.f32 %v3089, %v3107
    %v3109 = vpop.f32.mrf.mxu0
    %v3110 = vadd.f32 %v3091, %v3109
    %3111 = vmatmul.bf16.gmra.mxu0 %v1000
    %v3112 = vpop.f32.mrf.mxu0
    %v3113 = vadd.f32 %v3094, %v3112
    %v3114 = vpop.f32.mrf.mxu0
    %v3115 = vadd.f32 %v3096, %v3114
    %3116 = vdwg.mxu0
    %3117 = vmatpush.bf16.msra.mxu0 %v2226
    %3118 = vmatpush.bf16.msra.mxu0 %v2218
    %3119 = vmatpush.bf16.msra.mxu0 %v2210
    %3120 = vmatpush.bf16.msra.mxu0 %v2202
    %3121 = vmatpush.bf16.msra.mxu0 %v2194
    %3122 = vmatpush.bf16.msra.mxu0 %v2186
    %3123 = vmatpush.bf16.msra.mxu0 %v2178
    %3124 = vmatpush.bf16.msra.mxu0 %v2170
    %3125 = vmatmul.bf16.gmra.mxu0 %v981
    %v3126 = vpop.f32.mrf.mxu0
    %v3127 = vadd.f32 %v3108, %v3126
    %v3128 = vpop.f32.mrf.mxu0
    %v3129 = vadd.f32 %v3110, %v3128
    %3130 = vmatmul.bf16.gmra.mxu0 %v1001
    %v3131 = vpop.f32.mrf.mxu0
    %v3132 = vadd.f32 %v3113, %v3131
    %v3133 = vpop.f32.mrf.mxu0
    %v3134 = vadd.f32 %v3115, %v3133
    %3135 = vdwg.mxu0
    %3136 = vmatpush.bf16.msra.mxu0 %v2290
    %3137 = vmatpush.bf16.msra.mxu0 %v2282
    %3138 = vmatpush.bf16.msra.mxu0 %v2274
    %3139 = vmatpush.bf16.msra.mxu0 %v2266
    %3140 = vmatpush.bf16.msra.mxu0 %v2258
    %3141 = vmatpush.bf16.msra.mxu0 %v2250
    %3142 = vmatpush.bf16.msra.mxu0 %v2242
    %3143 = vmatpush.bf16.msra.mxu0 %v2234
    %3144 = vmatmul.bf16.gmra.mxu0 %v982
    %v3145 = vpop.f32.mrf.mxu0
    %v3146 = vadd.f32 %v3127, %v3145
    %v3147 = vpop.f32.mrf.mxu0
    %v3148 = vadd.f32 %v3129, %v3147
    %3149 = vmatmul.bf16.gmra.mxu0 %v1002
    %v3150 = vpop.f32.mrf.mxu0
    %v3151 = vadd.f32 %v3132, %v3150
    %v3152 = vpop.f32.mrf.mxu0
    %v3153 = vadd.f32 %v3134, %v3152
    %3154 = vdwg.mxu0
    %v3163 = vrot.slane %v3070, 7
    %v3164 = vrot.slane %v3146, 7
    %v3165 = vrot.slane %v3072, 7
    %v3166 = vsel %vm869, %v3163, %v3165
    %v3167 = vrot.slane %v3148, 7
    %v3168 = vsel %vm869, %v3164, %v3167
    %v3169 = vrot.slane %v3075, 7
    %v3170 = vrot.slane %v3151, 7
    %v3171 = vrot.slane %v3077, 7
    %v3172 = vsel %vm869, %v3169, %v3171
    %v3173 = vrot.slane %v3153, 7
    %v3174 = vsel %vm869, %v3170, %v3173
    %v3183 = vsel %vm869, 0.0, %v3163
    %v3184 = vsel %vm869, 0.0, %v3164
    %v3185 = vsel %vm869, 0.0, %v3169
    %v3186 = vsel %vm869, 0.0, %v3170
    %v3187 = vadd.f32 %v2766, %v3183
    %v3188 = vadd.f32 %v2842, %v3184
    %v3189 = vadd.f32 %v2768, %v3166
    %v3190 = vadd.f32 %v2844, %v3168
    %v3191 = vadd.f32 %v2771, %v3185
    %v3192 = vadd.f32 %v2847, %v3186
    %v3193 = vadd.f32 %v2773, %v3172
    %v3194 = vadd.f32 %v2849, %v3174
    %vm3203 = vcmask 1046528
    %v3204 = vrot.slane %v2614, 1
    %v3205 = vrot.slane %v2616, 1
    %v3206 = vsel %vm3203, %v3204, %v3205
    %v3207 = vrot.slane %v2690, 1
    %v3208 = vrot.slane %v2692, 1
    %v3209 = vsel %vm3203, %v3207, %v3208
    %v3210 = vrot.slane %v2619, 1
    %v3211 = vrot.slane %v2621, 1
    %v3212 = vsel %vm3203, %v3210, %v3211
    %v3213 = vrot.slane %v2695, 1
    %v3214 = vrot.slane %v2697, 1
    %v3215 = vsel %vm3203, %v3213, %v3214
    %v3224 = vsel %vm3203, %v3205, 0.0
    %v3225 = vsel %vm3203, %v3208, 0.0
    %v3226 = vsel %vm3203, %v3211, 0.0
    %v3227 = vsel %vm3203, %v3214, 0.0
    %v3228 = vadd.f32 %v2918, %v3206
    %v3229 = vadd.f32 %v2994, %v3209
    %v3230 = vadd.f32 %v2920, %v3224
    %v3231 = vadd.f32 %v2996, %v3225
    %v3232 = vadd.f32 %v2923, %v3212
    %v3233 = vadd.f32 %v2999, %v3215
    %v3234 = vadd.f32 %v2925, %v3226
    %v3235 = vadd.f32 %v3001, %v3227
    %v3236 = vld [vmem:[%s5] sm:$0x3]
    %v3237 = vld [vmem:[#allocation13] sm:$0x3]
    %v3238 = vadd.f32 %v3187, %v3189
    %v3239 = vadd.f32 %v3238, %v3191
    %v3240 = vadd.f32 %v3239, %v3193
    %v3241 = vrot.slane %v3240, 4
    %v3242 = vadd.f32 %v3240, %v3241
    %v3243 = vrot.slane %v3242, 2
    %v3244 = vadd.f32 %v3242, %v3243
    %v3245 = vrot.slane %v3244, 1
    %v3246 = vadd.f32 %v3244, %v3245
    %v3247 = vadd.f32 %v3188, %v3190
    %v3248 = vadd.f32 %v3247, %v3192
    %v3249 = vadd.f32 %v3248, %v3194
    %v3250 = vrot.slane %v3249, 4
    %v3251 = vadd.f32 %v3249, %v3250
    %v3252 = vrot.slane %v3251, 2
    %v3253 = vadd.f32 %v3251, %v3252
    %v3254 = vrot.slane %v3253, 1
    %v3255 = vadd.f32 %v3253, %v3254
    %v3256 = vadd.f32 %v3228, %v3230
    %v3257 = vadd.f32 %v3256, %v3232
    %v3258 = vadd.f32 %v3257, %v3234
    %v3259 = vrot.slane %v3258, 4
    %v3260 = vadd.f32 %v3258, %v3259
    %v3261 = vrot.slane %v3260, 2
    %v3262 = vadd.f32 %v3260, %v3261
    %v3263 = vrot.slane %v3262, 1
    %v3264 = vadd.f32 %v3262, %v3263
    %v3265 = vadd.f32 %v3229, %v3231
    %v3266 = vadd.f32 %v3265, %v3233
    %v3267 = vadd.f32 %v3266, %v3235
    %v3268 = vrot.slane %v3267, 4
    %v3269 = vadd.f32 %v3267, %v3268
    %v3270 = vrot.slane %v3269, 2
    %v3271 = vadd.f32 %v3269, %v3270
    %v3272 = vrot.slane %v3271, 1
    %v3273 = vadd.f32 %v3271, %v3272
    %v3274 = vadd.f32 %v3246, %v3264
    %v3275 = vadd.f32 %v3255, %v3273
    %v3276 = vmul.f32 %v3274, 0.015625
    %v3277 = vmul.f32 %v3275, 0.015625
    %v3278 = vsub.f32 %v3187, %v3276
    %v3279 = vsub.f32 %v3188, %v3277
    %v3280 = vsub.f32 %v3189, %v3276
    %v3281 = vsub.f32 %v3190, %v3277
    %v3282 = vsub.f32 %v3191, %v3276
    %v3283 = vsub.f32 %v3192, %v3277
    %v3284 = vsub.f32 %v3193, %v3276
    %v3285 = vsub.f32 %v3194, %v3277
    %v3286 = vmul.f32 %v3278, %v3278
    %v3287 = vmul.f32 %v3279, %v3279
    %v3288 = vmul.f32 %v3280, %v3280
    %v3289 = vmul.f32 %v3281, %v3281
    %v3290 = vmul.f32 %v3282, %v3282
    %v3291 = vmul.f32 %v3283, %v3283
    %v3292 = vmul.f32 %v3284, %v3284
    %v3293 = vmul.f32 %v3285, %v3285
    %v3294 = vadd.f32 %v3286, %v3288
    %v3295 = vadd.f32 %v3294, %v3290
    %v3296 = vadd.f32 %v3295, %v3292
    %v3297 = vrot.slane %v3296, 4
    %v3298 = vadd.f32 %v3296, %v3297
    %v3299 = vrot.slane %v3298, 2
    %v3300 = vadd.f32 %v3298, %v3299
    %v3301 = vrot.slane %v3300, 1
    %v3302 = vadd.f32 %v3300, %v3301
    %v3303 = vadd.f32 %v3287, %v3289
    %v3304 = vadd.f32 %v3303, %v3291
    %v3305 = vadd.f32 %v3304, %v3293
    %v3306 = vrot.slane %v3305, 4
    %v3307 = vadd.f32 %v3305, %v3306
    %v3308 = vrot.slane %v3307, 2
    %v3309 = vadd.f32 %v3307, %v3308
    %v3310 = vrot.slane %v3309, 1
    %v3311 = vadd.f32 %v3309, %v3310
    %v3312 = vsub.f32 %v3228, %v3276
    %v3313 = vsub.f32 %v3229, %v3277
    %v3314 = vsub.f32 %v3230, %v3276
    %v3315 = vsub.f32 %v3231, %v3277
    %v3316 = vsub.f32 %v3232, %v3276
    %v3317 = vsub.f32 %v3233, %v3277
    %v3318 = vsub.f32 %v3234, %v3276
    %v3319 = vsub.f32 %v3235, %v3277
    %v3320 = vmul.f32 %v3312, %v3312
    %v3321 = vmul.f32 %v3313, %v3313
    %v3322 = vmul.f32 %v3314, %v3314
    %v3323 = vmul.f32 %v3315, %v3315
    %v3324 = vmul.f32 %v3316, %v3316
    %v3325 = vmul.f32 %v3317, %v3317
    %v3326 = vmul.f32 %v3318, %v3318
    %v3327 = vmul.f32 %v3319, %v3319
    %v3328 = vadd.f32 %v3320, %v3322
    %v3329 = vadd.f32 %v3328, %v3324
    %v3330 = vadd.f32 %v3329, %v3326
    %v3331 = vrot.slane %v3330, 4
    %v3332 = vadd.f32 %v3330, %v3331
    %v3333 = vrot.slane %v3332, 2
    %v3334 = vadd.f32 %v3332, %v3333
    %v3335 = vrot.slane %v3334, 1
    %v3336 = vadd.f32 %v3334, %v3335
    %v3337 = vadd.f32 %v3321, %v3323
    %v3338 = vadd.f32 %v3337, %v3325
    %v3339 = vadd.f32 %v3338, %v3327
    %v3340 = vrot.slane %v3339, 4
    %v3341 = vadd.f32 %v3339, %v3340
    %v3342 = vrot.slane %v3341, 2
    %v3343 = vadd.f32 %v3341, %v3342
    %v3344 = vrot.slane %v3343, 1
    %v3345 = vadd.f32 %v3343, %v3344
    %v3346 = vadd.f32 %v3302, %v3336
    %v3347 = vadd.f32 %v3311, %v3345
    %v3348 = vmul.f32 %v3346, 0.015625
    %v3349 = vmul.f32 %v3347, 0.015625
    %v3350 = vadd.f32 %v3348, 1e-05
    %v3351 = vadd.f32 %v3349, 1e-05
    %v3352 = vrsqrt.pop %v3350
    %v3353 = vmul.f32 %v3352, %v3350
    %v3354 = vmul.f32 %v3353, %v3352
    %v3355 = vmul.f32 0.5, %v3354
    %v3356 = vsub.f32 1.5, %v3355
    %v3357 = vmul.f32 %v3352, %v3356
    %vm3358 = vweird.f32 %v3350
    %vm3359 = vweird.f32 %v3352
    %vm3360 = vmor %vm3358, %vm3359
    %v3361 = vsel %vm3360, %v3352, %v3357
    %v3362 = vrsqrt.pop %v3351
    %v3363 = vmul.f32 %v3362, %v3351
    %v3364 = vmul.f32 %v3363, %v3362
    %v3365 = vmul.f32 0.5, %v3364
    %v3366 = vsub.f32 1.5, %v3365
    %v3367 = vmul.f32 %v3362, %v3366
    %vm3368 = vweird.f32 %v3351
    %vm3369 = vweird.f32 %v3362
    %vm3370 = vmor %vm3368, %vm3369
    %v3371 = vsel %vm3370, %v3362, %v3367
    %v3374 = vrot.slane %v3371, 7
    %v3375 = vsel %vm869, %v3361, %v3374
    %v3377 = vmul.f32 %v3236, %v3375
    %v3379 = vperm.slane %v3377, 0
    %v3380 = vperm.slane %v3377, 1
    %v3383 = vmul.f32 %v3276, %v3379
    %v3384 = vmul.f32 %v3277, %v3380
    %v3387 = vrot.slane %v3384, 7
    %v3388 = vsel %vm869, %v3383, %v3387
    %v3390 = vsub.f32 %v3237, %v3388
    %v3391 = vmul.f32 %v3187, %v3379
    %v3392 = vmul.f32 %v3188, %v3380
    %v3393 = vmul.f32 %v3189, %v3379
    %v3394 = vmul.f32 %v3190, %v3380
    %v3395 = vmul.f32 %v3191, %v3379
    %v3396 = vmul.f32 %v3192, %v3380
    %v3397 = vmul.f32 %v3193, %v3379
    %v3398 = vmul.f32 %v3194, %v3380
    %v3400 = vperm.slane %v3390, 0
    %v3401 = vperm.slane %v3390, 1
    %v3404 = vadd.f32 %v3391, %v3400
    %v3405 = vadd.f32 %v3392, %v3401
    %v3406 = vadd.f32 %v3393, %v3400
    %v3407 = vadd.f32 %v3394, %v3401
    %v3408 = vadd.f32 %v3395, %v3400
    %v3409 = vadd.f32 %v3396, %v3401
    %v3410 = vadd.f32 %v3397, %v3400
    %v3411 = vadd.f32 %v3398, %v3401
    %v3412 = vmax.f32 %v3404, 0.0
    %v3413 = vmax.f32 %v3405, 0.0
    %v3414 = vmax.f32 %v3406, 0.0
    %v3415 = vmax.f32 %v3407, 0.0
    %v3416 = vmax.f32 %v3408, 0.0
    %v3417 = vmax.f32 %v3409, 0.0
    %v3418 = vmax.f32 %v3410, 0.0
    %v3419 = vmax.f32 %v3411, 0.0
    %v3420 = vpack.c.bf16 %v3413, %v3412
    %v3421 = vpack.c.bf16 %v3415, %v3414
    %v3422 = vpack.c.bf16 %v3417, %v3416
    %v3423 = vpack.c.bf16 %v3419, %v3418
    %v3424 = vmul.f32 %v3228, %v3379
    %v3425 = vmul.f32 %v3229, %v3380
    %v3426 = vmul.f32 %v3230, %v3379
    %v3427 = vmul.f32 %v3231, %v3380
    %v3428 = vmul.f32 %v3232, %v3379
    %v3429 = vmul.f32 %v3233, %v3380
    %v3430 = vmul.f32 %v3234, %v3379
    %v3431 = vmul.f32 %v3235, %v3380
    %v3432 = vadd.f32 %v3424, %v3400
    %v3433 = vadd.f32 %v3425, %v3401
    %v3434 = vadd.f32 %v3426, %v3400
    %v3435 = vadd.f32 %v3427, %v3401
    %v3436 = vadd.f32 %v3428, %v3400
    %v3437 = vadd.f32 %v3429, %v3401
    %v3438 = vadd.f32 %v3430, %v3400
    %v3439 = vadd.f32 %v3431, %v3401
    %v3440 = vmax.f32 %v3432, 0.0
    %v3441 = vmax.f32 %v3433, 0.0
    %v3442 = vmax.f32 %v3434, 0.0
    %v3443 = vmax.f32 %v3435, 0.0
    %v3444 = vmax.f32 %v3436, 0.0
    %v3445 = vmax.f32 %v3437, 0.0
    %v3446 = vmax.f32 %v3438, 0.0
    %v3447 = vmax.f32 %v3439, 0.0
    %v3448 = vpack.c.bf16 %v3441, %v3440
    %v3449 = vpack.c.bf16 %v3443, %v3442
    %v3450 = vpack.c.bf16 %v3445, %v3444
    %v3451 = vpack.c.bf16 %v3447, %v3446
    %v3456 = vunpack.c.l.b16 %v3420
    %v3457 = vunpack.c.h.b16 %v3420
    %v3458 = vunpack.c.l.b16 %v3421
    %v3459 = vunpack.c.h.b16 %v3421
    %v3460 = vunpack.c.l.b16 %v3422
    %v3461 = vunpack.c.h.b16 %v3422
    %v3462 = vunpack.c.l.b16 %v3423
    %v3463 = vunpack.c.h.b16 %v3423
    %v3464 = vpack.c.b16 %v3458, %v3456
    %v3465 = vpack.c.b16 %v3459, %v3457
    %v3466 = vpack.c.b16 %v3462, %v3460
    %v3467 = vpack.c.b16 %v3463, %v3461
    %v3476 = vunpack.c.l.b16 %v3448
    %v3477 = vunpack.c.h.b16 %v3448
    %v3478 = vunpack.c.l.b16 %v3449
    %v3479 = vunpack.c.h.b16 %v3449
    %v3480 = vunpack.c.l.b16 %v3450
    %v3481 = vunpack.c.h.b16 %v3450
    %v3482 = vunpack.c.l.b16 %v3451
    %v3483 = vunpack.c.h.b16 %v3451
    %v3484 = vpack.c.b16 %v3478, %v3476
    %v3485 = vpack.c.b16 %v3479, %v3477
    %v3486 = vpack.c.b16 %v3482, %v3480
    %v3487 = vpack.c.b16 %v3483, %v3481
    %s3492 = smul.u32 4, 32
    %s3493 = smul.u32 %s3492, 4
    %s3494 = sshll.u32 %s3493, 4
    %3495 = dma.done %s136, %s3494
    %v3496 = vld [vmem:[#allocation3] sm:$0xff]
    %v3497 = vld [vmem:[#allocation3 + $0x8] sm:$0xff]
    %v3498 = vld [vmem:[#allocation3 + $0x10] sm:$0xff]
    %v3499 = vld [vmem:[#allocation3 + $0x18] sm:$0xff]
    %v3500 = vld [vmem:[#allocation3 + $0x20] sm:$0xff]
    %v3501 = vld [vmem:[#allocation3 + $0x28] sm:$0xff]
    %v3502 = vld [vmem:[#allocation3 + $0x30] sm:$0xff]
    %v3503 = vld [vmem:[#allocation3 + $0x38] sm:$0xff]
    %v3504 = vld [vmem:[#allocation3 + $0x40] sm:$0xff]
    %v3505 = vld [vmem:[#allocation3 + $0x48] sm:$0xff]
    %v3506 = vld [vmem:[#allocation3 + $0x50] sm:$0xff]
    %v3507 = vld [vmem:[#allocation3 + $0x58] sm:$0xff]
    %v3508 = vld [vmem:[#allocation3 + $0x60] sm:$0xff]
    %v3509 = vld [vmem:[#allocation3 + $0x68] sm:$0xff]
    %v3510 = vld [vmem:[#allocation3 + $0x70] sm:$0xff]
    %v3511 = vld [vmem:[#allocation3 + $0x78] sm:$0xff]
    %v3512 = vld [vmem:[#allocation3 + $0x80] sm:$0xff]
    %v3513 = vld [vmem:[#allocation3 + $0x88] sm:$0xff]
    %v3514 = vld [vmem:[#allocation3 + $0x90] sm:$0xff]
    %v3515 = vld [vmem:[#allocation3 + $0x98] sm:$0xff]
    %v3516 = vld [vmem:[#allocation3 + $0xa0] sm:$0xff]
    %v3517 = vld [vmem:[#allocation3 + $0xa8] sm:$0xff]
    %v3518 = vld [vmem:[#allocation3 + $0xb0] sm:$0xff]
    %v3519 = vld [vmem:[#allocation3 + $0xb8] sm:$0xff]
    %v3520 = vld [vmem:[#allocation3 + $0xc0] sm:$0xff]
    %v3521 = vld [vmem:[#allocation3 + $0xc8] sm:$0xff]
    %v3522 = vld [vmem:[#allocation3 + $0xd0] sm:$0xff]
    %v3523 = vld [vmem:[#allocation3 + $0xd8] sm:$0xff]
    %v3524 = vld [vmem:[#allocation3 + $0xe0] sm:$0xff]
    %v3525 = vld [vmem:[#allocation3 + $0xe8] sm:$0xff]
    %v3526 = vld [vmem:[#allocation3 + $0xf0] sm:$0xff]
    %v3527 = vld [vmem:[#allocation3 + $0xf8] sm:$0xff]
    %v3528 = vld [vmem:[#allocation3 + $0x100] sm:$0xff]
    %v3529 = vld [vmem:[#allocation3 + $0x108] sm:$0xff]
    %v3530 = vld [vmem:[#allocation3 + $0x110] sm:$0xff]
    %v3531 = vld [vmem:[#allocation3 + $0x118] sm:$0xff]
    %v3532 = vld [vmem:[#allocation3 + $0x120] sm:$0xff]
    %v3533 = vld [vmem:[#allocation3 + $0x128] sm:$0xff]
    %v3534 = vld [vmem:[#allocation3 + $0x130] sm:$0xff]
    %v3535 = vld [vmem:[#allocation3 + $0x138] sm:$0xff]
    %v3536 = vld [vmem:[#allocation3 + $0x140] sm:$0xff]
    %v3537 = vld [vmem:[#allocation3 + $0x148] sm:$0xff]
    %v3538 = vld [vmem:[#allocation3 + $0x150] sm:$0xff]
    %v3539 = vld [vmem:[#allocation3 + $0x158] sm:$0xff]
    %v3540 = vld [vmem:[#allocation3 + $0x160] sm:$0xff]
    %v3541 = vld [vmem:[#allocation3 + $0x168] sm:$0xff]
    %v3542 = vld [vmem:[#allocation3 + $0x170] sm:$0xff]
    %v3543 = vld [vmem:[#allocation3 + $0x178] sm:$0xff]
    %v3544 = vld [vmem:[#allocation3 + $0x180] sm:$0xff]
    %v3545 = vld [vmem:[#allocation3 + $0x188] sm:$0xff]
    %v3546 = vld [vmem:[#allocation3 + $0x190] sm:$0xff]
    %v3547 = vld [vmem:[#allocation3 + $0x198] sm:$0xff]
    %v3548 = vld [vmem:[#allocation3 + $0x1a0] sm:$0xff]
    %v3549 = vld [vmem:[#allocation3 + $0x1a8] sm:$0xff]
    %v3550 = vld [vmem:[#allocation3 + $0x1b0] sm:$0xff]
    %v3551 = vld [vmem:[#allocation3 + $0x1b8] sm:$0xff]
    %v3552 = vld [vmem:[#allocation3 + $0x1c0] sm:$0xff]
    %v3553 = vld [vmem:[#allocation3 + $0x1c8] sm:$0xff]
    %v3554 = vld [vmem:[#allocation3 + $0x1d0] sm:$0xff]
    %v3555 = vld [vmem:[#allocation3 + $0x1d8] sm:$0xff]
    %v3556 = vld [vmem:[#allocation3 + $0x1e0] sm:$0xff]
    %v3557 = vld [vmem:[#allocation3 + $0x1e8] sm:$0xff]
    %v3558 = vld [vmem:[#allocation3 + $0x1f0] sm:$0xff]
    %v3559 = vld [vmem:[#allocation3 + $0x1f8] sm:$0xff]
    %v3624 = vunpack.c.l.b16 %v3496
    %v3625 = vunpack.c.h.b16 %v3496
    %v3626 = vunpack.c.l.b16 %v3497
    %v3627 = vunpack.c.h.b16 %v3497
    %v3628 = vunpack.c.l.b16 %v3498
    %v3629 = vunpack.c.h.b16 %v3498
    %v3630 = vunpack.c.l.b16 %v3499
    %v3631 = vunpack.c.h.b16 %v3499
    %v3632 = vunpack.c.l.b16 %v3500
    %v3633 = vunpack.c.h.b16 %v3500
    %v3634 = vunpack.c.l.b16 %v3501
    %v3635 = vunpack.c.h.b16 %v3501
    %v3636 = vunpack.c.l.b16 %v3502
    %v3637 = vunpack.c.h.b16 %v3502
    %v3638 = vunpack.c.l.b16 %v3503
    %v3639 = vunpack.c.h.b16 %v3503
    %v3640 = vunpack.c.l.b16 %v3504
    %v3641 = vunpack.c.h.b16 %v3504
    %v3642 = vunpack.c.l.b16 %v3505
    %v3643 = vunpack.c.h.b16 %v3505
    %v3644 = vunpack.c.l.b16 %v3506
    %v3645 = vunpack.c.h.b16 %v3506
    %v3646 = vunpack.c.l.b16 %v3507
    %v3647 = vunpack.c.h.b16 %v3507
    %v3648 = vunpack.c.l.b16 %v3508
    %v3649 = vunpack.c.h.b16 %v3508
    %v3650 = vunpack.c.l.b16 %v3509
    %v3651 = vunpack.c.h.b16 %v3509
    %v3652 = vunpack.c.l.b16 %v3510
    %v3653 = vunpack.c.h.b16 %v3510
    %v3654 = vunpack.c.l.b16 %v3511
    %v3655 = vunpack.c.h.b16 %v3511
    %v3656 = vunpack.c.l.b16 %v3512
    %v3657 = vunpack.c.h.b16 %v3512
    %v3658 = vunpack.c.l.b16 %v3513
    %v3659 = vunpack.c.h.b16 %v3513
    %v3660 = vunpack.c.l.b16 %v3514
    %v3661 = vunpack.c.h.b16 %v3514
    %v3662 = vunpack.c.l.b16 %v3515
    %v3663 = vunpack.c.h.b16 %v3515
    %v3664 = vunpack.c.l.b16 %v3516
    %v3665 = vunpack.c.h.b16 %v3516
    %v3666 = vunpack.c.l.b16 %v3517
    %v3667 = vunpack.c.h.b16 %v3517
    %v3668 = vunpack.c.l.b16 %v3518
    %v3669 = vunpack.c.h.b16 %v3518
    %v3670 = vunpack.c.l.b16 %v3519
    %v3671 = vunpack.c.h.b16 %v3519
    %v3672 = vunpack.c.l.b16 %v3520
    %v3673 = vunpack.c.h.b16 %v3520
    %v3674 = vunpack.c.l.b16 %v3521
    %v3675 = vunpack.c.h.b16 %v3521
    %v3676 = vunpack.c.l.b16 %v3522
    %v3677 = vunpack.c.h.b16 %v3522
    %v3678 = vunpack.c.l.b16 %v3523
    %v3679 = vunpack.c.h.b16 %v3523
    %v3680 = vunpack.c.l.b16 %v3524
    %v3681 = vunpack.c.h.b16 %v3524
    %v3682 = vunpack.c.l.b16 %v3525
    %v3683 = vunpack.c.h.b16 %v3525
    %v3684 = vunpack.c.l.b16 %v3526
    %v3685 = vunpack.c.h.b16 %v3526
    %v3686 = vunpack.c.l.b16 %v3527
    %v3687 = vunpack.c.h.b16 %v3527
    %v3688 = vunpack.c.l.b16 %v3528
    %v3689 = vunpack.c.h.b16 %v3528
    %v3690 = vunpack.c.l.b16 %v3529
    %v3691 = vunpack.c.h.b16 %v3529
    %v3692 = vunpack.c.l.b16 %v3530
    %v3693 = vunpack.c.h.b16 %v3530
    %v3694 = vunpack.c.l.b16 %v3531
    %v3695 = vunpack.c.h.b16 %v3531
    %v3696 = vunpack.c.l.b16 %v3532
    %v3697 = vunpack.c.h.b16 %v3532
    %v3698 = vunpack.c.l.b16 %v3533
    %v3699 = vunpack.c.h.b16 %v3533
    %v3700 = vunpack.c.l.b16 %v3534
    %v3701 = vunpack.c.h.b16 %v3534
    %v3702 = vunpack.c.l.b16 %v3535
    %v3703 = vunpack.c.h.b16 %v3535
    %v3704 = vunpack.c.l.b16 %v3536
    %v3705 = vunpack.c.h.b16 %v3536
    %v3706 = vunpack.c.l.b16 %v3537
    %v3707 = vunpack.c.h.b16 %v3537
    %v3708 = vunpack.c.l.b16 %v3538
    %v3709 = vunpack.c.h.b16 %v3538
    %v3710 = vunpack.c.l.b16 %v3539
    %v3711 = vunpack.c.h.b16 %v3539
    %v3712 = vunpack.c.l.b16 %v3540
    %v3713 = vunpack.c.h.b16 %v3540
    %v3714 = vunpack.c.l.b16 %v3541
    %v3715 = vunpack.c.h.b16 %v3541
    %v3716 = vunpack.c.l.b16 %v3542
    %v3717 = vunpack.c.h.b16 %v3542
    %v3718 = vunpack.c.l.b16 %v3543
    %v3719 = vunpack.c.h.b16 %v3543
    %v3720 = vunpack.c.l.b16 %v3544
    %v3721 = vunpack.c.h.b16 %v3544
    %v3722 = vunpack.c.l.b16 %v3545
    %v3723 = vunpack.c.h.b16 %v3545
    %v3724 = vunpack.c.l.b16 %v3546
    %v3725 = vunpack.c.h.b16 %v3546
    %v3726 = vunpack.c.l.b16 %v3547
    %v3727 = vunpack.c.h.b16 %v3547
    %v3728 = vunpack.c.l.b16 %v3548
    %v3729 = vunpack.c.h.b16 %v3548
    %v3730 = vunpack.c.l.b16 %v3549
    %v3731 = vunpack.c.h.b16 %v3549
    %v3732 = vunpack.c.l.b16 %v3550
    %v3733 = vunpack.c.h.b16 %v3550
    %v3734 = vunpack.c.l.b16 %v3551
    %v3735 = vunpack.c.h.b16 %v3551
    %v3736 = vunpack.c.l.b16 %v3552
    %v3737 = vunpack.c.h.b16 %v3552
    %v3738 = vunpack.c.l.b16 %v3553
    %v3739 = vunpack.c.h.b16 %v3553
    %v3740 = vunpack.c.l.b16 %v3554
    %v3741 = vunpack.c.h.b16 %v3554
    %v3742 = vunpack.c.l.b16 %v3555
    %v3743 = vunpack.c.h.b16 %v3555
    %v3744 = vunpack.c.l.b16 %v3556
    %v3745 = vunpack.c.h.b16 %v3556
    %v3746 = vunpack.c.l.b16 %v3557
    %v3747 = vunpack.c.h.b16 %v3557
    %v3748 = vunpack.c.l.b16 %v3558
    %v3749 = vunpack.c.h.b16 %v3558
    %v3750 = vunpack.c.l.b16 %v3559
    %v3751 = vunpack.c.h.b16 %v3559
    %v3752 = vpack.c.b16 %v3628, %v3624
    %v3753 = vpack.c.b16 %v3629, %v3625
    %v3754 = vpack.c.b16 %v3630, %v3626
    %v3755 = vpack.c.b16 %v3631, %v3627
    %v3756 = vpack.c.b16 %v3636, %v3632
    %v3757 = vpack.c.b16 %v3637, %v3633
    %v3758 = vpack.c.b16 %v3638, %v3634
    %v3759 = vpack.c.b16 %v3639, %v3635
    %v3760 = vpack.c.b16 %v3644, %v3640
    %v3761 = vpack.c.b16 %v3645, %v3641
    %v3762 = vpack.c.b16 %v3646, %v3642
    %v3763 = vpack.c.b16 %v3647, %v3643
    %v3764 = vpack.c.b16 %v3652, %v3648
    %v3765 = vpack.c.b16 %v3653, %v3649
    %v3766 = vpack.c.b16 %v3654, %v3650
    %v3767 = vpack.c.b16 %v3655, %v3651
    %v3768 = vpack.c.b16 %v3660, %v3656
    %v3769 = vpack.c.b16 %v3661, %v3657
    %v3770 = vpack.c.b16 %v3662, %v3658
    %v3771 = vpack.c.b16 %v3663, %v3659
    %v3772 = vpack.c.b16 %v3668, %v3664
    %v3773 = vpack.c.b16 %v3669, %v3665
    %v3774 = vpack.c.b16 %v3670, %v3666
    %v3775 = vpack.c.b16 %v3671, %v3667
    %v3776 = vpack.c.b16 %v3676, %v3672
    %v3777 = vpack.c.b16 %v3677, %v3673
    %v3778 = vpack.c.b16 %v3678, %v3674
    %v3779 = vpack.c.b16 %v3679, %v3675
    %v3780 = vpack.c.b16 %v3684, %v3680
    %v3781 = vpack.c.b16 %v3685, %v3681
    %v3782 = vpack.c.b16 %v3686, %v3682
    %v3783 = vpack.c.b16 %v3687, %v3683
    %v3784 = vpack.c.b16 %v3692, %v3688
    %v3785 = vpack.c.b16 %v3693, %v3689
    %v3786 = vpack.c.b16 %v3694, %v3690
    %v3787 = vpack.c.b16 %v3695, %v3691
    %v3788 = vpack.c.b16 %v3700, %v3696
    %v3789 = vpack.c.b16 %v3701, %v3697
    %v3790 = vpack.c.b16 %v3702, %v3698
    %v3791 = vpack.c.b16 %v3703, %v3699
    %v3792 = vpack.c.b16 %v3708, %v3704
    %v3793 = vpack.c.b16 %v3709, %v3705
    %v3794 = vpack.c.b16 %v3710, %v3706
    %v3795 = vpack.c.b16 %v3711, %v3707
    %v3796 = vpack.c.b16 %v3716, %v3712
    %v3797 = vpack.c.b16 %v3717, %v3713
    %v3798 = vpack.c.b16 %v3718, %v3714
    %v3799 = vpack.c.b16 %v3719, %v3715
    %v3800 = vpack.c.b16 %v3724, %v3720
    %v3801 = vpack.c.b16 %v3725, %v3721
    %v3802 = vpack.c.b16 %v3726, %v3722
    %v3803 = vpack.c.b16 %v3727, %v3723
    %v3804 = vpack.c.b16 %v3732, %v3728
    %v3805 = vpack.c.b16 %v3733, %v3729
    %v3806 = vpack.c.b16 %v3734, %v3730
    %v3807 = vpack.c.b16 %v3735, %v3731
    %v3808 = vpack.c.b16 %v3740, %v3736
    %v3809 = vpack.c.b16 %v3741, %v3737
    %v3810 = vpack.c.b16 %v3742, %v3738
    %v3811 = vpack.c.b16 %v3743, %v3739
    %v3812 = vpack.c.b16 %v3748, %v3744
    %v3813 = vpack.c.b16 %v3749, %v3745
    %v3814 = vpack.c.b16 %v3750, %v3746
    %v3815 = vpack.c.b16 %v3751, %v3747
    %3880 = vmatpush.bf16.msra.mxu0 %v3780
    %3881 = vmatpush.bf16.msra.mxu0 %v3776
    %3882 = vmatpush.bf16.msra.mxu0 %v3772
    %3883 = vmatpush.bf16.msra.mxu0 %v3768
    %3884 = vmatpush.bf16.msra.mxu0 %v3764
    %3885 = vmatpush.bf16.msra.mxu0 %v3760
    %3886 = vmatpush.bf16.msra.mxu0 %v3756
    %3887 = vmatpush.bf16.msra.mxu0 %v3752
    %3888 = vmatmul.bf16.gmra.mxu0 %v3464
    %v3889 = vpop.f32.mrf.mxu0
    %v3890 = vadd.f32 0.0, %v3889
    %v3891 = vpop.f32.mrf.mxu0
    %v3892 = vadd.f32 0.0, %v3891
    %3893 = vmatmul.bf16.gmra.mxu0 %v3466
    %v3894 = vpop.f32.mrf.mxu0
    %v3895 = vadd.f32 0.0, %v3894
    %v3896 = vpop.f32.mrf.mxu0
    %v3897 = vadd.f32 0.0, %v3896
    %3898 = vmatmul.bf16.gmra.mxu0 %v3484
    %v3899 = vpop.f32.mrf.mxu0
    %v3900 = vadd.f32 0.0, %v3899
    %v3901 = vpop.f32.mrf.mxu0
    %v3902 = vadd.f32 0.0, %v3901
    %3903 = vmatmul.bf16.gmra.mxu0 %v3486
    %v3904 = vpop.f32.mrf.mxu0
    %v3905 = vadd.f32 0.0, %v3904
    %v3906 = vpop.f32.mrf.mxu0
    %v3907 = vadd.f32 0.0, %v3906
    %3908 = vdwg.mxu0
    %3909 = vmatpush.bf16.msra.mxu0 %v3812
    %3910 = vmatpush.bf16.msra.mxu0 %v3808
    %3911 = vmatpush.bf16.msra.mxu0 %v3804
    %3912 = vmatpush.bf16.msra.mxu0 %v3800
    %3913 = vmatpush.bf16.msra.mxu0 %v3796
    %3914 = vmatpush.bf16.msra.mxu0 %v3792
    %3915 = vmatpush.bf16.msra.mxu0 %v3788
    %3916 = vmatpush.bf16.msra.mxu0 %v3784
    %3917 = vmatmul.bf16.gmra.mxu0 %v3465
    %v3918 = vpop.f32.mrf.mxu0
    %v3919 = vadd.f32 %v3890, %v3918
    %v3920 = vpop.f32.mrf.mxu0
    %v3921 = vadd.f32 %v3892, %v3920
    %3922 = vmatmul.bf16.gmra.mxu0 %v3467
    %v3923 = vpop.f32.mrf.mxu0
    %v3924 = vadd.f32 %v3895, %v3923
    %v3925 = vpop.f32.mrf.mxu0
    %v3926 = vadd.f32 %v3897, %v3925
    %3927 = vmatmul.bf16.gmra.mxu0 %v3485
    %v3928 = vpop.f32.mrf.mxu0
    %v3929 = vadd.f32 %v3900, %v3928
    %v3930 = vpop.f32.mrf.mxu0
    %v3931 = vadd.f32 %v3902, %v3930
    %3932 = vmatmul.bf16.gmra.mxu0 %v3487
    %v3933 = vpop.f32.mrf.mxu0
    %v3934 = vadd.f32 %v3905, %v3933
    %v3935 = vpop.f32.mrf.mxu0
    %v3936 = vadd.f32 %v3907, %v3935
    %3937 = vdwg.mxu0
    %3938 = vmatpush.bf16.msra.mxu0 %v3781
    %3939 = vmatpush.bf16.msra.mxu0 %v3777
    %3940 = vmatpush.bf16.msra.mxu0 %v3773
    %3941 = vmatpush.bf16.msra.mxu0 %v3769
    %3942 = vmatpush.bf16.msra.mxu0 %v3765
    %3943 = vmatpush.bf16.msra.mxu0 %v3761
    %3944 = vmatpush.bf16.msra.mxu0 %v3757
    %3945 = vmatpush.bf16.msra.mxu0 %v3753
    %3946 = vmatmul.bf16.gmra.mxu0 %v3464
    %v3947 = vpop.f32.mrf.mxu0
    %v3948 = vadd.f32 0.0, %v3947
    %v3949 = vpop.f32.mrf.mxu0
    %v3950 = vadd.f32 0.0, %v3949
    %3951 = vmatmul.bf16.gmra.mxu0 %v3466
    %v3952 = vpop.f32.mrf.mxu0
    %v3953 = vadd.f32 0.0, %v3952
    %v3954 = vpop.f32.mrf.mxu0
    %v3955 = vadd.f32 0.0, %v3954
    %3956 = vmatmul.bf16.gmra.mxu0 %v3484
    %v3957 = vpop.f32.mrf.mxu0
    %v3958 = vadd.f32 0.0, %v3957
    %v3959 = vpop.f32.mrf.mxu0
    %v3960 = vadd.f32 0.0, %v3959
    %3961 = vmatmul.bf16.gmra.mxu0 %v3486
    %v3962 = vpop.f32.mrf.mxu0
    %v3963 = vadd.f32 0.0, %v3962
    %v3964 = vpop.f32.mrf.mxu0
    %v3965 = vadd.f32 0.0, %v3964
    %3966 = vdwg.mxu0
    %3967 = vmatpush.bf16.msra.mxu0 %v3813
    %3968 = vmatpush.bf16.msra.mxu0 %v3809
    %3969 = vmatpush.bf16.msra.mxu0 %v3805
    %3970 = vmatpush.bf16.msra.mxu0 %v3801
    %3971 = vmatpush.bf16.msra.mxu0 %v3797
    %3972 = vmatpush.bf16.msra.mxu0 %v3793
    %3973 = vmatpush.bf16.msra.mxu0 %v3789
    %3974 = vmatpush.bf16.msra.mxu0 %v3785
    %3975 = vmatmul.bf16.gmra.mxu0 %v3465
    %v3976 = vpop.f32.mrf.mxu0
    %v3977 = vadd.f32 %v3948, %v3976
    %v3978 = vpop.f32.mrf.mxu0
    %v3979 = vadd.f32 %v3950, %v3978
    %3980 = vmatmul.bf16.gmra.mxu0 %v3467
    %v3981 = vpop.f32.mrf.mxu0
    %v3982 = vadd.f32 %v3953, %v3981
    %v3983 = vpop.f32.mrf.mxu0
    %v3984 = vadd.f32 %v3955, %v3983
    %3985 = vmatmul.bf16.gmra.mxu0 %v3485
    %v3986 = vpop.f32.mrf.mxu0
    %v3987 = vadd.f32 %v3958, %v3986
    %v3988 = vpop.f32.mrf.mxu0
    %v3989 = vadd.f32 %v3960, %v3988
    %3990 = vmatmul.bf16.gmra.mxu0 %v3487
    %v3991 = vpop.f32.mrf.mxu0
    %v3992 = vadd.f32 %v3963, %v3991
    %v3993 = vpop.f32.mrf.mxu0
    %v3994 = vadd.f32 %v3965, %v3993
    %3995 = vdwg.mxu0
    %3996 = vmatpush.bf16.msra.mxu0 %v3782
    %3997 = vmatpush.bf16.msra.mxu0 %v3778
    %3998 = vmatpush.bf16.msra.mxu0 %v3774
    %3999 = vmatpush.bf16.msra.mxu0 %v3770
    %4000 = vmatpush.bf16.msra.mxu0 %v3766
    %4001 = vmatpush.bf16.msra.mxu0 %v3762
    %4002 = vmatpush.bf16.msra.mxu0 %v3758
    %4003 = vmatpush.bf16.msra.mxu0 %v3754
    %4004 = vmatmul.bf16.gmra.mxu0 %v3464
    %v4005 = vpop.f32.mrf.mxu0
    %v4006 = vadd.f32 0.0, %v4005
    %v4007 = vpop.f32.mrf.mxu0
    %v4008 = vadd.f32 0.0, %v4007
    %4009 = vmatmul.bf16.gmra.mxu0 %v3466
    %v4010 = vpop.f32.mrf.mxu0
    %v4011 = vadd.f32 0.0, %v4010
    %v4012 = vpop.f32.mrf.mxu0
    %v4013 = vadd.f32 0.0, %v4012
    %4014 = vmatmul.bf16.gmra.mxu0 %v3484
    %v4015 = vpop.f32.mrf.mxu0
    %v4016 = vadd.f32 0.0, %v4015
    %v4017 = vpop.f32.mrf.mxu0
    %v4018 = vadd.f32 0.0, %v4017
    %4019 = vmatmul.bf16.gmra.mxu0 %v3486
    %v4020 = vpop.f32.mrf.mxu0
    %v4021 = vadd.f32 0.0, %v4020
    %v4022 = vpop.f32.mrf.mxu0
    %v4023 = vadd.f32 0.0, %v4022
    %4024 = vdwg.mxu0
    %4025 = vmatpush.bf16.msra.mxu0 %v3814
    %4026 = vmatpush.bf16.msra.mxu0 %v3810
    %4027 = vmatpush.bf16.msra.mxu0 %v3806
    %4028 = vmatpush.bf16.msra.mxu0 %v3802
    %4029 = vmatpush.bf16.msra.mxu0 %v3798
    %4030 = vmatpush.bf16.msra.mxu0 %v3794
    %4031 = vmatpush.bf16.msra.mxu0 %v3790
    %4032 = vmatpush.bf16.msra.mxu0 %v3786
    %4033 = vmatmul.bf16.gmra.mxu0 %v3465
    %v4034 = vpop.f32.mrf.mxu0
    %v4035 = vadd.f32 %v4006, %v4034
    %v4036 = vpop.f32.mrf.mxu0
    %v4037 = vadd.f32 %v4008, %v4036
    %4038 = vmatmul.bf16.gmra.mxu0 %v3467
    %v4039 = vpop.f32.mrf.mxu0
    %v4040 = vadd.f32 %v4011, %v4039
    %v4041 = vpop.f32.mrf.mxu0
    %v4042 = vadd.f32 %v4013, %v4041
    %4043 = vmatmul.bf16.gmra.mxu0 %v3485
    %v4044 = vpop.f32.mrf.mxu0
    %v4045 = vadd.f32 %v4016, %v4044
    %v4046 = vpop.f32.mrf.mxu0
    %v4047 = vadd.f32 %v4018, %v4046
    %4048 = vmatmul.bf16.gmra.mxu0 %v3487
    %v4049 = vpop.f32.mrf.mxu0
    %v4050 = vadd.f32 %v4021, %v4049
    %v4051 = vpop.f32.mrf.mxu0
    %v4052 = vadd.f32 %v4023, %v4051
    %4053 = vdwg.mxu0
    %4054 = vmatpush.bf16.msra.mxu0 %v3783
    %4055 = vmatpush.bf16.msra.mxu0 %v3779
    %4056 = vmatpush.bf16.msra.mxu0 %v3775
    %4057 = vmatpush.bf16.msra.mxu0 %v3771
    %4058 = vmatpush.bf16.msra.mxu0 %v3767
    %4059 = vmatpush.bf16.msra.mxu0 %v3763
    %4060 = vmatpush.bf16.msra.mxu0 %v3759
    %4061 = vmatpush.bf16.msra.mxu0 %v3755
    %4062 = vmatmul.bf16.gmra.mxu0 %v3464
    %v4063 = vpop.f32.mrf.mxu0
    %v4064 = vadd.f32 0.0, %v4063
    %v4065 = vpop.f32.mrf.mxu0
    %v4066 = vadd.f32 0.0, %v4065
    %4067 = vmatmul.bf16.gmra.mxu0 %v3466
    %v4068 = vpop.f32.mrf.mxu0
    %v4069 = vadd.f32 0.0, %v4068
    %v4070 = vpop.f32.mrf.mxu0
    %v4071 = vadd.f32 0.0, %v4070
    %4072 = vmatmul.bf16.gmra.mxu0 %v3484
    %v4073 = vpop.f32.mrf.mxu0
    %v4074 = vadd.f32 0.0, %v4073
    %v4075 = vpop.f32.mrf.mxu0
    %v4076 = vadd.f32 0.0, %v4075
    %4077 = vmatmul.bf16.gmra.mxu0 %v3486
    %v4078 = vpop.f32.mrf.mxu0
    %v4079 = vadd.f32 0.0, %v4078
    %v4080 = vpop.f32.mrf.mxu0
    %v4081 = vadd.f32 0.0, %v4080
    %4082 = vdwg.mxu0
    %4083 = vmatpush.bf16.msra.mxu0 %v3815
    %4084 = vmatpush.bf16.msra.mxu0 %v3811
    %4085 = vmatpush.bf16.msra.mxu0 %v3807
    %4086 = vmatpush.bf16.msra.mxu0 %v3803
    %4087 = vmatpush.bf16.msra.mxu0 %v3799
    %4088 = vmatpush.bf16.msra.mxu0 %v3795
    %4089 = vmatpush.bf16.msra.mxu0 %v3791
    %4090 = vmatpush.bf16.msra.mxu0 %v3787
    %4091 = vmatmul.bf16.gmra.mxu0 %v3465
    %v4092 = vpop.f32.mrf.mxu0
    %v4093 = vadd.f32 %v4064, %v4092
    %v4094 = vpop.f32.mrf.mxu0
    %v4095 = vadd.f32 %v4066, %v4094
    %4096 = vmatmul.bf16.gmra.mxu0 %v3467
    %v4097 = vpop.f32.mrf.mxu0
    %v4098 = vadd.f32 %v4069, %v4097
    %v4099 = vpop.f32.mrf.mxu0
    %v4100 = vadd.f32 %v4071, %v4099
    %4101 = vmatmul.bf16.gmra.mxu0 %v3485
    %v4102 = vpop.f32.mrf.mxu0
    %v4103 = vadd.f32 %v4074, %v4102
    %v4104 = vpop.f32.mrf.mxu0
    %v4105 = vadd.f32 %v4076, %v4104
    %4106 = vmatmul.bf16.gmra.mxu0 %v3487
    %v4107 = vpop.f32.mrf.mxu0
    %v4108 = vadd.f32 %v4079, %v4107
    %v4109 = vpop.f32.mrf.mxu0
    %v4110 = vadd.f32 %v4081, %v4109
    %4111 = vdwg.mxu0
    %v4116 = vrot.slane %v4103, 7
    %v4117 = vrot.slane %v4105, 7
    %v4118 = vsel %vm869, %v4116, %v4117
    %v4119 = vrot.slane %v4108, 7
    %v4120 = vrot.slane %v4110, 7
    %v4121 = vsel %vm869, %v4119, %v4120
    %v4126 = vsel %vm869, 0.0, %v4116
    %v4127 = vsel %vm869, 0.0, %v4119
    %v4128 = vadd.f32 %v3977, %v4126
    %v4129 = vadd.f32 %v3979, %v4118
    %v4130 = vadd.f32 %v3982, %v4127
    %v4131 = vadd.f32 %v3984, %v4121
    %v4132 = vadd.f32 %v3987, %v4093
    %v4133 = vadd.f32 %v3989, %v4095
    %v4134 = vadd.f32 %v3992, %v4098
    %v4135 = vadd.f32 %v3994, %v4100
    %v4136 = vadd.f32 %v4035, %v3929
    %v4137 = vadd.f32 %v4037, %v3931
    %v4138 = vadd.f32 %v4040, %v3934
    %v4139 = vadd.f32 %v4042, %v3936
    %v4144 = vrot.slane %v3919, 1
    %v4145 = vrot.slane %v3921, 1
    %v4146 = vsel %vm3203, %v4144, %v4145
    %v4147 = vrot.slane %v3924, 1
    %v4148 = vrot.slane %v3926, 1
    %v4149 = vsel %vm3203, %v4147, %v4148
    %v4154 = vsel %vm3203, %v4145, 0.0
    %v4155 = vsel %vm3203, %v4148, 0.0
    %v4156 = vadd.f32 %v4045, %v4146
    %v4157 = vadd.f32 %v4047, %v4154
    %v4158 = vadd.f32 %v4050, %v4149
    %v4159 = vadd.f32 %v4052, %v4155
    %v4160 = vld [vmem:[%s8] sm:$0x1]
    %v4161 = vld [vmem:[#allocation14] sm:$0x1]
    %v4162 = vadd.f32 %v4128, %v4129
    %v4163 = vadd.f32 %v4162, %v4130
    %v4164 = vadd.f32 %v4163, %v4131
    %v4165 = vrot.slane %v4164, 4
    %v4166 = vadd.f32 %v4164, %v4165
    %v4167 = vrot.slane %v4166, 2
    %v4168 = vadd.f32 %v4166, %v4167
    %v4169 = vrot.slane %v4168, 1
    %v4170 = vadd.f32 %v4168, %v4169
    %v4171 = vadd.f32 %v4132, %v4133
    %v4172 = vadd.f32 %v4171, %v4134
    %v4173 = vadd.f32 %v4172, %v4135
    %v4174 = vrot.slane %v4173, 4
    %v4175 = vadd.f32 %v4173, %v4174
    %v4176 = vrot.slane %v4175, 2
    %v4177 = vadd.f32 %v4175, %v4176
    %v4178 = vrot.slane %v4177, 1
    %v4179 = vadd.f32 %v4177, %v4178
    %v4180 = vadd.f32 %v4170, %v4179
    %v4181 = vadd.f32 %v4136, %v4137
    %v4182 = vadd.f32 %v4181, %v4138
    %v4183 = vadd.f32 %v4182, %v4139
    %v4184 = vrot.slane %v4183, 4
    %v4185 = vadd.f32 %v4183, %v4184
    %v4186 = vrot.slane %v4185, 2
    %v4187 = vadd.f32 %v4185, %v4186
    %v4188 = vrot.slane %v4187, 1
    %v4189 = vadd.f32 %v4187, %v4188
    %v4190 = vadd.f32 %v4180, %v4189
    %v4191 = vadd.f32 %v4156, %v4157
    %v4192 = vadd.f32 %v4191, %v4158
    %v4193 = vadd.f32 %v4192, %v4159
    %v4194 = vrot.slane %v4193, 4
    %v4195 = vadd.f32 %v4193, %v4194
    %v4196 = vrot.slane %v4195, 2
    %v4197 = vadd.f32 %v4195, %v4196
    %v4198 = vrot.slane %v4197, 1
    %v4199 = vadd.f32 %v4197, %v4198
    %v4200 = vadd.f32 %v4190, %v4199
    %v4201 = vmul.f32 %v4200, 0.0078125
    %v4202 = vsub.f32 %v4128, %v4201
    %v4203 = vsub.f32 %v4129, %v4201
    %v4204 = vsub.f32 %v4130, %v4201
    %v4205 = vsub.f32 %v4131, %v4201
    %v4206 = vmul.f32 %v4202, %v4202
    %v4207 = vmul.f32 %v4203, %v4203
    %v4208 = vmul.f32 %v4204, %v4204
    %v4209 = vmul.f32 %v4205, %v4205
    %v4210 = vadd.f32 %v4206, %v4207
    %v4211 = vadd.f32 %v4210, %v4208
    %v4212 = vadd.f32 %v4211, %v4209
    %v4213 = vrot.slane %v4212, 4
    %v4214 = vadd.f32 %v4212, %v4213
    %v4215 = vrot.slane %v4214, 2
    %v4216 = vadd.f32 %v4214, %v4215
    %v4217 = vrot.slane %v4216, 1
    %v4218 = vadd.f32 %v4216, %v4217
    %v4219 = vsub.f32 %v4132, %v4201
    %v4220 = vsub.f32 %v4133, %v4201
    %v4221 = vsub.f32 %v4134, %v4201
    %v4222 = vsub.f32 %v4135, %v4201
    %v4223 = vmul.f32 %v4219, %v4219
    %v4224 = vmul.f32 %v4220, %v4220
    %v4225 = vmul.f32 %v4221, %v4221
    %v4226 = vmul.f32 %v4222, %v4222
    %v4227 = vadd.f32 %v4223, %v4224
    %v4228 = vadd.f32 %v4227, %v4225
    %v4229 = vadd.f32 %v4228, %v4226
    %v4230 = vrot.slane %v4229, 4
    %v4231 = vadd.f32 %v4229, %v4230
    %v4232 = vrot.slane %v4231, 2
    %v4233 = vadd.f32 %v4231, %v4232
    %v4234 = vrot.slane %v4233, 1
    %v4235 = vadd.f32 %v4233, %v4234
    %v4236 = vadd.f32 %v4218, %v4235
    %v4237 = vsub.f32 %v4136, %v4201
    %v4238 = vsub.f32 %v4137, %v4201
    %v4239 = vsub.f32 %v4138, %v4201
    %v4240 = vsub.f32 %v4139, %v4201
    %v4241 = vmul.f32 %v4237, %v4237
    %v4242 = vmul.f32 %v4238, %v4238
    %v4243 = vmul.f32 %v4239, %v4239
    %v4244 = vmul.f32 %v4240, %v4240
    %v4245 = vadd.f32 %v4241, %v4242
    %v4246 = vadd.f32 %v4245, %v4243
    %v4247 = vadd.f32 %v4246, %v4244
    %v4248 = vrot.slane %v4247, 4
    %v4249 = vadd.f32 %v4247, %v4248
    %v4250 = vrot.slane %v4249, 2
    %v4251 = vadd.f32 %v4249, %v4250
    %v4252 = vrot.slane %v4251, 1
    %v4253 = vadd.f32 %v4251, %v4252
    %v4254 = vadd.f32 %v4236, %v4253
    %v4255 = vsub.f32 %v4156, %v4201
    %v4256 = vsub.f32 %v4157, %v4201
    %v4257 = vsub.f32 %v4158, %v4201
    %v4258 = vsub.f32 %v4159, %v4201
    %v4259 = vmul.f32 %v4255, %v4255
    %v4260 = vmul.f32 %v4256, %v4256
    %v4261 = vmul.f32 %v4257, %v4257
    %v4262 = vmul.f32 %v4258, %v4258
    %v4263 = vadd.f32 %v4259, %v4260
    %v4264 = vadd.f32 %v4263, %v4261
    %v4265 = vadd.f32 %v4264, %v4262
    %v4266 = vrot.slane %v4265, 4
    %v4267 = vadd.f32 %v4265, %v4266
    %v4268 = vrot.slane %v4267, 2
    %v4269 = vadd.f32 %v4267, %v4268
    %v4270 = vrot.slane %v4269, 1
    %v4271 = vadd.f32 %v4269, %v4270
    %v4272 = vadd.f32 %v4254, %v4271
    %v4273 = vmul.f32 %v4272, 0.0078125
    %v4274 = vadd.f32 %v4273, 1e-05
    %v4275 = vrsqrt.pop %v4274
    %v4276 = vmul.f32 %v4275, %v4274
    %v4277 = vmul.f32 %v4276, %v4275
    %v4278 = vmul.f32 0.5, %v4277
    %v4279 = vsub.f32 1.5, %v4278
    %v4280 = vmul.f32 %v4275, %v4279
    %vm4281 = vweird.f32 %v4274
    %vm4282 = vweird.f32 %v4275
    %vm4283 = vmor %vm4281, %vm4282
    %v4284 = vsel %vm4283, %v4275, %v4280
    %v4285 = vmul.f32 %v4160, %v4284
    %v4286 = vmul.f32 %v4201, %v4285
    %v4287 = vsub.f32 %v4161, %v4286
    %v4289 = vperm.slane %v4285, 0
    %v4291 = vmul.f32 %v4128, %v4289
    %v4292 = vmul.f32 %v4129, %v4289
    %v4293 = vmul.f32 %v4130, %v4289
    %v4294 = vmul.f32 %v4131, %v4289
    %v4296 = vperm.slane %v4287, 0
    %v4298 = vadd.f32 %v4291, %v4296
    %v4299 = vadd.f32 %v4292, %v4296
    %v4300 = vadd.f32 %v4293, %v4296
    %v4301 = vadd.f32 %v4294, %v4296
    %v4302 = vmax.f32 %v4298, 0.0
    %v4303 = vmax.f32 %v4299, 0.0
    %v4304 = vmax.f32 %v4300, 0.0
    %v4305 = vmax.f32 %v4301, 0.0
    %v4306 = vpack.c.bf16 %v4302, %v4302
    %v4307 = vpack.c.bf16 %v4303, %v4303
    %v4308 = vpack.c.bf16 %v4304, %v4304
    %v4309 = vpack.c.bf16 %v4305, %v4305
    %v4310 = vmul.f32 %v4132, %v4289
    %v4311 = vmul.f32 %v4133, %v4289
    %v4312 = vmul.f32 %v4134, %v4289
    %v4313 = vmul.f32 %v4135, %v4289
    %v4314 = vadd.f32 %v4310, %v4296
    %v4315 = vadd.f32 %v4311, %v4296
    %v4316 = vadd.f32 %v4312, %v4296
    %v4317 = vadd.f32 %v4313, %v4296
    %v4318 = vmax.f32 %v4314, 0.0
    %v4319 = vmax.f32 %v4315, 0.0
    %v4320 = vmax.f32 %v4316, 0.0
    %v4321 = vmax.f32 %v4317, 0.0
    %v4322 = vpack.c.bf16 %v4318, %v4318
    %v4323 = vpack.c.bf16 %v4319, %v4319
    %v4324 = vpack.c.bf16 %v4320, %v4320
    %v4325 = vpack.c.bf16 %v4321, %v4321
    %v4326 = vmul.f32 %v4136, %v4289
    %v4327 = vmul.f32 %v4137, %v4289
    %v4328 = vmul.f32 %v4138, %v4289
    %v4329 = vmul.f32 %v4139, %v4289
    %v4330 = vadd.f32 %v4326, %v4296
    %v4331 = vadd.f32 %v4327, %v4296
    %v4332 = vadd.f32 %v4328, %v4296
    %v4333 = vadd.f32 %v4329, %v4296
    %v4334 = vmax.f32 %v4330, 0.0
    %v4335 = vmax.f32 %v4331, 0.0
    %v4336 = vmax.f32 %v4332, 0.0
    %v4337 = vmax.f32 %v4333, 0.0
    %v4338 = vpack.c.bf16 %v4334, %v4334
    %v4339 = vpack.c.bf16 %v4335, %v4335
    %v4340 = vpack.c.bf16 %v4336, %v4336
    %v4341 = vpack.c.bf16 %v4337, %v4337
    %v4342 = vmul.f32 %v4156, %v4289
    %v4343 = vmul.f32 %v4157, %v4289
    %v4344 = vmul.f32 %v4158, %v4289
    %v4345 = vmul.f32 %v4159, %v4289
    %v4346 = vadd.f32 %v4342, %v4296
    %v4347 = vadd.f32 %v4343, %v4296
    %v4348 = vadd.f32 %v4344, %v4296
    %v4349 = vadd.f32 %v4345, %v4296
    %v4350 = vmax.f32 %v4346, 0.0
    %v4351 = vmax.f32 %v4347, 0.0
    %v4352 = vmax.f32 %v4348, 0.0
    %v4353 = vmax.f32 %v4349, 0.0
    %v4354 = vpack.c.bf16 %v4350, %v4350
    %v4355 = vpack.c.bf16 %v4351, %v4351
    %v4356 = vpack.c.bf16 %v4352, %v4352
    %v4357 = vpack.c.bf16 %v4353, %v4353
    %v4362 = vunpack.c.l.b16 %v4306
    %v4363 = vunpack.c.l.b16 %v4307
    %v4364 = vunpack.c.l.b16 %v4308
    %v4365 = vunpack.c.l.b16 %v4309
    %v4366 = vpack.c.b16 %v4363, %v4362
    %v4367 = vpack.c.b16 %v4365, %v4364
    %v4374 = vunpack.c.l.b16 %v4322
    %v4375 = vunpack.c.l.b16 %v4323
    %v4376 = vunpack.c.l.b16 %v4324
    %v4377 = vunpack.c.l.b16 %v4325
    %v4378 = vpack.c.b16 %v4375, %v4374
    %v4379 = vpack.c.b16 %v4377, %v4376
    %v4386 = vunpack.c.l.b16 %v4338
    %v4387 = vunpack.c.l.b16 %v4339
    %v4388 = vunpack.c.l.b16 %v4340
    %v4389 = vunpack.c.l.b16 %v4341
    %v4390 = vpack.c.b16 %v4387, %v4386
    %v4391 = vpack.c.b16 %v4389, %v4388
    %v4398 = vunpack.c.l.b16 %v4354
    %v4399 = vunpack.c.l.b16 %v4355
    %v4400 = vunpack.c.l.b16 %v4356
    %v4401 = vunpack.c.l.b16 %v4357
    %v4402 = vpack.c.b16 %v4399, %v4398
    %v4403 = vpack.c.b16 %v4401, %v4400
    %s4406 = smul.u32 4, 16
    %s4407 = smul.u32 %s4406, 2
    %s4408 = sshll.u32 %s4407, 4
    %4409 = dma.done %s150, %s4408
    %v4410 = vld [vmem:[#allocation4] sm:$0xff]
    %v4411 = vld [vmem:[#allocation4 + $0x8] sm:$0xff]
    %v4412 = vld [vmem:[#allocation4 + $0x10] sm:$0xff]
    %v4413 = vld [vmem:[#allocation4 + $0x18] sm:$0xff]
    %v4414 = vld [vmem:[#allocation4 + $0x20] sm:$0xff]
    %v4415 = vld [vmem:[#allocation4 + $0x28] sm:$0xff]
    %v4416 = vld [vmem:[#allocation4 + $0x30] sm:$0xff]
    %v4417 = vld [vmem:[#allocation4 + $0x38] sm:$0xff]
    %v4418 = vld [vmem:[#allocation4 + $0x40] sm:$0xff]
    %v4419 = vld [vmem:[#allocation4 + $0x48] sm:$0xff]
    %v4420 = vld [vmem:[#allocation4 + $0x50] sm:$0xff]
    %v4421 = vld [vmem:[#allocation4 + $0x58] sm:$0xff]
    %v4422 = vld [vmem:[#allocation4 + $0x60] sm:$0xff]
    %v4423 = vld [vmem:[#allocation4 + $0x68] sm:$0xff]
    %v4424 = vld [vmem:[#allocation4 + $0x70] sm:$0xff]
    %v4425 = vld [vmem:[#allocation4 + $0x78] sm:$0xff]
    %v4442 = vunpack.c.l.b16 %v4410
    %v4443 = vunpack.c.h.b16 %v4410
    %v4444 = vunpack.c.l.b16 %v4411
    %v4445 = vunpack.c.h.b16 %v4411
    %v4446 = vunpack.c.l.b16 %v4412
    %v4447 = vunpack.c.h.b16 %v4412
    %v4448 = vunpack.c.l.b16 %v4413
    %v4449 = vunpack.c.h.b16 %v4413
    %v4450 = vunpack.c.l.b16 %v4414
    %v4451 = vunpack.c.h.b16 %v4414
    %v4452 = vunpack.c.l.b16 %v4415
    %v4453 = vunpack.c.h.b16 %v4415
    %v4454 = vunpack.c.l.b16 %v4416
    %v4455 = vunpack.c.h.b16 %v4416
    %v4456 = vunpack.c.l.b16 %v4417
    %v4457 = vunpack.c.h.b16 %v4417
    %v4458 = vunpack.c.l.b16 %v4418
    %v4459 = vunpack.c.h.b16 %v4418
    %v4460 = vunpack.c.l.b16 %v4419
    %v4461 = vunpack.c.h.b16 %v4419
    %v4462 = vunpack.c.l.b16 %v4420
    %v4463 = vunpack.c.h.b16 %v4420
    %v4464 = vunpack.c.l.b16 %v4421
    %v4465 = vunpack.c.h.b16 %v4421
    %v4466 = vunpack.c.l.b16 %v4422
    %v4467 = vunpack.c.h.b16 %v4422
    %v4468 = vunpack.c.l.b16 %v4423
    %v4469 = vunpack.c.h.b16 %v4423
    %v4470 = vunpack.c.l.b16 %v4424
    %v4471 = vunpack.c.h.b16 %v4424
    %v4472 = vunpack.c.l.b16 %v4425
    %v4473 = vunpack.c.h.b16 %v4425
    %v4474 = vpack.c.b16 %v4444, %v4442
    %v4475 = vpack.c.b16 %v4445, %v4443
    %v4476 = vpack.c.b16 %v4448, %v4446
    %v4477 = vpack.c.b16 %v4449, %v4447
    %v4478 = vpack.c.b16 %v4452, %v4450
    %v4479 = vpack.c.b16 %v4453, %v4451
    %v4480 = vpack.c.b16 %v4456, %v4454
    %v4481 = vpack.c.b16 %v4457, %v4455
    %v4482 = vpack.c.b16 %v4460, %v4458
    %v4483 = vpack.c.b16 %v4461, %v4459
    %v4484 = vpack.c.b16 %v4464, %v4462
    %v4485 = vpack.c.b16 %v4465, %v4463
    %v4486 = vpack.c.b16 %v4468, %v4466
    %v4487 = vpack.c.b16 %v4469, %v4467
    %v4488 = vpack.c.b16 %v4472, %v4470
    %v4489 = vpack.c.b16 %v4473, %v4471
    %4506 = vmatpush.bf16.msra.mxu0 %v4488
    %4507 = vmatpush.bf16.msra.mxu0 %v4486
    %4508 = vmatpush.bf16.msra.mxu0 %v4484
    %4509 = vmatpush.bf16.msra.mxu0 %v4482
    %4510 = vmatpush.bf16.msra.mxu0 %v4480
    %4511 = vmatpush.bf16.msra.mxu0 %v4478
    %4512 = vmatpush.bf16.msra.mxu0 %v4476
    %4513 = vmatpush.bf16.msra.mxu0 %v4474
    %4514 = vmatmul.bf16.gmra.mxu0 %v4366
    %v4515 = vpop.f32.mrf.mxu0
    %v4516 = vadd.f32 0.0, %v4515
    %v4517 = vpop.f32.mrf.mxu0
    %v4518 = vadd.f32 0.0, %v4517
    %4519 = vmatmul.bf16.gmra.mxu0 %v4367
    %v4520 = vpop.f32.mrf.mxu0
    %v4521 = vadd.f32 0.0, %v4520
    %v4522 = vpop.f32.mrf.mxu0
    %v4523 = vadd.f32 0.0, %v4522
    %4524 = vmatmul.bf16.gmra.mxu0 %v4378
    %v4525 = vpop.f32.mrf.mxu0
    %v4526 = vadd.f32 0.0, %v4525
    %v4527 = vpop.f32.mrf.mxu0
    %v4528 = vadd.f32 0.0, %v4527
    %4529 = vmatmul.bf16.gmra.mxu0 %v4379
    %v4530 = vpop.f32.mrf.mxu0
    %v4531 = vadd.f32 0.0, %v4530
    %v4532 = vpop.f32.mrf.mxu0
    %v4533 = vadd.f32 0.0, %v4532
    %4534 = vmatmul.bf16.gmra.mxu0 %v4390
    %v4535 = vpop.f32.mrf.mxu0
    %v4536 = vadd.f32 0.0, %v4535
    %v4537 = vpop.f32.mrf.mxu0
    %v4538 = vadd.f32 0.0, %v4537
    %4539 = vmatmul.bf16.gmra.mxu0 %v4391
    %v4540 = vpop.f32.mrf.mxu0
    %v4541 = vadd.f32 0.0, %v4540
    %v4542 = vpop.f32.mrf.mxu0
    %v4543 = vadd.f32 0.0, %v4542
    %4544 = vmatmul.bf16.gmra.mxu0 %v4402
    %v4545 = vpop.f32.mrf.mxu0
    %v4546 = vadd.f32 0.0, %v4545
    %v4547 = vpop.f32.mrf.mxu0
    %v4548 = vadd.f32 0.0, %v4547
    %4549 = vmatmul.bf16.gmra.mxu0 %v4403
    %v4550 = vpop.f32.mrf.mxu0
    %v4551 = vadd.f32 0.0, %v4550
    %v4552 = vpop.f32.mrf.mxu0
    %v4553 = vadd.f32 0.0, %v4552
    %4554 = vdwg.mxu0
    %4555 = vmatpush.bf16.msra.mxu0 %v4489
    %4556 = vmatpush.bf16.msra.mxu0 %v4487
    %4557 = vmatpush.bf16.msra.mxu0 %v4485
    %4558 = vmatpush.bf16.msra.mxu0 %v4483
    %4559 = vmatpush.bf16.msra.mxu0 %v4481
    %4560 = vmatpush.bf16.msra.mxu0 %v4479
    %4561 = vmatpush.bf16.msra.mxu0 %v4477
    %4562 = vmatpush.bf16.msra.mxu0 %v4475
    %4563 = vmatmul.bf16.gmra.mxu0 %v4366
    %v4564 = vpop.f32.mrf.mxu0
    %v4565 = vadd.f32 0.0, %v4564
    %v4566 = vpop.f32.mrf.mxu0
    %v4567 = vadd.f32 0.0, %v4566
    %4568 = vmatmul.bf16.gmra.mxu0 %v4367
    %v4569 = vpop.f32.mrf.mxu0
    %v4570 = vadd.f32 0.0, %v4569
    %v4571 = vpop.f32.mrf.mxu0
    %v4572 = vadd.f32 0.0, %v4571
    %4573 = vmatmul.bf16.gmra.mxu0 %v4378
    %v4574 = vpop.f32.mrf.mxu0
    %v4575 = vadd.f32 0.0, %v4574
    %v4576 = vpop.f32.mrf.mxu0
    %v4577 = vadd.f32 0.0, %v4576
    %4578 = vmatmul.bf16.gmra.mxu0 %v4379
    %v4579 = vpop.f32.mrf.mxu0
    %v4580 = vadd.f32 0.0, %v4579
    %v4581 = vpop.f32.mrf.mxu0
    %v4582 = vadd.f32 0.0, %v4581
    %4583 = vmatmul.bf16.gmra.mxu0 %v4390
    %v4584 = vpop.f32.mrf.mxu0
    %v4585 = vadd.f32 0.0, %v4584
    %v4586 = vpop.f32.mrf.mxu0
    %v4587 = vadd.f32 0.0, %v4586
    %4588 = vmatmul.bf16.gmra.mxu0 %v4391
    %v4589 = vpop.f32.mrf.mxu0
    %v4590 = vadd.f32 0.0, %v4589
    %v4591 = vpop.f32.mrf.mxu0
    %v4592 = vadd.f32 0.0, %v4591
    %4593 = vmatmul.bf16.gmra.mxu0 %v4402
    %v4594 = vpop.f32.mrf.mxu0
    %v4595 = vadd.f32 0.0, %v4594
    %v4596 = vpop.f32.mrf.mxu0
    %v4597 = vadd.f32 0.0, %v4596
    %4598 = vmatmul.bf16.gmra.mxu0 %v4403
    %v4599 = vpop.f32.mrf.mxu0
    %v4600 = vadd.f32 0.0, %v4599
    %v4601 = vpop.f32.mrf.mxu0
    %v4602 = vadd.f32 0.0, %v4601
    %4603 = vdwg.mxu0
    %v4608 = vrot.slane %v4595, 7
    %v4609 = vrot.slane %v4597, 7
    %v4610 = vsel %vm869, %v4608, %v4609
    %v4611 = vrot.slane %v4600, 7
    %v4612 = vrot.slane %v4602, 7
    %v4613 = vsel %vm869, %v4611, %v4612
    %4614 = vrot.lane.b32.xlu0 %v4608, 64
    %v4615 = vpop.permute.xlu0 %4614
    %4616 = vrot.lane.b32.xlu0 %v4610, 64
    %v4617 = vpop.permute.xlu0 %4616
    %4618 = vrot.lane.b32.xlu0 %v4611, 64
    %v4619 = vpop.permute.xlu0 %4618
    %4620 = vrot.lane.b32.xlu0 %v4613, 64
    %v4621 = vpop.permute.xlu0 %4620
    %v4624 = vsel %vm869, 0.0, %v4615
    %v4625 = vsel %vm869, 0.0, %v4619
    %4628 = vrot.lane.b32.xlu0 %v4624, 64
    %v4629 = vpop.permute.xlu0 %4628
    %4630 = vrot.lane.b32.xlu0 %v4617, 64
    %v4631 = vpop.permute.xlu0 %4630
    %4632 = vrot.lane.b32.xlu0 %v4625, 64
    %v4633 = vpop.permute.xlu0 %4632
    %4634 = vrot.lane.b32.xlu0 %v4621, 64
    %v4635 = vpop.permute.xlu0 %4634
    %v4640 = vadd.f32 %v4516, %v4629
    %v4641 = vadd.f32 %v4518, %v4631
    %v4642 = vadd.f32 %v4521, %v4633
    %v4643 = vadd.f32 %v4523, %v4635
    %v4644 = vadd.f32 %v4526, %v4585
    %v4645 = vadd.f32 %v4528, %v4587
    %v4646 = vadd.f32 %v4531, %v4590
    %v4647 = vadd.f32 %v4533, %v4592
    %v4648 = vadd.f32 %v4536, %v4565
    %v4649 = vadd.f32 %v4538, %v4567
    %v4650 = vadd.f32 %v4541, %v4570
    %v4651 = vadd.f32 %v4543, %v4572
    %v4652 = vadd.f32 %v4546, %v4575
    %v4653 = vadd.f32 %v4548, %v4577
    %v4654 = vadd.f32 %v4551, %v4580
    %v4655 = vadd.f32 %v4553, %v4582
    %v4660 = vrot.slane %v4516, 1
    %v4661 = vrot.slane %v4518, 1
    %v4662 = vsel %vm3203, %v4660, %v4661
    %v4663 = vrot.slane %v4521, 1
    %v4664 = vrot.slane %v4523, 1
    %v4665 = vsel %vm3203, %v4663, %v4664
    %v4670 = vsel %vm3203, %v4661, 0.0
    %v4671 = vsel %vm3203, %v4664, 0.0
    %v4672 = vadd.f32 %v4595, %v4662
    %v4673 = vadd.f32 %v4597, %v4670
    %v4674 = vadd.f32 %v4600, %v4665
    %v4675 = vadd.f32 %v4602, %v4671
    %v4676 = vld [vmem:[%s11] sm:$0x1]
    %v4677 = vld [vmem:[#allocation16] sm:$0x1]
    %vm4678 = vcmask 1048064
    %v4679 = vsel %vm4678, %v4640, 0.0
    %v4680 = vsel %vm4678, %v4641, 0.0
    %v4681 = vadd.f32 %v4679, %v4680
    %v4682 = vsel %vm4678, %v4642, 0.0
    %v4683 = vadd.f32 %v4681, %v4682
    %v4684 = vsel %vm4678, %v4643, 0.0
    %v4685 = vadd.f32 %v4683, %v4684
    %v4686 = vrot.slane %v4685, 4
    %v4687 = vadd.f32 %v4685, %v4686
    %v4688 = vrot.slane %v4687, 2
    %v4689 = vadd.f32 %v4687, %v4688
    %v4690 = vrot.slane %v4689, 1
    %v4691 = vadd.f32 %v4689, %v4690
    %v4692 = vsel %vm4678, %v4644, 0.0
    %v4693 = vsel %vm4678, %v4645, 0.0
    %v4694 = vadd.f32 %v4692, %v4693
    %v4695 = vsel %vm4678, %v4646, 0.0
    %v4696 = vadd.f32 %v4694, %v4695
    %v4697 = vsel %vm4678, %v4647, 0.0
    %v4698 = vadd.f32 %v4696, %v4697
    %v4699 = vrot.slane %v4698, 4
    %v4700 = vadd.f32 %v4698, %v4699
    %v4701 = vrot.slane %v4700, 2
    %v4702 = vadd.f32 %v4700, %v4701
    %v4703 = vrot.slane %v4702, 1
    %v4704 = vadd.f32 %v4702, %v4703
    %v4705 = vadd.f32 %v4691, %v4704
    %v4706 = vsel %vm4678, %v4648, 0.0
    %v4707 = vsel %vm4678, %v4649, 0.0
    %v4708 = vadd.f32 %v4706, %v4707
    %v4709 = vsel %vm4678, %v4650, 0.0
    %v4710 = vadd.f32 %v4708, %v4709
    %v4711 = vsel %vm4678, %v4651, 0.0
    %v4712 = vadd.f32 %v4710, %v4711
    %v4713 = vrot.slane %v4712, 4
    %v4714 = vadd.f32 %v4712, %v4713
    %v4715 = vrot.slane %v4714, 2
    %v4716 = vadd.f32 %v4714, %v4715
    %v4717 = vrot.slane %v4716, 1
    %v4718 = vadd.f32 %v4716, %v4717
    %v4719 = vadd.f32 %v4705, %v4718
    %v4720 = vsel %vm4678, %v4652, 0.0
    %v4721 = vsel %vm4678, %v4653, 0.0
    %v4722 = vadd.f32 %v4720, %v4721
    %v4723 = vsel %vm4678, %v4654, 0.0
    %v4724 = vadd.f32 %v4722, %v4723
    %v4725 = vsel %vm4678, %v4655, 0.0
    %v4726 = vadd.f32 %v4724, %v4725
    %v4727 = vrot.slane %v4726, 4
    %v4728 = vadd.f32 %v4726, %v4727
    %v4729 = vrot.slane %v4728, 2
    %v4730 = vadd.f32 %v4728, %v4729
    %v4731 = vrot.slane %v4730, 1
    %v4732 = vadd.f32 %v4730, %v4731
    %v4733 = vadd.f32 %v4719, %v4732
    %vm4734 = vcmask 523264
    %v4735 = vsel %vm4734, %v4648, 0.0
    %v4736 = vsel %vm4734, %v4649, 0.0
    %v4737 = vadd.f32 %v4735, %v4736
    %v4738 = vsel %vm4734, %v4650, 0.0
    %v4739 = vadd.f32 %v4737, %v4738
    %v4740 = vsel %vm4734, %v4651, 0.0
    %v4741 = vadd.f32 %v4739, %v4740
    %v4742 = vrot.slane %v4741, 4
    %v4743 = vadd.f32 %v4741, %v4742
    %v4744 = vrot.slane %v4743, 2
    %v4745 = vadd.f32 %v4743, %v4744
    %v4746 = vrot.slane %v4745, 1
    %v4747 = vadd.f32 %v4745, %v4746
    %4749 = vrot.lane.b32.xlu0 %v4747, 64
    %v4750 = vpop.permute.xlu0 %4749
    %v4752 = vadd.f32 %v4733, %v4750
    %v4753 = vsel %vm4734, %v4652, 0.0
    %v4754 = vsel %vm4734, %v4653, 0.0
    %v4755 = vadd.f32 %v4753, %v4754
    %v4756 = vsel %vm4734, %v4654, 0.0
    %v4757 = vadd.f32 %v4755, %v4756
    %v4758 = vsel %vm4734, %v4655, 0.0
    %v4759 = vadd.f32 %v4757, %v4758
    %v4760 = vrot.slane %v4759, 4
    %v4761 = vadd.f32 %v4759, %v4760
    %v4762 = vrot.slane %v4761, 2
    %v4763 = vadd.f32 %v4761, %v4762
    %v4764 = vrot.slane %v4763, 1
    %v4765 = vadd.f32 %v4763, %v4764
    %4767 = vrot.lane.b32.xlu0 %v4765, 64
    %v4768 = vpop.permute.xlu0 %4767
    %v4770 = vadd.f32 %v4752, %v4768
    %v4771 = vsel %vm4734, %v4644, 0.0
    %v4772 = vsel %vm4734, %v4645, 0.0
    %v4773 = vadd.f32 %v4771, %v4772
    %v4774 = vsel %vm4734, %v4646, 0.0
    %v4775 = vadd.f32 %v4773, %v4774
    %v4776 = vsel %vm4734, %v4647, 0.0
    %v4777 = vadd.f32 %v4775, %v4776
    %v4778 = vrot.slane %v4777, 4
    %v4779 = vadd.f32 %v4777, %v4778
    %v4780 = vrot.slane %v4779, 2
    %v4781 = vadd.f32 %v4779, %v4780
    %v4782 = vrot.slane %v4781, 1
    %v4783 = vadd.f32 %v4781, %v4782
    %4785 = vrot.lane.b32.xlu0 %v4783, 64
    %v4786 = vpop.permute.xlu0 %4785
    %v4788 = vadd.f32 %v4770, %v4786
    %v4789 = vsel %vm4734, %v4672, 0.0
    %v4790 = vsel %vm4734, %v4673, 0.0
    %v4791 = vadd.f32 %v4789, %v4790
    %v4792 = vsel %vm4734, %v4674, 0.0
    %v4793 = vadd.f32 %v4791, %v4792
    %v4794 = vsel %vm4734, %v4675, 0.0
    %v4795 = vadd.f32 %v4793, %v4794
    %v4796 = vrot.slane %v4795, 4
    %v4797 = vadd.f32 %v4795, %v4796
    %v4798 = vrot.slane %v4797, 2
    %v4799 = vadd.f32 %v4797, %v4798
    %v4800 = vrot.slane %v4799, 1
    %v4801 = vadd.f32 %v4799, %v4800
    %4803 = vrot.lane.b32.xlu0 %v4801, 64
    %v4804 = vpop.permute.xlu0 %4803
    %v4806 = vadd.f32 %v4788, %v4804
    %v4807 = vmul.f32 %v4806, 0.00390625
    %v4808 = vperm.slane %v4807, 0
    %v4809 = vsub.f32 %v4640, %v4808
    %v4810 = vsub.f32 %v4641, %v4808
    %v4811 = vsub.f32 %v4642, %v4808
    %v4812 = vsub.f32 %v4643, %v4808
    %v4813 = vmul.f32 %v4809, %v4809
    %v4814 = vmul.f32 %v4810, %v4810
    %v4815 = vmul.f32 %v4811, %v4811
    %v4816 = vmul.f32 %v4812, %v4812
    %v4817 = vsel %vm4678, %v4813, 0.0
    %v4818 = vsel %vm4678, %v4814, 0.0
    %v4819 = vadd.f32 %v4817, %v4818
    %v4820 = vsel %vm4678, %v4815, 0.0
    %v4821 = vadd.f32 %v4819, %v4820
    %v4822 = vsel %vm4678, %v4816, 0.0
    %v4823 = vadd.f32 %v4821, %v4822
    %v4824 = vrot.slane %v4823, 4
    %v4825 = vadd.f32 %v4823, %v4824
    %v4826 = vrot.slane %v4825, 2
    %v4827 = vadd.f32 %v4825, %v4826
    %v4828 = vrot.slane %v4827, 1
    %v4829 = vadd.f32 %v4827, %v4828
    %v4830 = vsub.f32 %v4644, %v4808
    %v4831 = vsub.f32 %v4645, %v4808
    %v4832 = vsub.f32 %v4646, %v4808
    %v4833 = vsub.f32 %v4647, %v4808
    %v4834 = vmul.f32 %v4830, %v4830
    %v4835 = vmul.f32 %v4831, %v4831
    %v4836 = vmul.f32 %v4832, %v4832
    %v4837 = vmul.f32 %v4833, %v4833
    %v4838 = vsel %vm4678, %v4834, 0.0
    %v4839 = vsel %vm4678, %v4835, 0.0
    %v4840 = vadd.f32 %v4838, %v4839
    %v4841 = vsel %vm4678, %v4836, 0.0
    %v4842 = vadd.f32 %v4840, %v4841
    %v4843 = vsel %vm4678, %v4837, 0.0
    %v4844 = vadd.f32 %v4842, %v4843
    %v4845 = vrot.slane %v4844, 4
    %v4846 = vadd.f32 %v4844, %v4845
    %v4847 = vrot.slane %v4846, 2
    %v4848 = vadd.f32 %v4846, %v4847
    %v4849 = vrot.slane %v4848, 1
    %v4850 = vadd.f32 %v4848, %v4849
    %v4851 = vadd.f32 %v4829, %v4850
    %v4852 = vsub.f32 %v4648, %v4808
    %v4853 = vsub.f32 %v4649, %v4808
    %v4854 = vsub.f32 %v4650, %v4808
    %v4855 = vsub.f32 %v4651, %v4808
    %v4856 = vmul.f32 %v4852, %v4852
    %v4857 = vmul.f32 %v4853, %v4853
    %v4858 = vmul.f32 %v4854, %v4854
    %v4859 = vmul.f32 %v4855, %v4855
    %v4860 = vsel %vm4678, %v4856, 0.0
    %v4861 = vsel %vm4678, %v4857, 0.0
    %v4862 = vadd.f32 %v4860, %v4861
    %v4863 = vsel %vm4678, %v4858, 0.0
    %v4864 = vadd.f32 %v4862, %v4863
    %v4865 = vsel %vm4678, %v4859, 0.0
    %v4866 = vadd.f32 %v4864, %v4865
    %v4867 = vrot.slane %v4866, 4
    %v4868 = vadd.f32 %v4866, %v4867
    %v4869 = vrot.slane %v4868, 2
    %v4870 = vadd.f32 %v4868, %v4869
    %v4871 = vrot.slane %v4870, 1
    %v4872 = vadd.f32 %v4870, %v4871
    %v4873 = vadd.f32 %v4851, %v4872
    %v4874 = vsub.f32 %v4652, %v4808
    %v4875 = vsub.f32 %v4653, %v4808
    %v4876 = vsub.f32 %v4654, %v4808
    %v4877 = vsub.f32 %v4655, %v4808
    %v4878 = vmul.f32 %v4874, %v4874
    %v4879 = vmul.f32 %v4875, %v4875
    %v4880 = vmul.f32 %v4876, %v4876
    %v4881 = vmul.f32 %v4877, %v4877
    %v4882 = vsel %vm4678, %v4878, 0.0
    %v4883 = vsel %vm4678, %v4879, 0.0
    %v4884 = vadd.f32 %v4882, %v4883
    %v4885 = vsel %vm4678, %v4880, 0.0
    %v4886 = vadd.f32 %v4884, %v4885
    %v4887 = vsel %vm4678, %v4881, 0.0
    %v4888 = vadd.f32 %v4886, %v4887
    %v4889 = vrot.slane %v4888, 4
    %v4890 = vadd.f32 %v4888, %v4889
    %v4891 = vrot.slane %v4890, 2
    %v4892 = vadd.f32 %v4890, %v4891
    %v4893 = vrot.slane %v4892, 1
    %v4894 = vadd.f32 %v4892, %v4893
    %v4895 = vadd.f32 %v4873, %v4894
    %4897 = vrot.lane.b32.xlu0 %v4808, 64
    %v4898 = vpop.permute.xlu0 %4897
    %v4900 = vsub.f32 %v4648, %v4898
    %v4901 = vsub.f32 %v4649, %v4898
    %v4902 = vsub.f32 %v4650, %v4898
    %v4903 = vsub.f32 %v4651, %v4898
    %v4904 = vmul.f32 %v4900, %v4900
    %v4905 = vmul.f32 %v4901, %v4901
    %v4906 = vmul.f32 %v4902, %v4902
    %v4907 = vmul.f32 %v4903, %v4903
    %v4908 = vsel %vm4734, %v4904, 0.0
    %v4909 = vsel %vm4734, %v4905, 0.0
    %v4910 = vadd.f32 %v4908, %v4909
    %v4911 = vsel %vm4734, %v4906, 0.0
    %v4912 = vadd.f32 %v4910, %v4911
    %v4913 = vsel %vm4734, %v4907, 0.0
    %v4914 = vadd.f32 %v4912, %v4913
    %v4915 = vrot.slane %v4914, 4
    %v4916 = vadd.f32 %v4914, %v4915
    %v4917 = vrot.slane %v4916, 2
    %v4918 = vadd.f32 %v4916, %v4917
    %v4919 = vrot.slane %v4918, 1
    %v4920 = vadd.f32 %v4918, %v4919
    %4922 = vrot.lane.b32.xlu0 %v4920, 64
    %v4923 = vpop.permute.xlu0 %4922
    %v4925 = vadd.f32 %v4895, %v4923
    %v4926 = vsub.f32 %v4652, %v4898
    %v4927 = vsub.f32 %v4653, %v4898
    %v4928 = vsub.f32 %v4654, %v4898
    %v4929 = vsub.f32 %v4655, %v4898
    %v4930 = vmul.f32 %v4926, %v4926
    %v4931 = vmul.f32 %v4927, %v4927
    %v4932 = vmul.f32 %v4928, %v4928
    %v4933 = vmul.f32 %v4929, %v4929
    %v4934 = vsel %vm4734, %v4930, 0.0
    %v4935 = vsel %vm4734, %v4931, 0.0
    %v4936 = vadd.f32 %v4934, %v4935
    %v4937 = vsel %vm4734, %v4932, 0.0
    %v4938 = vadd.f32 %v4936, %v4937
    %v4939 = vsel %vm4734, %v4933, 0.0
    %v4940 = vadd.f32 %v4938, %v4939
    %v4941 = vrot.slane %v4940, 4
    %v4942 = vadd.f32 %v4940, %v4941
    %v4943 = vrot.slane %v4942, 2
    %v4944 = vadd.f32 %v4942, %v4943
    %v4945 = vrot.slane %v4944, 1
    %v4946 = vadd.f32 %v4944, %v4945
    %4948 = vrot.lane.b32.xlu0 %v4946, 64
    %v4949 = vpop.permute.xlu0 %4948
    %v4951 = vadd.f32 %v4925, %v4949
    %v4952 = vsub.f32 %v4644, %v4898
    %v4953 = vsub.f32 %v4645, %v4898
    %v4954 = vsub.f32 %v4646, %v4898
    %v4955 = vsub.f32 %v4647, %v4898
    %v4956 = vmul.f32 %v4952, %v4952
    %v4957 = vmul.f32 %v4953, %v4953
    %v4958 = vmul.f32 %v4954, %v4954
    %v4959 = vmul.f32 %v4955, %v4955
    %v4960 = vsel %vm4734, %v4956, 0.0
    %v4961 = vsel %vm4734, %v4957, 0.0
    %v4962 = vadd.f32 %v4960, %v4961
    %v4963 = vsel %vm4734, %v4958, 0.0
    %v4964 = vadd.f32 %v4962, %v4963
    %v4965 = vsel %vm4734, %v4959, 0.0
    %v4966 = vadd.f32 %v4964, %v4965
    %v4967 = vrot.slane %v4966, 4
    %v4968 = vadd.f32 %v4966, %v4967
    %v4969 = vrot.slane %v4968, 2
    %v4970 = vadd.f32 %v4968, %v4969
    %v4971 = vrot.slane %v4970, 1
    %v4972 = vadd.f32 %v4970, %v4971
    %4974 = vrot.lane.b32.xlu0 %v4972, 64
    %v4975 = vpop.permute.xlu0 %4974
    %v4977 = vadd.f32 %v4951, %v4975
    %v4978 = vsub.f32 %v4672, %v4898
    %v4979 = vsub.f32 %v4673, %v4898
    %v4980 = vsub.f32 %v4674, %v4898
    %v4981 = vsub.f32 %v4675, %v4898
    %v4982 = vmul.f32 %v4978, %v4978
    %v4983 = vmul.f32 %v4979, %v4979
    %v4984 = vmul.f32 %v4980, %v4980
    %v4985 = vmul.f32 %v4981, %v4981
    %v4986 = vsel %vm4734, %v4982, 0.0
    %v4987 = vsel %vm4734, %v4983, 0.0
    %v4988 = vadd.f32 %v4986, %v4987
    %v4989 = vsel %vm4734, %v4984, 0.0
    %v4990 = vadd.f32 %v4988, %v4989
    %v4991 = vsel %vm4734, %v4985, 0.0
    %v4992 = vadd.f32 %v4990, %v4991
    %v4993 = vrot.slane %v4992, 4
    %v4994 = vadd.f32 %v4992, %v4993
    %v4995 = vrot.slane %v4994, 2
    %v4996 = vadd.f32 %v4994, %v4995
    %v4997 = vrot.slane %v4996, 1
    %v4998 = vadd.f32 %v4996, %v4997
    %5000 = vrot.lane.b32.xlu0 %v4998, 64
    %v5001 = vpop.permute.xlu0 %5000
    %v5003 = vadd.f32 %v4977, %v5001
    %v5004 = vmul.f32 %v5003, 0.00390625
    %v5005 = vadd.f32 %v5004, 1e-05
    %v5006 = vrsqrt.pop %v5005
    %v5007 = vmul.f32 %v5006, %v5005
    %v5008 = vmul.f32 %v5007, %v5006
    %v5009 = vmul.f32 0.5, %v5008
    %v5010 = vsub.f32 1.5, %v5009
    %v5011 = vmul.f32 %v5006, %v5010
    %vm5012 = vweird.f32 %v5005
    %vm5013 = vweird.f32 %v5006
    %vm5014 = vmor %vm5012, %vm5013
    %v5015 = vsel %vm5014, %v5006, %v5011
    %5017 = vrot.lane.b32.xlu0 %v5015, 64
    %v5018 = vpop.permute.xlu0 %5017
    %v5020 = vmul.f32 %v4676, %v5018
    %v5022 = vperm.slane %v5020, 0
    %5023 = vrot.lane.b32.xlu0 %v5022, 64
    %v5024 = vpop.permute.xlu0 %5023
    %v5026 = vmul.f32 %v4807, %v5024
    %5028 = vrot.lane.b32.xlu0 %v5026, 64
    %v5029 = vpop.permute.xlu0 %5028
    %v5031 = vsub.f32 %v4677, %v5029
    %v5033 = vmul.f32 %v4640, %v5024
    %v5034 = vmul.f32 %v4641, %v5024
    %v5035 = vmul.f32 %v4642, %v5024
    %v5036 = vmul.f32 %v4643, %v5024
    %v5038 = vperm.slane %v5031, 0
    %5040 = vrot.lane.b32.xlu0 %v5038, 64
    %v5041 = vpop.permute.xlu0 %5040
    %v5043 = vadd.f32 %v5033, %v5041
    %v5044 = vadd.f32 %v5034, %v5041
    %v5045 = vadd.f32 %v5035, %v5041
    %v5046 = vadd.f32 %v5036, %v5041
    %v5047 = vmax.f32 %v5043, 0.0
    %v5048 = vmax.f32 %v5044, 0.0
    %v5049 = vmax.f32 %v5045, 0.0
    %v5050 = vmax.f32 %v5046, 0.0
    %v5051 = vpack.c.bf16 %v5047, %v5047
    %v5052 = vpack.c.bf16 %v5048, %v5048
    %v5053 = vpack.c.bf16 %v5049, %v5049
    %v5054 = vpack.c.bf16 %v5050, %v5050
    %v5055 = vmul.f32 %v4644, %v5024
    %v5056 = vmul.f32 %v4645, %v5024
    %v5057 = vmul.f32 %v4646, %v5024
    %v5058 = vmul.f32 %v4647, %v5024
    %v5059 = vadd.f32 %v5055, %v5041
    %v5060 = vadd.f32 %v5056, %v5041
    %v5061 = vadd.f32 %v5057, %v5041
    %v5062 = vadd.f32 %v5058, %v5041
    %v5063 = vmax.f32 %v5059, 0.0
    %v5064 = vmax.f32 %v5060, 0.0
    %v5065 = vmax.f32 %v5061, 0.0
    %v5066 = vmax.f32 %v5062, 0.0
    %v5067 = vpack.c.bf16 %v5063, %v5063
    %v5068 = vpack.c.bf16 %v5064, %v5064
    %v5069 = vpack.c.bf16 %v5065, %v5065
    %v5070 = vpack.c.bf16 %v5066, %v5066
    %v5071 = vmul.f32 %v4648, %v5024
    %v5072 = vmul.f32 %v4649, %v5024
    %v5073 = vmul.f32 %v4650, %v5024
    %v5074 = vmul.f32 %v4651, %v5024
    %v5075 = vadd.f32 %v5071, %v5041
    %v5076 = vadd.f32 %v5072, %v5041
    %v5077 = vadd.f32 %v5073, %v5041
    %v5078 = vadd.f32 %v5074, %v5041
    %v5079 = vmax.f32 %v5075, 0.0
    %v5080 = vmax.f32 %v5076, 0.0
    %v5081 = vmax.f32 %v5077, 0.0
    %v5082 = vmax.f32 %v5078, 0.0
    %v5083 = vpack.c.bf16 %v5079, %v5079
    %v5084 = vpack.c.bf16 %v5080, %v5080
    %v5085 = vpack.c.bf16 %v5081, %v5081
    %v5086 = vpack.c.bf16 %v5082, %v5082
    %v5087 = vmul.f32 %v4652, %v5024
    %v5088 = vmul.f32 %v4653, %v5024
    %v5089 = vmul.f32 %v4654, %v5024
    %v5090 = vmul.f32 %v4655, %v5024
    %v5091 = vadd.f32 %v5087, %v5041
    %v5092 = vadd.f32 %v5088, %v5041
    %v5093 = vadd.f32 %v5089, %v5041
    %v5094 = vadd.f32 %v5090, %v5041
    %v5095 = vmax.f32 %v5091, 0.0
    %v5096 = vmax.f32 %v5092, 0.0
    %v5097 = vmax.f32 %v5093, 0.0
    %v5098 = vmax.f32 %v5094, 0.0
    %v5099 = vpack.c.bf16 %v5095, %v5095
    %v5100 = vpack.c.bf16 %v5096, %v5096
    %v5101 = vpack.c.bf16 %v5097, %v5097
    %v5102 = vpack.c.bf16 %v5098, %v5098
    %v5103 = vmul.f32 %v4648, %v5022
    %v5104 = vmul.f32 %v4649, %v5022
    %v5105 = vmul.f32 %v4650, %v5022
    %v5106 = vmul.f32 %v4651, %v5022
    %v5107 = vadd.f32 %v5103, %v5038
    %v5108 = vadd.f32 %v5104, %v5038
    %v5109 = vadd.f32 %v5105, %v5038
    %v5110 = vadd.f32 %v5106, %v5038
    %v5111 = vmax.f32 %v5107, 0.0
    %v5112 = vmax.f32 %v5108, 0.0
    %v5113 = vmax.f32 %v5109, 0.0
    %v5114 = vmax.f32 %v5110, 0.0
    %v5115 = vpack.c.bf16 %v5111, %v5111
    %v5116 = vpack.c.bf16 %v5112, %v5112
    %v5117 = vpack.c.bf16 %v5113, %v5113
    %v5118 = vpack.c.bf16 %v5114, %v5114
    %v5119 = vmul.f32 %v4652, %v5022
    %v5120 = vmul.f32 %v4653, %v5022
    %v5121 = vmul.f32 %v4654, %v5022
    %v5122 = vmul.f32 %v4655, %v5022
    %v5123 = vadd.f32 %v5119, %v5038
    %v5124 = vadd.f32 %v5120, %v5038
    %v5125 = vadd.f32 %v5121, %v5038
    %v5126 = vadd.f32 %v5122, %v5038
    %v5127 = vmax.f32 %v5123, 0.0
    %v5128 = vmax.f32 %v5124, 0.0
    %v5129 = vmax.f32 %v5125, 0.0
    %v5130 = vmax.f32 %v5126, 0.0
    %v5131 = vpack.c.bf16 %v5127, %v5127
    %v5132 = vpack.c.bf16 %v5128, %v5128
    %v5133 = vpack.c.bf16 %v5129, %v5129
    %v5134 = vpack.c.bf16 %v5130, %v5130
    %v5135 = vmul.f32 %v4644, %v5022
    %v5136 = vmul.f32 %v4645, %v5022
    %v5137 = vmul.f32 %v4646, %v5022
    %v5138 = vmul.f32 %v4647, %v5022
    %v5139 = vadd.f32 %v5135, %v5038
    %v5140 = vadd.f32 %v5136, %v5038
    %v5141 = vadd.f32 %v5137, %v5038
    %v5142 = vadd.f32 %v5138, %v5038
    %v5143 = vmax.f32 %v5139, 0.0
    %v5144 = vmax.f32 %v5140, 0.0
    %v5145 = vmax.f32 %v5141, 0.0
    %v5146 = vmax.f32 %v5142, 0.0
    %v5147 = vpack.c.bf16 %v5143, %v5143
    %v5148 = vpack.c.bf16 %v5144, %v5144
    %v5149 = vpack.c.bf16 %v5145, %v5145
    %v5150 = vpack.c.bf16 %v5146, %v5146
    %v5151 = vmul.f32 %v4672, %v5022
    %v5152 = vmul.f32 %v4673, %v5022
    %v5153 = vmul.f32 %v4674, %v5022
    %v5154 = vmul.f32 %v4675, %v5022
    %v5155 = vadd.f32 %v5151, %v5038
    %v5156 = vadd.f32 %v5152, %v5038
    %v5157 = vadd.f32 %v5153, %v5038
    %v5158 = vadd.f32 %v5154, %v5038
    %v5159 = vmax.f32 %v5155, 0.0
    %v5160 = vmax.f32 %v5156, 0.0
    %v5161 = vmax.f32 %v5157, 0.0
    %v5162 = vmax.f32 %v5158, 0.0
    %v5163 = vpack.c.bf16 %v5159, %v5159
    %v5164 = vpack.c.bf16 %v5160, %v5160
    %v5165 = vpack.c.bf16 %v5161, %v5161
    %v5166 = vpack.c.bf16 %v5162, %v5162
    %v5171 = vunpack.c.l.b16 %v5051
    %v5172 = vunpack.c.l.b16 %v5052
    %v5173 = vunpack.c.l.b16 %v5053
    %v5174 = vunpack.c.l.b16 %v5054
    %v5175 = vpack.c.b16 %v5172, %v5171
    %v5176 = vpack.c.b16 %v5174, %v5173
    %v5181 = vunpack.c.l.b16 %v5067
    %v5182 = vunpack.c.l.b16 %v5068
    %v5183 = vunpack.c.l.b16 %v5069
    %v5184 = vunpack.c.l.b16 %v5070
    %v5185 = vpack.c.b16 %v5182, %v5181
    %v5186 = vpack.c.b16 %v5184, %v5183
    %v5191 = vunpack.c.l.b16 %v5083
    %v5192 = vunpack.c.l.b16 %v5084
    %v5193 = vunpack.c.l.b16 %v5085
    %v5194 = vunpack.c.l.b16 %v5086
    %v5195 = vpack.c.b16 %v5192, %v5191
    %v5196 = vpack.c.b16 %v5194, %v5193
    %v5201 = vunpack.c.l.b16 %v5099
    %v5202 = vunpack.c.l.b16 %v5100
    %v5203 = vunpack.c.l.b16 %v5101
    %v5204 = vunpack.c.l.b16 %v5102
    %v5205 = vpack.c.b16 %v5202, %v5201
    %v5206 = vpack.c.b16 %v5204, %v5203
    %v5211 = vunpack.c.l.b16 %v5115
    %v5212 = vunpack.c.l.b16 %v5116
    %v5213 = vunpack.c.l.b16 %v5117
    %v5214 = vunpack.c.l.b16 %v5118
    %v5215 = vpack.c.b16 %v5212, %v5211
    %v5216 = vpack.c.b16 %v5214, %v5213
    %5217 = vrot.lane.b32.xlu0 %v5215, 64
    %v5218 = vpop.permute.xlu0 %5217
    %5219 = vrot.lane.b32.xlu0 %v5216, 64
    %v5220 = vpop.permute.xlu0 %5219
    %v5225 = vunpack.c.l.b16 %v5131
    %v5226 = vunpack.c.l.b16 %v5132
    %v5227 = vunpack.c.l.b16 %v5133
    %v5228 = vunpack.c.l.b16 %v5134
    %v5229 = vpack.c.b16 %v5226, %v5225
    %v5230 = vpack.c.b16 %v5228, %v5227
    %5231 = vrot.lane.b32.xlu0 %v5229, 64
    %v5232 = vpop.permute.xlu0 %5231
    %5233 = vrot.lane.b32.xlu0 %v5230, 64
    %v5234 = vpop.permute.xlu0 %5233
    %v5239 = vunpack.c.l.b16 %v5147
    %v5240 = vunpack.c.l.b16 %v5148
    %v5241 = vunpack.c.l.b16 %v5149
    %v5242 = vunpack.c.l.b16 %v5150
    %v5243 = vpack.c.b16 %v5240, %v5239
    %v5244 = vpack.c.b16 %v5242, %v5241
    %5245 = vrot.lane.b32.xlu0 %v5243, 64
    %v5246 = vpop.permute.xlu0 %5245
    %5247 = vrot.lane.b32.xlu0 %v5244, 64
    %v5248 = vpop.permute.xlu0 %5247
    %v5253 = vunpack.c.l.b16 %v5163
    %v5254 = vunpack.c.l.b16 %v5164
    %v5255 = vunpack.c.l.b16 %v5165
    %v5256 = vunpack.c.l.b16 %v5166
    %v5257 = vpack.c.b16 %v5254, %v5253
    %v5258 = vpack.c.b16 %v5256, %v5255
    %5259 = vrot.lane.b32.xlu0 %v5257, 64
    %v5260 = vpop.permute.xlu0 %5259
    %5261 = vrot.lane.b32.xlu0 %v5258, 64
    %v5262 = vpop.permute.xlu0 %5261
    %s5263 = smul.u32 4, 8
    %s5264 = smul.u32 %s5263, 4
    %s5265 = sshll.u32 %s5264, 4
    %5266 = dma.done %s164, %s5265
    %v5267 = vld [vmem:[#allocation5] sm:$0xff]
    %v5268 = vld [vmem:[#allocation5 + $0x8] sm:$0xff]
    %v5269 = vld [vmem:[#allocation5 + $0x10] sm:$0xff]
    %v5270 = vld [vmem:[#allocation5 + $0x18] sm:$0xff]
    %v5271 = vld [vmem:[#allocation5 + $0x20] sm:$0xff]
    %v5272 = vld [vmem:[#allocation5 + $0x28] sm:$0xff]
    %v5273 = vld [vmem:[#allocation5 + $0x30] sm:$0xff]
    %v5274 = vld [vmem:[#allocation5 + $0x38] sm:$0xff]
    %v5275 = vld [vmem:[#allocation5 + $0x40] sm:$0xff]
    %v5276 = vld [vmem:[#allocation5 + $0x48] sm:$0xff]
    %v5277 = vld [vmem:[#allocation5 + $0x50] sm:$0xff]
    %v5278 = vld [vmem:[#allocation5 + $0x58] sm:$0xff]
    %v5279 = vld [vmem:[#allocation5 + $0x60] sm:$0xff]
    %v5280 = vld [vmem:[#allocation5 + $0x68] sm:$0xff]
    %v5281 = vld [vmem:[#allocation5 + $0x70] sm:$0xff]
    %v5282 = vld [vmem:[#allocation5 + $0x78] sm:$0xff]
    %5283 = vrot.lane.b32.xlu0 %v5175, 64
    %v5284 = vpop.permute.xlu0 %5283
    %5285 = vrot.lane.b32.xlu0 %v5176, 64
    %v5286 = vpop.permute.xlu0 %5285
    %5287 = vrot.lane.b32.xlu0 %v5185, 64
    %v5288 = vpop.permute.xlu0 %5287
    %5289 = vrot.lane.b32.xlu0 %v5186, 64
    %v5290 = vpop.permute.xlu0 %5289
    %5291 = vrot.lane.b32.xlu0 %v5195, 64
    %v5292 = vpop.permute.xlu0 %5291
    %5293 = vrot.lane.b32.xlu0 %v5196, 64
    %v5294 = vpop.permute.xlu0 %5293
    %5295 = vrot.lane.b32.xlu0 %v5205, 64
    %v5296 = vpop.permute.xlu0 %5295
    %5297 = vrot.lane.b32.xlu0 %v5206, 64
    %v5298 = vpop.permute.xlu0 %5297
    %5299 = vrot.lane.b32.xlu0 %v5218, 64
    %v5300 = vpop.permute.xlu0 %5299
    %5301 = vrot.lane.b32.xlu0 %v5220, 64
    %v5302 = vpop.permute.xlu0 %5301
    %5303 = vrot.lane.b32.xlu0 %v5232, 64
    %v5304 = vpop.permute.xlu0 %5303
    %5305 = vrot.lane.b32.xlu0 %v5234, 64
    %v5306 = vpop.permute.xlu0 %5305
    %5307 = vrot.lane.b32.xlu0 %v5246, 64
    %v5308 = vpop.permute.xlu0 %5307
    %5309 = vrot.lane.b32.xlu0 %v5248, 64
    %v5310 = vpop.permute.xlu0 %5309
    %5311 = vrot.lane.b32.xlu0 %v5260, 64
    %v5312 = vpop.permute.xlu0 %5311
    %5313 = vrot.lane.b32.xlu0 %v5262, 64
    %v5314 = vpop.permute.xlu0 %5313
    %v5331 = vunpack.c.l.b16 %v5267
    %v5332 = vunpack.c.h.b16 %v5267
    %v5333 = vunpack.c.l.b16 %v5268
    %v5334 = vunpack.c.h.b16 %v5268
    %v5335 = vunpack.c.l.b16 %v5269
    %v5336 = vunpack.c.h.b16 %v5269
    %v5337 = vunpack.c.l.b16 %v5270
    %v5338 = vunpack.c.h.b16 %v5270
    %v5339 = vunpack.c.l.b16 %v5271
    %v5340 = vunpack.c.h.b16 %v5271
    %v5341 = vunpack.c.l.b16 %v5272
    %v5342 = vunpack.c.h.b16 %v5272
    %v5343 = vunpack.c.l.b16 %v5273
    %v5344 = vunpack.c.h.b16 %v5273
    %v5345 = vunpack.c.l.b16 %v5274
    %v5346 = vunpack.c.h.b16 %v5274
    %v5347 = vunpack.c.l.b16 %v5275
    %v5348 = vunpack.c.h.b16 %v5275
    %v5349 = vunpack.c.l.b16 %v5276
    %v5350 = vunpack.c.h.b16 %v5276
    %v5351 = vunpack.c.l.b16 %v5277
    %v5352 = vunpack.c.h.b16 %v5277
    %v5353 = vunpack.c.l.b16 %v5278
    %v5354 = vunpack.c.h.b16 %v5278
    %v5355 = vunpack.c.l.b16 %v5279
    %v5356 = vunpack.c.h.b16 %v5279
    %v5357 = vunpack.c.l.b16 %v5280
    %v5358 = vunpack.c.h.b16 %v5280
    %v5359 = vunpack.c.l.b16 %v5281
    %v5360 = vunpack.c.h.b16 %v5281
    %v5361 = vunpack.c.l.b16 %v5282
    %v5362 = vunpack.c.h.b16 %v5282
    %v5363 = vpack.c.b16 %v5335, %v5331
    %v5364 = vpack.c.b16 %v5336, %v5332
    %v5365 = vpack.c.b16 %v5337, %v5333
    %v5366 = vpack.c.b16 %v5338, %v5334
    %v5367 = vpack.c.b16 %v5343, %v5339
    %v5368 = vpack.c.b16 %v5344, %v5340
    %v5369 = vpack.c.b16 %v5345, %v5341
    %v5370 = vpack.c.b16 %v5346, %v5342
    %v5371 = vpack.c.b16 %v5351, %v5347
    %v5372 = vpack.c.b16 %v5352, %v5348
    %v5373 = vpack.c.b16 %v5353, %v5349
    %v5374 = vpack.c.b16 %v5354, %v5350
    %v5375 = vpack.c.b16 %v5359, %v5355
    %v5376 = vpack.c.b16 %v5360, %v5356
    %v5377 = vpack.c.b16 %v5361, %v5357
    %v5378 = vpack.c.b16 %v5362, %v5358
    %v5396 = vsel %vm4734, %v5284, 0
    %v5399 = vsel %vm4734, %v5286, 0
    %v5402 = vsel %vm4734, %v5288, 0
    %v5405 = vsel %vm4734, %v5290, 0
    %v5408 = vsel %vm4734, %v5292, 0
    %v5411 = vsel %vm4734, %v5294, 0
    %v5414 = vsel %vm4734, %v5296, 0
    %v5417 = vsel %vm4734, %v5298, 0
    %v5420 = vsel %vm4734, %v5300, 0
    %v5423 = vsel %vm4734, %v5302, 0
    %v5426 = vsel %vm4734, %v5304, 0
    %v5429 = vsel %vm4734, %v5306, 0
    %v5432 = vsel %vm4734, %v5308, 0
    %v5435 = vsel %vm4734, %v5310, 0
    %v5438 = vsel %vm4734, %v5312, 0
    %v5441 = vsel %vm4734, %v5314, 0
    %5443 = vmatpush.bf16.msra.mxu0 0
    %5444 = vmatpush.bf16.msra.mxu0 0
    %5445 = vmatpush.bf16.msra.mxu0 0
    %5446 = vmatpush.bf16.msra.mxu0 0
    %5447 = vmatpush.bf16.msra.mxu0 %v5375
    %5448 = vmatpush.bf16.msra.mxu0 %v5371
    %5449 = vmatpush.bf16.msra.mxu0 %v5367
    %5450 = vmatpush.bf16.msra.mxu0 %v5363
    %5451 = vmatmul.bf16.gmra.mxu0 %v5396
    %v5452 = vpop.f32.mrf.mxu0
    %v5453 = vadd.f32 0.0, %v5452
    %v5454 = vpop.f32.mrf.mxu0
    %v5455 = vadd.f32 0.0, %v5454
    %5456 = vmatmul.bf16.gmra.mxu0 %v5399
    %v5457 = vpop.f32.mrf.mxu0
    %v5458 = vadd.f32 0.0, %v5457
    %v5459 = vpop.f32.mrf.mxu0
    %v5460 = vadd.f32 0.0, %v5459
    %5461 = vmatmul.bf16.gmra.mxu0 %v5402
    %v5462 = vpop.f32.mrf.mxu0
    %v5463 = vadd.f32 0.0, %v5462
    %v5464 = vpop.f32.mrf.mxu0
    %v5465 = vadd.f32 0.0, %v5464
    %5466 = vmatmul.bf16.gmra.mxu0 %v5405
    %v5467 = vpop.f32.mrf.mxu0
    %v5468 = vadd.f32 0.0, %v5467
    %v5469 = vpop.f32.mrf.mxu0
    %v5470 = vadd.f32 0.0, %v5469
    %5471 = vmatmul.bf16.gmra.mxu0 %v5408
    %v5472 = vpop.f32.mrf.mxu0
    %v5473 = vadd.f32 0.0, %v5472
    %v5474 = vpop.f32.mrf.mxu0
    %v5475 = vadd.f32 0.0, %v5474
    %5476 = vmatmul.bf16.gmra.mxu0 %v5411
    %v5477 = vpop.f32.mrf.mxu0
    %v5478 = vadd.f32 0.0, %v5477
    %v5479 = vpop.f32.mrf.mxu0
    %v5480 = vadd.f32 0.0, %v5479
    %5481 = vmatmul.bf16.gmra.mxu0 %v5414
    %v5482 = vpop.f32.mrf.mxu0
    %v5483 = vadd.f32 0.0, %v5482
    %v5484 = vpop.f32.mrf.mxu0
    %v5485 = vadd.f32 0.0, %v5484
    %5486 = vmatmul.bf16.gmra.mxu0 %v5417
    %v5487 = vpop.f32.mrf.mxu0
    %v5488 = vadd.f32 0.0, %v5487
    %v5489 = vpop.f32.mrf.mxu0
    %v5490 = vadd.f32 0.0, %v5489
    %5491 = vmatmul.bf16.gmra.mxu0 %v5420
    %v5492 = vpop.f32.mrf.mxu0
    %v5493 = vadd.f32 0.0, %v5492
    %v5494 = vpop.f32.mrf.mxu0
    %v5495 = vadd.f32 0.0, %v5494
    %5496 = vmatmul.bf16.gmra.mxu0 %v5423
    %v5497 = vpop.f32.mrf.mxu0
    %v5498 = vadd.f32 0.0, %v5497
    %v5499 = vpop.f32.mrf.mxu0
    %v5500 = vadd.f32 0.0, %v5499
    %5501 = vmatmul.bf16.gmra.mxu0 %v5426
    %v5502 = vpop.f32.mrf.mxu0
    %v5503 = vadd.f32 0.0, %v5502
    %v5504 = vpop.f32.mrf.mxu0
    %v5505 = vadd.f32 0.0, %v5504
    %5506 = vmatmul.bf16.gmra.mxu0 %v5429
    %v5507 = vpop.f32.mrf.mxu0
    %v5508 = vadd.f32 0.0, %v5507
    %v5509 = vpop.f32.mrf.mxu0
    %v5510 = vadd.f32 0.0, %v5509
    %5511 = vmatmul.bf16.gmra.mxu0 %v5432
    %v5512 = vpop.f32.mrf.mxu0
    %v5513 = vadd.f32 0.0, %v5512
    %v5514 = vpop.f32.mrf.mxu0
    %v5515 = vadd.f32 0.0, %v5514
    %5516 = vmatmul.bf16.gmra.mxu0 %v5435
    %v5517 = vpop.f32.mrf.mxu0
    %v5518 = vadd.f32 0.0, %v5517
    %v5519 = vpop.f32.mrf.mxu0
    %v5520 = vadd.f32 0.0, %v5519
    %5521 = vmatmul.bf16.gmra.mxu0 %v5438
    %v5522 = vpop.f32.mrf.mxu0
    %v5523 = vadd.f32 0.0, %v5522
    %v5524 = vpop.f32.mrf.mxu0
    %v5525 = vadd.f32 0.0, %v5524
    %5526 = vmatmul.bf16.gmra.mxu0 %v5441
    %v5527 = vpop.f32.mrf.mxu0
    %v5528 = vadd.f32 0.0, %v5527
    %v5529 = vpop.f32.mrf.mxu0
    %v5530 = vadd.f32 0.0, %v5529
    %5531 = vdwg.mxu0
    %5532 = vmatpush.bf16.msra.mxu0 0
    %5533 = vmatpush.bf16.msra.mxu0 0
    %5534 = vmatpush.bf16.msra.mxu0 0
    %5535 = vmatpush.bf16.msra.mxu0 0
    %5536 = vmatpush.bf16.msra.mxu0 %v5376
    %5537 = vmatpush.bf16.msra.mxu0 %v5372
    %5538 = vmatpush.bf16.msra.mxu0 %v5368
    %5539 = vmatpush.bf16.msra.mxu0 %v5364
    %5540 = vmatmul.bf16.gmra.mxu0 %v5396
    %v5541 = vpop.f32.mrf.mxu0
    %v5542 = vadd.f32 0.0, %v5541
    %v5543 = vpop.f32.mrf.mxu0
    %v5544 = vadd.f32 0.0, %v5543
    %5545 = vmatmul.bf16.gmra.mxu0 %v5399
    %v5546 = vpop.f32.mrf.mxu0
    %v5547 = vadd.f32 0.0, %v5546
    %v5548 = vpop.f32.mrf.mxu0
    %v5549 = vadd.f32 0.0, %v5548
    %5550 = vmatmul.bf16.gmra.mxu0 %v5402
    %v5551 = vpop.f32.mrf.mxu0
    %v5552 = vadd.f32 0.0, %v5551
    %v5553 = vpop.f32.mrf.mxu0
    %v5554 = vadd.f32 0.0, %v5553
    %5555 = vmatmul.bf16.gmra.mxu0 %v5405
    %v5556 = vpop.f32.mrf.mxu0
    %v5557 = vadd.f32 0.0, %v5556
    %v5558 = vpop.f32.mrf.mxu0
    %v5559 = vadd.f32 0.0, %v5558
    %5560 = vmatmul.bf16.gmra.mxu0 %v5408
    %v5561 = vpop.f32.mrf.mxu0
    %v5562 = vadd.f32 0.0, %v5561
    %v5563 = vpop.f32.mrf.mxu0
    %v5564 = vadd.f32 0.0, %v5563
    %5565 = vmatmul.bf16.gmra.mxu0 %v5411
    %v5566 = vpop.f32.mrf.mxu0
    %v5567 = vadd.f32 0.0, %v5566
    %v5568 = vpop.f32.mrf.mxu0
    %v5569 = vadd.f32 0.0, %v5568
    %5570 = vmatmul.bf16.gmra.mxu0 %v5414
    %v5571 = vpop.f32.mrf.mxu0
    %v5572 = vadd.f32 0.0, %v5571
    %v5573 = vpop.f32.mrf.mxu0
    %v5574 = vadd.f32 0.0, %v5573
    %5575 = vmatmul.bf16.gmra.mxu0 %v5417
    %v5576 = vpop.f32.mrf.mxu0
    %v5577 = vadd.f32 0.0, %v5576
    %v5578 = vpop.f32.mrf.mxu0
    %v5579 = vadd.f32 0.0, %v5578
    %5580 = vmatmul.bf16.gmra.mxu0 %v5420
    %v5581 = vpop.f32.mrf.mxu0
    %v5582 = vadd.f32 0.0, %v5581
    %v5583 = vpop.f32.mrf.mxu0
    %v5584 = vadd.f32 0.0, %v5583
    %5585 = vmatmul.bf16.gmra.mxu0 %v5423
    %v5586 = vpop.f32.mrf.mxu0
    %v5587 = vadd.f32 0.0, %v5586
    %v5588 = vpop.f32.mrf.mxu0
    %v5589 = vadd.f32 0.0, %v5588
    %5590 = vmatmul.bf16.gmra.mxu0 %v5426
    %v5591 = vpop.f32.mrf.mxu0
    %v5592 = vadd.f32 0.0, %v5591
    %v5593 = vpop.f32.mrf.mxu0
    %v5594 = vadd.f32 0.0, %v5593
    %5595 = vmatmul.bf16.gmra.mxu0 %v5429
    %v5596 = vpop.f32.mrf.mxu0
    %v5597 = vadd.f32 0.0, %v5596
    %v5598 = vpop.f32.mrf.mxu0
    %v5599 = vadd.f32 0.0, %v5598
    %5600 = vmatmul.bf16.gmra.mxu0 %v5432
    %v5601 = vpop.f32.mrf.mxu0
    %v5602 = vadd.f32 0.0, %v5601
    %v5603 = vpop.f32.mrf.mxu0
    %v5604 = vadd.f32 0.0, %v5603
    %5605 = vmatmul.bf16.gmra.mxu0 %v5435
    %v5606 = vpop.f32.mrf.mxu0
    %v5607 = vadd.f32 0.0, %v5606
    %v5608 = vpop.f32.mrf.mxu0
    %v5609 = vadd.f32 0.0, %v5608
    %5610 = vmatmul.bf16.gmra.mxu0 %v5438
    %v5611 = vpop.f32.mrf.mxu0
    %v5612 = vadd.f32 0.0, %v5611
    %v5613 = vpop.f32.mrf.mxu0
    %v5614 = vadd.f32 0.0, %v5613
    %5615 = vmatmul.bf16.gmra.mxu0 %v5441
    %v5616 = vpop.f32.mrf.mxu0
    %v5617 = vadd.f32 0.0, %v5616
    %v5618 = vpop.f32.mrf.mxu0
    %v5619 = vadd.f32 0.0, %v5618
    %5620 = vdwg.mxu0
    %5621 = vmatpush.bf16.msra.mxu0 0
    %5622 = vmatpush.bf16.msra.mxu0 0
    %5623 = vmatpush.bf16.msra.mxu0 0
    %5624 = vmatpush.bf16.msra.mxu0 0
    %5625 = vmatpush.bf16.msra.mxu0 %v5377
    %5626 = vmatpush.bf16.msra.mxu0 %v5373
    %5627 = vmatpush.bf16.msra.mxu0 %v5369
    %5628 = vmatpush.bf16.msra.mxu0 %v5365
    %5629 = vmatmul.bf16.gmra.mxu0 %v5396
    %v5630 = vpop.f32.mrf.mxu0
    %v5631 = vadd.f32 0.0, %v5630
    %v5632 = vpop.f32.mrf.mxu0
    %v5633 = vadd.f32 0.0, %v5632
    %5634 = vmatmul.bf16.gmra.mxu0 %v5399
    %v5635 = vpop.f32.mrf.mxu0
    %v5636 = vadd.f32 0.0, %v5635
    %v5637 = vpop.f32.mrf.mxu0
    %v5638 = vadd.f32 0.0, %v5637
    %5639 = vmatmul.bf16.gmra.mxu0 %v5402
    %v5640 = vpop.f32.mrf.mxu0
    %v5641 = vadd.f32 0.0, %v5640
    %v5642 = vpop.f32.mrf.mxu0
    %v5643 = vadd.f32 0.0, %v5642
    %5644 = vmatmul.bf16.gmra.mxu0 %v5405
    %v5645 = vpop.f32.mrf.mxu0
    %v5646 = vadd.f32 0.0, %v5645
    %v5647 = vpop.f32.mrf.mxu0
    %v5648 = vadd.f32 0.0, %v5647
    %5649 = vmatmul.bf16.gmra.mxu0 %v5408
    %v5650 = vpop.f32.mrf.mxu0
    %v5651 = vadd.f32 0.0, %v5650
    %v5652 = vpop.f32.mrf.mxu0
    %v5653 = vadd.f32 0.0, %v5652
    %5654 = vmatmul.bf16.gmra.mxu0 %v5411
    %v5655 = vpop.f32.mrf.mxu0
    %v5656 = vadd.f32 0.0, %v5655
    %v5657 = vpop.f32.mrf.mxu0
    %v5658 = vadd.f32 0.0, %v5657
    %5659 = vmatmul.bf16.gmra.mxu0 %v5414
    %v5660 = vpop.f32.mrf.mxu0
    %v5661 = vadd.f32 0.0, %v5660
    %v5662 = vpop.f32.mrf.mxu0
    %v5663 = vadd.f32 0.0, %v5662
    %5664 = vmatmul.bf16.gmra.mxu0 %v5417
    %v5665 = vpop.f32.mrf.mxu0
    %v5666 = vadd.f32 0.0, %v5665
    %v5667 = vpop.f32.mrf.mxu0
    %v5668 = vadd.f32 0.0, %v5667
    %5669 = vmatmul.bf16.gmra.mxu0 %v5420
    %v5670 = vpop.f32.mrf.mxu0
    %v5671 = vadd.f32 0.0, %v5670
    %v5672 = vpop.f32.mrf.mxu0
    %v5673 = vadd.f32 0.0, %v5672
    %5674 = vmatmul.bf16.gmra.mxu0 %v5423
    %v5675 = vpop.f32.mrf.mxu0
    %v5676 = vadd.f32 0.0, %v5675
    %v5677 = vpop.f32.mrf.mxu0
    %v5678 = vadd.f32 0.0, %v5677
    %5679 = vmatmul.bf16.gmra.mxu0 %v5426
    %v5680 = vpop.f32.mrf.mxu0
    %v5681 = vadd.f32 0.0, %v5680
    %v5682 = vpop.f32.mrf.mxu0
    %v5683 = vadd.f32 0.0, %v5682
    %5684 = vmatmul.bf16.gmra.mxu0 %v5429
    %v5685 = vpop.f32.mrf.mxu0
    %v5686 = vadd.f32 0.0, %v5685
    %v5687 = vpop.f32.mrf.mxu0
    %v5688 = vadd.f32 0.0, %v5687
    %5689 = vmatmul.bf16.gmra.mxu0 %v5432
    %v5690 = vpop.f32.mrf.mxu0
    %v5691 = vadd.f32 0.0, %v5690
    %v5692 = vpop.f32.mrf.mxu0
    %v5693 = vadd.f32 0.0, %v5692
    %5694 = vmatmul.bf16.gmra.mxu0 %v5435
    %v5695 = vpop.f32.mrf.mxu0
    %v5696 = vadd.f32 0.0, %v5695
    %v5697 = vpop.f32.mrf.mxu0
    %v5698 = vadd.f32 0.0, %v5697
    %5699 = vmatmul.bf16.gmra.mxu0 %v5438
    %v5700 = vpop.f32.mrf.mxu0
    %v5701 = vadd.f32 0.0, %v5700
    %v5702 = vpop.f32.mrf.mxu0
    %v5703 = vadd.f32 0.0, %v5702
    %5704 = vmatmul.bf16.gmra.mxu0 %v5441
    %v5705 = vpop.f32.mrf.mxu0
    %v5706 = vadd.f32 0.0, %v5705
    %v5707 = vpop.f32.mrf.mxu0
    %v5708 = vadd.f32 0.0, %v5707
    %5709 = vdwg.mxu0
    %5710 = vmatpush.bf16.msra.mxu0 0
    %5711 = vmatpush.bf16.msra.mxu0 0
    %5712 = vmatpush.bf16.msra.mxu0 0
    %5713 = vmatpush.bf16.msra.mxu0 0
    %5714 = vmatpush.bf16.msra.mxu0 %v5378
    %5715 = vmatpush.bf16.msra.mxu0 %v5374
    %5716 = vmatpush.bf16.msra.mxu0 %v5370
    %5717 = vmatpush.bf16.msra.mxu0 %v5366
    %5718 = vmatmul.bf16.gmra.mxu0 %v5396
    %v5719 = vpop.f32.mrf.mxu0
    %v5720 = vadd.f32 0.0, %v5719
    %v5721 = vpop.f32.mrf.mxu0
    %v5722 = vadd.f32 0.0, %v5721
    %5723 = vmatmul.bf16.gmra.mxu0 %v5399
    %v5724 = vpop.f32.mrf.mxu0
    %v5725 = vadd.f32 0.0, %v5724
    %v5726 = vpop.f32.mrf.mxu0
    %v5727 = vadd.f32 0.0, %v5726
    %5728 = vmatmul.bf16.gmra.mxu0 %v5402
    %v5729 = vpop.f32.mrf.mxu0
    %v5730 = vadd.f32 0.0, %v5729
    %v5731 = vpop.f32.mrf.mxu0
    %v5732 = vadd.f32 0.0, %v5731
    %5733 = vmatmul.bf16.gmra.mxu0 %v5405
    %v5734 = vpop.f32.mrf.mxu0
    %v5735 = vadd.f32 0.0, %v5734
    %v5736 = vpop.f32.mrf.mxu0
    %v5737 = vadd.f32 0.0, %v5736
    %5738 = vmatmul.bf16.gmra.mxu0 %v5408
    %v5739 = vpop.f32.mrf.mxu0
    %v5740 = vadd.f32 0.0, %v5739
    %v5741 = vpop.f32.mrf.mxu0
    %v5742 = vadd.f32 0.0, %v5741
    %5743 = vmatmul.bf16.gmra.mxu0 %v5411
    %v5744 = vpop.f32.mrf.mxu0
    %v5745 = vadd.f32 0.0, %v5744
    %v5746 = vpop.f32.mrf.mxu0
    %v5747 = vadd.f32 0.0, %v5746
    %5748 = vmatmul.bf16.gmra.mxu0 %v5414
    %v5749 = vpop.f32.mrf.mxu0
    %v5750 = vadd.f32 0.0, %v5749
    %v5751 = vpop.f32.mrf.mxu0
    %v5752 = vadd.f32 0.0, %v5751
    %5753 = vmatmul.bf16.gmra.mxu0 %v5417
    %v5754 = vpop.f32.mrf.mxu0
    %v5755 = vadd.f32 0.0, %v5754
    %v5756 = vpop.f32.mrf.mxu0
    %v5757 = vadd.f32 0.0, %v5756
    %5758 = vmatmul.bf16.gmra.mxu0 %v5420
    %v5759 = vpop.f32.mrf.mxu0
    %v5760 = vadd.f32 0.0, %v5759
    %v5761 = vpop.f32.mrf.mxu0
    %v5762 = vadd.f32 0.0, %v5761
    %5763 = vmatmul.bf16.gmra.mxu0 %v5423
    %v5764 = vpop.f32.mrf.mxu0
    %v5765 = vadd.f32 0.0, %v5764
    %v5766 = vpop.f32.mrf.mxu0
    %v5767 = vadd.f32 0.0, %v5766
    %5768 = vmatmul.bf16.gmra.mxu0 %v5426
    %v5769 = vpop.f32.mrf.mxu0
    %v5770 = vadd.f32 0.0, %v5769
    %v5771 = vpop.f32.mrf.mxu0
    %v5772 = vadd.f32 0.0, %v5771
    %5773 = vmatmul.bf16.gmra.mxu0 %v5429
    %v5774 = vpop.f32.mrf.mxu0
    %v5775 = vadd.f32 0.0, %v5774
    %v5776 = vpop.f32.mrf.mxu0
    %v5777 = vadd.f32 0.0, %v5776
    %5778 = vmatmul.bf16.gmra.mxu0 %v5432
    %v5779 = vpop.f32.mrf.mxu0
    %v5780 = vadd.f32 0.0, %v5779
    %v5781 = vpop.f32.mrf.mxu0
    %v5782 = vadd.f32 0.0, %v5781
    %5783 = vmatmul.bf16.gmra.mxu0 %v5435
    %v5784 = vpop.f32.mrf.mxu0
    %v5785 = vadd.f32 0.0, %v5784
    %v5786 = vpop.f32.mrf.mxu0
    %v5787 = vadd.f32 0.0, %v5786
    %5788 = vmatmul.bf16.gmra.mxu0 %v5438
    %v5789 = vpop.f32.mrf.mxu0
    %v5790 = vadd.f32 0.0, %v5789
    %v5791 = vpop.f32.mrf.mxu0
    %v5792 = vadd.f32 0.0, %v5791
    %5793 = vmatmul.bf16.gmra.mxu0 %v5441
    %v5794 = vpop.f32.mrf.mxu0
    %v5795 = vadd.f32 0.0, %v5794
    %v5796 = vpop.f32.mrf.mxu0
    %v5797 = vadd.f32 0.0, %v5796
    %5798 = vdwg.mxu0
    %v5803 = vrot.slane %v5790, 7
    %v5804 = vrot.slane %v5792, 7
    %v5805 = vsel %vm869, %v5803, %v5804
    %v5806 = vrot.slane %v5795, 7
    %v5807 = vrot.slane %v5797, 7
    %v5808 = vsel %vm869, %v5806, %v5807
    %v5813 = vsel %vm869, 0.0, %v5803
    %v5814 = vsel %vm869, 0.0, %v5806
    %v5815 = vadd.f32 %v5542, %v5813
    %v5816 = vadd.f32 %v5544, %v5805
    %v5817 = vadd.f32 %v5547, %v5814
    %v5818 = vadd.f32 %v5549, %v5808
    %v5819 = vadd.f32 %v5552, %v5780
    %v5820 = vadd.f32 %v5554, %v5782
    %v5821 = vadd.f32 %v5557, %v5785
    %v5822 = vadd.f32 %v5559, %v5787
    %v5823 = vadd.f32 %v5562, %v5760
    %v5824 = vadd.f32 %v5564, %v5762
    %v5825 = vadd.f32 %v5567, %v5765
    %v5826 = vadd.f32 %v5569, %v5767
    %v5827 = vadd.f32 %v5572, %v5770
    %v5828 = vadd.f32 %v5574, %v5772
    %v5829 = vadd.f32 %v5577, %v5775
    %v5830 = vadd.f32 %v5579, %v5777
    %v5831 = vadd.f32 %v5582, %v5720
    %v5832 = vadd.f32 %v5584, %v5722
    %v5833 = vadd.f32 %v5587, %v5725
    %v5834 = vadd.f32 %v5589, %v5727
    %v5835 = vadd.f32 %v5592, %v5730
    %v5836 = vadd.f32 %v5594, %v5732
    %v5837 = vadd.f32 %v5597, %v5735
    %v5838 = vadd.f32 %v5599, %v5737
    %v5839 = vadd.f32 %v5602, %v5740
    %v5840 = vadd.f32 %v5604, %v5742
    %v5841 = vadd.f32 %v5607, %v5745
    %v5842 = vadd.f32 %v5609, %v5747
    %v5843 = vadd.f32 %v5612, %v5750
    %v5844 = vadd.f32 %v5614, %v5752
    %v5845 = vadd.f32 %v5617, %v5755
    %v5846 = vadd.f32 %v5619, %v5757
    %v5847 = vadd.f32 %v5631, %v5493
    %v5848 = vadd.f32 %v5633, %v5495
    %v5849 = vadd.f32 %v5636, %v5498
    %v5850 = vadd.f32 %v5638, %v5500
    %v5851 = vadd.f32 %v5641, %v5503
    %v5852 = vadd.f32 %v5643, %v5505
    %v5853 = vadd.f32 %v5646, %v5508
    %v5854 = vadd.f32 %v5648, %v5510
    %v5855 = vadd.f32 %v5651, %v5513
    %v5856 = vadd.f32 %v5653, %v5515
    %v5857 = vadd.f32 %v5656, %v5518
    %v5858 = vadd.f32 %v5658, %v5520
    %v5859 = vadd.f32 %v5661, %v5523
    %v5860 = vadd.f32 %v5663, %v5525
    %v5861 = vadd.f32 %v5666, %v5528
    %v5862 = vadd.f32 %v5668, %v5530
    %v5863 = vadd.f32 %v5671, %v5473
    %v5864 = vadd.f32 %v5673, %v5475
    %v5865 = vadd.f32 %v5676, %v5478
    %v5866 = vadd.f32 %v5678, %v5480
    %v5867 = vadd.f32 %v5681, %v5483
    %v5868 = vadd.f32 %v5683, %v5485
    %v5869 = vadd.f32 %v5686, %v5488
    %v5870 = vadd.f32 %v5688, %v5490
    %v5871 = vadd.f32 %v5691, %v5463
    %v5872 = vadd.f32 %v5693, %v5465
    %v5873 = vadd.f32 %v5696, %v5468
    %v5874 = vadd.f32 %v5698, %v5470
    %v5879 = vrot.slane %v5453, 1
    %v5880 = vrot.slane %v5455, 1
    %v5881 = vsel %vm3203, %v5879, %v5880
    %v5882 = vrot.slane %v5458, 1
    %v5883 = vrot.slane %v5460, 1
    %v5884 = vsel %vm3203, %v5882, %v5883
    %v5889 = vsel %vm3203, %v5880, 0.0
    %v5890 = vsel %vm3203, %v5883, 0.0
    %v5891 = vadd.f32 %v5701, %v5881
    %v5892 = vadd.f32 %v5703, %v5889
    %v5893 = vadd.f32 %v5706, %v5884
    %v5894 = vadd.f32 %v5708, %v5890
    %v5895 = vtanh.pop %v5815
    %v5896 = vtanh.pop %v5816
    %v5897 = vtanh.pop %v5817
    %v5898 = vtanh.pop %v5818
    %5899 = vst [vmem:[%s14] sm:$0xff] %v5895
    %5900 = vst [vmem:[%s14 + $0x8] sm:$0xff] %v5896
    %5901 = vst [vmem:[%s14 + $0x10] sm:$0xff] %v5897
    %5902 = vst [vmem:[%s14 + $0x18] sm:$0xff] %v5898
    %v5903 = vtanh.pop %v5819
    %v5904 = vtanh.pop %v5820
    %v5905 = vtanh.pop %v5821
    %v5906 = vtanh.pop %v5822
    %s5907 = scalar_lea.vmem %s14, 256
    %5908 = vst [vmem:[%s5907] sm:$0xff] %v5903
    %5909 = vst [vmem:[%s5907 + $0x8] sm:$0xff] %v5904
    %5910 = vst [vmem:[%s5907 + $0x10] sm:$0xff] %v5905
    %5911 = vst [vmem:[%s5907 + $0x18] sm:$0xff] %v5906
    %v5912 = vtanh.pop %v5823
    %v5913 = vtanh.pop %v5824
    %v5914 = vtanh.pop %v5825
    %v5915 = vtanh.pop %v5826
    %s5916 = scalar_lea.vmem %s14, 128
    %5917 = vst [vmem:[%s5916] sm:$0xff] %v5912
    %5918 = vst [vmem:[%s5916 + $0x8] sm:$0xff] %v5913
    %5919 = vst [vmem:[%s5916 + $0x10] sm:$0xff] %v5914
    %5920 = vst [vmem:[%s5916 + $0x18] sm:$0xff] %v5915
    %v5921 = vtanh.pop %v5827
    %v5922 = vtanh.pop %v5828
    %v5923 = vtanh.pop %v5829
    %v5924 = vtanh.pop %v5830
    %s5925 = scalar_lea.vmem %s14, 384
    %5926 = vst [vmem:[%s5925] sm:$0xff] %v5921
    %5927 = vst [vmem:[%s5925 + $0x8] sm:$0xff] %v5922
    %5928 = vst [vmem:[%s5925 + $0x10] sm:$0xff] %v5923
    %5929 = vst [vmem:[%s5925 + $0x18] sm:$0xff] %v5924
    %v5930 = vtanh.pop %v5831
    %v5931 = vtanh.pop %v5832
    %v5932 = vtanh.pop %v5833
    %v5933 = vtanh.pop %v5834
    %s5934 = scalar_lea.vmem %s14, 64
    %5935 = vst [vmem:[%s5934] sm:$0xff] %v5930
    %5936 = vst [vmem:[%s5934 + $0x8] sm:$0xff] %v5931
    %5937 = vst [vmem:[%s5934 + $0x10] sm:$0xff] %v5932
    %5938 = vst [vmem:[%s5934 + $0x18] sm:$0xff] %v5933
    %v5939 = vtanh.pop %v5835
    %v5940 = vtanh.pop %v5836
    %v5941 = vtanh.pop %v5837
    %v5942 = vtanh.pop %v5838
    %s5943 = scalar_lea.vmem %s14, 320
    %5944 = vst [vmem:[%s5943] sm:$0xff] %v5939
    %5945 = vst [vmem:[%s5943 + $0x8] sm:$0xff] %v5940
    %5946 = vst [vmem:[%s5943 + $0x10] sm:$0xff] %v5941
    %5947 = vst [vmem:[%s5943 + $0x18] sm:$0xff] %v5942
    %v5948 = vtanh.pop %v5839
    %v5949 = vtanh.pop %v5840
    %v5950 = vtanh.pop %v5841
    %v5951 = vtanh.pop %v5842
    %s5952 = scalar_lea.vmem %s14, 192
    %5953 = vst [vmem:[%s5952] sm:$0xff] %v5948
    %5954 = vst [vmem:[%s5952 + $0x8] sm:$0xff] %v5949
    %5955 = vst [vmem:[%s5952 + $0x10] sm:$0xff] %v5950
    %5956 = vst [vmem:[%s5952 + $0x18] sm:$0xff] %v5951
    %v5957 = vtanh.pop %v5843
    %v5958 = vtanh.pop %v5844
    %v5959 = vtanh.pop %v5845
    %v5960 = vtanh.pop %v5846
    %s5961 = scalar_lea.vmem %s14, 448
    %5962 = vst [vmem:[%s5961] sm:$0xff] %v5957
    %5963 = vst [vmem:[%s5961 + $0x8] sm:$0xff] %v5958
    %5964 = vst [vmem:[%s5961 + $0x10] sm:$0xff] %v5959
    %5965 = vst [vmem:[%s5961 + $0x18] sm:$0xff] %v5960
    %v5966 = vtanh.pop %v5847
    %v5967 = vtanh.pop %v5848
    %v5968 = vtanh.pop %v5849
    %v5969 = vtanh.pop %v5850
    %s5970 = scalar_lea.vmem %s14, 32
    %5971 = vst [vmem:[%s5970] sm:$0xff] %v5966
    %5972 = vst [vmem:[%s5970 + $0x8] sm:$0xff] %v5967
    %5973 = vst [vmem:[%s5970 + $0x10] sm:$0xff] %v5968
    %5974 = vst [vmem:[%s5970 + $0x18] sm:$0xff] %v5969
    %v5975 = vtanh.pop %v5851
    %v5976 = vtanh.pop %v5852
    %v5977 = vtanh.pop %v5853
    %v5978 = vtanh.pop %v5854
    %s5979 = scalar_lea.vmem %s14, 288
    %5980 = vst [vmem:[%s5979] sm:$0xff] %v5975
    %5981 = vst [vmem:[%s5979 + $0x8] sm:$0xff] %v5976
    %5982 = vst [vmem:[%s5979 + $0x10] sm:$0xff] %v5977
    %5983 = vst [vmem:[%s5979 + $0x18] sm:$0xff] %v5978
    %v5984 = vtanh.pop %v5855
    %v5985 = vtanh.pop %v5856
    %v5986 = vtanh.pop %v5857
    %v5987 = vtanh.pop %v5858
    %s5988 = scalar_lea.vmem %s14, 160
    %5989 = vst [vmem:[%s5988] sm:$0xff] %v5984
    %5990 = vst [vmem:[%s5988 + $0x8] sm:$0xff] %v5985
    %5991 = vst [vmem:[%s5988 + $0x10] sm:$0xff] %v5986
    %5992 = vst [vmem:[%s5988 + $0x18] sm:$0xff] %v5987
    %v5993 = vtanh.pop %v5859
    %v5994 = vtanh.pop %v5860
    %v5995 = vtanh.pop %v5861
    %v5996 = vtanh.pop %v5862
    %s5997 = scalar_lea.vmem %s14, 416
    %5998 = vst [vmem:[%s5997] sm:$0xff] %v5993
    %5999 = vst [vmem:[%s5997 + $0x8] sm:$0xff] %v5994
    %6000 = vst [vmem:[%s5997 + $0x10] sm:$0xff] %v5995
    %6001 = vst [vmem:[%s5997 + $0x18] sm:$0xff] %v5996
    %v6002 = vtanh.pop %v5863
    %v6003 = vtanh.pop %v5864
    %v6004 = vtanh.pop %v5865
    %v6005 = vtanh.pop %v5866
    %s6006 = scalar_lea.vmem %s14, 96
    %6007 = vst [vmem:[%s6006] sm:$0xff] %v6002
    %6008 = vst [vmem:[%s6006 + $0x8] sm:$0xff] %v6003
    %6009 = vst [vmem:[%s6006 + $0x10] sm:$0xff] %v6004
    %6010 = vst [vmem:[%s6006 + $0x18] sm:$0xff] %v6005
    %v6011 = vtanh.pop %v5867
    %v6012 = vtanh.pop %v5868
    %v6013 = vtanh.pop %v5869
    %v6014 = vtanh.pop %v5870
    %s6015 = scalar_lea.vmem %s14, 352
    %6016 = vst [vmem:[%s6015] sm:$0xff] %v6011
    %6017 = vst [vmem:[%s6015 + $0x8] sm:$0xff] %v6012
    %6018 = vst [vmem:[%s6015 + $0x10] sm:$0xff] %v6013
    %6019 = vst [vmem:[%s6015 + $0x18] sm:$0xff] %v6014
    %v6020 = vtanh.pop %v5871
    %v6021 = vtanh.pop %v5872
    %v6022 = vtanh.pop %v5873
    %v6023 = vtanh.pop %v5874
    %s6024 = scalar_lea.vmem %s14, 224
    %6025 = vst [vmem:[%s6024] sm:$0xff] %v6020
    %6026 = vst [vmem:[%s6024 + $0x8] sm:$0xff] %v6021
    %6027 = vst [vmem:[%s6024 + $0x10] sm:$0xff] %v6022
    %6028 = vst [vmem:[%s6024 + $0x18] sm:$0xff] %v6023
    %v6029 = vtanh.pop %v5891
    %v6030 = vtanh.pop %v5892
    %v6031 = vtanh.pop %v5893
    %v6032 = vtanh.pop %v5894
    %s6033 = scalar_lea.vmem %s14, 480
    %6034 = vst [vmem:[%s6033] sm:$0xff] %v6029
    %6035 = vst [vmem:[%s6033 + $0x8] sm:$0xff] %v6030
    %6036 = vst [vmem:[%s6033 + $0x10] sm:$0xff] %v6031
    %6037 = vst [vmem:[%s6033 + $0x18] sm:$0xff] %v6032
    // Predicated region
    $region82: #{generator_forward.1} parent=1 // pred_check
      _
    $region83: #{generator_forward.1} parent=1 // pred_check_branch
      %6039 = sbr.rel (0) target = $region85
    $region84: #{generator_forward.1} parent=1 // pred_region
      _
    $region85: #{generator_forward.1} parent=1 // pred_fallthru
      _
    // Predicated region
    $region86: #{generator_forward.1} parent=1 // pred_check
      _
    $region87: #{generator_forward.1} parent=1 // pred_check_branch
      %6041 = sbr.rel (0) target = $region89
    $region88: #{generator_forward.1} parent=1 // pred_region
      _
    $region89: #{generator_forward.1} parent=1 // pred_fallthru
      _
    %6042 = vsyncpa [#allocation8], 1
    %6043 = vsyncpa [#allocation12], 1
    %6044 = vsyncpa [#allocation15], 1
    %6045 = vsyncpa [#allocation9], 1
  %6046 = vsyncmov [#allocation6]
  %s6047 = vpop.sfrf %6046
  %p6048 = scmp.eq.s32.totalorder %s6047, 0
  %p6049 = pneg %p6048
  %6051 = shalt.err (%p6049)
  %s6052 = scalar_lea.sflag [#allocation6], 1
  %6053 = vsyncmov %s6052
  %s6054 = vpop.sfrf %6053
  %p6055 = scmp.eq.s32.totalorder %s6054, 0
  %p6056 = pneg %p6055
  %6058 = shalt.err (%p6056)
  %s6059 = scalar_lea.sflag [#allocation6], 2
  %6060 = vsyncmov %s6059
  %s6061 = vpop.sfrf %6060
  %p6062 = scmp.eq.s32.totalorder %s6061, 0
  %p6063 = pneg %p6062
  %6065 = shalt.err (%p6063)
  %s6066 = scalar_lea.sflag [#allocation6], 3
  %6067 = vsyncmov %s6066
  %s6068 = vpop.sfrf %6067
  %p6069 = scmp.eq.s32.totalorder %s6068, 0
  %p6070 = pneg %p6069
  %6072 = shalt.err (%p6070)

</llo_original>
